<compile_context>
chip_gen: v5e
topology: v5e:2x2
jax: 0.10.0
libtpu: 0.0.40
codegen_flags: <defaults>
</compile_context>

<pallas_src>
import math

import jax
import jax.numpy as jnp
from jax.experimental import pallas as pl
from jax.experimental.pallas import tpu as pltpu

SELU_ALPHA = 1.6732632423543772
SELU_SCALE = 1.0507009873554805


def _selu(x):
    # clamp the false branch so exp() never produces inf before being selected away
    return SELU_SCALE * jnp.where(
        x > 0, x, SELU_ALPHA * (jnp.exp(jnp.minimum(x, 0.0)) - 1.0))


def _round_up(x, m):
    return (x + m - 1) // m * m


# ----------------------------------------------------------------------------
# Fused kernel.
#
# Ref order: x2d, [wih_cat, whh_bd, b_cat] * num_layers, w1, b1, w2, b2,
#            out, gates_scr, act_scr
#   x2d       : (T*Bp, D_in)  time-major rows (row s*Bp + b = time s, batch b), bf16
#   wih_cat   : (D_l, 8Hp)    [fwd(i,f,o,g) | bwd(i,f,o,g)] input proj, bf16
#   whh_bd    : (2Hp, 8Hp)    block-diag [Whh_f | Whh_b] hidden proj, bf16
#   b_cat     : (1, 8Hp)      b_ih + b_hh, f32
#   gates_scr : (T*Bp, 8Hp)   f32: x @ W_ih + b for the current layer
#   act_scr   : (T*Bp, 2Hp)   f32: layer output [fwd h | bwd h], reused across layers
# All lane offsets used below (Hp, 2Hp, 3Hp, 4Hp, 7Hp) are multiples of 128.
# ----------------------------------------------------------------------------
def build_kernel(T, Bp, Hp, num_layers, mm_dtype):
    G4 = 4 * Hp

    if T <= 8:
        unroll = T
    elif T % 4 == 0:
        unroll = 4
    elif T % 2 == 0:
        unroll = 2
    else:
        unroll = 1

    def kernel(*refs):
        x_ref = refs[0]
        n_lw = 3 * num_layers
        layer_refs = refs[1:1 + n_lw]
        w1_ref, b1_ref, w2_ref, b2_ref = refs[1 + n_lw:5 + n_lw]
        out_ref = refs[5 + n_lw]
        gates_scr = refs[6 + n_lw]
        act_scr = refs[7 + n_lw]

        for layer in range(num_layers):
            wih_ref, whh_ref, b_ref = layer_refs[3 * layer:3 * layer + 3]

            # Hoisted input projection for BOTH directions (bias folded): one big
            # bf16 MXU matmul per layer instead of T tiny ones on the serial chain.
            xin = x_ref[...] if layer == 0 else act_scr[...].astype(mm_dtype)
            gates_scr[...] = (
                jnp.dot(xin, wih_ref[...], preferred_element_type=jnp.float32)
                + b_ref[...])

            whh = whh_ref[...]                       # loop-invariant (2Hp, 8Hp) bf16

            def step(s, carry, whh=whh):
                h_cat, c_f, c_b = carry              # (Bp,2Hp) f32, (Bp,Hp) f32 x2
                rf = pl.multiple_of(s * Bp, Bp)                  # fwd rows (time s)
                rb = pl.multiple_of((T - 1 - s) * Bp, Bp)        # bwd rows (time T-1-s)

                # ONE fused recurrent matmul for both directions (block-diag Whh).
                r = jnp.dot(h_cat.astype(mm_dtype), whh,
                            preferred_element_type=jnp.float32)  # (Bp, 8Hp)

                g_f = gates_scr[pl.ds(rf, Bp), :G4] + r[:, :G4]  # (Bp,4Hp) (i,f,o,g)
                g_b = gates_scr[pl.ds(rb, Bp), G4:] + r[:, G4:]

                sig_f = jax.nn.sigmoid(g_f[:, :3 * Hp])
                gt_f = jnp.tanh(g_f[:, 3 * Hp:])
                sig_b = jax.nn.sigmoid(g_b[:, :3 * Hp])
                gt_b = jnp.tanh(g_b[:, 3 * Hp:])

                c_f = sig_f[:, Hp:2 * Hp] * c_f + sig_f[:, :Hp] * gt_f
                c_b = sig_b[:, Hp:2 * Hp] * c_b + sig_b[:, :Hp] * gt_b
                h_f = sig_f[:, 2 * Hp:] * jnp.tanh(c_f)
                h_b = sig_b[:, 2 * Hp:] * jnp.tanh(c_b)

                act_scr[pl.ds(rf, Bp), :Hp] = h_f     # fwd output at time s
                act_scr[pl.ds(rb, Bp), Hp:] = h_b     # bwd output at time T-1-s
                return jnp.concatenate([h_f, h_b], axis=1), c_f, c_b

            h0 = jnp.zeros((Bp, 2 * Hp), jnp.float32)
            c0 = jnp.zeros((Bp, Hp), jnp.float32)
            jax.lax.fori_loop(0, T, step, (h0, c0, c0), unroll=unroll)

        # Head: SELU -> fc1 -> SELU -> fc2 on out_lstm[:, -1, :]  (dropouts = identity)
        h_last = act_scr[pl.ds((T - 1) * Bp, Bp), :]             # (Bp, 2Hp)
        a0 = _selu(h_last)
        z1 = jnp.dot(a0.astype(mm_dtype), w1_ref[...],
                     preferred_element_type=jnp.float32) + b1_ref[...]
        a1 = _selu(z1)
        out_ref[...] = (jnp.dot(a1.astype(mm_dtype), w2_ref[...],
                                preferred_element_type=jnp.float32)
                        + b2_ref[...]).astype(out_ref.dtype)

    return kernel


def forward_pallas(x_btd, prepped):
    B, T, D = x_btd.shape
    Hp = prepped["Hp"]
    layers = prepped["lstm"]
    num_layers = len(layers)
    w1, b1, w2, b2 = prepped["head"]
    F = w1.shape[1]
    O = w2.shape[1]
    mm_dtype = layers[0][0].dtype
    Bp = _round_up(B, 8)

    # time-major rows, batch padded to 8 sublanes: row s*Bp + b = (time s, batch b)
    xp = jnp.pad(x_btd, ((0, Bp - B), (0, 0), (0, 0)))
    x2d = jnp.transpose(xp, (1, 0, 2)).reshape(T * Bp, D).astype(mm_dtype)

    inputs = [x2d]
    for lp in layers:
        inputs.extend(lp)                      # wih_cat, whh_bd, b_cat
    inputs.extend([w1, b1, w2, b2])

    # --- explicit VMEM budget + cost estimate --------------------------------
    scratch_bytes = (T * Bp * 8 * Hp + T * Bp * 2 * Hp) * 4
    in_bytes = sum(int(a.size) * a.dtype.itemsize for a in inputs)
    out_bytes = Bp * O * 4
    needed = in_bytes + out_bytes + scratch_bytes
    vmem_limit = int(min(max(2 * needed + (2 << 20), 16 << 20), 64 << 20))

    flops = 0
    trans = 0
    for lp in layers:
        din = lp[0].shape[0]
        flops += 2 * (T * Bp) * din * 8 * Hp           # hoisted input projection
        flops += 2 * T * Bp * (2 * Hp) * (8 * Hp)      # fused recurrence
        trans += 10 * Hp * Bp * T                      # sigmoid/tanh per step
    flops += 2 * Bp * (2 * Hp) * F + 2 * Bp * F * O
    trans += Bp * (2 * Hp + F)

    kernel = build_kernel(T, Bp, Hp, num_layers, mm_dtype)

    out = pl.pallas_call(
        kernel,
        out_shape=jax.ShapeDtypeStruct((Bp, O), jnp.float32),
        in_specs=[pl.BlockSpec(memory_space=pltpu.MemorySpace.VMEM)] * len(inputs),
        out_specs=pl.BlockSpec(memory_space=pltpu.MemorySpace.VMEM),
        scratch_shapes=[
            pltpu.VMEM((T * Bp, 8 * Hp), jnp.float32),   # gates_scr
            pltpu.VMEM((T * Bp, 2 * Hp), jnp.float32),   # act_scr
        ],
        compiler_params=pltpu.CompilerParams(vmem_limit_bytes=vmem_limit),
        cost_estimate=pl.CostEstimate(flops=int(flops), transcendentals=int(trans),
                                      bytes_accessed=int(in_bytes + out_bytes)),
    )(*inputs)
    return out[:B]


# ----------------------------------------------------------------------------
# Parameter init in PyTorch layout + prep into the kernel layout.
# PyTorch: w_ih (4H, D), w_hh (4H, H), b_ih/b_hh (4H,), gate order (i, f, g, o).
# Kernel:  gate order (i, f, o, g), each gate zero-padded H->Hp, weights transposed,
#          fwd/bwd concatenated along columns, Whh block-diagonal, weights in bf16.
# ----------------------------------------------------------------------------
def init_params(key, input_size, H, F, O, num_layers):
    raw = {"lstm": [], "head": None}
    k_lstm = 1.0 / math.sqrt(H)
    for layer in range(num_layers):
        d_in = input_size if layer == 0 else 2 * H
        dirs = []
        for _ in range(2):  # forward, backward
            key, k1, k2, k3, k4 = jax.random.split(key, 5)
            w_ih = jax.random.uniform(k1, (4 * H, d_in), jnp.float32, -k_lstm, k_lstm)
            w_hh = jax.random.uniform(k2, (4 * H, H), jnp.float32, -k_lstm, k_lstm)
            b_ih = jax.random.uniform(k3, (4 * H,), jnp.float32, -k_lstm, k_lstm)
            b_hh = jax.random.uniform(k4, (4 * H,), jnp.float32, -k_lstm, k_lstm)
            dirs.append((w_ih, w_hh, b_ih, b_hh))
        raw["lstm"].append(tuple(dirs))

    key, k1, k2, k3, k4 = jax.random.split(key, 5)
    kf1 = 1.0 / math.sqrt(2 * H)
    kf2 = 1.0 / math.sqrt(F)
    w1 = jax.random.uniform(k1, (F, 2 * H), jnp.float32, -kf1, kf1)   # nn.Linear (out,in)
    b1 = jax.random.uniform(k2, (F,), jnp.float32, -kf1, kf1)
    w2 = jax.random.uniform(k3, (O, F), jnp.float32, -kf2, kf2)
    b2 = jax.random.uniform(k4, (O,), jnp.float32, -kf2, kf2)
    raw["head"] = (w1, b1, w2, b2)
    return raw


def prep_params(raw, H, weight_dtype=jnp.bfloat16):
    Hp = _round_up(H, 128)

    def reorder_pad(w):
        # (4H, ...) gate order (i,f,g,o) -> (4Hp, ...) order (i,f,o,g), gates padded.
        i, f, g, o = w[0:H], w[H:2 * H], w[2 * H:3 * H], w[3 * H:4 * H]
        pad = lambda blk: jnp.pad(blk, ((0, Hp - H),) + ((0, 0),) * (blk.ndim - 1))
        return jnp.concatenate([pad(i), pad(f), pad(o), pad(g)], axis=0)

    def scatter_rows_2h(w_2h_cols):
        # (2H, X) rows [fwd H | bwd H] -> (2Hp, X) rows [fwd @0 | bwd @Hp], zero-pad.
        out = jnp.zeros((2 * Hp, w_2h_cols.shape[1]), jnp.float32)
        out = out.at[0:H].set(w_2h_cols[0:H])
        out = out.at[Hp:Hp + H].set(w_2h_cols[H:2 * H])
        return out

    def prep_dir(p, first_layer):
        w_ih, w_hh, b_ih, b_hh = p
        wih_t = reorder_pad(w_ih).T                       # (Din, 4Hp) or (2H, 4Hp)
        if not first_layer:
            wih_t = scatter_rows_2h(wih_t)                # (2Hp, 4Hp)
        whh_t = jnp.pad(reorder_pad(w_hh).T, ((0, Hp - H), (0, 0)))   # (Hp, 4Hp)
        b = reorder_pad(b_ih + b_hh)                      # (4Hp,)
        return wih_t, whh_t, b

    layers = []
    for li, (fwd, bwd) in enumerate(raw["lstm"]):
        wih_f, whh_f, b_f = prep_dir(fwd, li == 0)
        wih_b, whh_b, b_b = prep_dir(bwd, li == 0)
        wih_cat = jnp.concatenate([wih_f, wih_b], axis=1).astype(weight_dtype)
        whh_bd = jnp.zeros((2 * Hp, 8 * Hp), jnp.float32)
        whh_bd = whh_bd.at[:Hp, :4 * Hp].set(whh_f)
        whh_bd = whh_bd.at[Hp:, 4 * Hp:].set(whh_b)
        whh_bd = whh_bd.astype(weight_dtype)
        b_cat = jnp.concatenate([b_f, b_b]).reshape(1, 8 * Hp)        # f32
        layers.append((wih_cat, whh_bd, b_cat))

    w1, b1, w2, b2 = raw["head"]
    w1_p = scatter_rows_2h(w1.T).astype(weight_dtype)                 # (2Hp, F)
    head = (w1_p, b1.reshape(1, -1), w2.T.astype(weight_dtype), b2.reshape(1, -1))
    return {"lstm": layers, "head": head, "Hp": Hp}


# ----------------------------------------------------------------------------
# Pure-JAX reference (PyTorch semantics, original layout).  mm_dtype mirrors the
# kernel's matmul-input precision (bf16 weights/activations, f32 accumulation and
# f32 elementwise/state math) so the check validates the kernel logic exactly.
# ----------------------------------------------------------------------------
def lstm_direction_ref(x_tbd, w_ih, w_hh, b_ih, b_hh, mm_dtype):
    H = w_hh.shape[1]
    w_ih_t = w_ih.T.astype(mm_dtype)
    w_hh_t = w_hh.T.astype(mm_dtype)
    b = (b_ih + b_hh)[None, :]

    def step(carry, x_t):
        h, c = carry
        gates = (jnp.dot(x_t.astype(mm_dtype), w_ih_t, preferred_element_type=jnp.float32)
                 + jnp.dot(h.astype(mm_dtype), w_hh_t, preferred_element_type=jnp.float32)
                 + b)
        i_g = jax.nn.sigmoid(gates[:, 0:H])
        f_g = jax.nn.sigmoid(gates[:, H:2 * H])
        g_g = jnp.tanh(gates[:, 2 * H:3 * H])
        o_g = jax.nn.sigmoid(gates[:, 3 * H:4 * H])
        c = f_g * c + i_g * g_g
        h = o_g * jnp.tanh(c)
        return (h, c), h

    B = x_tbd.shape[1]
    init = (jnp.zeros((B, H), jnp.float32), jnp.zeros((B, H), jnp.float32))
    _, ys = jax.lax.scan(step, init, x_tbd)
    return ys


def forward_ref(x_btd, raw, mm_dtype=jnp.float32):
    x = jnp.transpose(x_btd, (1, 0, 2))
    for (fwd, bwd) in raw["lstm"]:
        y_f = lstm_direction_ref(x, *fwd, mm_dtype=mm_dtype)
        y_b = jnp.flip(lstm_direction_ref(jnp.flip(x, axis=0), *bwd, mm_dtype=mm_dtype),
                       axis=0)
        x = jnp.concatenate([y_f, y_b], axis=-1)
    h_last = _selu(x[-1])
    w1, b1, w2, b2 = raw["head"]
    z1 = jnp.dot(h_last.astype(mm_dtype), w1.T.astype(mm_dtype),
                 preferred_element_type=jnp.float32) + b1
    a1 = _selu(z1)
    return jnp.dot(a1.astype(mm_dtype), w2.T.astype(mm_dtype),
                   preferred_element_type=jnp.float32) + b2


if __name__ == "__main__":
    # Small shapes consistent with the module (bidirectional, multi-layer,
    # SELU/FC head preserved; sizes scaled down).
    B, T = 2, 8
    INPUT_SIZE = 32
    LSTM_HIDDEN = 32
    FC_HIDDEN = 32
    OUTPUT_SIZE = 16
    NUM_LSTM_LAYERS = 2

    key = jax.random.PRNGKey(0)
    key, kx = jax.random.split(key)
    x = jax.random.normal(kx, (B, T, INPUT_SIZE), jnp.float32)

    raw = init_params(key, INPUT_SIZE, LSTM_HIDDEN, FC_HIDDEN, OUTPUT_SIZE,
                      NUM_LSTM_LAYERS)
    prepped = prep_params(raw, LSTM_HIDDEN, weight_dtype=jnp.bfloat16)

    out = jax.block_until_ready(forward_pallas(x, prepped))
    ref = jax.block_until_ready(forward_ref(x, raw, mm_dtype=jnp.bfloat16))

    assert out.shape == (B, OUTPUT_SIZE), out.shape
    err = float(jnp.max(jnp.abs(out - ref)))
    assert jnp.allclose(out, ref, atol=2e-3, rtol=2e-3), f"max abs err = {err}"

    print("KERNEL_OK")
</pallas_src>

<mosaic_0001>
module attributes {stable_mosaic.version = 11 : i64} {
  func.func @kernel(%arg0: memref<64x32xbf16, #tpu.memory_space<vmem>>, %arg1: memref<32x1024xbf16, #tpu.memory_space<vmem>>, %arg2: memref<256x1024xbf16, #tpu.memory_space<vmem>>, %arg3: memref<1x1024xf32, #tpu.memory_space<vmem>>, %arg4: memref<256x1024xbf16, #tpu.memory_space<vmem>>, %arg5: memref<256x1024xbf16, #tpu.memory_space<vmem>>, %arg6: memref<1x1024xf32, #tpu.memory_space<vmem>>, %arg7: memref<256x32xbf16, #tpu.memory_space<vmem>>, %arg8: memref<1x32xf32, #tpu.memory_space<vmem>>, %arg9: memref<32x16xbf16, #tpu.memory_space<vmem>>, %arg10: memref<1x16xf32, #tpu.memory_space<vmem>>, %arg11: memref<8x16xf32, #tpu.memory_space<vmem>>, %arg12: memref<64x1024xf32, #tpu.memory_space<vmem>>, %arg13: memref<64x256xf32, #tpu.memory_space<vmem>>) attributes {dimension_semantics = [], scalar_prefetch = 0 : i64, scratch_operands = 2 : i64, tpu.core_type = #tpu.core_type<tc>} {
    %c0 = arith.constant 0 : index
    %c0_0 = arith.constant 0 : index
    %0 = vector.load %arg0[%c0, %c0_0] : memref<64x32xbf16, #tpu.memory_space<vmem>>, vector<64x32xbf16>
    %c0_1 = arith.constant 0 : index
    %c0_2 = arith.constant 0 : index
    %1 = vector.load %arg1[%c0_1, %c0_2] : memref<32x1024xbf16, #tpu.memory_space<vmem>>, vector<32x1024xbf16>
    %cst = arith.constant dense<0.000000e+00> : vector<64x1024xf32>
    %2 = tpu.matmul %0, %1, %cst {dimension_numbers = #tpu.dot_dimension_numbers<[1], [0], [0], [1], [0, 0, 1, 1], [], []>} : vector<64x32xbf16>, vector<32x1024xbf16>, vector<64x1024xf32> -> vector<64x1024xf32>
    %c0_3 = arith.constant 0 : index
    %c0_4 = arith.constant 0 : index
    %3 = vector.load %arg3[%c0_3, %c0_4] : memref<1x1024xf32, #tpu.memory_space<vmem>>, vector<1x1024xf32>
    %4 = vector.broadcast %3 : vector<1x1024xf32> to vector<64x1024xf32>
    %5 = arith.addf %2, %4 : vector<64x1024xf32>
    %c0_5 = arith.constant 0 : index
    %c0_6 = arith.constant 0 : index
    %6 = vector.load %arg12[%c0_5, %c0_6] : memref<64x1024xf32, #tpu.memory_space<vmem>>, vector<64x1024xf32>
    tpu.vector_store %arg12[%c0_5, %c0_6], %5 {strides = array<i32>} : memref<64x1024xf32, #tpu.memory_space<vmem>>, vector<64x1024xf32>,
    %c0_7 = arith.constant 0 : index
    %c0_8 = arith.constant 0 : index
    %7 = vector.load %arg2[%c0_7, %c0_8] : memref<256x1024xbf16, #tpu.memory_space<vmem>>, vector<256x1024xbf16>
    %cst_9 = arith.constant 0.000000e+00 : f32
    %8 = vector.broadcast %cst_9 : f32 to vector<8x256xf32>
    %cst_10 = arith.constant 0.000000e+00 : f32
    %9 = vector.broadcast %cst_10 : f32 to vector<8x128xf32>
    %c0_i32 = arith.constant 0 : i32
    %c8_i32 = arith.constant 8 : i32
    %10 = arith.muli %c0_i32, %c8_i32 : i32
    %11 = tpu.assume_multiple %10, 8 : i32
    %c7_i32 = arith.constant 7 : i32
    %12 = arith.subi %c7_i32, %c0_i32 : i32
    %c8_i32_11 = arith.constant 8 : i32
    %13 = arith.muli %12, %c8_i32_11 : i32
    %14 = tpu.assume_multiple %13, 8 : i32
    %15 = arith.truncf %8 : vector<8x256xf32> to vector<8x256xbf16>
    %cst_12 = arith.constant dense<0.000000e+00> : vector<8x1024xf32>
    %16 = tpu.matmul %15, %7, %cst_12 {dimension_numbers = #tpu.dot_dimension_numbers<[1], [0], [0], [1], [0, 0, 1, 1], [], []>} : vector<8x256xbf16>, vector<256x1024xbf16>, vector<8x1024xf32> -> vector<8x1024xf32>
    %17 = arith.index_cast %11 : i32 to index
    %c0_13 = arith.constant 0 : index
    %18 = vector.load %arg12[%17, %c0_13] : memref<64x1024xf32, #tpu.memory_space<vmem>>, vector<8x512xf32>
    %19 = vector.extract_strided_slice %16 {offsets = [0, 0], sizes = [8, 512], strides = [1, 1]} : vector<8x1024xf32> to vector<8x512xf32>
    %20 = arith.addf %18, %19 : vector<8x512xf32>
    %21 = arith.index_cast %14 : i32 to index
    %c512 = arith.constant 512 : index
    %22 = vector.load %arg12[%21, %c512] : memref<64x1024xf32, #tpu.memory_space<vmem>>, vector<8x512xf32>
    %23 = vector.extract_strided_slice %16 {offsets = [0, 512], sizes = [8, 512], strides = [1, 1]} : vector<8x1024xf32> to vector<8x512xf32>
    %24 = arith.addf %22, %23 : vector<8x512xf32>
    %25 = vector.extract_strided_slice %20 {offsets = [0, 0], sizes = [8, 384], strides = [1, 1]} : vector<8x512xf32> to vector<8x384xf32>
    %26 = arith.negf %25 : vector<8x384xf32>
    %27 = math.exp %26 : vector<8x384xf32>
    %cst_14 = arith.constant 1.000000e+00 : f32
    %28 = vector.broadcast %cst_14 : f32 to vector<8x384xf32>
    %29 = arith.addf %28, %27 : vector<8x384xf32>
    %30 = arith.divf %28, %29 : vector<8x384xf32>
    %31 = vector.extract_strided_slice %20 {offsets = [0, 384], sizes = [8, 128], strides = [1, 1]} : vector<8x512xf32> to vector<8x128xf32>
    %32 = math.tanh %31 : vector<8x128xf32>
    %33 = vector.extract_strided_slice %24 {offsets = [0, 0], sizes = [8, 384], strides = [1, 1]} : vector<8x512xf32> to vector<8x384xf32>
    %34 = arith.negf %33 : vector<8x384xf32>
    %35 = math.exp %34 : vector<8x384xf32>
    %cst_15 = arith.constant 1.000000e+00 : f32
    %36 = vector.broadcast %cst_15 : f32 to vector<8x384xf32>
    %37 = arith.addf %36, %35 : vector<8x384xf32>
    %38 = arith.divf %36, %37 : vector<8x384xf32>
    %39 = vector.extract_strided_slice %24 {offsets = [0, 384], sizes = [8, 128], strides = [1, 1]} : vector<8x512xf32> to vector<8x128xf32>
    %40 = math.tanh %39 : vector<8x128xf32>
    %41 = vector.extract_strided_slice %30 {offsets = [0, 128], sizes = [8, 128], strides = [1, 1]} : vector<8x384xf32> to vector<8x128xf32>
    %42 = arith.mulf %41, %9 : vector<8x128xf32>
    %43 = vector.extract_strided_slice %30 {offsets = [0, 0], sizes = [8, 128], strides = [1, 1]} : vector<8x384xf32> to vector<8x128xf32>
    %44 = arith.mulf %43, %32 : vector<8x128xf32>
    %45 = arith.addf %42, %44 : vector<8x128xf32>
    %46 = vector.extract_strided_slice %38 {offsets = [0, 128], sizes = [8, 128], strides = [1, 1]} : vector<8x384xf32> to vector<8x128xf32>
    %47 = arith.mulf %46, %9 : vector<8x128xf32>
    %48 = vector.extract_strided_slice %38 {offsets = [0, 0], sizes = [8, 128], strides = [1, 1]} : vector<8x384xf32> to vector<8x128xf32>
    %49 = arith.mulf %48, %40 : vector<8x128xf32>
    %50 = arith.addf %47, %49 : vector<8x128xf32>
    %51 = vector.extract_strided_slice %30 {offsets = [0, 256], sizes = [8, 128], strides = [1, 1]} : vector<8x384xf32> to vector<8x128xf32>
    %52 = math.tanh %45 : vector<8x128xf32>
    %53 = arith.mulf %51, %52 : vector<8x128xf32>
    %54 = vector.extract_strided_slice %38 {offsets = [0, 256], sizes = [8, 128], strides = [1, 1]} : vector<8x384xf32> to vector<8x128xf32>
    %55 = math.tanh %50 : vector<8x128xf32>
    %56 = arith.mulf %54, %55 : vector<8x128xf32>
    %57 = arith.index_cast %11 : i32 to index
    %c0_16 = arith.constant 0 : index
    %58 = vector.load %arg13[%57, %c0_16] : memref<64x256xf32, #tpu.memory_space<vmem>>, vector<8x128xf32>
    tpu.vector_store %arg13[%57, %c0_16], %53 {strides = array<i32>} : memref<64x256xf32, #tpu.memory_space<vmem>>, vector<8x128xf32>,
    %59 = arith.index_cast %14 : i32 to index
    %c128 = arith.constant 128 : index
    %60 = vector.load %arg13[%59, %c128] : memref<64x256xf32, #tpu.memory_space<vmem>>, vector<8x128xf32>
    tpu.vector_store %arg13[%59, %c128], %56 {strides = array<i32>} : memref<64x256xf32, #tpu.memory_space<vmem>>, vector<8x128xf32>,
    %61 = tpu.concatenate %53, %56 in 1 : vector<8x128xf32>, vector<8x128xf32> -> vector<8x256xf32>
    %c1_i32 = arith.constant 1 : i32
    %c8_i32_17 = arith.constant 8 : i32
    %62 = arith.muli %c1_i32, %c8_i32_17 : i32
    %63 = tpu.assume_multiple %62, 8 : i32
    %c7_i32_18 = arith.constant 7 : i32
    %64 = arith.subi %c7_i32_18, %c1_i32 : i32
    %c8_i32_19 = arith.constant 8 : i32
    %65 = arith.muli %64, %c8_i32_19 : i32
    %66 = tpu.assume_multiple %65, 8 : i32
    %67 = arith.truncf %61 : vector<8x256xf32> to vector<8x256xbf16>
    %cst_20 = arith.constant dense<0.000000e+00> : vector<8x1024xf32>
    %68 = tpu.matmul %67, %7, %cst_20 {dimension_numbers = #tpu.dot_dimension_numbers<[1], [0], [0], [1], [0, 0, 1, 1], [], []>} : vector<8x256xbf16>, vector<256x1024xbf16>, vector<8x1024xf32> -> vector<8x1024xf32>
    %69 = arith.index_cast %63 : i32 to index
    %c0_21 = arith.constant 0 : index
    %70 = vector.load %arg12[%69, %c0_21] : memref<64x1024xf32, #tpu.memory_space<vmem>>, vector<8x512xf32>
    %71 = vector.extract_strided_slice %68 {offsets = [0, 0], sizes = [8, 512], strides = [1, 1]} : vector<8x1024xf32> to vector<8x512xf32>
    %72 = arith.addf %70, %71 : vector<8x512xf32>
    %73 = arith.index_cast %66 : i32 to index
    %c512_22 = arith.constant 512 : index
    %74 = vector.load %arg12[%73, %c512_22] : memref<64x1024xf32, #tpu.memory_space<vmem>>, vector<8x512xf32>
    %75 = vector.extract_strided_slice %68 {offsets = [0, 512], sizes = [8, 512], strides = [1, 1]} : vector<8x1024xf32> to vector<8x512xf32>
    %76 = arith.addf %74, %75 : vector<8x512xf32>
    %77 = vector.extract_strided_slice %72 {offsets = [0, 0], sizes = [8, 384], strides = [1, 1]} : vector<8x512xf32> to vector<8x384xf32>
    %78 = arith.negf %77 : vector<8x384xf32>
    %79 = math.exp %78 : vector<8x384xf32>
    %cst_23 = arith.constant 1.000000e+00 : f32
    %80 = vector.broadcast %cst_23 : f32 to vector<8x384xf32>
    %81 = arith.addf %80, %79 : vector<8x384xf32>
    %82 = arith.divf %80, %81 : vector<8x384xf32>
    %83 = vector.extract_strided_slice %72 {offsets = [0, 384], sizes = [8, 128], strides = [1, 1]} : vector<8x512xf32> to vector<8x128xf32>
    %84 = math.tanh %83 : vector<8x128xf32>
    %85 = vector.extract_strided_slice %76 {offsets = [0, 0], sizes = [8, 384], strides = [1, 1]} : vector<8x512xf32> to vector<8x384xf32>
    %86 = arith.negf %85 : vector<8x384xf32>
    %87 = math.exp %86 : vector<8x384xf32>
    %cst_24 = arith.constant 1.000000e+00 : f32
    %88 = vector.broadcast %cst_24 : f32 to vector<8x384xf32>
    %89 = arith.addf %88, %87 : vector<8x384xf32>
    %90 = arith.divf %88, %89 : vector<8x384xf32>
    %91 = vector.extract_strided_slice %76 {offsets = [0, 384], sizes = [8, 128], strides = [1, 1]} : vector<8x512xf32> to vector<8x128xf32>
    %92 = math.tanh %91 : vector<8x128xf32>
    %93 = vector.extract_strided_slice %82 {offsets = [0, 128], sizes = [8, 128], strides = [1, 1]} : vector<8x384xf32> to vector<8x128xf32>
    %94 = arith.mulf %93, %45 : vector<8x128xf32>
    %95 = vector.extract_strided_slice %82 {offsets = [0, 0], sizes = [8, 128], strides = [1, 1]} : vector<8x384xf32> to vector<8x128xf32>
    %96 = arith.mulf %95, %84 : vector<8x128xf32>
    %97 = arith.addf %94, %96 : vector<8x128xf32>
    %98 = vector.extract_strided_slice %90 {offsets = [0, 128], sizes = [8, 128], strides = [1, 1]} : vector<8x384xf32> to vector<8x128xf32>
    %99 = arith.mulf %98, %50 : vector<8x128xf32>
    %100 = vector.extract_strided_slice %90 {offsets = [0, 0], sizes = [8, 128], strides = [1, 1]} : vector<8x384xf32> to vector<8x128xf32>
    %101 = arith.mulf %100, %92 : vector<8x128xf32>
    %102 = arith.addf %99, %101 : vector<8x128xf32>
    %103 = vector.extract_strided_slice %82 {offsets = [0, 256], sizes = [8, 128], strides = [1, 1]} : vector<8x384xf32> to vector<8x128xf32>
    %104 = math.tanh %97 : vector<8x128xf32>
    %105 = arith.mulf %103, %104 : vector<8x128xf32>
    %106 = vector.extract_strided_slice %90 {offsets = [0, 256], sizes = [8, 128], strides = [1, 1]} : vector<8x384xf32> to vector<8x128xf32>
    %107 = math.tanh %102 : vector<8x128xf32>
    %108 = arith.mulf %106, %107 : vector<8x128xf32>
    %109 = arith.index_cast %63 : i32 to index
    %c0_25 = arith.constant 0 : index
    %110 = vector.load %arg13[%109, %c0_25] : memref<64x256xf32, #tpu.memory_space<vmem>>, vector<8x128xf32>
    tpu.vector_store %arg13[%109, %c0_25], %105 {strides = array<i32>} : memref<64x256xf32, #tpu.memory_space<vmem>>, vector<8x128xf32>,
    %111 = arith.index_cast %66 : i32 to index
    %c128_26 = arith.constant 128 : index
    %112 = vector.load %arg13[%111, %c128_26] : memref<64x256xf32, #tpu.memory_space<vmem>>, vector<8x128xf32>
    tpu.vector_store %arg13[%111, %c128_26], %108 {strides = array<i32>} : memref<64x256xf32, #tpu.memory_space<vmem>>, vector<8x128xf32>,
    %113 = tpu.concatenate %105, %108 in 1 : vector<8x128xf32>, vector<8x128xf32> -> vector<8x256xf32>
    %c2_i32 = arith.constant 2 : i32
    %c8_i32_27 = arith.constant 8 : i32
    %114 = arith.muli %c2_i32, %c8_i32_27 : i32
    %115 = tpu.assume_multiple %114, 8 : i32
    %c7_i32_28 = arith.constant 7 : i32
    %116 = arith.subi %c7_i32_28, %c2_i32 : i32
    %c8_i32_29 = arith.constant 8 : i32
    %117 = arith.muli %116, %c8_i32_29 : i32
    %118 = tpu.assume_multiple %117, 8 : i32
    %119 = arith.truncf %113 : vector<8x256xf32> to vector<8x256xbf16>
    %cst_30 = arith.constant dense<0.000000e+00> : vector<8x1024xf32>
    %120 = tpu.matmul %119, %7, %cst_30 {dimension_numbers = #tpu.dot_dimension_numbers<[1], [0], [0], [1], [0, 0, 1, 1], [], []>} : vector<8x256xbf16>, vector<256x1024xbf16>, vector<8x1024xf32> -> vector<8x1024xf32>
    %121 = arith.index_cast %115 : i32 to index
    %c0_31 = arith.constant 0 : index
    %122 = vector.load %arg12[%121, %c0_31] : memref<64x1024xf32, #tpu.memory_space<vmem>>, vector<8x512xf32>
    %123 = vector.extract_strided_slice %120 {offsets = [0, 0], sizes = [8, 512], strides = [1, 1]} : vector<8x1024xf32> to vector<8x512xf32>
    %124 = arith.addf %122, %123 : vector<8x512xf32>
    %125 = arith.index_cast %118 : i32 to index
    %c512_32 = arith.constant 512 : index
    %126 = vector.load %arg12[%125, %c512_32] : memref<64x1024xf32, #tpu.memory_space<vmem>>, vector<8x512xf32>
    %127 = vector.extract_strided_slice %120 {offsets = [0, 512], sizes = [8, 512], strides = [1, 1]} : vector<8x1024xf32> to vector<8x512xf32>
    %128 = arith.addf %126, %127 : vector<8x512xf32>
    %129 = vector.extract_strided_slice %124 {offsets = [0, 0], sizes = [8, 384], strides = [1, 1]} : vector<8x512xf32> to vector<8x384xf32>
    %130 = arith.negf %129 : vector<8x384xf32>
    %131 = math.exp %130 : vector<8x384xf32>
    %cst_33 = arith.constant 1.000000e+00 : f32
    %132 = vector.broadcast %cst_33 : f32 to vector<8x384xf32>
    %133 = arith.addf %132, %131 : vector<8x384xf32>
    %134 = arith.divf %132, %133 : vector<8x384xf32>
    %135 = vector.extract_strided_slice %124 {offsets = [0, 384], sizes = [8, 128], strides = [1, 1]} : vector<8x512xf32> to vector<8x128xf32>
    %136 = math.tanh %135 : vector<8x128xf32>
    %137 = vector.extract_strided_slice %128 {offsets = [0, 0], sizes = [8, 384], strides = [1, 1]} : vector<8x512xf32> to vector<8x384xf32>
    %138 = arith.negf %137 : vector<8x384xf32>
    %139 = math.exp %138 : vector<8x384xf32>
    %cst_34 = arith.constant 1.000000e+00 : f32
    %140 = vector.broadcast %cst_34 : f32 to vector<8x384xf32>
    %141 = arith.addf %140, %139 : vector<8x384xf32>
    %142 = arith.divf %140, %141 : vector<8x384xf32>
    %143 = vector.extract_strided_slice %128 {offsets = [0, 384], sizes = [8, 128], strides = [1, 1]} : vector<8x512xf32> to vector<8x128xf32>
    %144 = math.tanh %143 : vector<8x128xf32>
    %145 = vector.extract_strided_slice %134 {offsets = [0, 128], sizes = [8, 128], strides = [1, 1]} : vector<8x384xf32> to vector<8x128xf32>
    %146 = arith.mulf %145, %97 : vector<8x128xf32>
    %147 = vector.extract_strided_slice %134 {offsets = [0, 0], sizes = [8, 128], strides = [1, 1]} : vector<8x384xf32> to vector<8x128xf32>
    %148 = arith.mulf %147, %136 : vector<8x128xf32>
    %149 = arith.addf %146, %148 : vector<8x128xf32>
    %150 = vector.extract_strided_slice %142 {offsets = [0, 128], sizes = [8, 128], strides = [1, 1]} : vector<8x384xf32> to vector<8x128xf32>
    %151 = arith.mulf %150, %102 : vector<8x128xf32>
    %152 = vector.extract_strided_slice %142 {offsets = [0, 0], sizes = [8, 128], strides = [1, 1]} : vector<8x384xf32> to vector<8x128xf32>
    %153 = arith.mulf %152, %144 : vector<8x128xf32>
    %154 = arith.addf %151, %153 : vector<8x128xf32>
    %155 = vector.extract_strided_slice %134 {offsets = [0, 256], sizes = [8, 128], strides = [1, 1]} : vector<8x384xf32> to vector<8x128xf32>
    %156 = math.tanh %149 : vector<8x128xf32>
    %157 = arith.mulf %155, %156 : vector<8x128xf32>
    %158 = vector.extract_strided_slice %142 {offsets = [0, 256], sizes = [8, 128], strides = [1, 1]} : vector<8x384xf32> to vector<8x128xf32>
    %159 = math.tanh %154 : vector<8x128xf32>
    %160 = arith.mulf %158, %159 : vector<8x128xf32>
    %161 = arith.index_cast %115 : i32 to index
    %c0_35 = arith.constant 0 : index
    %162 = vector.load %arg13[%161, %c0_35] : memref<64x256xf32, #tpu.memory_space<vmem>>, vector<8x128xf32>
    tpu.vector_store %arg13[%161, %c0_35], %157 {strides = array<i32>} : memref<64x256xf32, #tpu.memory_space<vmem>>, vector<8x128xf32>,
    %163 = arith.index_cast %118 : i32 to index
    %c128_36 = arith.constant 128 : index
    %164 = vector.load %arg13[%163, %c128_36] : memref<64x256xf32, #tpu.memory_space<vmem>>, vector<8x128xf32>
    tpu.vector_store %arg13[%163, %c128_36], %160 {strides = array<i32>} : memref<64x256xf32, #tpu.memory_space<vmem>>, vector<8x128xf32>,
    %165 = tpu.concatenate %157, %160 in 1 : vector<8x128xf32>, vector<8x128xf32> -> vector<8x256xf32>
    %c3_i32 = arith.constant 3 : i32
    %c8_i32_37 = arith.constant 8 : i32
    %166 = arith.muli %c3_i32, %c8_i32_37 : i32
    %167 = tpu.assume_multiple %166, 8 : i32
    %c7_i32_38 = arith.constant 7 : i32
    %168 = arith.subi %c7_i32_38, %c3_i32 : i32
    %c8_i32_39 = arith.constant 8 : i32
    %169 = arith.muli %168, %c8_i32_39 : i32
    %170 = tpu.assume_multiple %169, 8 : i32
    %171 = arith.truncf %165 : vector<8x256xf32> to vector<8x256xbf16>
    %cst_40 = arith.constant dense<0.000000e+00> : vector<8x1024xf32>
    %172 = tpu.matmul %171, %7, %cst_40 {dimension_numbers = #tpu.dot_dimension_numbers<[1], [0], [0], [1], [0, 0, 1, 1], [], []>} : vector<8x256xbf16>, vector<256x1024xbf16>, vector<8x1024xf32> -> vector<8x1024xf32>
    %173 = arith.index_cast %167 : i32 to index
    %c0_41 = arith.constant 0 : index
    %174 = vector.load %arg12[%173, %c0_41] : memref<64x1024xf32, #tpu.memory_space<vmem>>, vector<8x512xf32>
    %175 = vector.extract_strided_slice %172 {offsets = [0, 0], sizes = [8, 512], strides = [1, 1]} : vector<8x1024xf32> to vector<8x512xf32>
    %176 = arith.addf %174, %175 : vector<8x512xf32>
    %177 = arith.index_cast %170 : i32 to index
    %c512_42 = arith.constant 512 : index
    %178 = vector.load %arg12[%177, %c512_42] : memref<64x1024xf32, #tpu.memory_space<vmem>>, vector<8x512xf32>
    %179 = vector.extract_strided_slice %172 {offsets = [0, 512], sizes = [8, 512], strides = [1, 1]} : vector<8x1024xf32> to vector<8x512xf32>
    %180 = arith.addf %178, %179 : vector<8x512xf32>
    %181 = vector.extract_strided_slice %176 {offsets = [0, 0], sizes = [8, 384], strides = [1, 1]} : vector<8x512xf32> to vector<8x384xf32>
    %182 = arith.negf %181 : vector<8x384xf32>
    %183 = math.exp %182 : vector<8x384xf32>
    %cst_43 = arith.constant 1.000000e+00 : f32
    %184 = vector.broadcast %cst_43 : f32 to vector<8x384xf32>
    %185 = arith.addf %184, %183 : vector<8x384xf32>
    %186 = arith.divf %184, %185 : vector<8x384xf32>
    %187 = vector.extract_strided_slice %176 {offsets = [0, 384], sizes = [8, 128], strides = [1, 1]} : vector<8x512xf32> to vector<8x128xf32>
    %188 = math.tanh %187 : vector<8x128xf32>
    %189 = vector.extract_strided_slice %180 {offsets = [0, 0], sizes = [8, 384], strides = [1, 1]} : vector<8x512xf32> to vector<8x384xf32>
    %190 = arith.negf %189 : vector<8x384xf32>
    %191 = math.exp %190 : vector<8x384xf32>
    %cst_44 = arith.constant 1.000000e+00 : f32
    %192 = vector.broadcast %cst_44 : f32 to vector<8x384xf32>
    %193 = arith.addf %192, %191 : vector<8x384xf32>
    %194 = arith.divf %192, %193 : vector<8x384xf32>
    %195 = vector.extract_strided_slice %180 {offsets = [0, 384], sizes = [8, 128], strides = [1, 1]} : vector<8x512xf32> to vector<8x128xf32>
    %196 = math.tanh %195 : vector<8x128xf32>
    %197 = vector.extract_strided_slice %186 {offsets = [0, 128], sizes = [8, 128], strides = [1, 1]} : vector<8x384xf32> to vector<8x128xf32>
    %198 = arith.mulf %197, %149 : vector<8x128xf32>
    %199 = vector.extract_strided_slice %186 {offsets = [0, 0], sizes = [8, 128], strides = [1, 1]} : vector<8x384xf32> to vector<8x128xf32>
    %200 = arith.mulf %199, %188 : vector<8x128xf32>
    %201 = arith.addf %198, %200 : vector<8x128xf32>
    %202 = vector.extract_strided_slice %194 {offsets = [0, 128], sizes = [8, 128], strides = [1, 1]} : vector<8x384xf32> to vector<8x128xf32>
    %203 = arith.mulf %202, %154 : vector<8x128xf32>
    %204 = vector.extract_strided_slice %194 {offsets = [0, 0], sizes = [8, 128], strides = [1, 1]} : vector<8x384xf32> to vector<8x128xf32>
    %205 = arith.mulf %204, %196 : vector<8x128xf32>
    %206 = arith.addf %203, %205 : vector<8x128xf32>
    %207 = vector.extract_strided_slice %186 {offsets = [0, 256], sizes = [8, 128], strides = [1, 1]} : vector<8x384xf32> to vector<8x128xf32>
    %208 = math.tanh %201 : vector<8x128xf32>
    %209 = arith.mulf %207, %208 : vector<8x128xf32>
    %210 = vector.extract_strided_slice %194 {offsets = [0, 256], sizes = [8, 128], strides = [1, 1]} : vector<8x384xf32> to vector<8x128xf32>
    %211 = math.tanh %206 : vector<8x128xf32>
    %212 = arith.mulf %210, %211 : vector<8x128xf32>
    %213 = arith.index_cast %167 : i32 to index
    %c0_45 = arith.constant 0 : index
    %214 = vector.load %arg13[%213, %c0_45] : memref<64x256xf32, #tpu.memory_space<vmem>>, vector<8x128xf32>
    tpu.vector_store %arg13[%213, %c0_45], %209 {strides = array<i32>} : memref<64x256xf32, #tpu.memory_space<vmem>>, vector<8x128xf32>,
    %215 = arith.index_cast %170 : i32 to index
    %c128_46 = arith.constant 128 : index
    %216 = vector.load %arg13[%215, %c128_46] : memref<64x256xf32, #tpu.memory_space<vmem>>, vector<8x128xf32>
    tpu.vector_store %arg13[%215, %c128_46], %212 {strides = array<i32>} : memref<64x256xf32, #tpu.memory_space<vmem>>, vector<8x128xf32>,
    %217 = tpu.concatenate %209, %212 in 1 : vector<8x128xf32>, vector<8x128xf32> -> vector<8x256xf32>
    %c4_i32 = arith.constant 4 : i32
    %c8_i32_47 = arith.constant 8 : i32
    %218 = arith.muli %c4_i32, %c8_i32_47 : i32
    %219 = tpu.assume_multiple %218, 8 : i32
    %c7_i32_48 = arith.constant 7 : i32
    %220 = arith.subi %c7_i32_48, %c4_i32 : i32
    %c8_i32_49 = arith.constant 8 : i32
    %221 = arith.muli %220, %c8_i32_49 : i32
    %222 = tpu.assume_multiple %221, 8 : i32
    %223 = arith.truncf %217 : vector<8x256xf32> to vector<8x256xbf16>
    %cst_50 = arith.constant dense<0.000000e+00> : vector<8x1024xf32>
    %224 = tpu.matmul %223, %7, %cst_50 {dimension_numbers = #tpu.dot_dimension_numbers<[1], [0], [0], [1], [0, 0, 1, 1], [], []>} : vector<8x256xbf16>, vector<256x1024xbf16>, vector<8x1024xf32> -> vector<8x1024xf32>
    %225 = arith.index_cast %219 : i32 to index
    %c0_51 = arith.constant 0 : index
    %226 = vector.load %arg12[%225, %c0_51] : memref<64x1024xf32, #tpu.memory_space<vmem>>, vector<8x512xf32>
    %227 = vector.extract_strided_slice %224 {offsets = [0, 0], sizes = [8, 512], strides = [1, 1]} : vector<8x1024xf32> to vector<8x512xf32>
    %228 = arith.addf %226, %227 : vector<8x512xf32>
    %229 = arith.index_cast %222 : i32 to index
    %c512_52 = arith.constant 512 : index
    %230 = vector.load %arg12[%229, %c512_52] : memref<64x1024xf32, #tpu.memory_space<vmem>>, vector<8x512xf32>
    %231 = vector.extract_strided_slice %224 {offsets = [0, 512], sizes = [8, 512], strides = [1, 1]} : vector<8x1024xf32> to vector<8x512xf32>
    %232 = arith.addf %230, %231 : vector<8x512xf32>
    %233 = vector.extract_strided_slice %228 {offsets = [0, 0], sizes = [8, 384], strides = [1, 1]} : vector<8x512xf32> to vector<8x384xf32>
    %234 = arith.negf %233 : vector<8x384xf32>
    %235 = math.exp %234 : vector<8x384xf32>
    %cst_53 = arith.constant 1.000000e+00 : f32
    %236 = vector.broadcast %cst_53 : f32 to vector<8x384xf32>
    %237 = arith.addf %236, %235 : vector<8x384xf32>
    %238 = arith.divf %236, %237 : vector<8x384xf32>
    %239 = vector.extract_strided_slice %228 {offsets = [0, 384], sizes = [8, 128], strides = [1, 1]} : vector<8x512xf32> to vector<8x128xf32>
    %240 = math.tanh %239 : vector<8x128xf32>
    %241 = vector.extract_strided_slice %232 {offsets = [0, 0], sizes = [8, 384], strides = [1, 1]} : vector<8x512xf32> to vector<8x384xf32>
    %242 = arith.negf %241 : vector<8x384xf32>
    %243 = math.exp %242 : vector<8x384xf32>
    %cst_54 = arith.constant 1.000000e+00 : f32
    %244 = vector.broadcast %cst_54 : f32 to vector<8x384xf32>
    %245 = arith.addf %244, %243 : vector<8x384xf32>
    %246 = arith.divf %244, %245 : vector<8x384xf32>
    %247 = vector.extract_strided_slice %232 {offsets = [0, 384], sizes = [8, 128], strides = [1, 1]} : vector<8x512xf32> to vector<8x128xf32>
    %248 = math.tanh %247 : vector<8x128xf32>
    %249 = vector.extract_strided_slice %238 {offsets = [0, 128], sizes = [8, 128], strides = [1, 1]} : vector<8x384xf32> to vector<8x128xf32>
    %250 = arith.mulf %249, %201 : vector<8x128xf32>
    %251 = vector.extract_strided_slice %238 {offsets = [0, 0], sizes = [8, 128], strides = [1, 1]} : vector<8x384xf32> to vector<8x128xf32>
    %252 = arith.mulf %251, %240 : vector<8x128xf32>
    %253 = arith.addf %250, %252 : vector<8x128xf32>
    %254 = vector.extract_strided_slice %246 {offsets = [0, 128], sizes = [8, 128], strides = [1, 1]} : vector<8x384xf32> to vector<8x128xf32>
    %255 = arith.mulf %254, %206 : vector<8x128xf32>
    %256 = vector.extract_strided_slice %246 {offsets = [0, 0], sizes = [8, 128], strides = [1, 1]} : vector<8x384xf32> to vector<8x128xf32>
    %257 = arith.mulf %256, %248 : vector<8x128xf32>
    %258 = arith.addf %255, %257 : vector<8x128xf32>
    %259 = vector.extract_strided_slice %238 {offsets = [0, 256], sizes = [8, 128], strides = [1, 1]} : vector<8x384xf32> to vector<8x128xf32>
    %260 = math.tanh %253 : vector<8x128xf32>
    %261 = arith.mulf %259, %260 : vector<8x128xf32>
    %262 = vector.extract_strided_slice %246 {offsets = [0, 256], sizes = [8, 128], strides = [1, 1]} : vector<8x384xf32> to vector<8x128xf32>
    %263 = math.tanh %258 : vector<8x128xf32>
    %264 = arith.mulf %262, %263 : vector<8x128xf32>
    %265 = arith.index_cast %219 : i32 to index
    %c0_55 = arith.constant 0 : index
    %266 = vector.load %arg13[%265, %c0_55] : memref<64x256xf32, #tpu.memory_space<vmem>>, vector<8x128xf32>
    tpu.vector_store %arg13[%265, %c0_55], %261 {strides = array<i32>} : memref<64x256xf32, #tpu.memory_space<vmem>>, vector<8x128xf32>,
    %267 = arith.index_cast %222 : i32 to index
    %c128_56 = arith.constant 128 : index
    %268 = vector.load %arg13[%267, %c128_56] : memref<64x256xf32, #tpu.memory_space<vmem>>, vector<8x128xf32>
    tpu.vector_store %arg13[%267, %c128_56], %264 {strides = array<i32>} : memref<64x256xf32, #tpu.memory_space<vmem>>, vector<8x128xf32>,
    %269 = tpu.concatenate %261, %264 in 1 : vector<8x128xf32>, vector<8x128xf32> -> vector<8x256xf32>
    %c5_i32 = arith.constant 5 : i32
    %c8_i32_57 = arith.constant 8 : i32
    %270 = arith.muli %c5_i32, %c8_i32_57 : i32
    %271 = tpu.assume_multiple %270, 8 : i32
    %c7_i32_58 = arith.constant 7 : i32
    %272 = arith.subi %c7_i32_58, %c5_i32 : i32
    %c8_i32_59 = arith.constant 8 : i32
    %273 = arith.muli %272, %c8_i32_59 : i32
    %274 = tpu.assume_multiple %273, 8 : i32
    %275 = arith.truncf %269 : vector<8x256xf32> to vector<8x256xbf16>
    %cst_60 = arith.constant dense<0.000000e+00> : vector<8x1024xf32>
    %276 = tpu.matmul %275, %7, %cst_60 {dimension_numbers = #tpu.dot_dimension_numbers<[1], [0], [0], [1], [0, 0, 1, 1], [], []>} : vector<8x256xbf16>, vector<256x1024xbf16>, vector<8x1024xf32> -> vector<8x1024xf32>
    %277 = arith.index_cast %271 : i32 to index
    %c0_61 = arith.constant 0 : index
    %278 = vector.load %arg12[%277, %c0_61] : memref<64x1024xf32, #tpu.memory_space<vmem>>, vector<8x512xf32>
    %279 = vector.extract_strided_slice %276 {offsets = [0, 0], sizes = [8, 512], strides = [1, 1]} : vector<8x1024xf32> to vector<8x512xf32>
    %280 = arith.addf %278, %279 : vector<8x512xf32>
    %281 = arith.index_cast %274 : i32 to index
    %c512_62 = arith.constant 512 : index
    %282 = vector.load %arg12[%281, %c512_62] : memref<64x1024xf32, #tpu.memory_space<vmem>>, vector<8x512xf32>
    %283 = vector.extract_strided_slice %276 {offsets = [0, 512], sizes = [8, 512], strides = [1, 1]} : vector<8x1024xf32> to vector<8x512xf32>
    %284 = arith.addf %282, %283 : vector<8x512xf32>
    %285 = vector.extract_strided_slice %280 {offsets = [0, 0], sizes = [8, 384], strides = [1, 1]} : vector<8x512xf32> to vector<8x384xf32>
    %286 = arith.negf %285 : vector<8x384xf32>
    %287 = math.exp %286 : vector<8x384xf32>
    %cst_63 = arith.constant 1.000000e+00 : f32
    %288 = vector.broadcast %cst_63 : f32 to vector<8x384xf32>
    %289 = arith.addf %288, %287 : vector<8x384xf32>
    %290 = arith.divf %288, %289 : vector<8x384xf32>
    %291 = vector.extract_strided_slice %280 {offsets = [0, 384], sizes = [8, 128], strides = [1, 1]} : vector<8x512xf32> to vector<8x128xf32>
    %292 = math.tanh %291 : vector<8x128xf32>
    %293 = vector.extract_strided_slice %284 {offsets = [0, 0], sizes = [8, 384], strides = [1, 1]} : vector<8x512xf32> to vector<8x384xf32>
    %294 = arith.negf %293 : vector<8x384xf32>
    %295 = math.exp %294 : vector<8x384xf32>
    %cst_64 = arith.constant 1.000000e+00 : f32
    %296 = vector.broadcast %cst_64 : f32 to vector<8x384xf32>
    %297 = arith.addf %296, %295 : vector<8x384xf32>
    %298 = arith.divf %296, %297 : vector<8x384xf32>
    %299 = vector.extract_strided_slice %284 {offsets = [0, 384], sizes = [8, 128], strides = [1, 1]} : vector<8x512xf32> to vector<8x128xf32>
    %300 = math.tanh %299 : vector<8x128xf32>
    %301 = vector.extract_strided_slice %290 {offsets = [0, 128], sizes = [8, 128], strides = [1, 1]} : vector<8x384xf32> to vector<8x128xf32>
    %302 = arith.mulf %301, %253 : vector<8x128xf32>
    %303 = vector.extract_strided_slice %290 {offsets = [0, 0], sizes = [8, 128], strides = [1, 1]} : vector<8x384xf32> to vector<8x128xf32>
    %304 = arith.mulf %303, %292 : vector<8x128xf32>
    %305 = arith.addf %302, %304 : vector<8x128xf32>
    %306 = vector.extract_strided_slice %298 {offsets = [0, 128], sizes = [8, 128], strides = [1, 1]} : vector<8x384xf32> to vector<8x128xf32>
    %307 = arith.mulf %306, %258 : vector<8x128xf32>
    %308 = vector.extract_strided_slice %298 {offsets = [0, 0], sizes = [8, 128], strides = [1, 1]} : vector<8x384xf32> to vector<8x128xf32>
    %309 = arith.mulf %308, %300 : vector<8x128xf32>
    %310 = arith.addf %307, %309 : vector<8x128xf32>
    %311 = vector.extract_strided_slice %290 {offsets = [0, 256], sizes = [8, 128], strides = [1, 1]} : vector<8x384xf32> to vector<8x128xf32>
    %312 = math.tanh %305 : vector<8x128xf32>
    %313 = arith.mulf %311, %312 : vector<8x128xf32>
    %314 = vector.extract_strided_slice %298 {offsets = [0, 256], sizes = [8, 128], strides = [1, 1]} : vector<8x384xf32> to vector<8x128xf32>
    %315 = math.tanh %310 : vector<8x128xf32>
    %316 = arith.mulf %314, %315 : vector<8x128xf32>
    %317 = arith.index_cast %271 : i32 to index
    %c0_65 = arith.constant 0 : index
    %318 = vector.load %arg13[%317, %c0_65] : memref<64x256xf32, #tpu.memory_space<vmem>>, vector<8x128xf32>
    tpu.vector_store %arg13[%317, %c0_65], %313 {strides = array<i32>} : memref<64x256xf32, #tpu.memory_space<vmem>>, vector<8x128xf32>,
    %319 = arith.index_cast %274 : i32 to index
    %c128_66 = arith.constant 128 : index
    %320 = vector.load %arg13[%319, %c128_66] : memref<64x256xf32, #tpu.memory_space<vmem>>, vector<8x128xf32>
    tpu.vector_store %arg13[%319, %c128_66], %316 {strides = array<i32>} : memref<64x256xf32, #tpu.memory_space<vmem>>, vector<8x128xf32>,
    %321 = tpu.concatenate %313, %316 in 1 : vector<8x128xf32>, vector<8x128xf32> -> vector<8x256xf32>
    %c6_i32 = arith.constant 6 : i32
    %c8_i32_67 = arith.constant 8 : i32
    %322 = arith.muli %c6_i32, %c8_i32_67 : i32
    %323 = tpu.assume_multiple %322, 8 : i32
    %c7_i32_68 = arith.constant 7 : i32
    %324 = arith.subi %c7_i32_68, %c6_i32 : i32
    %c8_i32_69 = arith.constant 8 : i32
    %325 = arith.muli %324, %c8_i32_69 : i32
    %326 = tpu.assume_multiple %325, 8 : i32
    %327 = arith.truncf %321 : vector<8x256xf32> to vector<8x256xbf16>
    %cst_70 = arith.constant dense<0.000000e+00> : vector<8x1024xf32>
    %328 = tpu.matmul %327, %7, %cst_70 {dimension_numbers = #tpu.dot_dimension_numbers<[1], [0], [0], [1], [0, 0, 1, 1], [], []>} : vector<8x256xbf16>, vector<256x1024xbf16>, vector<8x1024xf32> -> vector<8x1024xf32>
    %329 = arith.index_cast %323 : i32 to index
    %c0_71 = arith.constant 0 : index
    %330 = vector.load %arg12[%329, %c0_71] : memref<64x1024xf32, #tpu.memory_space<vmem>>, vector<8x512xf32>
    %331 = vector.extract_strided_slice %328 {offsets = [0, 0], sizes = [8, 512], strides = [1, 1]} : vector<8x1024xf32> to vector<8x512xf32>
    %332 = arith.addf %330, %331 : vector<8x512xf32>
    %333 = arith.index_cast %326 : i32 to index
    %c512_72 = arith.constant 512 : index
    %334 = vector.load %arg12[%333, %c512_72] : memref<64x1024xf32, #tpu.memory_space<vmem>>, vector<8x512xf32>
    %335 = vector.extract_strided_slice %328 {offsets = [0, 512], sizes = [8, 512], strides = [1, 1]} : vector<8x1024xf32> to vector<8x512xf32>
    %336 = arith.addf %334, %335 : vector<8x512xf32>
    %337 = vector.extract_strided_slice %332 {offsets = [0, 0], sizes = [8, 384], strides = [1, 1]} : vector<8x512xf32> to vector<8x384xf32>
    %338 = arith.negf %337 : vector<8x384xf32>
    %339 = math.exp %338 : vector<8x384xf32>
    %cst_73 = arith.constant 1.000000e+00 : f32
    %340 = vector.broadcast %cst_73 : f32 to vector<8x384xf32>
    %341 = arith.addf %340, %339 : vector<8x384xf32>
    %342 = arith.divf %340, %341 : vector<8x384xf32>
    %343 = vector.extract_strided_slice %332 {offsets = [0, 384], sizes = [8, 128], strides = [1, 1]} : vector<8x512xf32> to vector<8x128xf32>
    %344 = math.tanh %343 : vector<8x128xf32>
    %345 = vector.extract_strided_slice %336 {offsets = [0, 0], sizes = [8, 384], strides = [1, 1]} : vector<8x512xf32> to vector<8x384xf32>
    %346 = arith.negf %345 : vector<8x384xf32>
    %347 = math.exp %346 : vector<8x384xf32>
    %cst_74 = arith.constant 1.000000e+00 : f32
    %348 = vector.broadcast %cst_74 : f32 to vector<8x384xf32>
    %349 = arith.addf %348, %347 : vector<8x384xf32>
    %350 = arith.divf %348, %349 : vector<8x384xf32>
    %351 = vector.extract_strided_slice %336 {offsets = [0, 384], sizes = [8, 128], strides = [1, 1]} : vector<8x512xf32> to vector<8x128xf32>
    %352 = math.tanh %351 : vector<8x128xf32>
    %353 = vector.extract_strided_slice %342 {offsets = [0, 128], sizes = [8, 128], strides = [1, 1]} : vector<8x384xf32> to vector<8x128xf32>
    %354 = arith.mulf %353, %305 : vector<8x128xf32>
    %355 = vector.extract_strided_slice %342 {offsets = [0, 0], sizes = [8, 128], strides = [1, 1]} : vector<8x384xf32> to vector<8x128xf32>
    %356 = arith.mulf %355, %344 : vector<8x128xf32>
    %357 = arith.addf %354, %356 : vector<8x128xf32>
    %358 = vector.extract_strided_slice %350 {offsets = [0, 128], sizes = [8, 128], strides = [1, 1]} : vector<8x384xf32> to vector<8x128xf32>
    %359 = arith.mulf %358, %310 : vector<8x128xf32>
    %360 = vector.extract_strided_slice %350 {offsets = [0, 0], sizes = [8, 128], strides = [1, 1]} : vector<8x384xf32> to vector<8x128xf32>
    %361 = arith.mulf %360, %352 : vector<8x128xf32>
    %362 = arith.addf %359, %361 : vector<8x128xf32>
    %363 = vector.extract_strided_slice %342 {offsets = [0, 256], sizes = [8, 128], strides = [1, 1]} : vector<8x384xf32> to vector<8x128xf32>
    %364 = math.tanh %357 : vector<8x128xf32>
    %365 = arith.mulf %363, %364 : vector<8x128xf32>
    %366 = vector.extract_strided_slice %350 {offsets = [0, 256], sizes = [8, 128], strides = [1, 1]} : vector<8x384xf32> to vector<8x128xf32>
    %367 = math.tanh %362 : vector<8x128xf32>
    %368 = arith.mulf %366, %367 : vector<8x128xf32>
    %369 = arith.index_cast %323 : i32 to index
    %c0_75 = arith.constant 0 : index
    %370 = vector.load %arg13[%369, %c0_75] : memref<64x256xf32, #tpu.memory_space<vmem>>, vector<8x128xf32>
    tpu.vector_store %arg13[%369, %c0_75], %365 {strides = array<i32>} : memref<64x256xf32, #tpu.memory_space<vmem>>, vector<8x128xf32>,
    %371 = arith.index_cast %326 : i32 to index
    %c128_76 = arith.constant 128 : index
    %372 = vector.load %arg13[%371, %c128_76] : memref<64x256xf32, #tpu.memory_space<vmem>>, vector<8x128xf32>
    tpu.vector_store %arg13[%371, %c128_76], %368 {strides = array<i32>} : memref<64x256xf32, #tpu.memory_space<vmem>>, vector<8x128xf32>,
    %373 = tpu.concatenate %365, %368 in 1 : vector<8x128xf32>, vector<8x128xf32> -> vector<8x256xf32>
    %c7_i32_77 = arith.constant 7 : i32
    %c8_i32_78 = arith.constant 8 : i32
    %374 = arith.muli %c7_i32_77, %c8_i32_78 : i32
    %375 = tpu.assume_multiple %374, 8 : i32
    %c7_i32_79 = arith.constant 7 : i32
    %376 = arith.subi %c7_i32_79, %c7_i32_77 : i32
    %c8_i32_80 = arith.constant 8 : i32
    %377 = arith.muli %376, %c8_i32_80 : i32
    %378 = tpu.assume_multiple %377, 8 : i32
    %379 = arith.truncf %373 : vector<8x256xf32> to vector<8x256xbf16>
    %cst_81 = arith.constant dense<0.000000e+00> : vector<8x1024xf32>
    %380 = tpu.matmul %379, %7, %cst_81 {dimension_numbers = #tpu.dot_dimension_numbers<[1], [0], [0], [1], [0, 0, 1, 1], [], []>} : vector<8x256xbf16>, vector<256x1024xbf16>, vector<8x1024xf32> -> vector<8x1024xf32>
    %381 = arith.index_cast %375 : i32 to index
    %c0_82 = arith.constant 0 : index
    %382 = vector.load %arg12[%381, %c0_82] : memref<64x1024xf32, #tpu.memory_space<vmem>>, vector<8x512xf32>
    %383 = vector.extract_strided_slice %380 {offsets = [0, 0], sizes = [8, 512], strides = [1, 1]} : vector<8x1024xf32> to vector<8x512xf32>
    %384 = arith.addf %382, %383 : vector<8x512xf32>
    %385 = arith.index_cast %378 : i32 to index
    %c512_83 = arith.constant 512 : index
    %386 = vector.load %arg12[%385, %c512_83] : memref<64x1024xf32, #tpu.memory_space<vmem>>, vector<8x512xf32>
    %387 = vector.extract_strided_slice %380 {offsets = [0, 512], sizes = [8, 512], strides = [1, 1]} : vector<8x1024xf32> to vector<8x512xf32>
    %388 = arith.addf %386, %387 : vector<8x512xf32>
    %389 = vector.extract_strided_slice %384 {offsets = [0, 0], sizes = [8, 384], strides = [1, 1]} : vector<8x512xf32> to vector<8x384xf32>
    %390 = arith.negf %389 : vector<8x384xf32>
    %391 = math.exp %390 : vector<8x384xf32>
    %cst_84 = arith.constant 1.000000e+00 : f32
    %392 = vector.broadcast %cst_84 : f32 to vector<8x384xf32>
    %393 = arith.addf %392, %391 : vector<8x384xf32>
    %394 = arith.divf %392, %393 : vector<8x384xf32>
    %395 = vector.extract_strided_slice %384 {offsets = [0, 384], sizes = [8, 128], strides = [1, 1]} : vector<8x512xf32> to vector<8x128xf32>
    %396 = math.tanh %395 : vector<8x128xf32>
    %397 = vector.extract_strided_slice %388 {offsets = [0, 0], sizes = [8, 384], strides = [1, 1]} : vector<8x512xf32> to vector<8x384xf32>
    %398 = arith.negf %397 : vector<8x384xf32>
    %399 = math.exp %398 : vector<8x384xf32>
    %cst_85 = arith.constant 1.000000e+00 : f32
    %400 = vector.broadcast %cst_85 : f32 to vector<8x384xf32>
    %401 = arith.addf %400, %399 : vector<8x384xf32>
    %402 = arith.divf %400, %401 : vector<8x384xf32>
    %403 = vector.extract_strided_slice %388 {offsets = [0, 384], sizes = [8, 128], strides = [1, 1]} : vector<8x512xf32> to vector<8x128xf32>
    %404 = math.tanh %403 : vector<8x128xf32>
    %405 = vector.extract_strided_slice %394 {offsets = [0, 128], sizes = [8, 128], strides = [1, 1]} : vector<8x384xf32> to vector<8x128xf32>
    %406 = arith.mulf %405, %357 : vector<8x128xf32>
    %407 = vector.extract_strided_slice %394 {offsets = [0, 0], sizes = [8, 128], strides = [1, 1]} : vector<8x384xf32> to vector<8x128xf32>
    %408 = arith.mulf %407, %396 : vector<8x128xf32>
    %409 = arith.addf %406, %408 : vector<8x128xf32>
    %410 = vector.extract_strided_slice %402 {offsets = [0, 128], sizes = [8, 128], strides = [1, 1]} : vector<8x384xf32> to vector<8x128xf32>
    %411 = arith.mulf %410, %362 : vector<8x128xf32>
    %412 = vector.extract_strided_slice %402 {offsets = [0, 0], sizes = [8, 128], strides = [1, 1]} : vector<8x384xf32> to vector<8x128xf32>
    %413 = arith.mulf %412, %404 : vector<8x128xf32>
    %414 = arith.addf %411, %413 : vector<8x128xf32>
    %415 = vector.extract_strided_slice %394 {offsets = [0, 256], sizes = [8, 128], strides = [1, 1]} : vector<8x384xf32> to vector<8x128xf32>
    %416 = math.tanh %409 : vector<8x128xf32>
    %417 = arith.mulf %415, %416 : vector<8x128xf32>
    %418 = vector.extract_strided_slice %402 {offsets = [0, 256], sizes = [8, 128], strides = [1, 1]} : vector<8x384xf32> to vector<8x128xf32>
    %419 = math.tanh %414 : vector<8x128xf32>
    %420 = arith.mulf %418, %419 : vector<8x128xf32>
    %421 = arith.index_cast %375 : i32 to index
    %c0_86 = arith.constant 0 : index
    %422 = vector.load %arg13[%421, %c0_86] : memref<64x256xf32, #tpu.memory_space<vmem>>, vector<8x128xf32>
    tpu.vector_store %arg13[%421, %c0_86], %417 {strides = array<i32>} : memref<64x256xf32, #tpu.memory_space<vmem>>, vector<8x128xf32>,
    %423 = arith.index_cast %378 : i32 to index
    %c128_87 = arith.constant 128 : index
    %424 = vector.load %arg13[%423, %c128_87] : memref<64x256xf32, #tpu.memory_space<vmem>>, vector<8x128xf32>
    tpu.vector_store %arg13[%423, %c128_87], %420 {strides = array<i32>} : memref<64x256xf32, #tpu.memory_space<vmem>>, vector<8x128xf32>,
    %425 = tpu.concatenate %417, %420 in 1 : vector<8x128xf32>, vector<8x128xf32> -> vector<8x256xf32>
    %c8_i32_88 = arith.constant 8 : i32
    %c0_89 = arith.constant 0 : index
    %c0_90 = arith.constant 0 : index
    %426 = vector.load %arg13[%c0_89, %c0_90] : memref<64x256xf32, #tpu.memory_space<vmem>>, vector<64x256xf32>
    %427 = arith.truncf %426 : vector<64x256xf32> to vector<64x256xbf16>
    %c0_91 = arith.constant 0 : index
    %c0_92 = arith.constant 0 : index
    %428 = vector.load %arg4[%c0_91, %c0_92] : memref<256x1024xbf16, #tpu.memory_space<vmem>>, vector<256x1024xbf16>
    %cst_93 = arith.constant dense<0.000000e+00> : vector<64x1024xf32>
    %429 = tpu.matmul %427, %428, %cst_93 {dimension_numbers = #tpu.dot_dimension_numbers<[1], [0], [0], [1], [0, 0, 1, 1], [], []>} : vector<64x256xbf16>, vector<256x1024xbf16>, vector<64x1024xf32> -> vector<64x1024xf32>
    %c0_94 = arith.constant 0 : index
    %c0_95 = arith.constant 0 : index
    %430 = vector.load %arg6[%c0_94, %c0_95] : memref<1x1024xf32, #tpu.memory_space<vmem>>, vector<1x1024xf32>
    %431 = vector.broadcast %430 : vector<1x1024xf32> to vector<64x1024xf32>
    %432 = arith.addf %429, %431 : vector<64x1024xf32>
    %c0_96 = arith.constant 0 : index
    %c0_97 = arith.constant 0 : index
    %433 = vector.load %arg12[%c0_96, %c0_97] : memref<64x1024xf32, #tpu.memory_space<vmem>>, vector<64x1024xf32>
    tpu.vector_store %arg12[%c0_96, %c0_97], %432 {strides = array<i32>} : memref<64x1024xf32, #tpu.memory_space<vmem>>, vector<64x1024xf32>,
    %c0_98 = arith.constant 0 : index
    %c0_99 = arith.constant 0 : index
    %434 = vector.load %arg5[%c0_98, %c0_99] : memref<256x1024xbf16, #tpu.memory_space<vmem>>, vector<256x1024xbf16>
    %cst_100 = arith.constant 0.000000e+00 : f32
    %435 = vector.broadcast %cst_100 : f32 to vector<8x256xf32>
    %cst_101 = arith.constant 0.000000e+00 : f32
    %436 = vector.broadcast %cst_101 : f32 to vector<8x128xf32>
    %c0_i32_102 = arith.constant 0 : i32
    %c8_i32_103 = arith.constant 8 : i32
    %437 = arith.muli %c0_i32_102, %c8_i32_103 : i32
    %438 = tpu.assume_multiple %437, 8 : i32
    %c7_i32_104 = arith.constant 7 : i32
    %439 = arith.subi %c7_i32_104, %c0_i32_102 : i32
    %c8_i32_105 = arith.constant 8 : i32
    %440 = arith.muli %439, %c8_i32_105 : i32
    %441 = tpu.assume_multiple %440, 8 : i32
    %442 = arith.truncf %435 : vector<8x256xf32> to vector<8x256xbf16>
    %cst_106 = arith.constant dense<0.000000e+00> : vector<8x1024xf32>
    %443 = tpu.matmul %442, %434, %cst_106 {dimension_numbers = #tpu.dot_dimension_numbers<[1], [0], [0], [1], [0, 0, 1, 1], [], []>} : vector<8x256xbf16>, vector<256x1024xbf16>, vector<8x1024xf32> -> vector<8x1024xf32>
    %444 = arith.index_cast %438 : i32 to index
    %c0_107 = arith.constant 0 : index
    %445 = vector.load %arg12[%444, %c0_107] : memref<64x1024xf32, #tpu.memory_space<vmem>>, vector<8x512xf32>
    %446 = vector.extract_strided_slice %443 {offsets = [0, 0], sizes = [8, 512], strides = [1, 1]} : vector<8x1024xf32> to vector<8x512xf32>
    %447 = arith.addf %445, %446 : vector<8x512xf32>
    %448 = arith.index_cast %441 : i32 to index
    %c512_108 = arith.constant 512 : index
    %449 = vector.load %arg12[%448, %c512_108] : memref<64x1024xf32, #tpu.memory_space<vmem>>, vector<8x512xf32>
    %450 = vector.extract_strided_slice %443 {offsets = [0, 512], sizes = [8, 512], strides = [1, 1]} : vector<8x1024xf32> to vector<8x512xf32>
    %451 = arith.addf %449, %450 : vector<8x512xf32>
    %452 = vector.extract_strided_slice %447 {offsets = [0, 0], sizes = [8, 384], strides = [1, 1]} : vector<8x512xf32> to vector<8x384xf32>
    %453 = arith.negf %452 : vector<8x384xf32>
    %454 = math.exp %453 : vector<8x384xf32>
    %cst_109 = arith.constant 1.000000e+00 : f32
    %455 = vector.broadcast %cst_109 : f32 to vector<8x384xf32>
    %456 = arith.addf %455, %454 : vector<8x384xf32>
    %457 = arith.divf %455, %456 : vector<8x384xf32>
    %458 = vector.extract_strided_slice %447 {offsets = [0, 384], sizes = [8, 128], strides = [1, 1]} : vector<8x512xf32> to vector<8x128xf32>
    %459 = math.tanh %458 : vector<8x128xf32>
    %460 = vector.extract_strided_slice %451 {offsets = [0, 0], sizes = [8, 384], strides = [1, 1]} : vector<8x512xf32> to vector<8x384xf32>
    %461 = arith.negf %460 : vector<8x384xf32>
    %462 = math.exp %461 : vector<8x384xf32>
    %cst_110 = arith.constant 1.000000e+00 : f32
    %463 = vector.broadcast %cst_110 : f32 to vector<8x384xf32>
    %464 = arith.addf %463, %462 : vector<8x384xf32>
    %465 = arith.divf %463, %464 : vector<8x384xf32>
    %466 = vector.extract_strided_slice %451 {offsets = [0, 384], sizes = [8, 128], strides = [1, 1]} : vector<8x512xf32> to vector<8x128xf32>
    %467 = math.tanh %466 : vector<8x128xf32>
    %468 = vector.extract_strided_slice %457 {offsets = [0, 128], sizes = [8, 128], strides = [1, 1]} : vector<8x384xf32> to vector<8x128xf32>
    %469 = arith.mulf %468, %436 : vector<8x128xf32>
    %470 = vector.extract_strided_slice %457 {offsets = [0, 0], sizes = [8, 128], strides = [1, 1]} : vector<8x384xf32> to vector<8x128xf32>
    %471 = arith.mulf %470, %459 : vector<8x128xf32>
    %472 = arith.addf %469, %471 : vector<8x128xf32>
    %473 = vector.extract_strided_slice %465 {offsets = [0, 128], sizes = [8, 128], strides = [1, 1]} : vector<8x384xf32> to vector<8x128xf32>
    %474 = arith.mulf %473, %436 : vector<8x128xf32>
    %475 = vector.extract_strided_slice %465 {offsets = [0, 0], sizes = [8, 128], strides = [1, 1]} : vector<8x384xf32> to vector<8x128xf32>
    %476 = arith.mulf %475, %467 : vector<8x128xf32>
    %477 = arith.addf %474, %476 : vector<8x128xf32>
    %478 = vector.extract_strided_slice %457 {offsets = [0, 256], sizes = [8, 128], strides = [1, 1]} : vector<8x384xf32> to vector<8x128xf32>
    %479 = math.tanh %472 : vector<8x128xf32>
    %480 = arith.mulf %478, %479 : vector<8x128xf32>
    %481 = vector.extract_strided_slice %465 {offsets = [0, 256], sizes = [8, 128], strides = [1, 1]} : vector<8x384xf32> to vector<8x128xf32>
    %482 = math.tanh %477 : vector<8x128xf32>
    %483 = arith.mulf %481, %482 : vector<8x128xf32>
    %484 = arith.index_cast %438 : i32 to index
    %c0_111 = arith.constant 0 : index
    %485 = vector.load %arg13[%484, %c0_111] : memref<64x256xf32, #tpu.memory_space<vmem>>, vector<8x128xf32>
    tpu.vector_store %arg13[%484, %c0_111], %480 {strides = array<i32>} : memref<64x256xf32, #tpu.memory_space<vmem>>, vector<8x128xf32>,
    %486 = arith.index_cast %441 : i32 to index
    %c128_112 = arith.constant 128 : index
    %487 = vector.load %arg13[%486, %c128_112] : memref<64x256xf32, #tpu.memory_space<vmem>>, vector<8x128xf32>
    tpu.vector_store %arg13[%486, %c128_112], %483 {strides = array<i32>} : memref<64x256xf32, #tpu.memory_space<vmem>>, vector<8x128xf32>,
    %488 = tpu.concatenate %480, %483 in 1 : vector<8x128xf32>, vector<8x128xf32> -> vector<8x256xf32>
    %c1_i32_113 = arith.constant 1 : i32
    %c8_i32_114 = arith.constant 8 : i32
    %489 = arith.muli %c1_i32_113, %c8_i32_114 : i32
    %490 = tpu.assume_multiple %489, 8 : i32
    %c7_i32_115 = arith.constant 7 : i32
    %491 = arith.subi %c7_i32_115, %c1_i32_113 : i32
    %c8_i32_116 = arith.constant 8 : i32
    %492 = arith.muli %491, %c8_i32_116 : i32
    %493 = tpu.assume_multiple %492, 8 : i32
    %494 = arith.truncf %488 : vector<8x256xf32> to vector<8x256xbf16>
    %cst_117 = arith.constant dense<0.000000e+00> : vector<8x1024xf32>
    %495 = tpu.matmul %494, %434, %cst_117 {dimension_numbers = #tpu.dot_dimension_numbers<[1], [0], [0], [1], [0, 0, 1, 1], [], []>} : vector<8x256xbf16>, vector<256x1024xbf16>, vector<8x1024xf32> -> vector<8x1024xf32>
    %496 = arith.index_cast %490 : i32 to index
    %c0_118 = arith.constant 0 : index
    %497 = vector.load %arg12[%496, %c0_118] : memref<64x1024xf32, #tpu.memory_space<vmem>>, vector<8x512xf32>
    %498 = vector.extract_strided_slice %495 {offsets = [0, 0], sizes = [8, 512], strides = [1, 1]} : vector<8x1024xf32> to vector<8x512xf32>
    %499 = arith.addf %497, %498 : vector<8x512xf32>
    %500 = arith.index_cast %493 : i32 to index
    %c512_119 = arith.constant 512 : index
    %501 = vector.load %arg12[%500, %c512_119] : memref<64x1024xf32, #tpu.memory_space<vmem>>, vector<8x512xf32>
    %502 = vector.extract_strided_slice %495 {offsets = [0, 512], sizes = [8, 512], strides = [1, 1]} : vector<8x1024xf32> to vector<8x512xf32>
    %503 = arith.addf %501, %502 : vector<8x512xf32>
    %504 = vector.extract_strided_slice %499 {offsets = [0, 0], sizes = [8, 384], strides = [1, 1]} : vector<8x512xf32> to vector<8x384xf32>
    %505 = arith.negf %504 : vector<8x384xf32>
    %506 = math.exp %505 : vector<8x384xf32>
    %cst_120 = arith.constant 1.000000e+00 : f32
    %507 = vector.broadcast %cst_120 : f32 to vector<8x384xf32>
    %508 = arith.addf %507, %506 : vector<8x384xf32>
    %509 = arith.divf %507, %508 : vector<8x384xf32>
    %510 = vector.extract_strided_slice %499 {offsets = [0, 384], sizes = [8, 128], strides = [1, 1]} : vector<8x512xf32> to vector<8x128xf32>
    %511 = math.tanh %510 : vector<8x128xf32>
    %512 = vector.extract_strided_slice %503 {offsets = [0, 0], sizes = [8, 384], strides = [1, 1]} : vector<8x512xf32> to vector<8x384xf32>
    %513 = arith.negf %512 : vector<8x384xf32>
    %514 = math.exp %513 : vector<8x384xf32>
    %cst_121 = arith.constant 1.000000e+00 : f32
    %515 = vector.broadcast %cst_121 : f32 to vector<8x384xf32>
    %516 = arith.addf %515, %514 : vector<8x384xf32>
    %517 = arith.divf %515, %516 : vector<8x384xf32>
    %518 = vector.extract_strided_slice %503 {offsets = [0, 384], sizes = [8, 128], strides = [1, 1]} : vector<8x512xf32> to vector<8x128xf32>
    %519 = math.tanh %518 : vector<8x128xf32>
    %520 = vector.extract_strided_slice %509 {offsets = [0, 128], sizes = [8, 128], strides = [1, 1]} : vector<8x384xf32> to vector<8x128xf32>
    %521 = arith.mulf %520, %472 : vector<8x128xf32>
    %522 = vector.extract_strided_slice %509 {offsets = [0, 0], sizes = [8, 128], strides = [1, 1]} : vector<8x384xf32> to vector<8x128xf32>
    %523 = arith.mulf %522, %511 : vector<8x128xf32>
    %524 = arith.addf %521, %523 : vector<8x128xf32>
    %525 = vector.extract_strided_slice %517 {offsets = [0, 128], sizes = [8, 128], strides = [1, 1]} : vector<8x384xf32> to vector<8x128xf32>
    %526 = arith.mulf %525, %477 : vector<8x128xf32>
    %527 = vector.extract_strided_slice %517 {offsets = [0, 0], sizes = [8, 128], strides = [1, 1]} : vector<8x384xf32> to vector<8x128xf32>
    %528 = arith.mulf %527, %519 : vector<8x128xf32>
    %529 = arith.addf %526, %528 : vector<8x128xf32>
    %530 = vector.extract_strided_slice %509 {offsets = [0, 256], sizes = [8, 128], strides = [1, 1]} : vector<8x384xf32> to vector<8x128xf32>
    %531 = math.tanh %524 : vector<8x128xf32>
    %532 = arith.mulf %530, %531 : vector<8x128xf32>
    %533 = vector.extract_strided_slice %517 {offsets = [0, 256], sizes = [8, 128], strides = [1, 1]} : vector<8x384xf32> to vector<8x128xf32>
    %534 = math.tanh %529 : vector<8x128xf32>
    %535 = arith.mulf %533, %534 : vector<8x128xf32>
    %536 = arith.index_cast %490 : i32 to index
    %c0_122 = arith.constant 0 : index
    %537 = vector.load %arg13[%536, %c0_122] : memref<64x256xf32, #tpu.memory_space<vmem>>, vector<8x128xf32>
    tpu.vector_store %arg13[%536, %c0_122], %532 {strides = array<i32>} : memref<64x256xf32, #tpu.memory_space<vmem>>, vector<8x128xf32>,
    %538 = arith.index_cast %493 : i32 to index
    %c128_123 = arith.constant 128 : index
    %539 = vector.load %arg13[%538, %c128_123] : memref<64x256xf32, #tpu.memory_space<vmem>>, vector<8x128xf32>
    tpu.vector_store %arg13[%538, %c128_123], %535 {strides = array<i32>} : memref<64x256xf32, #tpu.memory_space<vmem>>, vector<8x128xf32>,
    %540 = tpu.concatenate %532, %535 in 1 : vector<8x128xf32>, vector<8x128xf32> -> vector<8x256xf32>
    %c2_i32_124 = arith.constant 2 : i32
    %c8_i32_125 = arith.constant 8 : i32
    %541 = arith.muli %c2_i32_124, %c8_i32_125 : i32
    %542 = tpu.assume_multiple %541, 8 : i32
    %c7_i32_126 = arith.constant 7 : i32
    %543 = arith.subi %c7_i32_126, %c2_i32_124 : i32
    %c8_i32_127 = arith.constant 8 : i32
    %544 = arith.muli %543, %c8_i32_127 : i32
    %545 = tpu.assume_multiple %544, 8 : i32
    %546 = arith.truncf %540 : vector<8x256xf32> to vector<8x256xbf16>
    %cst_128 = arith.constant dense<0.000000e+00> : vector<8x1024xf32>
    %547 = tpu.matmul %546, %434, %cst_128 {dimension_numbers = #tpu.dot_dimension_numbers<[1], [0], [0], [1], [0, 0, 1, 1], [], []>} : vector<8x256xbf16>, vector<256x1024xbf16>, vector<8x1024xf32> -> vector<8x1024xf32>
    %548 = arith.index_cast %542 : i32 to index
    %c0_129 = arith.constant 0 : index
    %549 = vector.load %arg12[%548, %c0_129] : memref<64x1024xf32, #tpu.memory_space<vmem>>, vector<8x512xf32>
    %550 = vector.extract_strided_slice %547 {offsets = [0, 0], sizes = [8, 512], strides = [1, 1]} : vector<8x1024xf32> to vector<8x512xf32>
    %551 = arith.addf %549, %550 : vector<8x512xf32>
    %552 = arith.index_cast %545 : i32 to index
    %c512_130 = arith.constant 512 : index
    %553 = vector.load %arg12[%552, %c512_130] : memref<64x1024xf32, #tpu.memory_space<vmem>>, vector<8x512xf32>
    %554 = vector.extract_strided_slice %547 {offsets = [0, 512], sizes = [8, 512], strides = [1, 1]} : vector<8x1024xf32> to vector<8x512xf32>
    %555 = arith.addf %553, %554 : vector<8x512xf32>
    %556 = vector.extract_strided_slice %551 {offsets = [0, 0], sizes = [8, 384], strides = [1, 1]} : vector<8x512xf32> to vector<8x384xf32>
    %557 = arith.negf %556 : vector<8x384xf32>
    %558 = math.exp %557 : vector<8x384xf32>
    %cst_131 = arith.constant 1.000000e+00 : f32
    %559 = vector.broadcast %cst_131 : f32 to vector<8x384xf32>
    %560 = arith.addf %559, %558 : vector<8x384xf32>
    %561 = arith.divf %559, %560 : vector<8x384xf32>
    %562 = vector.extract_strided_slice %551 {offsets = [0, 384], sizes = [8, 128], strides = [1, 1]} : vector<8x512xf32> to vector<8x128xf32>
    %563 = math.tanh %562 : vector<8x128xf32>
    %564 = vector.extract_strided_slice %555 {offsets = [0, 0], sizes = [8, 384], strides = [1, 1]} : vector<8x512xf32> to vector<8x384xf32>
    %565 = arith.negf %564 : vector<8x384xf32>
    %566 = math.exp %565 : vector<8x384xf32>
    %cst_132 = arith.constant 1.000000e+00 : f32
    %567 = vector.broadcast %cst_132 : f32 to vector<8x384xf32>
    %568 = arith.addf %567, %566 : vector<8x384xf32>
    %569 = arith.divf %567, %568 : vector<8x384xf32>
    %570 = vector.extract_strided_slice %555 {offsets = [0, 384], sizes = [8, 128], strides = [1, 1]} : vector<8x512xf32> to vector<8x128xf32>
    %571 = math.tanh %570 : vector<8x128xf32>
    %572 = vector.extract_strided_slice %561 {offsets = [0, 128], sizes = [8, 128], strides = [1, 1]} : vector<8x384xf32> to vector<8x128xf32>
    %573 = arith.mulf %572, %524 : vector<8x128xf32>
    %574 = vector.extract_strided_slice %561 {offsets = [0, 0], sizes = [8, 128], strides = [1, 1]} : vector<8x384xf32> to vector<8x128xf32>
    %575 = arith.mulf %574, %563 : vector<8x128xf32>
    %576 = arith.addf %573, %575 : vector<8x128xf32>
    %577 = vector.extract_strided_slice %569 {offsets = [0, 128], sizes = [8, 128], strides = [1, 1]} : vector<8x384xf32> to vector<8x128xf32>
    %578 = arith.mulf %577, %529 : vector<8x128xf32>
    %579 = vector.extract_strided_slice %569 {offsets = [0, 0], sizes = [8, 128], strides = [1, 1]} : vector<8x384xf32> to vector<8x128xf32>
    %580 = arith.mulf %579, %571 : vector<8x128xf32>
    %581 = arith.addf %578, %580 : vector<8x128xf32>
    %582 = vector.extract_strided_slice %561 {offsets = [0, 256], sizes = [8, 128], strides = [1, 1]} : vector<8x384xf32> to vector<8x128xf32>
    %583 = math.tanh %576 : vector<8x128xf32>
    %584 = arith.mulf %582, %583 : vector<8x128xf32>
    %585 = vector.extract_strided_slice %569 {offsets = [0, 256], sizes = [8, 128], strides = [1, 1]} : vector<8x384xf32> to vector<8x128xf32>
    %586 = math.tanh %581 : vector<8x128xf32>
    %587 = arith.mulf %585, %586 : vector<8x128xf32>
    %588 = arith.index_cast %542 : i32 to index
    %c0_133 = arith.constant 0 : index
    %589 = vector.load %arg13[%588, %c0_133] : memref<64x256xf32, #tpu.memory_space<vmem>>, vector<8x128xf32>
    tpu.vector_store %arg13[%588, %c0_133], %584 {strides = array<i32>} : memref<64x256xf32, #tpu.memory_space<vmem>>, vector<8x128xf32>,
    %590 = arith.index_cast %545 : i32 to index
    %c128_134 = arith.constant 128 : index
    %591 = vector.load %arg13[%590, %c128_134] : memref<64x256xf32, #tpu.memory_space<vmem>>, vector<8x128xf32>
    tpu.vector_store %arg13[%590, %c128_134], %587 {strides = array<i32>} : memref<64x256xf32, #tpu.memory_space<vmem>>, vector<8x128xf32>,
    %592 = tpu.concatenate %584, %587 in 1 : vector<8x128xf32>, vector<8x128xf32> -> vector<8x256xf32>
    %c3_i32_135 = arith.constant 3 : i32
    %c8_i32_136 = arith.constant 8 : i32
    %593 = arith.muli %c3_i32_135, %c8_i32_136 : i32
    %594 = tpu.assume_multiple %593, 8 : i32
    %c7_i32_137 = arith.constant 7 : i32
    %595 = arith.subi %c7_i32_137, %c3_i32_135 : i32
    %c8_i32_138 = arith.constant 8 : i32
    %596 = arith.muli %595, %c8_i32_138 : i32
    %597 = tpu.assume_multiple %596, 8 : i32
    %598 = arith.truncf %592 : vector<8x256xf32> to vector<8x256xbf16>
    %cst_139 = arith.constant dense<0.000000e+00> : vector<8x1024xf32>
    %599 = tpu.matmul %598, %434, %cst_139 {dimension_numbers = #tpu.dot_dimension_numbers<[1], [0], [0], [1], [0, 0, 1, 1], [], []>} : vector<8x256xbf16>, vector<256x1024xbf16>, vector<8x1024xf32> -> vector<8x1024xf32>
    %600 = arith.index_cast %594 : i32 to index
    %c0_140 = arith.constant 0 : index
    %601 = vector.load %arg12[%600, %c0_140] : memref<64x1024xf32, #tpu.memory_space<vmem>>, vector<8x512xf32>
    %602 = vector.extract_strided_slice %599 {offsets = [0, 0], sizes = [8, 512], strides = [1, 1]} : vector<8x1024xf32> to vector<8x512xf32>
    %603 = arith.addf %601, %602 : vector<8x512xf32>
    %604 = arith.index_cast %597 : i32 to index
    %c512_141 = arith.constant 512 : index
    %605 = vector.load %arg12[%604, %c512_141] : memref<64x1024xf32, #tpu.memory_space<vmem>>, vector<8x512xf32>
    %606 = vector.extract_strided_slice %599 {offsets = [0, 512], sizes = [8, 512], strides = [1, 1]} : vector<8x1024xf32> to vector<8x512xf32>
    %607 = arith.addf %605, %606 : vector<8x512xf32>
    %608 = vector.extract_strided_slice %603 {offsets = [0, 0], sizes = [8, 384], strides = [1, 1]} : vector<8x512xf32> to vector<8x384xf32>
    %609 = arith.negf %608 : vector<8x384xf32>
    %610 = math.exp %609 : vector<8x384xf32>
    %cst_142 = arith.constant 1.000000e+00 : f32
    %611 = vector.broadcast %cst_142 : f32 to vector<8x384xf32>
    %612 = arith.addf %611, %610 : vector<8x384xf32>
    %613 = arith.divf %611, %612 : vector<8x384xf32>
    %614 = vector.extract_strided_slice %603 {offsets = [0, 384], sizes = [8, 128], strides = [1, 1]} : vector<8x512xf32> to vector<8x128xf32>
    %615 = math.tanh %614 : vector<8x128xf32>
    %616 = vector.extract_strided_slice %607 {offsets = [0, 0], sizes = [8, 384], strides = [1, 1]} : vector<8x512xf32> to vector<8x384xf32>
    %617 = arith.negf %616 : vector<8x384xf32>
    %618 = math.exp %617 : vector<8x384xf32>
    %cst_143 = arith.constant 1.000000e+00 : f32
    %619 = vector.broadcast %cst_143 : f32 to vector<8x384xf32>
    %620 = arith.addf %619, %618 : vector<8x384xf32>
    %621 = arith.divf %619, %620 : vector<8x384xf32>
    %622 = vector.extract_strided_slice %607 {offsets = [0, 384], sizes = [8, 128], strides = [1, 1]} : vector<8x512xf32> to vector<8x128xf32>
    %623 = math.tanh %622 : vector<8x128xf32>
    %624 = vector.extract_strided_slice %613 {offsets = [0, 128], sizes = [8, 128], strides = [1, 1]} : vector<8x384xf32> to vector<8x128xf32>
    %625 = arith.mulf %624, %576 : vector<8x128xf32>
    %626 = vector.extract_strided_slice %613 {offsets = [0, 0], sizes = [8, 128], strides = [1, 1]} : vector<8x384xf32> to vector<8x128xf32>
    %627 = arith.mulf %626, %615 : vector<8x128xf32>
    %628 = arith.addf %625, %627 : vector<8x128xf32>
    %629 = vector.extract_strided_slice %621 {offsets = [0, 128], sizes = [8, 128], strides = [1, 1]} : vector<8x384xf32> to vector<8x128xf32>
    %630 = arith.mulf %629, %581 : vector<8x128xf32>
    %631 = vector.extract_strided_slice %621 {offsets = [0, 0], sizes = [8, 128], strides = [1, 1]} : vector<8x384xf32> to vector<8x128xf32>
    %632 = arith.mulf %631, %623 : vector<8x128xf32>
    %633 = arith.addf %630, %632 : vector<8x128xf32>
    %634 = vector.extract_strided_slice %613 {offsets = [0, 256], sizes = [8, 128], strides = [1, 1]} : vector<8x384xf32> to vector<8x128xf32>
    %635 = math.tanh %628 : vector<8x128xf32>
    %636 = arith.mulf %634, %635 : vector<8x128xf32>
    %637 = vector.extract_strided_slice %621 {offsets = [0, 256], sizes = [8, 128], strides = [1, 1]} : vector<8x384xf32> to vector<8x128xf32>
    %638 = math.tanh %633 : vector<8x128xf32>
    %639 = arith.mulf %637, %638 : vector<8x128xf32>
    %640 = arith.index_cast %594 : i32 to index
    %c0_144 = arith.constant 0 : index
    %641 = vector.load %arg13[%640, %c0_144] : memref<64x256xf32, #tpu.memory_space<vmem>>, vector<8x128xf32>
    tpu.vector_store %arg13[%640, %c0_144], %636 {strides = array<i32>} : memref<64x256xf32, #tpu.memory_space<vmem>>, vector<8x128xf32>,
    %642 = arith.index_cast %597 : i32 to index
    %c128_145 = arith.constant 128 : index
    %643 = vector.load %arg13[%642, %c128_145] : memref<64x256xf32, #tpu.memory_space<vmem>>, vector<8x128xf32>
    tpu.vector_store %arg13[%642, %c128_145], %639 {strides = array<i32>} : memref<64x256xf32, #tpu.memory_space<vmem>>, vector<8x128xf32>,
    %644 = tpu.concatenate %636, %639 in 1 : vector<8x128xf32>, vector<8x128xf32> -> vector<8x256xf32>
    %c4_i32_146 = arith.constant 4 : i32
    %c8_i32_147 = arith.constant 8 : i32
    %645 = arith.muli %c4_i32_146, %c8_i32_147 : i32
    %646 = tpu.assume_multiple %645, 8 : i32
    %c7_i32_148 = arith.constant 7 : i32
    %647 = arith.subi %c7_i32_148, %c4_i32_146 : i32
    %c8_i32_149 = arith.constant 8 : i32
    %648 = arith.muli %647, %c8_i32_149 : i32
    %649 = tpu.assume_multiple %648, 8 : i32
    %650 = arith.truncf %644 : vector<8x256xf32> to vector<8x256xbf16>
    %cst_150 = arith.constant dense<0.000000e+00> : vector<8x1024xf32>
    %651 = tpu.matmul %650, %434, %cst_150 {dimension_numbers = #tpu.dot_dimension_numbers<[1], [0], [0], [1], [0, 0, 1, 1], [], []>} : vector<8x256xbf16>, vector<256x1024xbf16>, vector<8x1024xf32> -> vector<8x1024xf32>
    %652 = arith.index_cast %646 : i32 to index
    %c0_151 = arith.constant 0 : index
    %653 = vector.load %arg12[%652, %c0_151] : memref<64x1024xf32, #tpu.memory_space<vmem>>, vector<8x512xf32>
    %654 = vector.extract_strided_slice %651 {offsets = [0, 0], sizes = [8, 512], strides = [1, 1]} : vector<8x1024xf32> to vector<8x512xf32>
    %655 = arith.addf %653, %654 : vector<8x512xf32>
    %656 = arith.index_cast %649 : i32 to index
    %c512_152 = arith.constant 512 : index
    %657 = vector.load %arg12[%656, %c512_152] : memref<64x1024xf32, #tpu.memory_space<vmem>>, vector<8x512xf32>
    %658 = vector.extract_strided_slice %651 {offsets = [0, 512], sizes = [8, 512], strides = [1, 1]} : vector<8x1024xf32> to vector<8x512xf32>
    %659 = arith.addf %657, %658 : vector<8x512xf32>
    %660 = vector.extract_strided_slice %655 {offsets = [0, 0], sizes = [8, 384], strides = [1, 1]} : vector<8x512xf32> to vector<8x384xf32>
    %661 = arith.negf %660 : vector<8x384xf32>
    %662 = math.exp %661 : vector<8x384xf32>
    %cst_153 = arith.constant 1.000000e+00 : f32
    %663 = vector.broadcast %cst_153 : f32 to vector<8x384xf32>
    %664 = arith.addf %663, %662 : vector<8x384xf32>
    %665 = arith.divf %663, %664 : vector<8x384xf32>
    %666 = vector.extract_strided_slice %655 {offsets = [0, 384], sizes = [8, 128], strides = [1, 1]} : vector<8x512xf32> to vector<8x128xf32>
    %667 = math.tanh %666 : vector<8x128xf32>
    %668 = vector.extract_strided_slice %659 {offsets = [0, 0], sizes = [8, 384], strides = [1, 1]} : vector<8x512xf32> to vector<8x384xf32>
    %669 = arith.negf %668 : vector<8x384xf32>
    %670 = math.exp %669 : vector<8x384xf32>
    %cst_154 = arith.constant 1.000000e+00 : f32
    %671 = vector.broadcast %cst_154 : f32 to vector<8x384xf32>
    %672 = arith.addf %671, %670 : vector<8x384xf32>
    %673 = arith.divf %671, %672 : vector<8x384xf32>
    %674 = vector.extract_strided_slice %659 {offsets = [0, 384], sizes = [8, 128], strides = [1, 1]} : vector<8x512xf32> to vector<8x128xf32>
    %675 = math.tanh %674 : vector<8x128xf32>
    %676 = vector.extract_strided_slice %665 {offsets = [0, 128], sizes = [8, 128], strides = [1, 1]} : vector<8x384xf32> to vector<8x128xf32>
    %677 = arith.mulf %676, %628 : vector<8x128xf32>
    %678 = vector.extract_strided_slice %665 {offsets = [0, 0], sizes = [8, 128], strides = [1, 1]} : vector<8x384xf32> to vector<8x128xf32>
    %679 = arith.mulf %678, %667 : vector<8x128xf32>
    %680 = arith.addf %677, %679 : vector<8x128xf32>
    %681 = vector.extract_strided_slice %673 {offsets = [0, 128], sizes = [8, 128], strides = [1, 1]} : vector<8x384xf32> to vector<8x128xf32>
    %682 = arith.mulf %681, %633 : vector<8x128xf32>
    %683 = vector.extract_strided_slice %673 {offsets = [0, 0], sizes = [8, 128], strides = [1, 1]} : vector<8x384xf32> to vector<8x128xf32>
    %684 = arith.mulf %683, %675 : vector<8x128xf32>
    %685 = arith.addf %682, %684 : vector<8x128xf32>
    %686 = vector.extract_strided_slice %665 {offsets = [0, 256], sizes = [8, 128], strides = [1, 1]} : vector<8x384xf32> to vector<8x128xf32>
    %687 = math.tanh %680 : vector<8x128xf32>
    %688 = arith.mulf %686, %687 : vector<8x128xf32>
    %689 = vector.extract_strided_slice %673 {offsets = [0, 256], sizes = [8, 128], strides = [1, 1]} : vector<8x384xf32> to vector<8x128xf32>
    %690 = math.tanh %685 : vector<8x128xf32>
    %691 = arith.mulf %689, %690 : vector<8x128xf32>
    %692 = arith.index_cast %646 : i32 to index
    %c0_155 = arith.constant 0 : index
    %693 = vector.load %arg13[%692, %c0_155] : memref<64x256xf32, #tpu.memory_space<vmem>>, vector<8x128xf32>
    tpu.vector_store %arg13[%692, %c0_155], %688 {strides = array<i32>} : memref<64x256xf32, #tpu.memory_space<vmem>>, vector<8x128xf32>,
    %694 = arith.index_cast %649 : i32 to index
    %c128_156 = arith.constant 128 : index
    %695 = vector.load %arg13[%694, %c128_156] : memref<64x256xf32, #tpu.memory_space<vmem>>, vector<8x128xf32>
    tpu.vector_store %arg13[%694, %c128_156], %691 {strides = array<i32>} : memref<64x256xf32, #tpu.memory_space<vmem>>, vector<8x128xf32>,
    %696 = tpu.concatenate %688, %691 in 1 : vector<8x128xf32>, vector<8x128xf32> -> vector<8x256xf32>
    %c5_i32_157 = arith.constant 5 : i32
    %c8_i32_158 = arith.constant 8 : i32
    %697 = arith.muli %c5_i32_157, %c8_i32_158 : i32
    %698 = tpu.assume_multiple %697, 8 : i32
    %c7_i32_159 = arith.constant 7 : i32
    %699 = arith.subi %c7_i32_159, %c5_i32_157 : i32
    %c8_i32_160 = arith.constant 8 : i32
    %700 = arith.muli %699, %c8_i32_160 : i32
    %701 = tpu.assume_multiple %700, 8 : i32
    %702 = arith.truncf %696 : vector<8x256xf32> to vector<8x256xbf16>
    %cst_161 = arith.constant dense<0.000000e+00> : vector<8x1024xf32>
    %703 = tpu.matmul %702, %434, %cst_161 {dimension_numbers = #tpu.dot_dimension_numbers<[1], [0], [0], [1], [0, 0, 1, 1], [], []>} : vector<8x256xbf16>, vector<256x1024xbf16>, vector<8x1024xf32> -> vector<8x1024xf32>
    %704 = arith.index_cast %698 : i32 to index
    %c0_162 = arith.constant 0 : index
    %705 = vector.load %arg12[%704, %c0_162] : memref<64x1024xf32, #tpu.memory_space<vmem>>, vector<8x512xf32>
    %706 = vector.extract_strided_slice %703 {offsets = [0, 0], sizes = [8, 512], strides = [1, 1]} : vector<8x1024xf32> to vector<8x512xf32>
    %707 = arith.addf %705, %706 : vector<8x512xf32>
    %708 = arith.index_cast %701 : i32 to index
    %c512_163 = arith.constant 512 : index
    %709 = vector.load %arg12[%708, %c512_163] : memref<64x1024xf32, #tpu.memory_space<vmem>>, vector<8x512xf32>
    %710 = vector.extract_strided_slice %703 {offsets = [0, 512], sizes = [8, 512], strides = [1, 1]} : vector<8x1024xf32> to vector<8x512xf32>
    %711 = arith.addf %709, %710 : vector<8x512xf32>
    %712 = vector.extract_strided_slice %707 {offsets = [0, 0], sizes = [8, 384], strides = [1, 1]} : vector<8x512xf32> to vector<8x384xf32>
    %713 = arith.negf %712 : vector<8x384xf32>
    %714 = math.exp %713 : vector<8x384xf32>
    %cst_164 = arith.constant 1.000000e+00 : f32
    %715 = vector.broadcast %cst_164 : f32 to vector<8x384xf32>
    %716 = arith.addf %715, %714 : vector<8x384xf32>
    %717 = arith.divf %715, %716 : vector<8x384xf32>
    %718 = vector.extract_strided_slice %707 {offsets = [0, 384], sizes = [8, 128], strides = [1, 1]} : vector<8x512xf32> to vector<8x128xf32>
    %719 = math.tanh %718 : vector<8x128xf32>
    %720 = vector.extract_strided_slice %711 {offsets = [0, 0], sizes = [8, 384], strides = [1, 1]} : vector<8x512xf32> to vector<8x384xf32>
    %721 = arith.negf %720 : vector<8x384xf32>
    %722 = math.exp %721 : vector<8x384xf32>
    %cst_165 = arith.constant 1.000000e+00 : f32
    %723 = vector.broadcast %cst_165 : f32 to vector<8x384xf32>
    %724 = arith.addf %723, %722 : vector<8x384xf32>
    %725 = arith.divf %723, %724 : vector<8x384xf32>
    %726 = vector.extract_strided_slice %711 {offsets = [0, 384], sizes = [8, 128], strides = [1, 1]} : vector<8x512xf32> to vector<8x128xf32>
    %727 = math.tanh %726 : vector<8x128xf32>
    %728 = vector.extract_strided_slice %717 {offsets = [0, 128], sizes = [8, 128], strides = [1, 1]} : vector<8x384xf32> to vector<8x128xf32>
    %729 = arith.mulf %728, %680 : vector<8x128xf32>
    %730 = vector.extract_strided_slice %717 {offsets = [0, 0], sizes = [8, 128], strides = [1, 1]} : vector<8x384xf32> to vector<8x128xf32>
    %731 = arith.mulf %730, %719 : vector<8x128xf32>
    %732 = arith.addf %729, %731 : vector<8x128xf32>
    %733 = vector.extract_strided_slice %725 {offsets = [0, 128], sizes = [8, 128], strides = [1, 1]} : vector<8x384xf32> to vector<8x128xf32>
    %734 = arith.mulf %733, %685 : vector<8x128xf32>
    %735 = vector.extract_strided_slice %725 {offsets = [0, 0], sizes = [8, 128], strides = [1, 1]} : vector<8x384xf32> to vector<8x128xf32>
    %736 = arith.mulf %735, %727 : vector<8x128xf32>
    %737 = arith.addf %734, %736 : vector<8x128xf32>
    %738 = vector.extract_strided_slice %717 {offsets = [0, 256], sizes = [8, 128], strides = [1, 1]} : vector<8x384xf32> to vector<8x128xf32>
    %739 = math.tanh %732 : vector<8x128xf32>
    %740 = arith.mulf %738, %739 : vector<8x128xf32>
    %741 = vector.extract_strided_slice %725 {offsets = [0, 256], sizes = [8, 128], strides = [1, 1]} : vector<8x384xf32> to vector<8x128xf32>
    %742 = math.tanh %737 : vector<8x128xf32>
    %743 = arith.mulf %741, %742 : vector<8x128xf32>
    %744 = arith.index_cast %698 : i32 to index
    %c0_166 = arith.constant 0 : index
    %745 = vector.load %arg13[%744, %c0_166] : memref<64x256xf32, #tpu.memory_space<vmem>>, vector<8x128xf32>
    tpu.vector_store %arg13[%744, %c0_166], %740 {strides = array<i32>} : memref<64x256xf32, #tpu.memory_space<vmem>>, vector<8x128xf32>,
    %746 = arith.index_cast %701 : i32 to index
    %c128_167 = arith.constant 128 : index
    %747 = vector.load %arg13[%746, %c128_167] : memref<64x256xf32, #tpu.memory_space<vmem>>, vector<8x128xf32>
    tpu.vector_store %arg13[%746, %c128_167], %743 {strides = array<i32>} : memref<64x256xf32, #tpu.memory_space<vmem>>, vector<8x128xf32>,
    %748 = tpu.concatenate %740, %743 in 1 : vector<8x128xf32>, vector<8x128xf32> -> vector<8x256xf32>
    %c6_i32_168 = arith.constant 6 : i32
    %c8_i32_169 = arith.constant 8 : i32
    %749 = arith.muli %c6_i32_168, %c8_i32_169 : i32
    %750 = tpu.assume_multiple %749, 8 : i32
    %c7_i32_170 = arith.constant 7 : i32
    %751 = arith.subi %c7_i32_170, %c6_i32_168 : i32
    %c8_i32_171 = arith.constant 8 : i32
    %752 = arith.muli %751, %c8_i32_171 : i32
    %753 = tpu.assume_multiple %752, 8 : i32
    %754 = arith.truncf %748 : vector<8x256xf32> to vector<8x256xbf16>
    %cst_172 = arith.constant dense<0.000000e+00> : vector<8x1024xf32>
    %755 = tpu.matmul %754, %434, %cst_172 {dimension_numbers = #tpu.dot_dimension_numbers<[1], [0], [0], [1], [0, 0, 1, 1], [], []>} : vector<8x256xbf16>, vector<256x1024xbf16>, vector<8x1024xf32> -> vector<8x1024xf32>
    %756 = arith.index_cast %750 : i32 to index
    %c0_173 = arith.constant 0 : index
    %757 = vector.load %arg12[%756, %c0_173] : memref<64x1024xf32, #tpu.memory_space<vmem>>, vector<8x512xf32>
    %758 = vector.extract_strided_slice %755 {offsets = [0, 0], sizes = [8, 512], strides = [1, 1]} : vector<8x1024xf32> to vector<8x512xf32>
    %759 = arith.addf %757, %758 : vector<8x512xf32>
    %760 = arith.index_cast %753 : i32 to index
    %c512_174 = arith.constant 512 : index
    %761 = vector.load %arg12[%760, %c512_174] : memref<64x1024xf32, #tpu.memory_space<vmem>>, vector<8x512xf32>
    %762 = vector.extract_strided_slice %755 {offsets = [0, 512], sizes = [8, 512], strides = [1, 1]} : vector<8x1024xf32> to vector<8x512xf32>
    %763 = arith.addf %761, %762 : vector<8x512xf32>
    %764 = vector.extract_strided_slice %759 {offsets = [0, 0], sizes = [8, 384], strides = [1, 1]} : vector<8x512xf32> to vector<8x384xf32>
    %765 = arith.negf %764 : vector<8x384xf32>
    %766 = math.exp %765 : vector<8x384xf32>
    %cst_175 = arith.constant 1.000000e+00 : f32
    %767 = vector.broadcast %cst_175 : f32 to vector<8x384xf32>
    %768 = arith.addf %767, %766 : vector<8x384xf32>
    %769 = arith.divf %767, %768 : vector<8x384xf32>
    %770 = vector.extract_strided_slice %759 {offsets = [0, 384], sizes = [8, 128], strides = [1, 1]} : vector<8x512xf32> to vector<8x128xf32>
    %771 = math.tanh %770 : vector<8x128xf32>
    %772 = vector.extract_strided_slice %763 {offsets = [0, 0], sizes = [8, 384], strides = [1, 1]} : vector<8x512xf32> to vector<8x384xf32>
    %773 = arith.negf %772 : vector<8x384xf32>
    %774 = math.exp %773 : vector<8x384xf32>
    %cst_176 = arith.constant 1.000000e+00 : f32
    %775 = vector.broadcast %cst_176 : f32 to vector<8x384xf32>
    %776 = arith.addf %775, %774 : vector<8x384xf32>
    %777 = arith.divf %775, %776 : vector<8x384xf32>
    %778 = vector.extract_strided_slice %763 {offsets = [0, 384], sizes = [8, 128], strides = [1, 1]} : vector<8x512xf32> to vector<8x128xf32>
    %779 = math.tanh %778 : vector<8x128xf32>
    %780 = vector.extract_strided_slice %769 {offsets = [0, 128], sizes = [8, 128], strides = [1, 1]} : vector<8x384xf32> to vector<8x128xf32>
    %781 = arith.mulf %780, %732 : vector<8x128xf32>
    %782 = vector.extract_strided_slice %769 {offsets = [0, 0], sizes = [8, 128], strides = [1, 1]} : vector<8x384xf32> to vector<8x128xf32>
    %783 = arith.mulf %782, %771 : vector<8x128xf32>
    %784 = arith.addf %781, %783 : vector<8x128xf32>
    %785 = vector.extract_strided_slice %777 {offsets = [0, 128], sizes = [8, 128], strides = [1, 1]} : vector<8x384xf32> to vector<8x128xf32>
    %786 = arith.mulf %785, %737 : vector<8x128xf32>
    %787 = vector.extract_strided_slice %777 {offsets = [0, 0], sizes = [8, 128], strides = [1, 1]} : vector<8x384xf32> to vector<8x128xf32>
    %788 = arith.mulf %787, %779 : vector<8x128xf32>
    %789 = arith.addf %786, %788 : vector<8x128xf32>
    %790 = vector.extract_strided_slice %769 {offsets = [0, 256], sizes = [8, 128], strides = [1, 1]} : vector<8x384xf32> to vector<8x128xf32>
    %791 = math.tanh %784 : vector<8x128xf32>
    %792 = arith.mulf %790, %791 : vector<8x128xf32>
    %793 = vector.extract_strided_slice %777 {offsets = [0, 256], sizes = [8, 128], strides = [1, 1]} : vector<8x384xf32> to vector<8x128xf32>
    %794 = math.tanh %789 : vector<8x128xf32>
    %795 = arith.mulf %793, %794 : vector<8x128xf32>
    %796 = arith.index_cast %750 : i32 to index
    %c0_177 = arith.constant 0 : index
    %797 = vector.load %arg13[%796, %c0_177] : memref<64x256xf32, #tpu.memory_space<vmem>>, vector<8x128xf32>
    tpu.vector_store %arg13[%796, %c0_177], %792 {strides = array<i32>} : memref<64x256xf32, #tpu.memory_space<vmem>>, vector<8x128xf32>,
    %798 = arith.index_cast %753 : i32 to index
    %c128_178 = arith.constant 128 : index
    %799 = vector.load %arg13[%798, %c128_178] : memref<64x256xf32, #tpu.memory_space<vmem>>, vector<8x128xf32>
    tpu.vector_store %arg13[%798, %c128_178], %795 {strides = array<i32>} : memref<64x256xf32, #tpu.memory_space<vmem>>, vector<8x128xf32>,
    %800 = tpu.concatenate %792, %795 in 1 : vector<8x128xf32>, vector<8x128xf32> -> vector<8x256xf32>
    %c7_i32_179 = arith.constant 7 : i32
    %c8_i32_180 = arith.constant 8 : i32
    %801 = arith.muli %c7_i32_179, %c8_i32_180 : i32
    %802 = tpu.assume_multiple %801, 8 : i32
    %c7_i32_181 = arith.constant 7 : i32
    %803 = arith.subi %c7_i32_181, %c7_i32_179 : i32
    %c8_i32_182 = arith.constant 8 : i32
    %804 = arith.muli %803, %c8_i32_182 : i32
    %805 = tpu.assume_multiple %804, 8 : i32
    %806 = arith.truncf %800 : vector<8x256xf32> to vector<8x256xbf16>
    %cst_183 = arith.constant dense<0.000000e+00> : vector<8x1024xf32>
    %807 = tpu.matmul %806, %434, %cst_183 {dimension_numbers = #tpu.dot_dimension_numbers<[1], [0], [0], [1], [0, 0, 1, 1], [], []>} : vector<8x256xbf16>, vector<256x1024xbf16>, vector<8x1024xf32> -> vector<8x1024xf32>
    %808 = arith.index_cast %802 : i32 to index
    %c0_184 = arith.constant 0 : index
    %809 = vector.load %arg12[%808, %c0_184] : memref<64x1024xf32, #tpu.memory_space<vmem>>, vector<8x512xf32>
    %810 = vector.extract_strided_slice %807 {offsets = [0, 0], sizes = [8, 512], strides = [1, 1]} : vector<8x1024xf32> to vector<8x512xf32>
    %811 = arith.addf %809, %810 : vector<8x512xf32>
    %812 = arith.index_cast %805 : i32 to index
    %c512_185 = arith.constant 512 : index
    %813 = vector.load %arg12[%812, %c512_185] : memref<64x1024xf32, #tpu.memory_space<vmem>>, vector<8x512xf32>
    %814 = vector.extract_strided_slice %807 {offsets = [0, 512], sizes = [8, 512], strides = [1, 1]} : vector<8x1024xf32> to vector<8x512xf32>
    %815 = arith.addf %813, %814 : vector<8x512xf32>
    %816 = vector.extract_strided_slice %811 {offsets = [0, 0], sizes = [8, 384], strides = [1, 1]} : vector<8x512xf32> to vector<8x384xf32>
    %817 = arith.negf %816 : vector<8x384xf32>
    %818 = math.exp %817 : vector<8x384xf32>
    %cst_186 = arith.constant 1.000000e+00 : f32
    %819 = vector.broadcast %cst_186 : f32 to vector<8x384xf32>
    %820 = arith.addf %819, %818 : vector<8x384xf32>
    %821 = arith.divf %819, %820 : vector<8x384xf32>
    %822 = vector.extract_strided_slice %811 {offsets = [0, 384], sizes = [8, 128], strides = [1, 1]} : vector<8x512xf32> to vector<8x128xf32>
    %823 = math.tanh %822 : vector<8x128xf32>
    %824 = vector.extract_strided_slice %815 {offsets = [0, 0], sizes = [8, 384], strides = [1, 1]} : vector<8x512xf32> to vector<8x384xf32>
    %825 = arith.negf %824 : vector<8x384xf32>
    %826 = math.exp %825 : vector<8x384xf32>
    %cst_187 = arith.constant 1.000000e+00 : f32
    %827 = vector.broadcast %cst_187 : f32 to vector<8x384xf32>
    %828 = arith.addf %827, %826 : vector<8x384xf32>
    %829 = arith.divf %827, %828 : vector<8x384xf32>
    %830 = vector.extract_strided_slice %815 {offsets = [0, 384], sizes = [8, 128], strides = [1, 1]} : vector<8x512xf32> to vector<8x128xf32>
    %831 = math.tanh %830 : vector<8x128xf32>
    %832 = vector.extract_strided_slice %821 {offsets = [0, 128], sizes = [8, 128], strides = [1, 1]} : vector<8x384xf32> to vector<8x128xf32>
    %833 = arith.mulf %832, %784 : vector<8x128xf32>
    %834 = vector.extract_strided_slice %821 {offsets = [0, 0], sizes = [8, 128], strides = [1, 1]} : vector<8x384xf32> to vector<8x128xf32>
    %835 = arith.mulf %834, %823 : vector<8x128xf32>
    %836 = arith.addf %833, %835 : vector<8x128xf32>
    %837 = vector.extract_strided_slice %829 {offsets = [0, 128], sizes = [8, 128], strides = [1, 1]} : vector<8x384xf32> to vector<8x128xf32>
    %838 = arith.mulf %837, %789 : vector<8x128xf32>
    %839 = vector.extract_strided_slice %829 {offsets = [0, 0], sizes = [8, 128], strides = [1, 1]} : vector<8x384xf32> to vector<8x128xf32>
    %840 = arith.mulf %839, %831 : vector<8x128xf32>
    %841 = arith.addf %838, %840 : vector<8x128xf32>
    %842 = vector.extract_strided_slice %821 {offsets = [0, 256], sizes = [8, 128], strides = [1, 1]} : vector<8x384xf32> to vector<8x128xf32>
    %843 = math.tanh %836 : vector<8x128xf32>
    %844 = arith.mulf %842, %843 : vector<8x128xf32>
    %845 = vector.extract_strided_slice %829 {offsets = [0, 256], sizes = [8, 128], strides = [1, 1]} : vector<8x384xf32> to vector<8x128xf32>
    %846 = math.tanh %841 : vector<8x128xf32>
    %847 = arith.mulf %845, %846 : vector<8x128xf32>
    %848 = arith.index_cast %802 : i32 to index
    %c0_188 = arith.constant 0 : index
    %849 = vector.load %arg13[%848, %c0_188] : memref<64x256xf32, #tpu.memory_space<vmem>>, vector<8x128xf32>
    tpu.vector_store %arg13[%848, %c0_188], %844 {strides = array<i32>} : memref<64x256xf32, #tpu.memory_space<vmem>>, vector<8x128xf32>,
    %850 = arith.index_cast %805 : i32 to index
    %c128_189 = arith.constant 128 : index
    %851 = vector.load %arg13[%850, %c128_189] : memref<64x256xf32, #tpu.memory_space<vmem>>, vector<8x128xf32>
    tpu.vector_store %arg13[%850, %c128_189], %847 {strides = array<i32>} : memref<64x256xf32, #tpu.memory_space<vmem>>, vector<8x128xf32>,
    %852 = tpu.concatenate %844, %847 in 1 : vector<8x128xf32>, vector<8x128xf32> -> vector<8x256xf32>
    %c8_i32_190 = arith.constant 8 : i32
    %c56 = arith.constant 56 : index
    %c0_191 = arith.constant 0 : index
    %853 = vector.load %arg13[%c56, %c0_191] : memref<64x256xf32, #tpu.memory_space<vmem>>, vector<8x256xf32>
    %cst_192 = arith.constant 0.000000e+00 : f32
    %854 = vector.broadcast %cst_192 : f32 to vector<8x256xf32>
    %855 = arith.cmpf ogt, %853, %854 : vector<8x256xf32>
    %cst_193 = arith.constant 0.000000e+00 : f32
    %856 = vector.broadcast %cst_193 : f32 to vector<8x256xf32>
    %857 = arith.minimumf %853, %856 : vector<8x256xf32>
    %858 = math.exp %857 : vector<8x256xf32>
    %cst_194 = arith.constant 1.000000e+00 : f32
    %859 = vector.broadcast %cst_194 : f32 to vector<8x256xf32>
    %860 = arith.subf %858, %859 : vector<8x256xf32>
    %cst_195 = arith.constant 1.67326319 : f32
    %861 = vector.broadcast %cst_195 : f32 to vector<8x256xf32>
    %862 = arith.mulf %861, %860 : vector<8x256xf32>
    %863 = arith.select %855, %853, %862 : vector<8x256xi1>, vector<8x256xf32>
    %cst_196 = arith.constant 1.05070102 : f32
    %864 = vector.broadcast %cst_196 : f32 to vector<8x256xf32>
    %865 = arith.mulf %864, %863 : vector<8x256xf32>
    %866 = arith.truncf %865 : vector<8x256xf32> to vector<8x256xbf16>
    %c0_197 = arith.constant 0 : index
    %c0_198 = arith.constant 0 : index
    %867 = vector.load %arg7[%c0_197, %c0_198] : memref<256x32xbf16, #tpu.memory_space<vmem>>, vector<256x32xbf16>
    %cst_199 = arith.constant dense<0.000000e+00> : vector<8x32xf32>
    %868 = tpu.matmul %866, %867, %cst_199 {dimension_numbers = #tpu.dot_dimension_numbers<[1], [0], [0], [1], [0, 0, 1, 1], [], []>} : vector<8x256xbf16>, vector<256x32xbf16>, vector<8x32xf32> -> vector<8x32xf32>
    %c0_200 = arith.constant 0 : index
    %c0_201 = arith.constant 0 : index
    %869 = vector.load %arg8[%c0_200, %c0_201] : memref<1x32xf32, #tpu.memory_space<vmem>>, vector<1x32xf32>
    %870 = vector.broadcast %869 : vector<1x32xf32> to vector<8x32xf32>
    %871 = arith.addf %868, %870 : vector<8x32xf32>
    %cst_202 = arith.constant 0.000000e+00 : f32
    %872 = vector.broadcast %cst_202 : f32 to vector<8x32xf32>
    %873 = arith.cmpf ogt, %871, %872 : vector<8x32xf32>
    %cst_203 = arith.constant 0.000000e+00 : f32
    %874 = vector.broadcast %cst_203 : f32 to vector<8x32xf32>
    %875 = arith.minimumf %871, %874 : vector<8x32xf32>
    %876 = math.exp %875 : vector<8x32xf32>
    %cst_204 = arith.constant 1.000000e+00 : f32
    %877 = vector.broadcast %cst_204 : f32 to vector<8x32xf32>
    %878 = arith.subf %876, %877 : vector<8x32xf32>
    %cst_205 = arith.constant 1.67326319 : f32
    %879 = vector.broadcast %cst_205 : f32 to vector<8x32xf32>
    %880 = arith.mulf %879, %878 : vector<8x32xf32>
    %881 = arith.select %873, %871, %880 : vector<8x32xi1>, vector<8x32xf32>
    %cst_206 = arith.constant 1.05070102 : f32
    %882 = vector.broadcast %cst_206 : f32 to vector<8x32xf32>
    %883 = arith.mulf %882, %881 : vector<8x32xf32>
    %884 = arith.truncf %883 : vector<8x32xf32> to vector<8x32xbf16>
    %c0_207 = arith.constant 0 : index
    %c0_208 = arith.constant 0 : index
    %885 = vector.load %arg9[%c0_207, %c0_208] : memref<32x16xbf16, #tpu.memory_space<vmem>>, vector<32x16xbf16>
    %cst_209 = arith.constant dense<0.000000e+00> : vector<8x16xf32>
    %886 = tpu.matmul %884, %885, %cst_209 {dimension_numbers = #tpu.dot_dimension_numbers<[1], [0], [0], [1], [0, 0, 1, 1], [], []>} : vector<8x32xbf16>, vector<32x16xbf16>, vector<8x16xf32> -> vector<8x16xf32>
    %c0_210 = arith.constant 0 : index
    %c0_211 = arith.constant 0 : index
    %887 = vector.load %arg10[%c0_210, %c0_211] : memref<1x16xf32, #tpu.memory_space<vmem>>, vector<1x16xf32>
    %888 = vector.broadcast %887 : vector<1x16xf32> to vector<8x16xf32>
    %889 = arith.addf %886, %888 : vector<8x16xf32>
    %c0_212 = arith.constant 0 : index
    %c0_213 = arith.constant 0 : index
    %890 = vector.load %arg11[%c0_212, %c0_213] : memref<8x16xf32, #tpu.memory_space<vmem>>, vector<8x16xf32>
    tpu.vector_store %arg11[%c0_212, %c0_213], %889 {strides = array<i32>} : memref<8x16xf32, #tpu.memory_space<vmem>>, vector<8x16xf32>,
    return
  }
}

</mosaic_0001>

<llo_original>
// kernel: tpu_custom_call.1
$region0: #{tpu_custom_call.1}
  #allocation0 [shape = 'u32[]', space=smem, size = 0x4, offset = 0x4, fixed_abs, tag = 'smem constant byte address 0x4 - core index']
  #allocation1 [shape = 'u32[72,128]{1,0:T(1,128)}', space=vmem, size = 0x9000, scoped, tag = 'internal scratch']
  #allocation2 [shape = 'f32[64,1024]{1,0:T(8,128)}', space=vmem, size = 0x40000, scoped, tag = 'scratch operand']
  #allocation3 [shape = 'f32[64,256]{1,0:T(8,128)}', space=vmem, size = 0x10000, scoped, tag = 'scratch operand']
  %s0 = inlined_call_operand.vmem [shape: bf16[64,32], index: 0, kind: input, shape index: {}]
  %s1 = inlined_call_operand.vmem [shape: bf16[32,1024], index: 1, kind: input, shape index: {}]
  %s2 = inlined_call_operand.hbm [shape: bf16[256,1024], index: 2, kind: input, shape index: {}]
  %s3 = inlined_call_operand.vmem [shape: f32[1,1024], index: 3, kind: input, shape index: {}]
  %s4 = inlined_call_operand.hbm [shape: bf16[256,1024], index: 4, kind: input, shape index: {}]
  %s5 = inlined_call_operand.hbm [shape: bf16[256,1024], index: 5, kind: input, shape index: {}]
  %s6 = inlined_call_operand.vmem [shape: f32[1,1024], index: 6, kind: input, shape index: {}]
  %s7 = inlined_call_operand.vmem [shape: bf16[256,32], index: 7, kind: input, shape index: {}]
  %s8 = inlined_call_operand.vmem [shape: f32[1,32], index: 8, kind: input, shape index: {}]
  %s9 = inlined_call_operand.vmem [shape: bf16[32,16], index: 9, kind: input, shape index: {}]
  %s10 = inlined_call_operand.vmem [shape: f32[1,16], index: 10, kind: input, shape index: {}]
  %s11 = inlined_call_operand.hbm [shape: f32[8,16], index: 11, kind: output, shape index: {}]
  %s12 = sld [smem:[#allocation0]]
  $region66: #{tpu_custom_call.1} parent=0
    _
  %s14 = ssub.s32 1, %s12
  %s15 = scalar_select 0, %s14, %s12
  $region1: #{tpu_custom_call.1} parent=0
    #allocation4 [shape = 'u8[524288]{0}', space=vmem, size = 0x80000, scoped, tag = 'input window, operand 2, single buffered']
    #allocation5 [shape = 's32[1]{0}', space=sflag, size = 0x4, scoped, tag = 'scoped memory for tpu_custom_call.1']
    #allocation6 [shape = 's32[1]{0}', space=sflag, size = 0x4, scoped, tag = 'scoped memory for tpu_custom_call.1']
    #allocation7 [shape = 'u8[524288]{0}', space=vmem, size = 0x80000, scoped, tag = 'input window, operand 4, single buffered']
    #allocation8 [shape = 's32[1]{0}', space=sflag, size = 0x4, scoped, tag = 'scoped memory for tpu_custom_call.1']
    #allocation9 [shape = 'u8[524288]{0}', space=vmem, size = 0x80000, scoped, tag = 'input window, operand 5, single buffered']
    #allocation10 [shape = 'u8[4096]{0}', space=vmem, size = 0x1000, scoped, tag = 'output window, operand 0, single buffered']
    %16 = vsyncpa [#allocation5], 0
    %17 = vsyncpa [#allocation8], 0
    %18 = vsyncpa [#allocation6], 0
    // Predicated region
    $region2: #{tpu_custom_call.1} parent=1 // pred_check
      _
    $region3: #{tpu_custom_call.1} parent=1 // pred_check_branch
      %20 = sbr.rel (0) target = $region5
    $region4: #{tpu_custom_call.1} parent=1 // pred_region
      _
    $region5: #{tpu_custom_call.1} parent=1 // pred_fallthru
      _
    // Predicated region
    $region6: #{tpu_custom_call.1} parent=1 // pred_check
      _
    $region7: #{tpu_custom_call.1} parent=1 // pred_check_branch
      %22 = sbr.rel (0) target = $region9
    $region8: #{tpu_custom_call.1} parent=1 // pred_region
      _
    $region9: #{tpu_custom_call.1} parent=1 // pred_fallthru
      _
    // Predicated region
    $region10: #{tpu_custom_call.1} parent=1 // pred_check
      _
    $region11: #{tpu_custom_call.1} parent=1 // pred_check_branch
      %24 = sbr.rel (0) target = $region13
    $region12: #{tpu_custom_call.1} parent=1 // pred_region
      %26 = vsyncadd [#allocation5], 0
      %s27 = sshll.u32 %s2, 4
      %s28 = int_to_ptr.hbm [resolvable:$true] %s27
      %s29 = sshll.u32 [#allocation4], 4
      %s30 = int_to_ptr.vmem [resolvable:$true] %s29
      %35 = dma.hbm_to_vmem [thread:$0]  %s28, 16384, %s30, [#allocation5], 512, 512, 32
    $region13: #{tpu_custom_call.1} parent=1 // pred_fallthru
      _
    // Predicated region
    $region14: #{tpu_custom_call.1} parent=1 // pred_check
      _
    $region15: #{tpu_custom_call.1} parent=1 // pred_check_branch
      %37 = sbr.rel (0) target = $region17
    $region16: #{tpu_custom_call.1} parent=1 // pred_region
      _
    $region17: #{tpu_custom_call.1} parent=1 // pred_fallthru
      _
    // Predicated region
    $region18: #{tpu_custom_call.1} parent=1 // pred_check
      _
    $region19: #{tpu_custom_call.1} parent=1 // pred_check_branch
      %39 = sbr.rel (0) target = $region21
    $region20: #{tpu_custom_call.1} parent=1 // pred_region
      %41 = vsyncadd [#allocation8], 0
      %s42 = sshll.u32 %s4, 4
      %s43 = int_to_ptr.hbm [resolvable:$true] %s42
      %s44 = sshll.u32 [#allocation7], 4
      %s45 = int_to_ptr.vmem [resolvable:$true] %s44
      %50 = dma.hbm_to_vmem [thread:$0]  %s43, 16384, %s45, [#allocation8], 512, 512, 32
    $region21: #{tpu_custom_call.1} parent=1 // pred_fallthru
      _
    // Predicated region
    $region22: #{tpu_custom_call.1} parent=1 // pred_check
      _
    $region23: #{tpu_custom_call.1} parent=1 // pred_check_branch
      %52 = sbr.rel (0) target = $region25
    $region24: #{tpu_custom_call.1} parent=1 // pred_region
      %54 = vsyncadd [#allocation8], 0
      %s55 = sshll.u32 %s5, 4
      %s56 = int_to_ptr.hbm [resolvable:$true] %s55
      %s57 = sshll.u32 [#allocation9], 4
      %s58 = int_to_ptr.vmem [resolvable:$true] %s57
      %63 = dma.hbm_to_vmem [thread:$0]  %s56, 16384, %s58, [#allocation8], 512, 512, 32
    $region25: #{tpu_custom_call.1} parent=1 // pred_fallthru
      _
    // Predicated region
    $region26: #{tpu_custom_call.1} parent=1 // pred_check
      _
    $region27: #{tpu_custom_call.1} parent=1 // pred_check_branch
      %65 = sbr.rel (0) target = $region29
    $region28: #{tpu_custom_call.1} parent=1 // pred_region
      _
    $region29: #{tpu_custom_call.1} parent=1 // pred_fallthru
      _
    // Predicated region
    $region30: #{tpu_custom_call.1} parent=1 // pred_check
      _
    $region31: #{tpu_custom_call.1} parent=1 // pred_check_branch
      %67 = sbr.rel (0) target = $region33
    $region32: #{tpu_custom_call.1} parent=1 // pred_region
      _
    $region33: #{tpu_custom_call.1} parent=1 // pred_fallthru
      _
    // Predicated region
    $region34: #{tpu_custom_call.1} parent=1 // pred_check
      _
    $region35: #{tpu_custom_call.1} parent=1 // pred_check_branch
      %69 = sbr.rel (0) target = $region37
    $region36: #{tpu_custom_call.1} parent=1 // pred_region
      _
    $region37: #{tpu_custom_call.1} parent=1 // pred_fallthru
      _
    // Predicated region
    $region38: #{tpu_custom_call.1} parent=1 // pred_check
      _
    $region39: #{tpu_custom_call.1} parent=1 // pred_check_branch
      %71 = sbr.rel (0) target = $region41
    $region40: #{tpu_custom_call.1} parent=1 // pred_region
      _
    $region41: #{tpu_custom_call.1} parent=1 // pred_fallthru
      _
    // Predicated region
    $region42: #{tpu_custom_call.1} parent=1 // pred_check
      _
    $region43: #{tpu_custom_call.1} parent=1 // pred_check_branch
      %73 = sbr.rel (0) target = $region45
    $region44: #{tpu_custom_call.1} parent=1 // pred_region
      _
    $region45: #{tpu_custom_call.1} parent=1 // pred_fallthru
      _
    // Predicated region
    $region46: #{tpu_custom_call.1} parent=1 // pred_check
      _
    $region47: #{tpu_custom_call.1} parent=1 // pred_check_branch
      %75 = sbr.rel (0) target = $region49
    $region48: #{tpu_custom_call.1} parent=1 // pred_region
      %77 = dma.done [#allocation5], 16384
    $region49: #{tpu_custom_call.1} parent=1 // pred_fallthru
      _
    // Predicated region
    $region50: #{tpu_custom_call.1} parent=1 // pred_check
      _
    $region51: #{tpu_custom_call.1} parent=1 // pred_check_branch
      %79 = sbr.rel (0) target = $region53
    $region52: #{tpu_custom_call.1} parent=1 // pred_region
      %81 = dma.done [#allocation8], 16384
    $region53: #{tpu_custom_call.1} parent=1 // pred_fallthru
      _
    // Predicated region
    $region54: #{tpu_custom_call.1} parent=1 // pred_check
      _
    $region55: #{tpu_custom_call.1} parent=1 // pred_check_branch
      %83 = sbr.rel (0) target = $region57
    $region56: #{tpu_custom_call.1} parent=1 // pred_region
      %85 = dma.done [#allocation8], 16384
    $region57: #{tpu_custom_call.1} parent=1 // pred_fallthru
      _
    %v87 = vld [vmem:[%s0] sm:$0xf]
    %v88 = vld [vmem:[%s0 + $0x4] sm:$0xf]
    %v89 = vld [vmem:[%s0 + $0x8] sm:$0xf]
    %v90 = vld [vmem:[%s0 + $0xc] sm:$0xf]
    %v91 = vld [vmem:[%s0 + $0x10] sm:$0xf]
    %v92 = vld [vmem:[%s0 + $0x14] sm:$0xf]
    %v93 = vld [vmem:[%s0 + $0x18] sm:$0xf]
    %v94 = vld [vmem:[%s0 + $0x1c] sm:$0xf]
    %v95 = vld [vmem:[%s1] sm:$0xff]
    %v96 = vld [vmem:[%s1 + $0x8] sm:$0xff]
    %v97 = vld [vmem:[%s1 + $0x10] sm:$0xff]
    %v98 = vld [vmem:[%s1 + $0x18] sm:$0xff]
    %v99 = vld [vmem:[%s1 + $0x20] sm:$0xff]
    %v100 = vld [vmem:[%s1 + $0x28] sm:$0xff]
    %v101 = vld [vmem:[%s1 + $0x30] sm:$0xff]
    %v102 = vld [vmem:[%s1 + $0x38] sm:$0xff]
    %v103 = vld [vmem:[%s1 + $0x40] sm:$0xff]
    %v104 = vld [vmem:[%s1 + $0x48] sm:$0xff]
    %v105 = vld [vmem:[%s1 + $0x50] sm:$0xff]
    %v106 = vld [vmem:[%s1 + $0x58] sm:$0xff]
    %v107 = vld [vmem:[%s1 + $0x60] sm:$0xff]
    %v108 = vld [vmem:[%s1 + $0x68] sm:$0xff]
    %v109 = vld [vmem:[%s1 + $0x70] sm:$0xff]
    %v110 = vld [vmem:[%s1 + $0x78] sm:$0xff]
    %v111 = vld [vmem:[%s3] sm:$0xff]
    %v113 = vperm.slane %v111, 0
    %v114 = vperm.slane %v111, 1
    %v115 = vperm.slane %v111, 2
    %v116 = vperm.slane %v111, 3
    %v117 = vperm.slane %v111, 4
    %v118 = vperm.slane %v111, 5
    %v119 = vperm.slane %v111, 6
    %v120 = vperm.slane %v111, 7
    %v137 = vunpack.c.l.b16 %v87
    %v138 = vunpack.c.l.b16 %v88
    %v139 = vunpack.c.l.b16 %v89
    %v140 = vunpack.c.l.b16 %v90
    %v141 = vunpack.c.l.b16 %v91
    %v142 = vunpack.c.l.b16 %v92
    %v143 = vunpack.c.l.b16 %v93
    %v144 = vunpack.c.l.b16 %v94
    %v145 = vpack.c.b16 %v138, %v137
    %v146 = vpack.c.b16 %v140, %v139
    %v147 = vpack.c.b16 %v142, %v141
    %v148 = vpack.c.b16 %v144, %v143
    %v165 = vunpack.c.l.b16 %v95
    %v166 = vunpack.c.h.b16 %v95
    %v167 = vunpack.c.l.b16 %v96
    %v168 = vunpack.c.h.b16 %v96
    %v169 = vunpack.c.l.b16 %v97
    %v170 = vunpack.c.h.b16 %v97
    %v171 = vunpack.c.l.b16 %v98
    %v172 = vunpack.c.h.b16 %v98
    %v173 = vunpack.c.l.b16 %v99
    %v174 = vunpack.c.h.b16 %v99
    %v175 = vunpack.c.l.b16 %v100
    %v176 = vunpack.c.h.b16 %v100
    %v177 = vunpack.c.l.b16 %v101
    %v178 = vunpack.c.h.b16 %v101
    %v179 = vunpack.c.l.b16 %v102
    %v180 = vunpack.c.h.b16 %v102
    %v181 = vunpack.c.l.b16 %v103
    %v182 = vunpack.c.h.b16 %v103
    %v183 = vunpack.c.l.b16 %v104
    %v184 = vunpack.c.h.b16 %v104
    %v185 = vunpack.c.l.b16 %v105
    %v186 = vunpack.c.h.b16 %v105
    %v187 = vunpack.c.l.b16 %v106
    %v188 = vunpack.c.h.b16 %v106
    %v189 = vunpack.c.l.b16 %v107
    %v190 = vunpack.c.h.b16 %v107
    %v191 = vunpack.c.l.b16 %v108
    %v192 = vunpack.c.h.b16 %v108
    %v193 = vunpack.c.l.b16 %v109
    %v194 = vunpack.c.h.b16 %v109
    %v195 = vunpack.c.l.b16 %v110
    %v196 = vunpack.c.h.b16 %v110
    %v197 = vpack.c.b16 %v173, %v165
    %v198 = vpack.c.b16 %v174, %v166
    %v199 = vpack.c.b16 %v175, %v167
    %v200 = vpack.c.b16 %v176, %v168
    %v201 = vpack.c.b16 %v177, %v169
    %v202 = vpack.c.b16 %v178, %v170
    %v203 = vpack.c.b16 %v179, %v171
    %v204 = vpack.c.b16 %v180, %v172
    %v205 = vpack.c.b16 %v189, %v181
    %v206 = vpack.c.b16 %v190, %v182
    %v207 = vpack.c.b16 %v191, %v183
    %v208 = vpack.c.b16 %v192, %v184
    %v209 = vpack.c.b16 %v193, %v185
    %v210 = vpack.c.b16 %v194, %v186
    %v211 = vpack.c.b16 %v195, %v187
    %v212 = vpack.c.b16 %v196, %v188
    %vm229 = vcmask 261120
    %v231 = vsel %vm229, %v145, 0
    %v234 = vsel %vm229, %v146, 0
    %v237 = vsel %vm229, %v147, 0
    %v240 = vsel %vm229, %v148, 0
    %242 = vmatpush.bf16.msra.mxu0 0
    %243 = vmatpush.bf16.msra.mxu0 0
    %244 = vmatpush.bf16.msra.mxu0 0
    %245 = vmatpush.bf16.msra.mxu0 0
    %246 = vmatpush.bf16.msra.mxu0 0
    %247 = vmatpush.bf16.msra.mxu0 0
    %248 = vmatpush.bf16.msra.mxu0 %v205
    %249 = vmatpush.bf16.msra.mxu0 %v197
    %250 = vmatmul.bf16.gmra.mxu0 %v231
    %v251 = vpop.f32.mrf.mxu0
    %v252 = vadd.f32 %v113, %v251
    %v253 = vpop.f32.mrf.mxu0
    %v254 = vadd.f32 %v113, %v253
    %255 = vmatmul.bf16.gmra.mxu0 %v234
    %v256 = vpop.f32.mrf.mxu0
    %v257 = vadd.f32 %v113, %v256
    %v258 = vpop.f32.mrf.mxu0
    %v259 = vadd.f32 %v113, %v258
    %260 = vmatmul.bf16.gmra.mxu0 %v237
    %v261 = vpop.f32.mrf.mxu0
    %v262 = vadd.f32 %v113, %v261
    %v263 = vpop.f32.mrf.mxu0
    %v264 = vadd.f32 %v113, %v263
    %265 = vmatmul.bf16.gmra.mxu0 %v240
    %v266 = vpop.f32.mrf.mxu0
    %v267 = vadd.f32 %v113, %v266
    %v268 = vpop.f32.mrf.mxu0
    %v269 = vadd.f32 %v113, %v268
    %270 = vdwg.mxu0
    %271 = vmatpush.bf16.msra.mxu0 0
    %272 = vmatpush.bf16.msra.mxu0 0
    %273 = vmatpush.bf16.msra.mxu0 0
    %274 = vmatpush.bf16.msra.mxu0 0
    %275 = vmatpush.bf16.msra.mxu0 0
    %276 = vmatpush.bf16.msra.mxu0 0
    %277 = vmatpush.bf16.msra.mxu0 %v206
    %278 = vmatpush.bf16.msra.mxu0 %v198
    %279 = vmatmul.bf16.gmra.mxu0 %v231
    %v280 = vpop.f32.mrf.mxu0
    %v281 = vadd.f32 %v114, %v280
    %v282 = vpop.f32.mrf.mxu0
    %v283 = vadd.f32 %v114, %v282
    %284 = vmatmul.bf16.gmra.mxu0 %v234
    %v285 = vpop.f32.mrf.mxu0
    %v286 = vadd.f32 %v114, %v285
    %v287 = vpop.f32.mrf.mxu0
    %v288 = vadd.f32 %v114, %v287
    %289 = vmatmul.bf16.gmra.mxu0 %v237
    %v290 = vpop.f32.mrf.mxu0
    %v291 = vadd.f32 %v114, %v290
    %v292 = vpop.f32.mrf.mxu0
    %v293 = vadd.f32 %v114, %v292
    %294 = vmatmul.bf16.gmra.mxu0 %v240
    %v295 = vpop.f32.mrf.mxu0
    %v296 = vadd.f32 %v114, %v295
    %v297 = vpop.f32.mrf.mxu0
    %v298 = vadd.f32 %v114, %v297
    %299 = vdwg.mxu0
    %300 = vmatpush.bf16.msra.mxu0 0
    %301 = vmatpush.bf16.msra.mxu0 0
    %302 = vmatpush.bf16.msra.mxu0 0
    %303 = vmatpush.bf16.msra.mxu0 0
    %304 = vmatpush.bf16.msra.mxu0 0
    %305 = vmatpush.bf16.msra.mxu0 0
    %306 = vmatpush.bf16.msra.mxu0 %v207
    %307 = vmatpush.bf16.msra.mxu0 %v199
    %308 = vmatmul.bf16.gmra.mxu0 %v231
    %v309 = vpop.f32.mrf.mxu0
    %v310 = vadd.f32 %v115, %v309
    %v311 = vpop.f32.mrf.mxu0
    %v312 = vadd.f32 %v115, %v311
    %313 = vmatmul.bf16.gmra.mxu0 %v234
    %v314 = vpop.f32.mrf.mxu0
    %v315 = vadd.f32 %v115, %v314
    %v316 = vpop.f32.mrf.mxu0
    %v317 = vadd.f32 %v115, %v316
    %318 = vmatmul.bf16.gmra.mxu0 %v237
    %v319 = vpop.f32.mrf.mxu0
    %v320 = vadd.f32 %v115, %v319
    %v321 = vpop.f32.mrf.mxu0
    %v322 = vadd.f32 %v115, %v321
    %323 = vmatmul.bf16.gmra.mxu0 %v240
    %v324 = vpop.f32.mrf.mxu0
    %v325 = vadd.f32 %v115, %v324
    %v326 = vpop.f32.mrf.mxu0
    %v327 = vadd.f32 %v115, %v326
    %328 = vdwg.mxu0
    %329 = vmatpush.bf16.msra.mxu0 0
    %330 = vmatpush.bf16.msra.mxu0 0
    %331 = vmatpush.bf16.msra.mxu0 0
    %332 = vmatpush.bf16.msra.mxu0 0
    %333 = vmatpush.bf16.msra.mxu0 0
    %334 = vmatpush.bf16.msra.mxu0 0
    %335 = vmatpush.bf16.msra.mxu0 %v208
    %336 = vmatpush.bf16.msra.mxu0 %v200
    %337 = vmatmul.bf16.gmra.mxu0 %v231
    %v338 = vpop.f32.mrf.mxu0
    %v339 = vadd.f32 %v116, %v338
    %v340 = vpop.f32.mrf.mxu0
    %v341 = vadd.f32 %v116, %v340
    %342 = vmatmul.bf16.gmra.mxu0 %v234
    %v343 = vpop.f32.mrf.mxu0
    %v344 = vadd.f32 %v116, %v343
    %v345 = vpop.f32.mrf.mxu0
    %v346 = vadd.f32 %v116, %v345
    %347 = vmatmul.bf16.gmra.mxu0 %v237
    %v348 = vpop.f32.mrf.mxu0
    %v349 = vadd.f32 %v116, %v348
    %v350 = vpop.f32.mrf.mxu0
    %v351 = vadd.f32 %v116, %v350
    %352 = vmatmul.bf16.gmra.mxu0 %v240
    %v353 = vpop.f32.mrf.mxu0
    %v354 = vadd.f32 %v116, %v353
    %v355 = vpop.f32.mrf.mxu0
    %v356 = vadd.f32 %v116, %v355
    %357 = vdwg.mxu0
    %358 = vmatpush.bf16.msra.mxu0 0
    %359 = vmatpush.bf16.msra.mxu0 0
    %360 = vmatpush.bf16.msra.mxu0 0
    %361 = vmatpush.bf16.msra.mxu0 0
    %362 = vmatpush.bf16.msra.mxu0 0
    %363 = vmatpush.bf16.msra.mxu0 0
    %364 = vmatpush.bf16.msra.mxu0 %v209
    %365 = vmatpush.bf16.msra.mxu0 %v201
    %366 = vmatmul.bf16.gmra.mxu0 %v231
    %v367 = vpop.f32.mrf.mxu0
    %v368 = vadd.f32 %v117, %v367
    %v369 = vpop.f32.mrf.mxu0
    %v370 = vadd.f32 %v117, %v369
    %371 = vmatmul.bf16.gmra.mxu0 %v234
    %v372 = vpop.f32.mrf.mxu0
    %v373 = vadd.f32 %v117, %v372
    %v374 = vpop.f32.mrf.mxu0
    %v375 = vadd.f32 %v117, %v374
    %376 = vmatmul.bf16.gmra.mxu0 %v237
    %v377 = vpop.f32.mrf.mxu0
    %v378 = vadd.f32 %v117, %v377
    %v379 = vpop.f32.mrf.mxu0
    %v380 = vadd.f32 %v117, %v379
    %381 = vmatmul.bf16.gmra.mxu0 %v240
    %v382 = vpop.f32.mrf.mxu0
    %v383 = vadd.f32 %v117, %v382
    %v384 = vpop.f32.mrf.mxu0
    %v385 = vadd.f32 %v117, %v384
    %386 = vdwg.mxu0
    %387 = vmatpush.bf16.msra.mxu0 0
    %388 = vmatpush.bf16.msra.mxu0 0
    %389 = vmatpush.bf16.msra.mxu0 0
    %390 = vmatpush.bf16.msra.mxu0 0
    %391 = vmatpush.bf16.msra.mxu0 0
    %392 = vmatpush.bf16.msra.mxu0 0
    %393 = vmatpush.bf16.msra.mxu0 %v210
    %394 = vmatpush.bf16.msra.mxu0 %v202
    %395 = vmatmul.bf16.gmra.mxu0 %v231
    %v396 = vpop.f32.mrf.mxu0
    %v397 = vadd.f32 %v118, %v396
    %v398 = vpop.f32.mrf.mxu0
    %v399 = vadd.f32 %v118, %v398
    %400 = vmatmul.bf16.gmra.mxu0 %v234
    %v401 = vpop.f32.mrf.mxu0
    %v402 = vadd.f32 %v118, %v401
    %v403 = vpop.f32.mrf.mxu0
    %v404 = vadd.f32 %v118, %v403
    %405 = vmatmul.bf16.gmra.mxu0 %v237
    %v406 = vpop.f32.mrf.mxu0
    %v407 = vadd.f32 %v118, %v406
    %v408 = vpop.f32.mrf.mxu0
    %v409 = vadd.f32 %v118, %v408
    %410 = vmatmul.bf16.gmra.mxu0 %v240
    %v411 = vpop.f32.mrf.mxu0
    %v412 = vadd.f32 %v118, %v411
    %v413 = vpop.f32.mrf.mxu0
    %v414 = vadd.f32 %v118, %v413
    %415 = vdwg.mxu0
    %416 = vmatpush.bf16.msra.mxu0 0
    %417 = vmatpush.bf16.msra.mxu0 0
    %418 = vmatpush.bf16.msra.mxu0 0
    %419 = vmatpush.bf16.msra.mxu0 0
    %420 = vmatpush.bf16.msra.mxu0 0
    %421 = vmatpush.bf16.msra.mxu0 0
    %422 = vmatpush.bf16.msra.mxu0 %v211
    %423 = vmatpush.bf16.msra.mxu0 %v203
    %424 = vmatmul.bf16.gmra.mxu0 %v231
    %v425 = vpop.f32.mrf.mxu0
    %v426 = vadd.f32 %v119, %v425
    %v427 = vpop.f32.mrf.mxu0
    %v428 = vadd.f32 %v119, %v427
    %429 = vmatmul.bf16.gmra.mxu0 %v234
    %v430 = vpop.f32.mrf.mxu0
    %v431 = vadd.f32 %v119, %v430
    %v432 = vpop.f32.mrf.mxu0
    %v433 = vadd.f32 %v119, %v432
    %434 = vmatmul.bf16.gmra.mxu0 %v237
    %v435 = vpop.f32.mrf.mxu0
    %v436 = vadd.f32 %v119, %v435
    %v437 = vpop.f32.mrf.mxu0
    %v438 = vadd.f32 %v119, %v437
    %439 = vmatmul.bf16.gmra.mxu0 %v240
    %v440 = vpop.f32.mrf.mxu0
    %v441 = vadd.f32 %v119, %v440
    %v442 = vpop.f32.mrf.mxu0
    %v443 = vadd.f32 %v119, %v442
    %444 = vdwg.mxu0
    %445 = vmatpush.bf16.msra.mxu0 0
    %446 = vmatpush.bf16.msra.mxu0 0
    %447 = vmatpush.bf16.msra.mxu0 0
    %448 = vmatpush.bf16.msra.mxu0 0
    %449 = vmatpush.bf16.msra.mxu0 0
    %450 = vmatpush.bf16.msra.mxu0 0
    %451 = vmatpush.bf16.msra.mxu0 %v212
    %452 = vmatpush.bf16.msra.mxu0 %v204
    %453 = vmatmul.bf16.gmra.mxu0 %v231
    %v454 = vpop.f32.mrf.mxu0
    %v455 = vadd.f32 %v120, %v454
    %v456 = vpop.f32.mrf.mxu0
    %v457 = vadd.f32 %v120, %v456
    %458 = vmatmul.bf16.gmra.mxu0 %v234
    %v459 = vpop.f32.mrf.mxu0
    %v460 = vadd.f32 %v120, %v459
    %v461 = vpop.f32.mrf.mxu0
    %v462 = vadd.f32 %v120, %v461
    %463 = vmatmul.bf16.gmra.mxu0 %v237
    %v464 = vpop.f32.mrf.mxu0
    %v465 = vadd.f32 %v120, %v464
    %v466 = vpop.f32.mrf.mxu0
    %v467 = vadd.f32 %v120, %v466
    %468 = vmatmul.bf16.gmra.mxu0 %v240
    %v469 = vpop.f32.mrf.mxu0
    %v470 = vadd.f32 %v120, %v469
    %v471 = vpop.f32.mrf.mxu0
    %v472 = vadd.f32 %v120, %v471
    %473 = vdwg.mxu0
    %474 = vst [vmem:[#allocation2] sm:$0xff] %v252
    %475 = vst [vmem:[#allocation2 + $0x8] sm:$0xff] %v281
    %476 = vst [vmem:[#allocation2 + $0x10] sm:$0xff] %v310
    %477 = vst [vmem:[#allocation2 + $0x18] sm:$0xff] %v339
    %478 = vst [vmem:[#allocation2 + $0x20] sm:$0xff] %v368
    %479 = vst [vmem:[#allocation2 + $0x28] sm:$0xff] %v397
    %480 = vst [vmem:[#allocation2 + $0x30] sm:$0xff] %v426
    %481 = vst [vmem:[#allocation2 + $0x38] sm:$0xff] %v455
    %482 = vst [vmem:[#allocation2 + $0x40] sm:$0xff] %v254
    %483 = vst [vmem:[#allocation2 + $0x48] sm:$0xff] %v283
    %484 = vst [vmem:[#allocation2 + $0x50] sm:$0xff] %v312
    %485 = vst [vmem:[#allocation2 + $0x58] sm:$0xff] %v341
    %486 = vst [vmem:[#allocation2 + $0x60] sm:$0xff] %v370
    %487 = vst [vmem:[#allocation2 + $0x68] sm:$0xff] %v399
    %488 = vst [vmem:[#allocation2 + $0x70] sm:$0xff] %v428
    %489 = vst [vmem:[#allocation2 + $0x78] sm:$0xff] %v457
    %490 = vst [vmem:[#allocation2 + $0x80] sm:$0xff] %v257
    %491 = vst [vmem:[#allocation2 + $0x88] sm:$0xff] %v286
    %492 = vst [vmem:[#allocation2 + $0x90] sm:$0xff] %v315
    %493 = vst [vmem:[#allocation2 + $0x98] sm:$0xff] %v344
    %494 = vst [vmem:[#allocation2 + $0xa0] sm:$0xff] %v373
    %495 = vst [vmem:[#allocation2 + $0xa8] sm:$0xff] %v402
    %496 = vst [vmem:[#allocation2 + $0xb0] sm:$0xff] %v431
    %497 = vst [vmem:[#allocation2 + $0xb8] sm:$0xff] %v460
    %498 = vst [vmem:[#allocation2 + $0xc0] sm:$0xff] %v259
    %499 = vst [vmem:[#allocation2 + $0xc8] sm:$0xff] %v288
    %500 = vst [vmem:[#allocation2 + $0xd0] sm:$0xff] %v317
    %501 = vst [vmem:[#allocation2 + $0xd8] sm:$0xff] %v346
    %502 = vst [vmem:[#allocation2 + $0xe0] sm:$0xff] %v375
    %503 = vst [vmem:[#allocation2 + $0xe8] sm:$0xff] %v404
    %504 = vst [vmem:[#allocation2 + $0xf0] sm:$0xff] %v433
    %505 = vst [vmem:[#allocation2 + $0xf8] sm:$0xff] %v462
    %506 = vst [vmem:[#allocation2 + $0x100] sm:$0xff] %v262
    %507 = vst [vmem:[#allocation2 + $0x108] sm:$0xff] %v291
    %508 = vst [vmem:[#allocation2 + $0x110] sm:$0xff] %v320
    %509 = vst [vmem:[#allocation2 + $0x118] sm:$0xff] %v349
    %510 = vst [vmem:[#allocation2 + $0x120] sm:$0xff] %v378
    %511 = vst [vmem:[#allocation2 + $0x128] sm:$0xff] %v407
    %512 = vst [vmem:[#allocation2 + $0x130] sm:$0xff] %v436
    %513 = vst [vmem:[#allocation2 + $0x138] sm:$0xff] %v465
    %514 = vst [vmem:[#allocation2 + $0x140] sm:$0xff] %v264
    %515 = vst [vmem:[#allocation2 + $0x148] sm:$0xff] %v293
    %516 = vst [vmem:[#allocation2 + $0x150] sm:$0xff] %v322
    %517 = vst [vmem:[#allocation2 + $0x158] sm:$0xff] %v351
    %518 = vst [vmem:[#allocation2 + $0x160] sm:$0xff] %v380
    %519 = vst [vmem:[#allocation2 + $0x168] sm:$0xff] %v409
    %520 = vst [vmem:[#allocation2 + $0x170] sm:$0xff] %v438
    %521 = vst [vmem:[#allocation2 + $0x178] sm:$0xff] %v467
    %522 = vst [vmem:[#allocation2 + $0x180] sm:$0xff] %v267
    %523 = vst [vmem:[#allocation2 + $0x188] sm:$0xff] %v296
    %524 = vst [vmem:[#allocation2 + $0x190] sm:$0xff] %v325
    %525 = vst [vmem:[#allocation2 + $0x198] sm:$0xff] %v354
    %526 = vst [vmem:[#allocation2 + $0x1a0] sm:$0xff] %v383
    %527 = vst [vmem:[#allocation2 + $0x1a8] sm:$0xff] %v412
    %528 = vst [vmem:[#allocation2 + $0x1b0] sm:$0xff] %v441
    %529 = vst [vmem:[#allocation2 + $0x1b8] sm:$0xff] %v470
    %530 = vst [vmem:[#allocation2 + $0x1c0] sm:$0xff] %v269
    %531 = vst [vmem:[#allocation2 + $0x1c8] sm:$0xff] %v298
    %532 = vst [vmem:[#allocation2 + $0x1d0] sm:$0xff] %v327
    %533 = vst [vmem:[#allocation2 + $0x1d8] sm:$0xff] %v356
    %534 = vst [vmem:[#allocation2 + $0x1e0] sm:$0xff] %v385
    %535 = vst [vmem:[#allocation2 + $0x1e8] sm:$0xff] %v414
    %536 = vst [vmem:[#allocation2 + $0x1f0] sm:$0xff] %v443
    %537 = vst [vmem:[#allocation2 + $0x1f8] sm:$0xff] %v472
    %v538 = vld [vmem:[#allocation4] sm:$0xff]
    %v539 = vld [vmem:[#allocation4 + $0x8] sm:$0xff]
    %v540 = vld [vmem:[#allocation4 + $0x10] sm:$0xff]
    %v541 = vld [vmem:[#allocation4 + $0x18] sm:$0xff]
    %v542 = vld [vmem:[#allocation4 + $0x20] sm:$0xff]
    %v543 = vld [vmem:[#allocation4 + $0x28] sm:$0xff]
    %v544 = vld [vmem:[#allocation4 + $0x30] sm:$0xff]
    %v545 = vld [vmem:[#allocation4 + $0x38] sm:$0xff]
    %v546 = vld [vmem:[#allocation4 + $0x40] sm:$0xff]
    %v547 = vld [vmem:[#allocation4 + $0x48] sm:$0xff]
    %v548 = vld [vmem:[#allocation4 + $0x50] sm:$0xff]
    %v549 = vld [vmem:[#allocation4 + $0x58] sm:$0xff]
    %v550 = vld [vmem:[#allocation4 + $0x60] sm:$0xff]
    %v551 = vld [vmem:[#allocation4 + $0x68] sm:$0xff]
    %v552 = vld [vmem:[#allocation4 + $0x70] sm:$0xff]
    %v553 = vld [vmem:[#allocation4 + $0x78] sm:$0xff]
    %v554 = vld [vmem:[#allocation4 + $0x80] sm:$0xff]
    %v555 = vld [vmem:[#allocation4 + $0x88] sm:$0xff]
    %v556 = vld [vmem:[#allocation4 + $0x90] sm:$0xff]
    %v557 = vld [vmem:[#allocation4 + $0x98] sm:$0xff]
    %v558 = vld [vmem:[#allocation4 + $0xa0] sm:$0xff]
    %v559 = vld [vmem:[#allocation4 + $0xa8] sm:$0xff]
    %v560 = vld [vmem:[#allocation4 + $0xb0] sm:$0xff]
    %v561 = vld [vmem:[#allocation4 + $0xb8] sm:$0xff]
    %v562 = vld [vmem:[#allocation4 + $0xc0] sm:$0xff]
    %v563 = vld [vmem:[#allocation4 + $0xc8] sm:$0xff]
    %v564 = vld [vmem:[#allocation4 + $0xd0] sm:$0xff]
    %v565 = vld [vmem:[#allocation4 + $0xd8] sm:$0xff]
    %v566 = vld [vmem:[#allocation4 + $0xe0] sm:$0xff]
    %v567 = vld [vmem:[#allocation4 + $0xe8] sm:$0xff]
    %v568 = vld [vmem:[#allocation4 + $0xf0] sm:$0xff]
    %v569 = vld [vmem:[#allocation4 + $0xf8] sm:$0xff]
    %v570 = vld [vmem:[#allocation4 + $0x100] sm:$0xff]
    %v571 = vld [vmem:[#allocation4 + $0x108] sm:$0xff]
    %v572 = vld [vmem:[#allocation4 + $0x110] sm:$0xff]
    %v573 = vld [vmem:[#allocation4 + $0x118] sm:$0xff]
    %v574 = vld [vmem:[#allocation4 + $0x120] sm:$0xff]
    %v575 = vld [vmem:[#allocation4 + $0x128] sm:$0xff]
    %v576 = vld [vmem:[#allocation4 + $0x130] sm:$0xff]
    %v577 = vld [vmem:[#allocation4 + $0x138] sm:$0xff]
    %v578 = vld [vmem:[#allocation4 + $0x140] sm:$0xff]
    %v579 = vld [vmem:[#allocation4 + $0x148] sm:$0xff]
    %v580 = vld [vmem:[#allocation4 + $0x150] sm:$0xff]
    %v581 = vld [vmem:[#allocation4 + $0x158] sm:$0xff]
    %v582 = vld [vmem:[#allocation4 + $0x160] sm:$0xff]
    %v583 = vld [vmem:[#allocation4 + $0x168] sm:$0xff]
    %v584 = vld [vmem:[#allocation4 + $0x170] sm:$0xff]
    %v585 = vld [vmem:[#allocation4 + $0x178] sm:$0xff]
    %v586 = vld [vmem:[#allocation4 + $0x180] sm:$0xff]
    %v587 = vld [vmem:[#allocation4 + $0x188] sm:$0xff]
    %v588 = vld [vmem:[#allocation4 + $0x190] sm:$0xff]
    %v589 = vld [vmem:[#allocation4 + $0x198] sm:$0xff]
    %v590 = vld [vmem:[#allocation4 + $0x1a0] sm:$0xff]
    %v591 = vld [vmem:[#allocation4 + $0x1a8] sm:$0xff]
    %v592 = vld [vmem:[#allocation4 + $0x1b0] sm:$0xff]
    %v593 = vld [vmem:[#allocation4 + $0x1b8] sm:$0xff]
    %v594 = vld [vmem:[#allocation4 + $0x1c0] sm:$0xff]
    %v595 = vld [vmem:[#allocation4 + $0x1c8] sm:$0xff]
    %v596 = vld [vmem:[#allocation4 + $0x1d0] sm:$0xff]
    %v597 = vld [vmem:[#allocation4 + $0x1d8] sm:$0xff]
    %v598 = vld [vmem:[#allocation4 + $0x1e0] sm:$0xff]
    %v599 = vld [vmem:[#allocation4 + $0x1e8] sm:$0xff]
    %v600 = vld [vmem:[#allocation4 + $0x1f0] sm:$0xff]
    %v601 = vld [vmem:[#allocation4 + $0x1f8] sm:$0xff]
    %v602 = vld [vmem:[#allocation4 + $0x200] sm:$0xff]
    %v603 = vld [vmem:[#allocation4 + $0x208] sm:$0xff]
    %v604 = vld [vmem:[#allocation4 + $0x210] sm:$0xff]
    %v605 = vld [vmem:[#allocation4 + $0x218] sm:$0xff]
    %v606 = vld [vmem:[#allocation4 + $0x220] sm:$0xff]
    %v607 = vld [vmem:[#allocation4 + $0x228] sm:$0xff]
    %v608 = vld [vmem:[#allocation4 + $0x230] sm:$0xff]
    %v609 = vld [vmem:[#allocation4 + $0x238] sm:$0xff]
    %v610 = vld [vmem:[#allocation4 + $0x240] sm:$0xff]
    %v611 = vld [vmem:[#allocation4 + $0x248] sm:$0xff]
    %v612 = vld [vmem:[#allocation4 + $0x250] sm:$0xff]
    %v613 = vld [vmem:[#allocation4 + $0x258] sm:$0xff]
    %v614 = vld [vmem:[#allocation4 + $0x260] sm:$0xff]
    %v615 = vld [vmem:[#allocation4 + $0x268] sm:$0xff]
    %v616 = vld [vmem:[#allocation4 + $0x270] sm:$0xff]
    %v617 = vld [vmem:[#allocation4 + $0x278] sm:$0xff]
    %v618 = vld [vmem:[#allocation4 + $0x280] sm:$0xff]
    %v619 = vld [vmem:[#allocation4 + $0x288] sm:$0xff]
    %v620 = vld [vmem:[#allocation4 + $0x290] sm:$0xff]
    %v621 = vld [vmem:[#allocation4 + $0x298] sm:$0xff]
    %v622 = vld [vmem:[#allocation4 + $0x2a0] sm:$0xff]
    %v623 = vld [vmem:[#allocation4 + $0x2a8] sm:$0xff]
    %v624 = vld [vmem:[#allocation4 + $0x2b0] sm:$0xff]
    %v625 = vld [vmem:[#allocation4 + $0x2b8] sm:$0xff]
    %v626 = vld [vmem:[#allocation4 + $0x2c0] sm:$0xff]
    %v627 = vld [vmem:[#allocation4 + $0x2c8] sm:$0xff]
    %v628 = vld [vmem:[#allocation4 + $0x2d0] sm:$0xff]
    %v629 = vld [vmem:[#allocation4 + $0x2d8] sm:$0xff]
    %v630 = vld [vmem:[#allocation4 + $0x2e0] sm:$0xff]
    %v631 = vld [vmem:[#allocation4 + $0x2e8] sm:$0xff]
    %v632 = vld [vmem:[#allocation4 + $0x2f0] sm:$0xff]
    %v633 = vld [vmem:[#allocation4 + $0x2f8] sm:$0xff]
    %v634 = vld [vmem:[#allocation4 + $0x300] sm:$0xff]
    %v635 = vld [vmem:[#allocation4 + $0x308] sm:$0xff]
    %v636 = vld [vmem:[#allocation4 + $0x310] sm:$0xff]
    %v637 = vld [vmem:[#allocation4 + $0x318] sm:$0xff]
    %v638 = vld [vmem:[#allocation4 + $0x320] sm:$0xff]
    %v639 = vld [vmem:[#allocation4 + $0x328] sm:$0xff]
    %v640 = vld [vmem:[#allocation4 + $0x330] sm:$0xff]
    %v641 = vld [vmem:[#allocation4 + $0x338] sm:$0xff]
    %v642 = vld [vmem:[#allocation4 + $0x340] sm:$0xff]
    %v643 = vld [vmem:[#allocation4 + $0x348] sm:$0xff]
    %v644 = vld [vmem:[#allocation4 + $0x350] sm:$0xff]
    %v645 = vld [vmem:[#allocation4 + $0x358] sm:$0xff]
    %v646 = vld [vmem:[#allocation4 + $0x360] sm:$0xff]
    %v647 = vld [vmem:[#allocation4 + $0x368] sm:$0xff]
    %v648 = vld [vmem:[#allocation4 + $0x370] sm:$0xff]
    %v649 = vld [vmem:[#allocation4 + $0x378] sm:$0xff]
    %v650 = vld [vmem:[#allocation4 + $0x380] sm:$0xff]
    %v651 = vld [vmem:[#allocation4 + $0x388] sm:$0xff]
    %v652 = vld [vmem:[#allocation4 + $0x390] sm:$0xff]
    %v653 = vld [vmem:[#allocation4 + $0x398] sm:$0xff]
    %v654 = vld [vmem:[#allocation4 + $0x3a0] sm:$0xff]
    %v655 = vld [vmem:[#allocation4 + $0x3a8] sm:$0xff]
    %v656 = vld [vmem:[#allocation4 + $0x3b0] sm:$0xff]
    %v657 = vld [vmem:[#allocation4 + $0x3b8] sm:$0xff]
    %v658 = vld [vmem:[#allocation4 + $0x3c0] sm:$0xff]
    %v659 = vld [vmem:[#allocation4 + $0x3c8] sm:$0xff]
    %v660 = vld [vmem:[#allocation4 + $0x3d0] sm:$0xff]
    %v661 = vld [vmem:[#allocation4 + $0x3d8] sm:$0xff]
    %v662 = vld [vmem:[#allocation4 + $0x3e0] sm:$0xff]
    %v663 = vld [vmem:[#allocation4 + $0x3e8] sm:$0xff]
    %v664 = vld [vmem:[#allocation4 + $0x3f0] sm:$0xff]
    %v665 = vld [vmem:[#allocation4 + $0x3f8] sm:$0xff]
    %v794 = vunpack.c.l.b16 %v538
    %v795 = vunpack.c.h.b16 %v538
    %v796 = vunpack.c.l.b16 %v539
    %v797 = vunpack.c.h.b16 %v539
    %v798 = vunpack.c.l.b16 %v540
    %v799 = vunpack.c.h.b16 %v540
    %v800 = vunpack.c.l.b16 %v541
    %v801 = vunpack.c.h.b16 %v541
    %v802 = vunpack.c.l.b16 %v542
    %v803 = vunpack.c.h.b16 %v542
    %v804 = vunpack.c.l.b16 %v543
    %v805 = vunpack.c.h.b16 %v543
    %v806 = vunpack.c.l.b16 %v544
    %v807 = vunpack.c.h.b16 %v544
    %v808 = vunpack.c.l.b16 %v545
    %v809 = vunpack.c.h.b16 %v545
    %v810 = vunpack.c.l.b16 %v546
    %v811 = vunpack.c.h.b16 %v546
    %v812 = vunpack.c.l.b16 %v547
    %v813 = vunpack.c.h.b16 %v547
    %v814 = vunpack.c.l.b16 %v548
    %v815 = vunpack.c.h.b16 %v548
    %v816 = vunpack.c.l.b16 %v549
    %v817 = vunpack.c.h.b16 %v549
    %v818 = vunpack.c.l.b16 %v550
    %v819 = vunpack.c.h.b16 %v550
    %v820 = vunpack.c.l.b16 %v551
    %v821 = vunpack.c.h.b16 %v551
    %v822 = vunpack.c.l.b16 %v552
    %v823 = vunpack.c.h.b16 %v552
    %v824 = vunpack.c.l.b16 %v553
    %v825 = vunpack.c.h.b16 %v553
    %v826 = vunpack.c.l.b16 %v554
    %v827 = vunpack.c.h.b16 %v554
    %v828 = vunpack.c.l.b16 %v555
    %v829 = vunpack.c.h.b16 %v555
    %v830 = vunpack.c.l.b16 %v556
    %v831 = vunpack.c.h.b16 %v556
    %v832 = vunpack.c.l.b16 %v557
    %v833 = vunpack.c.h.b16 %v557
    %v834 = vunpack.c.l.b16 %v558
    %v835 = vunpack.c.h.b16 %v558
    %v836 = vunpack.c.l.b16 %v559
    %v837 = vunpack.c.h.b16 %v559
    %v838 = vunpack.c.l.b16 %v560
    %v839 = vunpack.c.h.b16 %v560
    %v840 = vunpack.c.l.b16 %v561
    %v841 = vunpack.c.h.b16 %v561
    %v842 = vunpack.c.l.b16 %v562
    %v843 = vunpack.c.h.b16 %v562
    %v844 = vunpack.c.l.b16 %v563
    %v845 = vunpack.c.h.b16 %v563
    %v846 = vunpack.c.l.b16 %v564
    %v847 = vunpack.c.h.b16 %v564
    %v848 = vunpack.c.l.b16 %v565
    %v849 = vunpack.c.h.b16 %v565
    %v850 = vunpack.c.l.b16 %v566
    %v851 = vunpack.c.h.b16 %v566
    %v852 = vunpack.c.l.b16 %v567
    %v853 = vunpack.c.h.b16 %v567
    %v854 = vunpack.c.l.b16 %v568
    %v855 = vunpack.c.h.b16 %v568
    %v856 = vunpack.c.l.b16 %v569
    %v857 = vunpack.c.h.b16 %v569
    %v858 = vunpack.c.l.b16 %v570
    %v859 = vunpack.c.h.b16 %v570
    %v860 = vunpack.c.l.b16 %v571
    %v861 = vunpack.c.h.b16 %v571
    %v862 = vunpack.c.l.b16 %v572
    %v863 = vunpack.c.h.b16 %v572
    %v864 = vunpack.c.l.b16 %v573
    %v865 = vunpack.c.h.b16 %v573
    %v866 = vunpack.c.l.b16 %v574
    %v867 = vunpack.c.h.b16 %v574
    %v868 = vunpack.c.l.b16 %v575
    %v869 = vunpack.c.h.b16 %v575
    %v870 = vunpack.c.l.b16 %v576
    %v871 = vunpack.c.h.b16 %v576
    %v872 = vunpack.c.l.b16 %v577
    %v873 = vunpack.c.h.b16 %v577
    %v874 = vunpack.c.l.b16 %v578
    %v875 = vunpack.c.h.b16 %v578
    %v876 = vunpack.c.l.b16 %v579
    %v877 = vunpack.c.h.b16 %v579
    %v878 = vunpack.c.l.b16 %v580
    %v879 = vunpack.c.h.b16 %v580
    %v880 = vunpack.c.l.b16 %v581
    %v881 = vunpack.c.h.b16 %v581
    %v882 = vunpack.c.l.b16 %v582
    %v883 = vunpack.c.h.b16 %v582
    %v884 = vunpack.c.l.b16 %v583
    %v885 = vunpack.c.h.b16 %v583
    %v886 = vunpack.c.l.b16 %v584
    %v887 = vunpack.c.h.b16 %v584
    %v888 = vunpack.c.l.b16 %v585
    %v889 = vunpack.c.h.b16 %v585
    %v890 = vunpack.c.l.b16 %v586
    %v891 = vunpack.c.h.b16 %v586
    %v892 = vunpack.c.l.b16 %v587
    %v893 = vunpack.c.h.b16 %v587
    %v894 = vunpack.c.l.b16 %v588
    %v895 = vunpack.c.h.b16 %v588
    %v896 = vunpack.c.l.b16 %v589
    %v897 = vunpack.c.h.b16 %v589
    %v898 = vunpack.c.l.b16 %v590
    %v899 = vunpack.c.h.b16 %v590
    %v900 = vunpack.c.l.b16 %v591
    %v901 = vunpack.c.h.b16 %v591
    %v902 = vunpack.c.l.b16 %v592
    %v903 = vunpack.c.h.b16 %v592
    %v904 = vunpack.c.l.b16 %v593
    %v905 = vunpack.c.h.b16 %v593
    %v906 = vunpack.c.l.b16 %v594
    %v907 = vunpack.c.h.b16 %v594
    %v908 = vunpack.c.l.b16 %v595
    %v909 = vunpack.c.h.b16 %v595
    %v910 = vunpack.c.l.b16 %v596
    %v911 = vunpack.c.h.b16 %v596
    %v912 = vunpack.c.l.b16 %v597
    %v913 = vunpack.c.h.b16 %v597
    %v914 = vunpack.c.l.b16 %v598
    %v915 = vunpack.c.h.b16 %v598
    %v916 = vunpack.c.l.b16 %v599
    %v917 = vunpack.c.h.b16 %v599
    %v918 = vunpack.c.l.b16 %v600
    %v919 = vunpack.c.h.b16 %v600
    %v920 = vunpack.c.l.b16 %v601
    %v921 = vunpack.c.h.b16 %v601
    %v922 = vunpack.c.l.b16 %v602
    %v923 = vunpack.c.h.b16 %v602
    %v924 = vunpack.c.l.b16 %v603
    %v925 = vunpack.c.h.b16 %v603
    %v926 = vunpack.c.l.b16 %v604
    %v927 = vunpack.c.h.b16 %v604
    %v928 = vunpack.c.l.b16 %v605
    %v929 = vunpack.c.h.b16 %v605
    %v930 = vunpack.c.l.b16 %v606
    %v931 = vunpack.c.h.b16 %v606
    %v932 = vunpack.c.l.b16 %v607
    %v933 = vunpack.c.h.b16 %v607
    %v934 = vunpack.c.l.b16 %v608
    %v935 = vunpack.c.h.b16 %v608
    %v936 = vunpack.c.l.b16 %v609
    %v937 = vunpack.c.h.b16 %v609
    %v938 = vunpack.c.l.b16 %v610
    %v939 = vunpack.c.h.b16 %v610
    %v940 = vunpack.c.l.b16 %v611
    %v941 = vunpack.c.h.b16 %v611
    %v942 = vunpack.c.l.b16 %v612
    %v943 = vunpack.c.h.b16 %v612
    %v944 = vunpack.c.l.b16 %v613
    %v945 = vunpack.c.h.b16 %v613
    %v946 = vunpack.c.l.b16 %v614
    %v947 = vunpack.c.h.b16 %v614
    %v948 = vunpack.c.l.b16 %v615
    %v949 = vunpack.c.h.b16 %v615
    %v950 = vunpack.c.l.b16 %v616
    %v951 = vunpack.c.h.b16 %v616
    %v952 = vunpack.c.l.b16 %v617
    %v953 = vunpack.c.h.b16 %v617
    %v954 = vunpack.c.l.b16 %v618
    %v955 = vunpack.c.h.b16 %v618
    %v956 = vunpack.c.l.b16 %v619
    %v957 = vunpack.c.h.b16 %v619
    %v958 = vunpack.c.l.b16 %v620
    %v959 = vunpack.c.h.b16 %v620
    %v960 = vunpack.c.l.b16 %v621
    %v961 = vunpack.c.h.b16 %v621
    %v962 = vunpack.c.l.b16 %v622
    %v963 = vunpack.c.h.b16 %v622
    %v964 = vunpack.c.l.b16 %v623
    %v965 = vunpack.c.h.b16 %v623
    %v966 = vunpack.c.l.b16 %v624
    %v967 = vunpack.c.h.b16 %v624
    %v968 = vunpack.c.l.b16 %v625
    %v969 = vunpack.c.h.b16 %v625
    %v970 = vunpack.c.l.b16 %v626
    %v971 = vunpack.c.h.b16 %v626
    %v972 = vunpack.c.l.b16 %v627
    %v973 = vunpack.c.h.b16 %v627
    %v974 = vunpack.c.l.b16 %v628
    %v975 = vunpack.c.h.b16 %v628
    %v976 = vunpack.c.l.b16 %v629
    %v977 = vunpack.c.h.b16 %v629
    %v978 = vunpack.c.l.b16 %v630
    %v979 = vunpack.c.h.b16 %v630
    %v980 = vunpack.c.l.b16 %v631
    %v981 = vunpack.c.h.b16 %v631
    %v982 = vunpack.c.l.b16 %v632
    %v983 = vunpack.c.h.b16 %v632
    %v984 = vunpack.c.l.b16 %v633
    %v985 = vunpack.c.h.b16 %v633
    %v986 = vunpack.c.l.b16 %v634
    %v987 = vunpack.c.h.b16 %v634
    %v988 = vunpack.c.l.b16 %v635
    %v989 = vunpack.c.h.b16 %v635
    %v990 = vunpack.c.l.b16 %v636
    %v991 = vunpack.c.h.b16 %v636
    %v992 = vunpack.c.l.b16 %v637
    %v993 = vunpack.c.h.b16 %v637
    %v994 = vunpack.c.l.b16 %v638
    %v995 = vunpack.c.h.b16 %v638
    %v996 = vunpack.c.l.b16 %v639
    %v997 = vunpack.c.h.b16 %v639
    %v998 = vunpack.c.l.b16 %v640
    %v999 = vunpack.c.h.b16 %v640
    %v1000 = vunpack.c.l.b16 %v641
    %v1001 = vunpack.c.h.b16 %v641
    %v1002 = vunpack.c.l.b16 %v642
    %v1003 = vunpack.c.h.b16 %v642
    %v1004 = vunpack.c.l.b16 %v643
    %v1005 = vunpack.c.h.b16 %v643
    %v1006 = vunpack.c.l.b16 %v644
    %v1007 = vunpack.c.h.b16 %v644
    %v1008 = vunpack.c.l.b16 %v645
    %v1009 = vunpack.c.h.b16 %v645
    %v1010 = vunpack.c.l.b16 %v646
    %v1011 = vunpack.c.h.b16 %v646
    %v1012 = vunpack.c.l.b16 %v647
    %v1013 = vunpack.c.h.b16 %v647
    %v1014 = vunpack.c.l.b16 %v648
    %v1015 = vunpack.c.h.b16 %v648
    %v1016 = vunpack.c.l.b16 %v649
    %v1017 = vunpack.c.h.b16 %v649
    %v1018 = vunpack.c.l.b16 %v650
    %v1019 = vunpack.c.h.b16 %v650
    %v1020 = vunpack.c.l.b16 %v651
    %v1021 = vunpack.c.h.b16 %v651
    %v1022 = vunpack.c.l.b16 %v652
    %v1023 = vunpack.c.h.b16 %v652
    %v1024 = vunpack.c.l.b16 %v653
    %v1025 = vunpack.c.h.b16 %v653
    %v1026 = vunpack.c.l.b16 %v654
    %v1027 = vunpack.c.h.b16 %v654
    %v1028 = vunpack.c.l.b16 %v655
    %v1029 = vunpack.c.h.b16 %v655
    %v1030 = vunpack.c.l.b16 %v656
    %v1031 = vunpack.c.h.b16 %v656
    %v1032 = vunpack.c.l.b16 %v657
    %v1033 = vunpack.c.h.b16 %v657
    %v1034 = vunpack.c.l.b16 %v658
    %v1035 = vunpack.c.h.b16 %v658
    %v1036 = vunpack.c.l.b16 %v659
    %v1037 = vunpack.c.h.b16 %v659
    %v1038 = vunpack.c.l.b16 %v660
    %v1039 = vunpack.c.h.b16 %v660
    %v1040 = vunpack.c.l.b16 %v661
    %v1041 = vunpack.c.h.b16 %v661
    %v1042 = vunpack.c.l.b16 %v662
    %v1043 = vunpack.c.h.b16 %v662
    %v1044 = vunpack.c.l.b16 %v663
    %v1045 = vunpack.c.h.b16 %v663
    %v1046 = vunpack.c.l.b16 %v664
    %v1047 = vunpack.c.h.b16 %v664
    %v1048 = vunpack.c.l.b16 %v665
    %v1049 = vunpack.c.h.b16 %v665
    %v1050 = vpack.c.b16 %v802, %v794
    %v1051 = vpack.c.b16 %v803, %v795
    %v1052 = vpack.c.b16 %v804, %v796
    %v1053 = vpack.c.b16 %v805, %v797
    %v1054 = vpack.c.b16 %v806, %v798
    %v1055 = vpack.c.b16 %v807, %v799
    %v1056 = vpack.c.b16 %v808, %v800
    %v1057 = vpack.c.b16 %v809, %v801
    %v1058 = vpack.c.b16 %v818, %v810
    %v1059 = vpack.c.b16 %v819, %v811
    %v1060 = vpack.c.b16 %v820, %v812
    %v1061 = vpack.c.b16 %v821, %v813
    %v1062 = vpack.c.b16 %v822, %v814
    %v1063 = vpack.c.b16 %v823, %v815
    %v1064 = vpack.c.b16 %v824, %v816
    %v1065 = vpack.c.b16 %v825, %v817
    %v1066 = vpack.c.b16 %v834, %v826
    %v1067 = vpack.c.b16 %v835, %v827
    %v1068 = vpack.c.b16 %v836, %v828
    %v1069 = vpack.c.b16 %v837, %v829
    %v1070 = vpack.c.b16 %v838, %v830
    %v1071 = vpack.c.b16 %v839, %v831
    %v1072 = vpack.c.b16 %v840, %v832
    %v1073 = vpack.c.b16 %v841, %v833
    %v1074 = vpack.c.b16 %v850, %v842
    %v1075 = vpack.c.b16 %v851, %v843
    %v1076 = vpack.c.b16 %v852, %v844
    %v1077 = vpack.c.b16 %v853, %v845
    %v1078 = vpack.c.b16 %v854, %v846
    %v1079 = vpack.c.b16 %v855, %v847
    %v1080 = vpack.c.b16 %v856, %v848
    %v1081 = vpack.c.b16 %v857, %v849
    %v1082 = vpack.c.b16 %v866, %v858
    %v1083 = vpack.c.b16 %v867, %v859
    %v1084 = vpack.c.b16 %v868, %v860
    %v1085 = vpack.c.b16 %v869, %v861
    %v1086 = vpack.c.b16 %v870, %v862
    %v1087 = vpack.c.b16 %v871, %v863
    %v1088 = vpack.c.b16 %v872, %v864
    %v1089 = vpack.c.b16 %v873, %v865
    %v1090 = vpack.c.b16 %v882, %v874
    %v1091 = vpack.c.b16 %v883, %v875
    %v1092 = vpack.c.b16 %v884, %v876
    %v1093 = vpack.c.b16 %v885, %v877
    %v1094 = vpack.c.b16 %v886, %v878
    %v1095 = vpack.c.b16 %v887, %v879
    %v1096 = vpack.c.b16 %v888, %v880
    %v1097 = vpack.c.b16 %v889, %v881
    %v1098 = vpack.c.b16 %v898, %v890
    %v1099 = vpack.c.b16 %v899, %v891
    %v1100 = vpack.c.b16 %v900, %v892
    %v1101 = vpack.c.b16 %v901, %v893
    %v1102 = vpack.c.b16 %v902, %v894
    %v1103 = vpack.c.b16 %v903, %v895
    %v1104 = vpack.c.b16 %v904, %v896
    %v1105 = vpack.c.b16 %v905, %v897
    %v1106 = vpack.c.b16 %v914, %v906
    %v1107 = vpack.c.b16 %v915, %v907
    %v1108 = vpack.c.b16 %v916, %v908
    %v1109 = vpack.c.b16 %v917, %v909
    %v1110 = vpack.c.b16 %v918, %v910
    %v1111 = vpack.c.b16 %v919, %v911
    %v1112 = vpack.c.b16 %v920, %v912
    %v1113 = vpack.c.b16 %v921, %v913
    %v1114 = vpack.c.b16 %v930, %v922
    %v1115 = vpack.c.b16 %v931, %v923
    %v1116 = vpack.c.b16 %v932, %v924
    %v1117 = vpack.c.b16 %v933, %v925
    %v1118 = vpack.c.b16 %v934, %v926
    %v1119 = vpack.c.b16 %v935, %v927
    %v1120 = vpack.c.b16 %v936, %v928
    %v1121 = vpack.c.b16 %v937, %v929
    %v1122 = vpack.c.b16 %v946, %v938
    %v1123 = vpack.c.b16 %v947, %v939
    %v1124 = vpack.c.b16 %v948, %v940
    %v1125 = vpack.c.b16 %v949, %v941
    %v1126 = vpack.c.b16 %v950, %v942
    %v1127 = vpack.c.b16 %v951, %v943
    %v1128 = vpack.c.b16 %v952, %v944
    %v1129 = vpack.c.b16 %v953, %v945
    %v1130 = vpack.c.b16 %v962, %v954
    %v1131 = vpack.c.b16 %v963, %v955
    %v1132 = vpack.c.b16 %v964, %v956
    %v1133 = vpack.c.b16 %v965, %v957
    %v1134 = vpack.c.b16 %v966, %v958
    %v1135 = vpack.c.b16 %v967, %v959
    %v1136 = vpack.c.b16 %v968, %v960
    %v1137 = vpack.c.b16 %v969, %v961
    %v1138 = vpack.c.b16 %v978, %v970
    %v1139 = vpack.c.b16 %v979, %v971
    %v1140 = vpack.c.b16 %v980, %v972
    %v1141 = vpack.c.b16 %v981, %v973
    %v1142 = vpack.c.b16 %v982, %v974
    %v1143 = vpack.c.b16 %v983, %v975
    %v1144 = vpack.c.b16 %v984, %v976
    %v1145 = vpack.c.b16 %v985, %v977
    %v1146 = vpack.c.b16 %v994, %v986
    %v1147 = vpack.c.b16 %v995, %v987
    %v1148 = vpack.c.b16 %v996, %v988
    %v1149 = vpack.c.b16 %v997, %v989
    %v1150 = vpack.c.b16 %v998, %v990
    %v1151 = vpack.c.b16 %v999, %v991
    %v1152 = vpack.c.b16 %v1000, %v992
    %v1153 = vpack.c.b16 %v1001, %v993
    %v1154 = vpack.c.b16 %v1010, %v1002
    %v1155 = vpack.c.b16 %v1011, %v1003
    %v1156 = vpack.c.b16 %v1012, %v1004
    %v1157 = vpack.c.b16 %v1013, %v1005
    %v1158 = vpack.c.b16 %v1014, %v1006
    %v1159 = vpack.c.b16 %v1015, %v1007
    %v1160 = vpack.c.b16 %v1016, %v1008
    %v1161 = vpack.c.b16 %v1017, %v1009
    %v1162 = vpack.c.b16 %v1026, %v1018
    %v1163 = vpack.c.b16 %v1027, %v1019
    %v1164 = vpack.c.b16 %v1028, %v1020
    %v1165 = vpack.c.b16 %v1029, %v1021
    %v1166 = vpack.c.b16 %v1030, %v1022
    %v1167 = vpack.c.b16 %v1031, %v1023
    %v1168 = vpack.c.b16 %v1032, %v1024
    %v1169 = vpack.c.b16 %v1033, %v1025
    %v1170 = vpack.c.b16 %v1042, %v1034
    %v1171 = vpack.c.b16 %v1043, %v1035
    %v1172 = vpack.c.b16 %v1044, %v1036
    %v1173 = vpack.c.b16 %v1045, %v1037
    %v1174 = vpack.c.b16 %v1046, %v1038
    %v1175 = vpack.c.b16 %v1047, %v1039
    %v1176 = vpack.c.b16 %v1048, %v1040
    %v1177 = vpack.c.b16 %v1049, %v1041
    %1306 = vmatpush.bf16.msra.mxu0 %v1106
    %1307 = vmatpush.bf16.msra.mxu0 %v1098
    %1308 = vmatpush.bf16.msra.mxu0 %v1090
    %1309 = vmatpush.bf16.msra.mxu0 %v1082
    %1310 = vmatpush.bf16.msra.mxu0 %v1074
    %1311 = vmatpush.bf16.msra.mxu0 %v1066
    %1312 = vmatpush.bf16.msra.mxu0 %v1058
    %1313 = vmatpush.bf16.msra.mxu0 %v1050
    %1314 = vmatmul.bf16.gmra.mxu0 0
    %v1315 = vpop.f32.mrf.mxu0
    %v1316 = vadd.f32 0.0, %v1315
    %v1317 = vpop.f32.mrf.mxu0
    %1318 = vdwg.mxu0
    %1319 = vmatpush.bf16.msra.mxu0 %v1170
    %1320 = vmatpush.bf16.msra.mxu0 %v1162
    %1321 = vmatpush.bf16.msra.mxu0 %v1154
    %1322 = vmatpush.bf16.msra.mxu0 %v1146
    %1323 = vmatpush.bf16.msra.mxu0 %v1138
    %1324 = vmatpush.bf16.msra.mxu0 %v1130
    %1325 = vmatpush.bf16.msra.mxu0 %v1122
    %1326 = vmatpush.bf16.msra.mxu0 %v1114
    %1327 = vmatmul.bf16.gmra.mxu0 0
    %v1328 = vpop.f32.mrf.mxu0
    %v1329 = vadd.f32 %v1316, %v1328
    %v1330 = vpop.f32.mrf.mxu0
    %1331 = vdwg.mxu0
    %1332 = vmatpush.bf16.msra.mxu0 %v1107
    %1333 = vmatpush.bf16.msra.mxu0 %v1099
    %1334 = vmatpush.bf16.msra.mxu0 %v1091
    %1335 = vmatpush.bf16.msra.mxu0 %v1083
    %1336 = vmatpush.bf16.msra.mxu0 %v1075
    %1337 = vmatpush.bf16.msra.mxu0 %v1067
    %1338 = vmatpush.bf16.msra.mxu0 %v1059
    %1339 = vmatpush.bf16.msra.mxu0 %v1051
    %1340 = vmatmul.bf16.gmra.mxu0 0
    %v1341 = vpop.f32.mrf.mxu0
    %v1342 = vadd.f32 0.0, %v1341
    %v1343 = vpop.f32.mrf.mxu0
    %1344 = vdwg.mxu0
    %1345 = vmatpush.bf16.msra.mxu0 %v1171
    %1346 = vmatpush.bf16.msra.mxu0 %v1163
    %1347 = vmatpush.bf16.msra.mxu0 %v1155
    %1348 = vmatpush.bf16.msra.mxu0 %v1147
    %1349 = vmatpush.bf16.msra.mxu0 %v1139
    %1350 = vmatpush.bf16.msra.mxu0 %v1131
    %1351 = vmatpush.bf16.msra.mxu0 %v1123
    %1352 = vmatpush.bf16.msra.mxu0 %v1115
    %1353 = vmatmul.bf16.gmra.mxu0 0
    %v1354 = vpop.f32.mrf.mxu0
    %v1355 = vadd.f32 %v1342, %v1354
    %v1356 = vpop.f32.mrf.mxu0
    %1357 = vdwg.mxu0
    %1358 = vmatpush.bf16.msra.mxu0 %v1108
    %1359 = vmatpush.bf16.msra.mxu0 %v1100
    %1360 = vmatpush.bf16.msra.mxu0 %v1092
    %1361 = vmatpush.bf16.msra.mxu0 %v1084
    %1362 = vmatpush.bf16.msra.mxu0 %v1076
    %1363 = vmatpush.bf16.msra.mxu0 %v1068
    %1364 = vmatpush.bf16.msra.mxu0 %v1060
    %1365 = vmatpush.bf16.msra.mxu0 %v1052
    %1366 = vmatmul.bf16.gmra.mxu0 0
    %v1367 = vpop.f32.mrf.mxu0
    %v1368 = vadd.f32 0.0, %v1367
    %v1369 = vpop.f32.mrf.mxu0
    %1370 = vdwg.mxu0
    %1371 = vmatpush.bf16.msra.mxu0 %v1172
    %1372 = vmatpush.bf16.msra.mxu0 %v1164
    %1373 = vmatpush.bf16.msra.mxu0 %v1156
    %1374 = vmatpush.bf16.msra.mxu0 %v1148
    %1375 = vmatpush.bf16.msra.mxu0 %v1140
    %1376 = vmatpush.bf16.msra.mxu0 %v1132
    %1377 = vmatpush.bf16.msra.mxu0 %v1124
    %1378 = vmatpush.bf16.msra.mxu0 %v1116
    %1379 = vmatmul.bf16.gmra.mxu0 0
    %v1380 = vpop.f32.mrf.mxu0
    %v1381 = vadd.f32 %v1368, %v1380
    %v1382 = vpop.f32.mrf.mxu0
    %1383 = vdwg.mxu0
    %1384 = vmatpush.bf16.msra.mxu0 %v1109
    %1385 = vmatpush.bf16.msra.mxu0 %v1101
    %1386 = vmatpush.bf16.msra.mxu0 %v1093
    %1387 = vmatpush.bf16.msra.mxu0 %v1085
    %1388 = vmatpush.bf16.msra.mxu0 %v1077
    %1389 = vmatpush.bf16.msra.mxu0 %v1069
    %1390 = vmatpush.bf16.msra.mxu0 %v1061
    %1391 = vmatpush.bf16.msra.mxu0 %v1053
    %1392 = vmatmul.bf16.gmra.mxu0 0
    %v1393 = vpop.f32.mrf.mxu0
    %v1394 = vadd.f32 0.0, %v1393
    %v1395 = vpop.f32.mrf.mxu0
    %1396 = vdwg.mxu0
    %1397 = vmatpush.bf16.msra.mxu0 %v1173
    %1398 = vmatpush.bf16.msra.mxu0 %v1165
    %1399 = vmatpush.bf16.msra.mxu0 %v1157
    %1400 = vmatpush.bf16.msra.mxu0 %v1149
    %1401 = vmatpush.bf16.msra.mxu0 %v1141
    %1402 = vmatpush.bf16.msra.mxu0 %v1133
    %1403 = vmatpush.bf16.msra.mxu0 %v1125
    %1404 = vmatpush.bf16.msra.mxu0 %v1117
    %1405 = vmatmul.bf16.gmra.mxu0 0
    %v1406 = vpop.f32.mrf.mxu0
    %v1407 = vadd.f32 %v1394, %v1406
    %v1408 = vpop.f32.mrf.mxu0
    %1409 = vdwg.mxu0
    %1410 = vmatpush.bf16.msra.mxu0 %v1110
    %1411 = vmatpush.bf16.msra.mxu0 %v1102
    %1412 = vmatpush.bf16.msra.mxu0 %v1094
    %1413 = vmatpush.bf16.msra.mxu0 %v1086
    %1414 = vmatpush.bf16.msra.mxu0 %v1078
    %1415 = vmatpush.bf16.msra.mxu0 %v1070
    %1416 = vmatpush.bf16.msra.mxu0 %v1062
    %1417 = vmatpush.bf16.msra.mxu0 %v1054
    %1418 = vmatmul.bf16.gmra.mxu0 0
    %v1419 = vpop.f32.mrf.mxu0
    %v1420 = vadd.f32 0.0, %v1419
    %v1421 = vpop.f32.mrf.mxu0
    %1422 = vdwg.mxu0
    %1423 = vmatpush.bf16.msra.mxu0 %v1174
    %1424 = vmatpush.bf16.msra.mxu0 %v1166
    %1425 = vmatpush.bf16.msra.mxu0 %v1158
    %1426 = vmatpush.bf16.msra.mxu0 %v1150
    %1427 = vmatpush.bf16.msra.mxu0 %v1142
    %1428 = vmatpush.bf16.msra.mxu0 %v1134
    %1429 = vmatpush.bf16.msra.mxu0 %v1126
    %1430 = vmatpush.bf16.msra.mxu0 %v1118
    %1431 = vmatmul.bf16.gmra.mxu0 0
    %v1432 = vpop.f32.mrf.mxu0
    %v1433 = vadd.f32 %v1420, %v1432
    %v1434 = vpop.f32.mrf.mxu0
    %1435 = vdwg.mxu0
    %1436 = vmatpush.bf16.msra.mxu0 %v1111
    %1437 = vmatpush.bf16.msra.mxu0 %v1103
    %1438 = vmatpush.bf16.msra.mxu0 %v1095
    %1439 = vmatpush.bf16.msra.mxu0 %v1087
    %1440 = vmatpush.bf16.msra.mxu0 %v1079
    %1441 = vmatpush.bf16.msra.mxu0 %v1071
    %1442 = vmatpush.bf16.msra.mxu0 %v1063
    %1443 = vmatpush.bf16.msra.mxu0 %v1055
    %1444 = vmatmul.bf16.gmra.mxu0 0
    %v1445 = vpop.f32.mrf.mxu0
    %v1446 = vadd.f32 0.0, %v1445
    %v1447 = vpop.f32.mrf.mxu0
    %1448 = vdwg.mxu0
    %1449 = vmatpush.bf16.msra.mxu0 %v1175
    %1450 = vmatpush.bf16.msra.mxu0 %v1167
    %1451 = vmatpush.bf16.msra.mxu0 %v1159
    %1452 = vmatpush.bf16.msra.mxu0 %v1151
    %1453 = vmatpush.bf16.msra.mxu0 %v1143
    %1454 = vmatpush.bf16.msra.mxu0 %v1135
    %1455 = vmatpush.bf16.msra.mxu0 %v1127
    %1456 = vmatpush.bf16.msra.mxu0 %v1119
    %1457 = vmatmul.bf16.gmra.mxu0 0
    %v1458 = vpop.f32.mrf.mxu0
    %v1459 = vadd.f32 %v1446, %v1458
    %v1460 = vpop.f32.mrf.mxu0
    %1461 = vdwg.mxu0
    %1462 = vmatpush.bf16.msra.mxu0 %v1112
    %1463 = vmatpush.bf16.msra.mxu0 %v1104
    %1464 = vmatpush.bf16.msra.mxu0 %v1096
    %1465 = vmatpush.bf16.msra.mxu0 %v1088
    %1466 = vmatpush.bf16.msra.mxu0 %v1080
    %1467 = vmatpush.bf16.msra.mxu0 %v1072
    %1468 = vmatpush.bf16.msra.mxu0 %v1064
    %1469 = vmatpush.bf16.msra.mxu0 %v1056
    %1470 = vmatmul.bf16.gmra.mxu0 0
    %v1471 = vpop.f32.mrf.mxu0
    %v1472 = vadd.f32 0.0, %v1471
    %v1473 = vpop.f32.mrf.mxu0
    %1474 = vdwg.mxu0
    %1475 = vmatpush.bf16.msra.mxu0 %v1176
    %1476 = vmatpush.bf16.msra.mxu0 %v1168
    %1477 = vmatpush.bf16.msra.mxu0 %v1160
    %1478 = vmatpush.bf16.msra.mxu0 %v1152
    %1479 = vmatpush.bf16.msra.mxu0 %v1144
    %1480 = vmatpush.bf16.msra.mxu0 %v1136
    %1481 = vmatpush.bf16.msra.mxu0 %v1128
    %1482 = vmatpush.bf16.msra.mxu0 %v1120
    %1483 = vmatmul.bf16.gmra.mxu0 0
    %v1484 = vpop.f32.mrf.mxu0
    %v1485 = vadd.f32 %v1472, %v1484
    %v1486 = vpop.f32.mrf.mxu0
    %1487 = vdwg.mxu0
    %1488 = vmatpush.bf16.msra.mxu0 %v1113
    %1489 = vmatpush.bf16.msra.mxu0 %v1105
    %1490 = vmatpush.bf16.msra.mxu0 %v1097
    %1491 = vmatpush.bf16.msra.mxu0 %v1089
    %1492 = vmatpush.bf16.msra.mxu0 %v1081
    %1493 = vmatpush.bf16.msra.mxu0 %v1073
    %1494 = vmatpush.bf16.msra.mxu0 %v1065
    %1495 = vmatpush.bf16.msra.mxu0 %v1057
    %1496 = vmatmul.bf16.gmra.mxu0 0
    %v1497 = vpop.f32.mrf.mxu0
    %v1498 = vadd.f32 0.0, %v1497
    %v1499 = vpop.f32.mrf.mxu0
    %1500 = vdwg.mxu0
    %1501 = vmatpush.bf16.msra.mxu0 %v1177
    %1502 = vmatpush.bf16.msra.mxu0 %v1169
    %1503 = vmatpush.bf16.msra.mxu0 %v1161
    %1504 = vmatpush.bf16.msra.mxu0 %v1153
    %1505 = vmatpush.bf16.msra.mxu0 %v1145
    %1506 = vmatpush.bf16.msra.mxu0 %v1137
    %1507 = vmatpush.bf16.msra.mxu0 %v1129
    %1508 = vmatpush.bf16.msra.mxu0 %v1121
    %1509 = vmatmul.bf16.gmra.mxu0 0
    %v1510 = vpop.f32.mrf.mxu0
    %v1511 = vadd.f32 %v1498, %v1510
    %v1512 = vpop.f32.mrf.mxu0
    %1513 = vdwg.mxu0
    %s1514 = smul.u32 0, 8
    %s1515 = smul.addr %s1514, 8
    %s1516 = scalar_lea.vmem [#allocation2], %s1515
    %v1517 = vld [vmem:[%s1516] sm:$0xff]
    %v1518 = vld [vmem:[%s1516 + $0x8] sm:$0xff]
    %v1519 = vld [vmem:[%s1516 + $0x10] sm:$0xff]
    %v1520 = vld [vmem:[%s1516 + $0x18] sm:$0xff]
    %v1521 = vadd.f32 %v1517, %v1329
    %v1522 = vadd.f32 %v1518, %v1355
    %v1523 = vadd.f32 %v1519, %v1381
    %v1524 = vadd.f32 %v1520, %v1407
    %s1525 = smul.u32 7, 8
    %s1526 = smul.addr %s1525, 8
    %s1527 = scalar_lea.vmem [#allocation2], %s1526
    %v1528 = vld [vmem:[%s1527 + $0x20] sm:$0xff]
    %v1529 = vld [vmem:[%s1527 + $0x28] sm:$0xff]
    %v1530 = vld [vmem:[%s1527 + $0x30] sm:$0xff]
    %v1531 = vld [vmem:[%s1527 + $0x38] sm:$0xff]
    %v1532 = vadd.f32 %v1528, %v1433
    %v1533 = vadd.f32 %v1529, %v1459
    %v1534 = vadd.f32 %v1530, %v1485
    %v1535 = vadd.f32 %v1531, %v1511
    %v1536 = vxor.u32 %v1521, 2147483648
    %v1537 = vxor.u32 %v1522, 2147483648
    %v1538 = vxor.u32 %v1523, 2147483648
    %v1539 = vmul.f32 %v1536, 1.442695
    %v1540 = vpow.pop %v1539
    %v1541 = vmul.f32 %v1537, 1.442695
    %v1542 = vpow.pop %v1541
    %v1543 = vmul.f32 %v1538, 1.442695
    %v1544 = vpow.pop %v1543
    %v1545 = vadd.f32 %v1540, 1.0
    %v1546 = vadd.f32 %v1542, 1.0
    %v1547 = vadd.f32 %v1544, 1.0
    %v1548 = vrcp.pop %v1545
    %v1549 = vmul.f32 %v1545, %v1548
    %v1550 = vsub.f32 1.0, %v1549
    %v1551 = vmul.f32 %v1548, %v1550
    %v1552 = vadd.f32 %v1548, %v1551
    %vm1553 = vweird.f32 %v1545
    %vm1554 = vweird.f32 %v1548
    %vm1555 = vmor %vm1553, %vm1554
    %v1556 = vsel %vm1555, %v1548, %v1552
    %v1557 = vand.u32 2147483647, %v1545
    %vm1558 = vcmp.eq.f32.partialorder %v1557, 8.507059e+37
    %v1559 = vand.u32 %v1545, 2147483648
    %v1560 = vor.u32 1.1754944e-38, %v1559
    %v1561 = vsel %vm1558, %v1560, %v1556
    %v1562 = vmul.f32 1.0, %v1561
    %v1563 = vrcp.pop %v1546
    %v1564 = vmul.f32 %v1546, %v1563
    %v1565 = vsub.f32 1.0, %v1564
    %v1566 = vmul.f32 %v1563, %v1565
    %v1567 = vadd.f32 %v1563, %v1566
    %vm1568 = vweird.f32 %v1546
    %vm1569 = vweird.f32 %v1563
    %vm1570 = vmor %vm1568, %vm1569
    %v1571 = vsel %vm1570, %v1563, %v1567
    %v1572 = vand.u32 2147483647, %v1546
    %vm1573 = vcmp.eq.f32.partialorder %v1572, 8.507059e+37
    %v1574 = vand.u32 %v1546, 2147483648
    %v1575 = vor.u32 1.1754944e-38, %v1574
    %v1576 = vsel %vm1573, %v1575, %v1571
    %v1577 = vmul.f32 1.0, %v1576
    %v1578 = vrcp.pop %v1547
    %v1579 = vmul.f32 %v1547, %v1578
    %v1580 = vsub.f32 1.0, %v1579
    %v1581 = vmul.f32 %v1578, %v1580
    %v1582 = vadd.f32 %v1578, %v1581
    %vm1583 = vweird.f32 %v1547
    %vm1584 = vweird.f32 %v1578
    %vm1585 = vmor %vm1583, %vm1584
    %v1586 = vsel %vm1585, %v1578, %v1582
    %v1587 = vand.u32 2147483647, %v1547
    %vm1588 = vcmp.eq.f32.partialorder %v1587, 8.507059e+37
    %v1589 = vand.u32 %v1547, 2147483648
    %v1590 = vor.u32 1.1754944e-38, %v1589
    %v1591 = vsel %vm1588, %v1590, %v1586
    %v1592 = vmul.f32 1.0, %v1591
    %v1593 = vtanh.pop %v1524
    %v1594 = vxor.u32 %v1532, 2147483648
    %v1595 = vxor.u32 %v1533, 2147483648
    %v1596 = vxor.u32 %v1534, 2147483648
    %v1597 = vmul.f32 %v1594, 1.442695
    %v1598 = vpow.pop %v1597
    %v1599 = vmul.f32 %v1595, 1.442695
    %v1600 = vpow.pop %v1599
    %v1601 = vmul.f32 %v1596, 1.442695
    %v1602 = vpow.pop %v1601
    %v1603 = vadd.f32 %v1598, 1.0
    %v1604 = vadd.f32 %v1600, 1.0
    %v1605 = vadd.f32 %v1602, 1.0
    %v1606 = vrcp.pop %v1603
    %v1607 = vmul.f32 %v1603, %v1606
    %v1608 = vsub.f32 1.0, %v1607
    %v1609 = vmul.f32 %v1606, %v1608
    %v1610 = vadd.f32 %v1606, %v1609
    %vm1611 = vweird.f32 %v1603
    %vm1612 = vweird.f32 %v1606
    %vm1613 = vmor %vm1611, %vm1612
    %v1614 = vsel %vm1613, %v1606, %v1610
    %v1615 = vand.u32 2147483647, %v1603
    %vm1616 = vcmp.eq.f32.partialorder %v1615, 8.507059e+37
    %v1617 = vand.u32 %v1603, 2147483648
    %v1618 = vor.u32 1.1754944e-38, %v1617
    %v1619 = vsel %vm1616, %v1618, %v1614
    %v1620 = vmul.f32 1.0, %v1619
    %v1621 = vrcp.pop %v1604
    %v1622 = vmul.f32 %v1604, %v1621
    %v1623 = vsub.f32 1.0, %v1622
    %v1624 = vmul.f32 %v1621, %v1623
    %v1625 = vadd.f32 %v1621, %v1624
    %vm1626 = vweird.f32 %v1604
    %vm1627 = vweird.f32 %v1621
    %vm1628 = vmor %vm1626, %vm1627
    %v1629 = vsel %vm1628, %v1621, %v1625
    %v1630 = vand.u32 2147483647, %v1604
    %vm1631 = vcmp.eq.f32.partialorder %v1630, 8.507059e+37
    %v1632 = vand.u32 %v1604, 2147483648
    %v1633 = vor.u32 1.1754944e-38, %v1632
    %v1634 = vsel %vm1631, %v1633, %v1629
    %v1635 = vmul.f32 1.0, %v1634
    %v1636 = vrcp.pop %v1605
    %v1637 = vmul.f32 %v1605, %v1636
    %v1638 = vsub.f32 1.0, %v1637
    %v1639 = vmul.f32 %v1636, %v1638
    %v1640 = vadd.f32 %v1636, %v1639
    %vm1641 = vweird.f32 %v1605
    %vm1642 = vweird.f32 %v1636
    %vm1643 = vmor %vm1641, %vm1642
    %v1644 = vsel %vm1643, %v1636, %v1640
    %v1645 = vand.u32 2147483647, %v1605
    %vm1646 = vcmp.eq.f32.partialorder %v1645, 8.507059e+37
    %v1647 = vand.u32 %v1605, 2147483648
    %v1648 = vor.u32 1.1754944e-38, %v1647
    %v1649 = vsel %vm1646, %v1648, %v1644
    %v1650 = vmul.f32 1.0, %v1649
    %v1651 = vtanh.pop %v1535
    %v1652 = vmul.f32 %v1577, 0.0
    %v1653 = vmul.f32 %v1562, %v1593
    %v1654 = vadd.f32 %v1652, %v1653
    %v1655 = vmul.f32 %v1635, 0.0
    %v1656 = vmul.f32 %v1620, %v1651
    %v1657 = vadd.f32 %v1655, %v1656
    %v1658 = vtanh.pop %v1654
    %v1659 = vmul.f32 %v1592, %v1658
    %v1660 = vtanh.pop %v1657
    %v1661 = vmul.f32 %v1650, %v1660
    %s1662 = smul.u32 0, 2
    %s1663 = smul.addr %s1662, 8
    %s1664 = scalar_lea.vmem [#allocation3], %s1663
    %1665 = vst [vmem:[%s1664] sm:$0xff] %v1659
    %s1666 = smul.u32 7, 2
    %s1667 = smul.addr %s1666, 8
    %s1668 = scalar_lea.vmem [#allocation3], %s1667
    %1669 = vst [vmem:[%s1668 + $0x8] sm:$0xff] %v1661
    %v1670 = vpack.c.bf16 %v1659, %v1659
    %v1671 = vpack.c.bf16 %v1661, %v1661
    %1672 = vmatpush.bf16.msra.mxu0 %v1106
    %1673 = vmatpush.bf16.msra.mxu0 %v1098
    %1674 = vmatpush.bf16.msra.mxu0 %v1090
    %1675 = vmatpush.bf16.msra.mxu0 %v1082
    %1676 = vmatpush.bf16.msra.mxu0 %v1074
    %1677 = vmatpush.bf16.msra.mxu0 %v1066
    %1678 = vmatpush.bf16.msra.mxu0 %v1058
    %1679 = vmatpush.bf16.msra.mxu0 %v1050
    %1680 = vmatmul.bf16.gmra.mxu0 %v1670
    %v1681 = vpop.f32.mrf.mxu0
    %v1682 = vadd.f32 0.0, %v1681
    %v1683 = vpop.f32.mrf.mxu0
    %1684 = vdwg.mxu0
    %1685 = vmatpush.bf16.msra.mxu0 %v1170
    %1686 = vmatpush.bf16.msra.mxu0 %v1162
    %1687 = vmatpush.bf16.msra.mxu0 %v1154
    %1688 = vmatpush.bf16.msra.mxu0 %v1146
    %1689 = vmatpush.bf16.msra.mxu0 %v1138
    %1690 = vmatpush.bf16.msra.mxu0 %v1130
    %1691 = vmatpush.bf16.msra.mxu0 %v1122
    %1692 = vmatpush.bf16.msra.mxu0 %v1114
    %1693 = vmatmul.bf16.gmra.mxu0 %v1671
    %v1694 = vpop.f32.mrf.mxu0
    %v1695 = vadd.f32 %v1682, %v1694
    %v1696 = vpop.f32.mrf.mxu0
    %1697 = vdwg.mxu0
    %1698 = vmatpush.bf16.msra.mxu0 %v1107
    %1699 = vmatpush.bf16.msra.mxu0 %v1099
    %1700 = vmatpush.bf16.msra.mxu0 %v1091
    %1701 = vmatpush.bf16.msra.mxu0 %v1083
    %1702 = vmatpush.bf16.msra.mxu0 %v1075
    %1703 = vmatpush.bf16.msra.mxu0 %v1067
    %1704 = vmatpush.bf16.msra.mxu0 %v1059
    %1705 = vmatpush.bf16.msra.mxu0 %v1051
    %1706 = vmatmul.bf16.gmra.mxu0 %v1670
    %v1707 = vpop.f32.mrf.mxu0
    %v1708 = vadd.f32 0.0, %v1707
    %v1709 = vpop.f32.mrf.mxu0
    %1710 = vdwg.mxu0
    %1711 = vmatpush.bf16.msra.mxu0 %v1171
    %1712 = vmatpush.bf16.msra.mxu0 %v1163
    %1713 = vmatpush.bf16.msra.mxu0 %v1155
    %1714 = vmatpush.bf16.msra.mxu0 %v1147
    %1715 = vmatpush.bf16.msra.mxu0 %v1139
    %1716 = vmatpush.bf16.msra.mxu0 %v1131
    %1717 = vmatpush.bf16.msra.mxu0 %v1123
    %1718 = vmatpush.bf16.msra.mxu0 %v1115
    %1719 = vmatmul.bf16.gmra.mxu0 %v1671
    %v1720 = vpop.f32.mrf.mxu0
    %v1721 = vadd.f32 %v1708, %v1720
    %v1722 = vpop.f32.mrf.mxu0
    %1723 = vdwg.mxu0
    %1724 = vmatpush.bf16.msra.mxu0 %v1108
    %1725 = vmatpush.bf16.msra.mxu0 %v1100
    %1726 = vmatpush.bf16.msra.mxu0 %v1092
    %1727 = vmatpush.bf16.msra.mxu0 %v1084
    %1728 = vmatpush.bf16.msra.mxu0 %v1076
    %1729 = vmatpush.bf16.msra.mxu0 %v1068
    %1730 = vmatpush.bf16.msra.mxu0 %v1060
    %1731 = vmatpush.bf16.msra.mxu0 %v1052
    %1732 = vmatmul.bf16.gmra.mxu0 %v1670
    %v1733 = vpop.f32.mrf.mxu0
    %v1734 = vadd.f32 0.0, %v1733
    %v1735 = vpop.f32.mrf.mxu0
    %1736 = vdwg.mxu0
    %1737 = vmatpush.bf16.msra.mxu0 %v1172
    %1738 = vmatpush.bf16.msra.mxu0 %v1164
    %1739 = vmatpush.bf16.msra.mxu0 %v1156
    %1740 = vmatpush.bf16.msra.mxu0 %v1148
    %1741 = vmatpush.bf16.msra.mxu0 %v1140
    %1742 = vmatpush.bf16.msra.mxu0 %v1132
    %1743 = vmatpush.bf16.msra.mxu0 %v1124
    %1744 = vmatpush.bf16.msra.mxu0 %v1116
    %1745 = vmatmul.bf16.gmra.mxu0 %v1671
    %v1746 = vpop.f32.mrf.mxu0
    %v1747 = vadd.f32 %v1734, %v1746
    %v1748 = vpop.f32.mrf.mxu0
    %1749 = vdwg.mxu0
    %1750 = vmatpush.bf16.msra.mxu0 %v1109
    %1751 = vmatpush.bf16.msra.mxu0 %v1101
    %1752 = vmatpush.bf16.msra.mxu0 %v1093
    %1753 = vmatpush.bf16.msra.mxu0 %v1085
    %1754 = vmatpush.bf16.msra.mxu0 %v1077
    %1755 = vmatpush.bf16.msra.mxu0 %v1069
    %1756 = vmatpush.bf16.msra.mxu0 %v1061
    %1757 = vmatpush.bf16.msra.mxu0 %v1053
    %1758 = vmatmul.bf16.gmra.mxu0 %v1670
    %v1759 = vpop.f32.mrf.mxu0
    %v1760 = vadd.f32 0.0, %v1759
    %v1761 = vpop.f32.mrf.mxu0
    %1762 = vdwg.mxu0
    %1763 = vmatpush.bf16.msra.mxu0 %v1173
    %1764 = vmatpush.bf16.msra.mxu0 %v1165
    %1765 = vmatpush.bf16.msra.mxu0 %v1157
    %1766 = vmatpush.bf16.msra.mxu0 %v1149
    %1767 = vmatpush.bf16.msra.mxu0 %v1141
    %1768 = vmatpush.bf16.msra.mxu0 %v1133
    %1769 = vmatpush.bf16.msra.mxu0 %v1125
    %1770 = vmatpush.bf16.msra.mxu0 %v1117
    %1771 = vmatmul.bf16.gmra.mxu0 %v1671
    %v1772 = vpop.f32.mrf.mxu0
    %v1773 = vadd.f32 %v1760, %v1772
    %v1774 = vpop.f32.mrf.mxu0
    %1775 = vdwg.mxu0
    %1776 = vmatpush.bf16.msra.mxu0 %v1110
    %1777 = vmatpush.bf16.msra.mxu0 %v1102
    %1778 = vmatpush.bf16.msra.mxu0 %v1094
    %1779 = vmatpush.bf16.msra.mxu0 %v1086
    %1780 = vmatpush.bf16.msra.mxu0 %v1078
    %1781 = vmatpush.bf16.msra.mxu0 %v1070
    %1782 = vmatpush.bf16.msra.mxu0 %v1062
    %1783 = vmatpush.bf16.msra.mxu0 %v1054
    %1784 = vmatmul.bf16.gmra.mxu0 %v1670
    %v1785 = vpop.f32.mrf.mxu0
    %v1786 = vadd.f32 0.0, %v1785
    %v1787 = vpop.f32.mrf.mxu0
    %1788 = vdwg.mxu0
    %1789 = vmatpush.bf16.msra.mxu0 %v1174
    %1790 = vmatpush.bf16.msra.mxu0 %v1166
    %1791 = vmatpush.bf16.msra.mxu0 %v1158
    %1792 = vmatpush.bf16.msra.mxu0 %v1150
    %1793 = vmatpush.bf16.msra.mxu0 %v1142
    %1794 = vmatpush.bf16.msra.mxu0 %v1134
    %1795 = vmatpush.bf16.msra.mxu0 %v1126
    %1796 = vmatpush.bf16.msra.mxu0 %v1118
    %1797 = vmatmul.bf16.gmra.mxu0 %v1671
    %v1798 = vpop.f32.mrf.mxu0
    %v1799 = vadd.f32 %v1786, %v1798
    %v1800 = vpop.f32.mrf.mxu0
    %1801 = vdwg.mxu0
    %1802 = vmatpush.bf16.msra.mxu0 %v1111
    %1803 = vmatpush.bf16.msra.mxu0 %v1103
    %1804 = vmatpush.bf16.msra.mxu0 %v1095
    %1805 = vmatpush.bf16.msra.mxu0 %v1087
    %1806 = vmatpush.bf16.msra.mxu0 %v1079
    %1807 = vmatpush.bf16.msra.mxu0 %v1071
    %1808 = vmatpush.bf16.msra.mxu0 %v1063
    %1809 = vmatpush.bf16.msra.mxu0 %v1055
    %1810 = vmatmul.bf16.gmra.mxu0 %v1670
    %v1811 = vpop.f32.mrf.mxu0
    %v1812 = vadd.f32 0.0, %v1811
    %v1813 = vpop.f32.mrf.mxu0
    %1814 = vdwg.mxu0
    %1815 = vmatpush.bf16.msra.mxu0 %v1175
    %1816 = vmatpush.bf16.msra.mxu0 %v1167
    %1817 = vmatpush.bf16.msra.mxu0 %v1159
    %1818 = vmatpush.bf16.msra.mxu0 %v1151
    %1819 = vmatpush.bf16.msra.mxu0 %v1143
    %1820 = vmatpush.bf16.msra.mxu0 %v1135
    %1821 = vmatpush.bf16.msra.mxu0 %v1127
    %1822 = vmatpush.bf16.msra.mxu0 %v1119
    %1823 = vmatmul.bf16.gmra.mxu0 %v1671
    %v1824 = vpop.f32.mrf.mxu0
    %v1825 = vadd.f32 %v1812, %v1824
    %v1826 = vpop.f32.mrf.mxu0
    %1827 = vdwg.mxu0
    %1828 = vmatpush.bf16.msra.mxu0 %v1112
    %1829 = vmatpush.bf16.msra.mxu0 %v1104
    %1830 = vmatpush.bf16.msra.mxu0 %v1096
    %1831 = vmatpush.bf16.msra.mxu0 %v1088
    %1832 = vmatpush.bf16.msra.mxu0 %v1080
    %1833 = vmatpush.bf16.msra.mxu0 %v1072
    %1834 = vmatpush.bf16.msra.mxu0 %v1064
    %1835 = vmatpush.bf16.msra.mxu0 %v1056
    %1836 = vmatmul.bf16.gmra.mxu0 %v1670
    %v1837 = vpop.f32.mrf.mxu0
    %v1838 = vadd.f32 0.0, %v1837
    %v1839 = vpop.f32.mrf.mxu0
    %1840 = vdwg.mxu0
    %1841 = vmatpush.bf16.msra.mxu0 %v1176
    %1842 = vmatpush.bf16.msra.mxu0 %v1168
    %1843 = vmatpush.bf16.msra.mxu0 %v1160
    %1844 = vmatpush.bf16.msra.mxu0 %v1152
    %1845 = vmatpush.bf16.msra.mxu0 %v1144
    %1846 = vmatpush.bf16.msra.mxu0 %v1136
    %1847 = vmatpush.bf16.msra.mxu0 %v1128
    %1848 = vmatpush.bf16.msra.mxu0 %v1120
    %1849 = vmatmul.bf16.gmra.mxu0 %v1671
    %v1850 = vpop.f32.mrf.mxu0
    %v1851 = vadd.f32 %v1838, %v1850
    %v1852 = vpop.f32.mrf.mxu0
    %1853 = vdwg.mxu0
    %1854 = vmatpush.bf16.msra.mxu0 %v1113
    %1855 = vmatpush.bf16.msra.mxu0 %v1105
    %1856 = vmatpush.bf16.msra.mxu0 %v1097
    %1857 = vmatpush.bf16.msra.mxu0 %v1089
    %1858 = vmatpush.bf16.msra.mxu0 %v1081
    %1859 = vmatpush.bf16.msra.mxu0 %v1073
    %1860 = vmatpush.bf16.msra.mxu0 %v1065
    %1861 = vmatpush.bf16.msra.mxu0 %v1057
    %1862 = vmatmul.bf16.gmra.mxu0 %v1670
    %v1863 = vpop.f32.mrf.mxu0
    %v1864 = vadd.f32 0.0, %v1863
    %v1865 = vpop.f32.mrf.mxu0
    %1866 = vdwg.mxu0
    %1867 = vmatpush.bf16.msra.mxu0 %v1177
    %1868 = vmatpush.bf16.msra.mxu0 %v1169
    %1869 = vmatpush.bf16.msra.mxu0 %v1161
    %1870 = vmatpush.bf16.msra.mxu0 %v1153
    %1871 = vmatpush.bf16.msra.mxu0 %v1145
    %1872 = vmatpush.bf16.msra.mxu0 %v1137
    %1873 = vmatpush.bf16.msra.mxu0 %v1129
    %1874 = vmatpush.bf16.msra.mxu0 %v1121
    %1875 = vmatmul.bf16.gmra.mxu0 %v1671
    %v1876 = vpop.f32.mrf.mxu0
    %v1877 = vadd.f32 %v1864, %v1876
    %v1878 = vpop.f32.mrf.mxu0
    %1879 = vdwg.mxu0
    %s1880 = smul.u32 1, 8
    %s1881 = smul.addr %s1880, 8
    %s1882 = scalar_lea.vmem [#allocation2], %s1881
    %v1883 = vld [vmem:[%s1882] sm:$0xff]
    %v1884 = vld [vmem:[%s1882 + $0x8] sm:$0xff]
    %v1885 = vld [vmem:[%s1882 + $0x10] sm:$0xff]
    %v1886 = vld [vmem:[%s1882 + $0x18] sm:$0xff]
    %v1887 = vadd.f32 %v1883, %v1695
    %v1888 = vadd.f32 %v1884, %v1721
    %v1889 = vadd.f32 %v1885, %v1747
    %v1890 = vadd.f32 %v1886, %v1773
    %s1891 = smul.u32 6, 8
    %s1892 = smul.addr %s1891, 8
    %s1893 = scalar_lea.vmem [#allocation2], %s1892
    %v1894 = vld [vmem:[%s1893 + $0x20] sm:$0xff]
    %v1895 = vld [vmem:[%s1893 + $0x28] sm:$0xff]
    %v1896 = vld [vmem:[%s1893 + $0x30] sm:$0xff]
    %v1897 = vld [vmem:[%s1893 + $0x38] sm:$0xff]
    %v1898 = vadd.f32 %v1894, %v1799
    %v1899 = vadd.f32 %v1895, %v1825
    %v1900 = vadd.f32 %v1896, %v1851
    %v1901 = vadd.f32 %v1897, %v1877
    %v1902 = vxor.u32 %v1887, 2147483648
    %v1903 = vxor.u32 %v1888, 2147483648
    %v1904 = vxor.u32 %v1889, 2147483648
    %v1905 = vmul.f32 %v1902, 1.442695
    %v1906 = vpow.pop %v1905
    %v1907 = vmul.f32 %v1903, 1.442695
    %v1908 = vpow.pop %v1907
    %v1909 = vmul.f32 %v1904, 1.442695
    %v1910 = vpow.pop %v1909
    %v1911 = vadd.f32 %v1906, 1.0
    %v1912 = vadd.f32 %v1908, 1.0
    %v1913 = vadd.f32 %v1910, 1.0
    %v1914 = vrcp.pop %v1911
    %v1915 = vmul.f32 %v1911, %v1914
    %v1916 = vsub.f32 1.0, %v1915
    %v1917 = vmul.f32 %v1914, %v1916
    %v1918 = vadd.f32 %v1914, %v1917
    %vm1919 = vweird.f32 %v1911
    %vm1920 = vweird.f32 %v1914
    %vm1921 = vmor %vm1919, %vm1920
    %v1922 = vsel %vm1921, %v1914, %v1918
    %v1923 = vand.u32 2147483647, %v1911
    %vm1924 = vcmp.eq.f32.partialorder %v1923, 8.507059e+37
    %v1925 = vand.u32 %v1911, 2147483648
    %v1926 = vor.u32 1.1754944e-38, %v1925
    %v1927 = vsel %vm1924, %v1926, %v1922
    %v1928 = vmul.f32 1.0, %v1927
    %v1929 = vrcp.pop %v1912
    %v1930 = vmul.f32 %v1912, %v1929
    %v1931 = vsub.f32 1.0, %v1930
    %v1932 = vmul.f32 %v1929, %v1931
    %v1933 = vadd.f32 %v1929, %v1932
    %vm1934 = vweird.f32 %v1912
    %vm1935 = vweird.f32 %v1929
    %vm1936 = vmor %vm1934, %vm1935
    %v1937 = vsel %vm1936, %v1929, %v1933
    %v1938 = vand.u32 2147483647, %v1912
    %vm1939 = vcmp.eq.f32.partialorder %v1938, 8.507059e+37
    %v1940 = vand.u32 %v1912, 2147483648
    %v1941 = vor.u32 1.1754944e-38, %v1940
    %v1942 = vsel %vm1939, %v1941, %v1937
    %v1943 = vmul.f32 1.0, %v1942
    %v1944 = vrcp.pop %v1913
    %v1945 = vmul.f32 %v1913, %v1944
    %v1946 = vsub.f32 1.0, %v1945
    %v1947 = vmul.f32 %v1944, %v1946
    %v1948 = vadd.f32 %v1944, %v1947
    %vm1949 = vweird.f32 %v1913
    %vm1950 = vweird.f32 %v1944
    %vm1951 = vmor %vm1949, %vm1950
    %v1952 = vsel %vm1951, %v1944, %v1948
    %v1953 = vand.u32 2147483647, %v1913
    %vm1954 = vcmp.eq.f32.partialorder %v1953, 8.507059e+37
    %v1955 = vand.u32 %v1913, 2147483648
    %v1956 = vor.u32 1.1754944e-38, %v1955
    %v1957 = vsel %vm1954, %v1956, %v1952
    %v1958 = vmul.f32 1.0, %v1957
    %v1959 = vtanh.pop %v1890
    %v1960 = vxor.u32 %v1898, 2147483648
    %v1961 = vxor.u32 %v1899, 2147483648
    %v1962 = vxor.u32 %v1900, 2147483648
    %v1963 = vmul.f32 %v1960, 1.442695
    %v1964 = vpow.pop %v1963
    %v1965 = vmul.f32 %v1961, 1.442695
    %v1966 = vpow.pop %v1965
    %v1967 = vmul.f32 %v1962, 1.442695
    %v1968 = vpow.pop %v1967
    %v1969 = vadd.f32 %v1964, 1.0
    %v1970 = vadd.f32 %v1966, 1.0
    %v1971 = vadd.f32 %v1968, 1.0
    %v1972 = vrcp.pop %v1969
    %v1973 = vmul.f32 %v1969, %v1972
    %v1974 = vsub.f32 1.0, %v1973
    %v1975 = vmul.f32 %v1972, %v1974
    %v1976 = vadd.f32 %v1972, %v1975
    %vm1977 = vweird.f32 %v1969
    %vm1978 = vweird.f32 %v1972
    %vm1979 = vmor %vm1977, %vm1978
    %v1980 = vsel %vm1979, %v1972, %v1976
    %v1981 = vand.u32 2147483647, %v1969
    %vm1982 = vcmp.eq.f32.partialorder %v1981, 8.507059e+37
    %v1983 = vand.u32 %v1969, 2147483648
    %v1984 = vor.u32 1.1754944e-38, %v1983
    %v1985 = vsel %vm1982, %v1984, %v1980
    %v1986 = vmul.f32 1.0, %v1985
    %v1987 = vrcp.pop %v1970
    %v1988 = vmul.f32 %v1970, %v1987
    %v1989 = vsub.f32 1.0, %v1988
    %v1990 = vmul.f32 %v1987, %v1989
    %v1991 = vadd.f32 %v1987, %v1990
    %vm1992 = vweird.f32 %v1970
    %vm1993 = vweird.f32 %v1987
    %vm1994 = vmor %vm1992, %vm1993
    %v1995 = vsel %vm1994, %v1987, %v1991
    %v1996 = vand.u32 2147483647, %v1970
    %vm1997 = vcmp.eq.f32.partialorder %v1996, 8.507059e+37
    %v1998 = vand.u32 %v1970, 2147483648
    %v1999 = vor.u32 1.1754944e-38, %v1998
    %v2000 = vsel %vm1997, %v1999, %v1995
    %v2001 = vmul.f32 1.0, %v2000
    %v2002 = vrcp.pop %v1971
    %v2003 = vmul.f32 %v1971, %v2002
    %v2004 = vsub.f32 1.0, %v2003
    %v2005 = vmul.f32 %v2002, %v2004
    %v2006 = vadd.f32 %v2002, %v2005
    %vm2007 = vweird.f32 %v1971
    %vm2008 = vweird.f32 %v2002
    %vm2009 = vmor %vm2007, %vm2008
    %v2010 = vsel %vm2009, %v2002, %v2006
    %v2011 = vand.u32 2147483647, %v1971
    %vm2012 = vcmp.eq.f32.partialorder %v2011, 8.507059e+37
    %v2013 = vand.u32 %v1971, 2147483648
    %v2014 = vor.u32 1.1754944e-38, %v2013
    %v2015 = vsel %vm2012, %v2014, %v2010
    %v2016 = vmul.f32 1.0, %v2015
    %v2017 = vtanh.pop %v1901
    %v2018 = vmul.f32 %v1943, %v1654
    %v2019 = vmul.f32 %v1928, %v1959
    %v2020 = vadd.f32 %v2018, %v2019
    %v2021 = vmul.f32 %v2001, %v1657
    %v2022 = vmul.f32 %v1986, %v2017
    %v2023 = vadd.f32 %v2021, %v2022
    %v2024 = vtanh.pop %v2020
    %v2025 = vmul.f32 %v1958, %v2024
    %v2026 = vtanh.pop %v2023
    %v2027 = vmul.f32 %v2016, %v2026
    %s2028 = smul.u32 1, 2
    %s2029 = smul.addr %s2028, 8
    %s2030 = scalar_lea.vmem [#allocation3], %s2029
    %2031 = vst [vmem:[%s2030] sm:$0xff] %v2025
    %s2032 = smul.u32 6, 2
    %s2033 = smul.addr %s2032, 8
    %s2034 = scalar_lea.vmem [#allocation3], %s2033
    %2035 = vst [vmem:[%s2034 + $0x8] sm:$0xff] %v2027
    %v2036 = vpack.c.bf16 %v2025, %v2025
    %v2037 = vpack.c.bf16 %v2027, %v2027
    %2038 = vmatpush.bf16.msra.mxu0 %v1106
    %2039 = vmatpush.bf16.msra.mxu0 %v1098
    %2040 = vmatpush.bf16.msra.mxu0 %v1090
    %2041 = vmatpush.bf16.msra.mxu0 %v1082
    %2042 = vmatpush.bf16.msra.mxu0 %v1074
    %2043 = vmatpush.bf16.msra.mxu0 %v1066
    %2044 = vmatpush.bf16.msra.mxu0 %v1058
    %2045 = vmatpush.bf16.msra.mxu0 %v1050
    %2046 = vmatmul.bf16.gmra.mxu0 %v2036
    %v2047 = vpop.f32.mrf.mxu0
    %v2048 = vadd.f32 0.0, %v2047
    %v2049 = vpop.f32.mrf.mxu0
    %2050 = vdwg.mxu0
    %2051 = vmatpush.bf16.msra.mxu0 %v1170
    %2052 = vmatpush.bf16.msra.mxu0 %v1162
    %2053 = vmatpush.bf16.msra.mxu0 %v1154
    %2054 = vmatpush.bf16.msra.mxu0 %v1146
    %2055 = vmatpush.bf16.msra.mxu0 %v1138
    %2056 = vmatpush.bf16.msra.mxu0 %v1130
    %2057 = vmatpush.bf16.msra.mxu0 %v1122
    %2058 = vmatpush.bf16.msra.mxu0 %v1114
    %2059 = vmatmul.bf16.gmra.mxu0 %v2037
    %v2060 = vpop.f32.mrf.mxu0
    %v2061 = vadd.f32 %v2048, %v2060
    %v2062 = vpop.f32.mrf.mxu0
    %2063 = vdwg.mxu0
    %2064 = vmatpush.bf16.msra.mxu0 %v1107
    %2065 = vmatpush.bf16.msra.mxu0 %v1099
    %2066 = vmatpush.bf16.msra.mxu0 %v1091
    %2067 = vmatpush.bf16.msra.mxu0 %v1083
    %2068 = vmatpush.bf16.msra.mxu0 %v1075
    %2069 = vmatpush.bf16.msra.mxu0 %v1067
    %2070 = vmatpush.bf16.msra.mxu0 %v1059
    %2071 = vmatpush.bf16.msra.mxu0 %v1051
    %2072 = vmatmul.bf16.gmra.mxu0 %v2036
    %v2073 = vpop.f32.mrf.mxu0
    %v2074 = vadd.f32 0.0, %v2073
    %v2075 = vpop.f32.mrf.mxu0
    %2076 = vdwg.mxu0
    %2077 = vmatpush.bf16.msra.mxu0 %v1171
    %2078 = vmatpush.bf16.msra.mxu0 %v1163
    %2079 = vmatpush.bf16.msra.mxu0 %v1155
    %2080 = vmatpush.bf16.msra.mxu0 %v1147
    %2081 = vmatpush.bf16.msra.mxu0 %v1139
    %2082 = vmatpush.bf16.msra.mxu0 %v1131
    %2083 = vmatpush.bf16.msra.mxu0 %v1123
    %2084 = vmatpush.bf16.msra.mxu0 %v1115
    %2085 = vmatmul.bf16.gmra.mxu0 %v2037
    %v2086 = vpop.f32.mrf.mxu0
    %v2087 = vadd.f32 %v2074, %v2086
    %v2088 = vpop.f32.mrf.mxu0
    %2089 = vdwg.mxu0
    %2090 = vmatpush.bf16.msra.mxu0 %v1108
    %2091 = vmatpush.bf16.msra.mxu0 %v1100
    %2092 = vmatpush.bf16.msra.mxu0 %v1092
    %2093 = vmatpush.bf16.msra.mxu0 %v1084
    %2094 = vmatpush.bf16.msra.mxu0 %v1076
    %2095 = vmatpush.bf16.msra.mxu0 %v1068
    %2096 = vmatpush.bf16.msra.mxu0 %v1060
    %2097 = vmatpush.bf16.msra.mxu0 %v1052
    %2098 = vmatmul.bf16.gmra.mxu0 %v2036
    %v2099 = vpop.f32.mrf.mxu0
    %v2100 = vadd.f32 0.0, %v2099
    %v2101 = vpop.f32.mrf.mxu0
    %2102 = vdwg.mxu0
    %2103 = vmatpush.bf16.msra.mxu0 %v1172
    %2104 = vmatpush.bf16.msra.mxu0 %v1164
    %2105 = vmatpush.bf16.msra.mxu0 %v1156
    %2106 = vmatpush.bf16.msra.mxu0 %v1148
    %2107 = vmatpush.bf16.msra.mxu0 %v1140
    %2108 = vmatpush.bf16.msra.mxu0 %v1132
    %2109 = vmatpush.bf16.msra.mxu0 %v1124
    %2110 = vmatpush.bf16.msra.mxu0 %v1116
    %2111 = vmatmul.bf16.gmra.mxu0 %v2037
    %v2112 = vpop.f32.mrf.mxu0
    %v2113 = vadd.f32 %v2100, %v2112
    %v2114 = vpop.f32.mrf.mxu0
    %2115 = vdwg.mxu0
    %2116 = vmatpush.bf16.msra.mxu0 %v1109
    %2117 = vmatpush.bf16.msra.mxu0 %v1101
    %2118 = vmatpush.bf16.msra.mxu0 %v1093
    %2119 = vmatpush.bf16.msra.mxu0 %v1085
    %2120 = vmatpush.bf16.msra.mxu0 %v1077
    %2121 = vmatpush.bf16.msra.mxu0 %v1069
    %2122 = vmatpush.bf16.msra.mxu0 %v1061
    %2123 = vmatpush.bf16.msra.mxu0 %v1053
    %2124 = vmatmul.bf16.gmra.mxu0 %v2036
    %v2125 = vpop.f32.mrf.mxu0
    %v2126 = vadd.f32 0.0, %v2125
    %v2127 = vpop.f32.mrf.mxu0
    %2128 = vdwg.mxu0
    %2129 = vmatpush.bf16.msra.mxu0 %v1173
    %2130 = vmatpush.bf16.msra.mxu0 %v1165
    %2131 = vmatpush.bf16.msra.mxu0 %v1157
    %2132 = vmatpush.bf16.msra.mxu0 %v1149
    %2133 = vmatpush.bf16.msra.mxu0 %v1141
    %2134 = vmatpush.bf16.msra.mxu0 %v1133
    %2135 = vmatpush.bf16.msra.mxu0 %v1125
    %2136 = vmatpush.bf16.msra.mxu0 %v1117
    %2137 = vmatmul.bf16.gmra.mxu0 %v2037
    %v2138 = vpop.f32.mrf.mxu0
    %v2139 = vadd.f32 %v2126, %v2138
    %v2140 = vpop.f32.mrf.mxu0
    %2141 = vdwg.mxu0
    %2142 = vmatpush.bf16.msra.mxu0 %v1110
    %2143 = vmatpush.bf16.msra.mxu0 %v1102
    %2144 = vmatpush.bf16.msra.mxu0 %v1094
    %2145 = vmatpush.bf16.msra.mxu0 %v1086
    %2146 = vmatpush.bf16.msra.mxu0 %v1078
    %2147 = vmatpush.bf16.msra.mxu0 %v1070
    %2148 = vmatpush.bf16.msra.mxu0 %v1062
    %2149 = vmatpush.bf16.msra.mxu0 %v1054
    %2150 = vmatmul.bf16.gmra.mxu0 %v2036
    %v2151 = vpop.f32.mrf.mxu0
    %v2152 = vadd.f32 0.0, %v2151
    %v2153 = vpop.f32.mrf.mxu0
    %2154 = vdwg.mxu0
    %2155 = vmatpush.bf16.msra.mxu0 %v1174
    %2156 = vmatpush.bf16.msra.mxu0 %v1166
    %2157 = vmatpush.bf16.msra.mxu0 %v1158
    %2158 = vmatpush.bf16.msra.mxu0 %v1150
    %2159 = vmatpush.bf16.msra.mxu0 %v1142
    %2160 = vmatpush.bf16.msra.mxu0 %v1134
    %2161 = vmatpush.bf16.msra.mxu0 %v1126
    %2162 = vmatpush.bf16.msra.mxu0 %v1118
    %2163 = vmatmul.bf16.gmra.mxu0 %v2037
    %v2164 = vpop.f32.mrf.mxu0
    %v2165 = vadd.f32 %v2152, %v2164
    %v2166 = vpop.f32.mrf.mxu0
    %2167 = vdwg.mxu0
    %2168 = vmatpush.bf16.msra.mxu0 %v1111
    %2169 = vmatpush.bf16.msra.mxu0 %v1103
    %2170 = vmatpush.bf16.msra.mxu0 %v1095
    %2171 = vmatpush.bf16.msra.mxu0 %v1087
    %2172 = vmatpush.bf16.msra.mxu0 %v1079
    %2173 = vmatpush.bf16.msra.mxu0 %v1071
    %2174 = vmatpush.bf16.msra.mxu0 %v1063
    %2175 = vmatpush.bf16.msra.mxu0 %v1055
    %2176 = vmatmul.bf16.gmra.mxu0 %v2036
    %v2177 = vpop.f32.mrf.mxu0
    %v2178 = vadd.f32 0.0, %v2177
    %v2179 = vpop.f32.mrf.mxu0
    %2180 = vdwg.mxu0
    %2181 = vmatpush.bf16.msra.mxu0 %v1175
    %2182 = vmatpush.bf16.msra.mxu0 %v1167
    %2183 = vmatpush.bf16.msra.mxu0 %v1159
    %2184 = vmatpush.bf16.msra.mxu0 %v1151
    %2185 = vmatpush.bf16.msra.mxu0 %v1143
    %2186 = vmatpush.bf16.msra.mxu0 %v1135
    %2187 = vmatpush.bf16.msra.mxu0 %v1127
    %2188 = vmatpush.bf16.msra.mxu0 %v1119
    %2189 = vmatmul.bf16.gmra.mxu0 %v2037
    %v2190 = vpop.f32.mrf.mxu0
    %v2191 = vadd.f32 %v2178, %v2190
    %v2192 = vpop.f32.mrf.mxu0
    %2193 = vdwg.mxu0
    %2194 = vmatpush.bf16.msra.mxu0 %v1112
    %2195 = vmatpush.bf16.msra.mxu0 %v1104
    %2196 = vmatpush.bf16.msra.mxu0 %v1096
    %2197 = vmatpush.bf16.msra.mxu0 %v1088
    %2198 = vmatpush.bf16.msra.mxu0 %v1080
    %2199 = vmatpush.bf16.msra.mxu0 %v1072
    %2200 = vmatpush.bf16.msra.mxu0 %v1064
    %2201 = vmatpush.bf16.msra.mxu0 %v1056
    %2202 = vmatmul.bf16.gmra.mxu0 %v2036
    %v2203 = vpop.f32.mrf.mxu0
    %v2204 = vadd.f32 0.0, %v2203
    %v2205 = vpop.f32.mrf.mxu0
    %2206 = vdwg.mxu0
    %2207 = vmatpush.bf16.msra.mxu0 %v1176
    %2208 = vmatpush.bf16.msra.mxu0 %v1168
    %2209 = vmatpush.bf16.msra.mxu0 %v1160
    %2210 = vmatpush.bf16.msra.mxu0 %v1152
    %2211 = vmatpush.bf16.msra.mxu0 %v1144
    %2212 = vmatpush.bf16.msra.mxu0 %v1136
    %2213 = vmatpush.bf16.msra.mxu0 %v1128
    %2214 = vmatpush.bf16.msra.mxu0 %v1120
    %2215 = vmatmul.bf16.gmra.mxu0 %v2037
    %v2216 = vpop.f32.mrf.mxu0
    %v2217 = vadd.f32 %v2204, %v2216
    %v2218 = vpop.f32.mrf.mxu0
    %2219 = vdwg.mxu0
    %2220 = vmatpush.bf16.msra.mxu0 %v1113
    %2221 = vmatpush.bf16.msra.mxu0 %v1105
    %2222 = vmatpush.bf16.msra.mxu0 %v1097
    %2223 = vmatpush.bf16.msra.mxu0 %v1089
    %2224 = vmatpush.bf16.msra.mxu0 %v1081
    %2225 = vmatpush.bf16.msra.mxu0 %v1073
    %2226 = vmatpush.bf16.msra.mxu0 %v1065
    %2227 = vmatpush.bf16.msra.mxu0 %v1057
    %2228 = vmatmul.bf16.gmra.mxu0 %v2036
    %v2229 = vpop.f32.mrf.mxu0
    %v2230 = vadd.f32 0.0, %v2229
    %v2231 = vpop.f32.mrf.mxu0
    %2232 = vdwg.mxu0
    %2233 = vmatpush.bf16.msra.mxu0 %v1177
    %2234 = vmatpush.bf16.msra.mxu0 %v1169
    %2235 = vmatpush.bf16.msra.mxu0 %v1161
    %2236 = vmatpush.bf16.msra.mxu0 %v1153
    %2237 = vmatpush.bf16.msra.mxu0 %v1145
    %2238 = vmatpush.bf16.msra.mxu0 %v1137
    %2239 = vmatpush.bf16.msra.mxu0 %v1129
    %2240 = vmatpush.bf16.msra.mxu0 %v1121
    %2241 = vmatmul.bf16.gmra.mxu0 %v2037
    %v2242 = vpop.f32.mrf.mxu0
    %v2243 = vadd.f32 %v2230, %v2242
    %v2244 = vpop.f32.mrf.mxu0
    %2245 = vdwg.mxu0
    %s2246 = smul.u32 2, 8
    %s2247 = smul.addr %s2246, 8
    %s2248 = scalar_lea.vmem [#allocation2], %s2247
    %v2249 = vld [vmem:[%s2248] sm:$0xff]
    %v2250 = vld [vmem:[%s2248 + $0x8] sm:$0xff]
    %v2251 = vld [vmem:[%s2248 + $0x10] sm:$0xff]
    %v2252 = vld [vmem:[%s2248 + $0x18] sm:$0xff]
    %v2253 = vadd.f32 %v2249, %v2061
    %v2254 = vadd.f32 %v2250, %v2087
    %v2255 = vadd.f32 %v2251, %v2113
    %v2256 = vadd.f32 %v2252, %v2139
    %s2257 = smul.u32 5, 8
    %s2258 = smul.addr %s2257, 8
    %s2259 = scalar_lea.vmem [#allocation2], %s2258
    %v2260 = vld [vmem:[%s2259 + $0x20] sm:$0xff]
    %v2261 = vld [vmem:[%s2259 + $0x28] sm:$0xff]
    %v2262 = vld [vmem:[%s2259 + $0x30] sm:$0xff]
    %v2263 = vld [vmem:[%s2259 + $0x38] sm:$0xff]
    %v2264 = vadd.f32 %v2260, %v2165
    %v2265 = vadd.f32 %v2261, %v2191
    %v2266 = vadd.f32 %v2262, %v2217
    %v2267 = vadd.f32 %v2263, %v2243
    %v2268 = vxor.u32 %v2253, 2147483648
    %v2269 = vxor.u32 %v2254, 2147483648
    %v2270 = vxor.u32 %v2255, 2147483648
    %v2271 = vmul.f32 %v2268, 1.442695
    %v2272 = vpow.pop %v2271
    %v2273 = vmul.f32 %v2269, 1.442695
    %v2274 = vpow.pop %v2273
    %v2275 = vmul.f32 %v2270, 1.442695
    %v2276 = vpow.pop %v2275
    %v2277 = vadd.f32 %v2272, 1.0
    %v2278 = vadd.f32 %v2274, 1.0
    %v2279 = vadd.f32 %v2276, 1.0
    %v2280 = vrcp.pop %v2277
    %v2281 = vmul.f32 %v2277, %v2280
    %v2282 = vsub.f32 1.0, %v2281
    %v2283 = vmul.f32 %v2280, %v2282
    %v2284 = vadd.f32 %v2280, %v2283
    %vm2285 = vweird.f32 %v2277
    %vm2286 = vweird.f32 %v2280
    %vm2287 = vmor %vm2285, %vm2286
    %v2288 = vsel %vm2287, %v2280, %v2284
    %v2289 = vand.u32 2147483647, %v2277
    %vm2290 = vcmp.eq.f32.partialorder %v2289, 8.507059e+37
    %v2291 = vand.u32 %v2277, 2147483648
    %v2292 = vor.u32 1.1754944e-38, %v2291
    %v2293 = vsel %vm2290, %v2292, %v2288
    %v2294 = vmul.f32 1.0, %v2293
    %v2295 = vrcp.pop %v2278
    %v2296 = vmul.f32 %v2278, %v2295
    %v2297 = vsub.f32 1.0, %v2296
    %v2298 = vmul.f32 %v2295, %v2297
    %v2299 = vadd.f32 %v2295, %v2298
    %vm2300 = vweird.f32 %v2278
    %vm2301 = vweird.f32 %v2295
    %vm2302 = vmor %vm2300, %vm2301
    %v2303 = vsel %vm2302, %v2295, %v2299
    %v2304 = vand.u32 2147483647, %v2278
    %vm2305 = vcmp.eq.f32.partialorder %v2304, 8.507059e+37
    %v2306 = vand.u32 %v2278, 2147483648
    %v2307 = vor.u32 1.1754944e-38, %v2306
    %v2308 = vsel %vm2305, %v2307, %v2303
    %v2309 = vmul.f32 1.0, %v2308
    %v2310 = vrcp.pop %v2279
    %v2311 = vmul.f32 %v2279, %v2310
    %v2312 = vsub.f32 1.0, %v2311
    %v2313 = vmul.f32 %v2310, %v2312
    %v2314 = vadd.f32 %v2310, %v2313
    %vm2315 = vweird.f32 %v2279
    %vm2316 = vweird.f32 %v2310
    %vm2317 = vmor %vm2315, %vm2316
    %v2318 = vsel %vm2317, %v2310, %v2314
    %v2319 = vand.u32 2147483647, %v2279
    %vm2320 = vcmp.eq.f32.partialorder %v2319, 8.507059e+37
    %v2321 = vand.u32 %v2279, 2147483648
    %v2322 = vor.u32 1.1754944e-38, %v2321
    %v2323 = vsel %vm2320, %v2322, %v2318
    %v2324 = vmul.f32 1.0, %v2323
    %v2325 = vtanh.pop %v2256
    %v2326 = vxor.u32 %v2264, 2147483648
    %v2327 = vxor.u32 %v2265, 2147483648
    %v2328 = vxor.u32 %v2266, 2147483648
    %v2329 = vmul.f32 %v2326, 1.442695
    %v2330 = vpow.pop %v2329
    %v2331 = vmul.f32 %v2327, 1.442695
    %v2332 = vpow.pop %v2331
    %v2333 = vmul.f32 %v2328, 1.442695
    %v2334 = vpow.pop %v2333
    %v2335 = vadd.f32 %v2330, 1.0
    %v2336 = vadd.f32 %v2332, 1.0
    %v2337 = vadd.f32 %v2334, 1.0
    %v2338 = vrcp.pop %v2335
    %v2339 = vmul.f32 %v2335, %v2338
    %v2340 = vsub.f32 1.0, %v2339
    %v2341 = vmul.f32 %v2338, %v2340
    %v2342 = vadd.f32 %v2338, %v2341
    %vm2343 = vweird.f32 %v2335
    %vm2344 = vweird.f32 %v2338
    %vm2345 = vmor %vm2343, %vm2344
    %v2346 = vsel %vm2345, %v2338, %v2342
    %v2347 = vand.u32 2147483647, %v2335
    %vm2348 = vcmp.eq.f32.partialorder %v2347, 8.507059e+37
    %v2349 = vand.u32 %v2335, 2147483648
    %v2350 = vor.u32 1.1754944e-38, %v2349
    %v2351 = vsel %vm2348, %v2350, %v2346
    %v2352 = vmul.f32 1.0, %v2351
    %v2353 = vrcp.pop %v2336
    %v2354 = vmul.f32 %v2336, %v2353
    %v2355 = vsub.f32 1.0, %v2354
    %v2356 = vmul.f32 %v2353, %v2355
    %v2357 = vadd.f32 %v2353, %v2356
    %vm2358 = vweird.f32 %v2336
    %vm2359 = vweird.f32 %v2353
    %vm2360 = vmor %vm2358, %vm2359
    %v2361 = vsel %vm2360, %v2353, %v2357
    %v2362 = vand.u32 2147483647, %v2336
    %vm2363 = vcmp.eq.f32.partialorder %v2362, 8.507059e+37
    %v2364 = vand.u32 %v2336, 2147483648
    %v2365 = vor.u32 1.1754944e-38, %v2364
    %v2366 = vsel %vm2363, %v2365, %v2361
    %v2367 = vmul.f32 1.0, %v2366
    %v2368 = vrcp.pop %v2337
    %v2369 = vmul.f32 %v2337, %v2368
    %v2370 = vsub.f32 1.0, %v2369
    %v2371 = vmul.f32 %v2368, %v2370
    %v2372 = vadd.f32 %v2368, %v2371
    %vm2373 = vweird.f32 %v2337
    %vm2374 = vweird.f32 %v2368
    %vm2375 = vmor %vm2373, %vm2374
    %v2376 = vsel %vm2375, %v2368, %v2372
    %v2377 = vand.u32 2147483647, %v2337
    %vm2378 = vcmp.eq.f32.partialorder %v2377, 8.507059e+37
    %v2379 = vand.u32 %v2337, 2147483648
    %v2380 = vor.u32 1.1754944e-38, %v2379
    %v2381 = vsel %vm2378, %v2380, %v2376
    %v2382 = vmul.f32 1.0, %v2381
    %v2383 = vtanh.pop %v2267
    %v2384 = vmul.f32 %v2309, %v2020
    %v2385 = vmul.f32 %v2294, %v2325
    %v2386 = vadd.f32 %v2384, %v2385
    %v2387 = vmul.f32 %v2367, %v2023
    %v2388 = vmul.f32 %v2352, %v2383
    %v2389 = vadd.f32 %v2387, %v2388
    %v2390 = vtanh.pop %v2386
    %v2391 = vmul.f32 %v2324, %v2390
    %v2392 = vtanh.pop %v2389
    %v2393 = vmul.f32 %v2382, %v2392
    %s2394 = smul.u32 2, 2
    %s2395 = smul.addr %s2394, 8
    %s2396 = scalar_lea.vmem [#allocation3], %s2395
    %2397 = vst [vmem:[%s2396] sm:$0xff] %v2391
    %s2398 = smul.u32 5, 2
    %s2399 = smul.addr %s2398, 8
    %s2400 = scalar_lea.vmem [#allocation3], %s2399
    %2401 = vst [vmem:[%s2400 + $0x8] sm:$0xff] %v2393
    %v2402 = vpack.c.bf16 %v2391, %v2391
    %v2403 = vpack.c.bf16 %v2393, %v2393
    %2404 = vmatpush.bf16.msra.mxu0 %v1106
    %2405 = vmatpush.bf16.msra.mxu0 %v1098
    %2406 = vmatpush.bf16.msra.mxu0 %v1090
    %2407 = vmatpush.bf16.msra.mxu0 %v1082
    %2408 = vmatpush.bf16.msra.mxu0 %v1074
    %2409 = vmatpush.bf16.msra.mxu0 %v1066
    %2410 = vmatpush.bf16.msra.mxu0 %v1058
    %2411 = vmatpush.bf16.msra.mxu0 %v1050
    %2412 = vmatmul.bf16.gmra.mxu0 %v2402
    %v2413 = vpop.f32.mrf.mxu0
    %v2414 = vadd.f32 0.0, %v2413
    %v2415 = vpop.f32.mrf.mxu0
    %2416 = vdwg.mxu0
    %2417 = vmatpush.bf16.msra.mxu0 %v1170
    %2418 = vmatpush.bf16.msra.mxu0 %v1162
    %2419 = vmatpush.bf16.msra.mxu0 %v1154
    %2420 = vmatpush.bf16.msra.mxu0 %v1146
    %2421 = vmatpush.bf16.msra.mxu0 %v1138
    %2422 = vmatpush.bf16.msra.mxu0 %v1130
    %2423 = vmatpush.bf16.msra.mxu0 %v1122
    %2424 = vmatpush.bf16.msra.mxu0 %v1114
    %2425 = vmatmul.bf16.gmra.mxu0 %v2403
    %v2426 = vpop.f32.mrf.mxu0
    %v2427 = vadd.f32 %v2414, %v2426
    %v2428 = vpop.f32.mrf.mxu0
    %2429 = vdwg.mxu0
    %2430 = vmatpush.bf16.msra.mxu0 %v1107
    %2431 = vmatpush.bf16.msra.mxu0 %v1099
    %2432 = vmatpush.bf16.msra.mxu0 %v1091
    %2433 = vmatpush.bf16.msra.mxu0 %v1083
    %2434 = vmatpush.bf16.msra.mxu0 %v1075
    %2435 = vmatpush.bf16.msra.mxu0 %v1067
    %2436 = vmatpush.bf16.msra.mxu0 %v1059
    %2437 = vmatpush.bf16.msra.mxu0 %v1051
    %2438 = vmatmul.bf16.gmra.mxu0 %v2402
    %v2439 = vpop.f32.mrf.mxu0
    %v2440 = vadd.f32 0.0, %v2439
    %v2441 = vpop.f32.mrf.mxu0
    %2442 = vdwg.mxu0
    %2443 = vmatpush.bf16.msra.mxu0 %v1171
    %2444 = vmatpush.bf16.msra.mxu0 %v1163
    %2445 = vmatpush.bf16.msra.mxu0 %v1155
    %2446 = vmatpush.bf16.msra.mxu0 %v1147
    %2447 = vmatpush.bf16.msra.mxu0 %v1139
    %2448 = vmatpush.bf16.msra.mxu0 %v1131
    %2449 = vmatpush.bf16.msra.mxu0 %v1123
    %2450 = vmatpush.bf16.msra.mxu0 %v1115
    %2451 = vmatmul.bf16.gmra.mxu0 %v2403
    %v2452 = vpop.f32.mrf.mxu0
    %v2453 = vadd.f32 %v2440, %v2452
    %v2454 = vpop.f32.mrf.mxu0
    %2455 = vdwg.mxu0
    %2456 = vmatpush.bf16.msra.mxu0 %v1108
    %2457 = vmatpush.bf16.msra.mxu0 %v1100
    %2458 = vmatpush.bf16.msra.mxu0 %v1092
    %2459 = vmatpush.bf16.msra.mxu0 %v1084
    %2460 = vmatpush.bf16.msra.mxu0 %v1076
    %2461 = vmatpush.bf16.msra.mxu0 %v1068
    %2462 = vmatpush.bf16.msra.mxu0 %v1060
    %2463 = vmatpush.bf16.msra.mxu0 %v1052
    %2464 = vmatmul.bf16.gmra.mxu0 %v2402
    %v2465 = vpop.f32.mrf.mxu0
    %v2466 = vadd.f32 0.0, %v2465
    %v2467 = vpop.f32.mrf.mxu0
    %2468 = vdwg.mxu0
    %2469 = vmatpush.bf16.msra.mxu0 %v1172
    %2470 = vmatpush.bf16.msra.mxu0 %v1164
    %2471 = vmatpush.bf16.msra.mxu0 %v1156
    %2472 = vmatpush.bf16.msra.mxu0 %v1148
    %2473 = vmatpush.bf16.msra.mxu0 %v1140
    %2474 = vmatpush.bf16.msra.mxu0 %v1132
    %2475 = vmatpush.bf16.msra.mxu0 %v1124
    %2476 = vmatpush.bf16.msra.mxu0 %v1116
    %2477 = vmatmul.bf16.gmra.mxu0 %v2403
    %v2478 = vpop.f32.mrf.mxu0
    %v2479 = vadd.f32 %v2466, %v2478
    %v2480 = vpop.f32.mrf.mxu0
    %2481 = vdwg.mxu0
    %2482 = vmatpush.bf16.msra.mxu0 %v1109
    %2483 = vmatpush.bf16.msra.mxu0 %v1101
    %2484 = vmatpush.bf16.msra.mxu0 %v1093
    %2485 = vmatpush.bf16.msra.mxu0 %v1085
    %2486 = vmatpush.bf16.msra.mxu0 %v1077
    %2487 = vmatpush.bf16.msra.mxu0 %v1069
    %2488 = vmatpush.bf16.msra.mxu0 %v1061
    %2489 = vmatpush.bf16.msra.mxu0 %v1053
    %2490 = vmatmul.bf16.gmra.mxu0 %v2402
    %v2491 = vpop.f32.mrf.mxu0
    %v2492 = vadd.f32 0.0, %v2491
    %v2493 = vpop.f32.mrf.mxu0
    %2494 = vdwg.mxu0
    %2495 = vmatpush.bf16.msra.mxu0 %v1173
    %2496 = vmatpush.bf16.msra.mxu0 %v1165
    %2497 = vmatpush.bf16.msra.mxu0 %v1157
    %2498 = vmatpush.bf16.msra.mxu0 %v1149
    %2499 = vmatpush.bf16.msra.mxu0 %v1141
    %2500 = vmatpush.bf16.msra.mxu0 %v1133
    %2501 = vmatpush.bf16.msra.mxu0 %v1125
    %2502 = vmatpush.bf16.msra.mxu0 %v1117
    %2503 = vmatmul.bf16.gmra.mxu0 %v2403
    %v2504 = vpop.f32.mrf.mxu0
    %v2505 = vadd.f32 %v2492, %v2504
    %v2506 = vpop.f32.mrf.mxu0
    %2507 = vdwg.mxu0
    %2508 = vmatpush.bf16.msra.mxu0 %v1110
    %2509 = vmatpush.bf16.msra.mxu0 %v1102
    %2510 = vmatpush.bf16.msra.mxu0 %v1094
    %2511 = vmatpush.bf16.msra.mxu0 %v1086
    %2512 = vmatpush.bf16.msra.mxu0 %v1078
    %2513 = vmatpush.bf16.msra.mxu0 %v1070
    %2514 = vmatpush.bf16.msra.mxu0 %v1062
    %2515 = vmatpush.bf16.msra.mxu0 %v1054
    %2516 = vmatmul.bf16.gmra.mxu0 %v2402
    %v2517 = vpop.f32.mrf.mxu0
    %v2518 = vadd.f32 0.0, %v2517
    %v2519 = vpop.f32.mrf.mxu0
    %2520 = vdwg.mxu0
    %2521 = vmatpush.bf16.msra.mxu0 %v1174
    %2522 = vmatpush.bf16.msra.mxu0 %v1166
    %2523 = vmatpush.bf16.msra.mxu0 %v1158
    %2524 = vmatpush.bf16.msra.mxu0 %v1150
    %2525 = vmatpush.bf16.msra.mxu0 %v1142
    %2526 = vmatpush.bf16.msra.mxu0 %v1134
    %2527 = vmatpush.bf16.msra.mxu0 %v1126
    %2528 = vmatpush.bf16.msra.mxu0 %v1118
    %2529 = vmatmul.bf16.gmra.mxu0 %v2403
    %v2530 = vpop.f32.mrf.mxu0
    %v2531 = vadd.f32 %v2518, %v2530
    %v2532 = vpop.f32.mrf.mxu0
    %2533 = vdwg.mxu0
    %2534 = vmatpush.bf16.msra.mxu0 %v1111
    %2535 = vmatpush.bf16.msra.mxu0 %v1103
    %2536 = vmatpush.bf16.msra.mxu0 %v1095
    %2537 = vmatpush.bf16.msra.mxu0 %v1087
    %2538 = vmatpush.bf16.msra.mxu0 %v1079
    %2539 = vmatpush.bf16.msra.mxu0 %v1071
    %2540 = vmatpush.bf16.msra.mxu0 %v1063
    %2541 = vmatpush.bf16.msra.mxu0 %v1055
    %2542 = vmatmul.bf16.gmra.mxu0 %v2402
    %v2543 = vpop.f32.mrf.mxu0
    %v2544 = vadd.f32 0.0, %v2543
    %v2545 = vpop.f32.mrf.mxu0
    %2546 = vdwg.mxu0
    %2547 = vmatpush.bf16.msra.mxu0 %v1175
    %2548 = vmatpush.bf16.msra.mxu0 %v1167
    %2549 = vmatpush.bf16.msra.mxu0 %v1159
    %2550 = vmatpush.bf16.msra.mxu0 %v1151
    %2551 = vmatpush.bf16.msra.mxu0 %v1143
    %2552 = vmatpush.bf16.msra.mxu0 %v1135
    %2553 = vmatpush.bf16.msra.mxu0 %v1127
    %2554 = vmatpush.bf16.msra.mxu0 %v1119
    %2555 = vmatmul.bf16.gmra.mxu0 %v2403
    %v2556 = vpop.f32.mrf.mxu0
    %v2557 = vadd.f32 %v2544, %v2556
    %v2558 = vpop.f32.mrf.mxu0
    %2559 = vdwg.mxu0
    %2560 = vmatpush.bf16.msra.mxu0 %v1112
    %2561 = vmatpush.bf16.msra.mxu0 %v1104
    %2562 = vmatpush.bf16.msra.mxu0 %v1096
    %2563 = vmatpush.bf16.msra.mxu0 %v1088
    %2564 = vmatpush.bf16.msra.mxu0 %v1080
    %2565 = vmatpush.bf16.msra.mxu0 %v1072
    %2566 = vmatpush.bf16.msra.mxu0 %v1064
    %2567 = vmatpush.bf16.msra.mxu0 %v1056
    %2568 = vmatmul.bf16.gmra.mxu0 %v2402
    %v2569 = vpop.f32.mrf.mxu0
    %v2570 = vadd.f32 0.0, %v2569
    %v2571 = vpop.f32.mrf.mxu0
    %2572 = vdwg.mxu0
    %2573 = vmatpush.bf16.msra.mxu0 %v1176
    %2574 = vmatpush.bf16.msra.mxu0 %v1168
    %2575 = vmatpush.bf16.msra.mxu0 %v1160
    %2576 = vmatpush.bf16.msra.mxu0 %v1152
    %2577 = vmatpush.bf16.msra.mxu0 %v1144
    %2578 = vmatpush.bf16.msra.mxu0 %v1136
    %2579 = vmatpush.bf16.msra.mxu0 %v1128
    %2580 = vmatpush.bf16.msra.mxu0 %v1120
    %2581 = vmatmul.bf16.gmra.mxu0 %v2403
    %v2582 = vpop.f32.mrf.mxu0
    %v2583 = vadd.f32 %v2570, %v2582
    %v2584 = vpop.f32.mrf.mxu0
    %2585 = vdwg.mxu0
    %2586 = vmatpush.bf16.msra.mxu0 %v1113
    %2587 = vmatpush.bf16.msra.mxu0 %v1105
    %2588 = vmatpush.bf16.msra.mxu0 %v1097
    %2589 = vmatpush.bf16.msra.mxu0 %v1089
    %2590 = vmatpush.bf16.msra.mxu0 %v1081
    %2591 = vmatpush.bf16.msra.mxu0 %v1073
    %2592 = vmatpush.bf16.msra.mxu0 %v1065
    %2593 = vmatpush.bf16.msra.mxu0 %v1057
    %2594 = vmatmul.bf16.gmra.mxu0 %v2402
    %v2595 = vpop.f32.mrf.mxu0
    %v2596 = vadd.f32 0.0, %v2595
    %v2597 = vpop.f32.mrf.mxu0
    %2598 = vdwg.mxu0
    %2599 = vmatpush.bf16.msra.mxu0 %v1177
    %2600 = vmatpush.bf16.msra.mxu0 %v1169
    %2601 = vmatpush.bf16.msra.mxu0 %v1161
    %2602 = vmatpush.bf16.msra.mxu0 %v1153
    %2603 = vmatpush.bf16.msra.mxu0 %v1145
    %2604 = vmatpush.bf16.msra.mxu0 %v1137
    %2605 = vmatpush.bf16.msra.mxu0 %v1129
    %2606 = vmatpush.bf16.msra.mxu0 %v1121
    %2607 = vmatmul.bf16.gmra.mxu0 %v2403
    %v2608 = vpop.f32.mrf.mxu0
    %v2609 = vadd.f32 %v2596, %v2608
    %v2610 = vpop.f32.mrf.mxu0
    %2611 = vdwg.mxu0
    %s2612 = smul.u32 3, 8
    %s2613 = smul.addr %s2612, 8
    %s2614 = scalar_lea.vmem [#allocation2], %s2613
    %v2615 = vld [vmem:[%s2614] sm:$0xff]
    %v2616 = vld [vmem:[%s2614 + $0x8] sm:$0xff]
    %v2617 = vld [vmem:[%s2614 + $0x10] sm:$0xff]
    %v2618 = vld [vmem:[%s2614 + $0x18] sm:$0xff]
    %v2619 = vadd.f32 %v2615, %v2427
    %v2620 = vadd.f32 %v2616, %v2453
    %v2621 = vadd.f32 %v2617, %v2479
    %v2622 = vadd.f32 %v2618, %v2505
    %s2623 = smul.u32 4, 8
    %s2624 = smul.addr %s2623, 8
    %s2625 = scalar_lea.vmem [#allocation2], %s2624
    %v2626 = vld [vmem:[%s2625 + $0x20] sm:$0xff]
    %v2627 = vld [vmem:[%s2625 + $0x28] sm:$0xff]
    %v2628 = vld [vmem:[%s2625 + $0x30] sm:$0xff]
    %v2629 = vld [vmem:[%s2625 + $0x38] sm:$0xff]
    %v2630 = vadd.f32 %v2626, %v2531
    %v2631 = vadd.f32 %v2627, %v2557
    %v2632 = vadd.f32 %v2628, %v2583
    %v2633 = vadd.f32 %v2629, %v2609
    %v2634 = vxor.u32 %v2619, 2147483648
    %v2635 = vxor.u32 %v2620, 2147483648
    %v2636 = vxor.u32 %v2621, 2147483648
    %v2637 = vmul.f32 %v2634, 1.442695
    %v2638 = vpow.pop %v2637
    %v2639 = vmul.f32 %v2635, 1.442695
    %v2640 = vpow.pop %v2639
    %v2641 = vmul.f32 %v2636, 1.442695
    %v2642 = vpow.pop %v2641
    %v2643 = vadd.f32 %v2638, 1.0
    %v2644 = vadd.f32 %v2640, 1.0
    %v2645 = vadd.f32 %v2642, 1.0
    %v2646 = vrcp.pop %v2643
    %v2647 = vmul.f32 %v2643, %v2646
    %v2648 = vsub.f32 1.0, %v2647
    %v2649 = vmul.f32 %v2646, %v2648
    %v2650 = vadd.f32 %v2646, %v2649
    %vm2651 = vweird.f32 %v2643
    %vm2652 = vweird.f32 %v2646
    %vm2653 = vmor %vm2651, %vm2652
    %v2654 = vsel %vm2653, %v2646, %v2650
    %v2655 = vand.u32 2147483647, %v2643
    %vm2656 = vcmp.eq.f32.partialorder %v2655, 8.507059e+37
    %v2657 = vand.u32 %v2643, 2147483648
    %v2658 = vor.u32 1.1754944e-38, %v2657
    %v2659 = vsel %vm2656, %v2658, %v2654
    %v2660 = vmul.f32 1.0, %v2659
    %v2661 = vrcp.pop %v2644
    %v2662 = vmul.f32 %v2644, %v2661
    %v2663 = vsub.f32 1.0, %v2662
    %v2664 = vmul.f32 %v2661, %v2663
    %v2665 = vadd.f32 %v2661, %v2664
    %vm2666 = vweird.f32 %v2644
    %vm2667 = vweird.f32 %v2661
    %vm2668 = vmor %vm2666, %vm2667
    %v2669 = vsel %vm2668, %v2661, %v2665
    %v2670 = vand.u32 2147483647, %v2644
    %vm2671 = vcmp.eq.f32.partialorder %v2670, 8.507059e+37
    %v2672 = vand.u32 %v2644, 2147483648
    %v2673 = vor.u32 1.1754944e-38, %v2672
    %v2674 = vsel %vm2671, %v2673, %v2669
    %v2675 = vmul.f32 1.0, %v2674
    %v2676 = vrcp.pop %v2645
    %v2677 = vmul.f32 %v2645, %v2676
    %v2678 = vsub.f32 1.0, %v2677
    %v2679 = vmul.f32 %v2676, %v2678
    %v2680 = vadd.f32 %v2676, %v2679
    %vm2681 = vweird.f32 %v2645
    %vm2682 = vweird.f32 %v2676
    %vm2683 = vmor %vm2681, %vm2682
    %v2684 = vsel %vm2683, %v2676, %v2680
    %v2685 = vand.u32 2147483647, %v2645
    %vm2686 = vcmp.eq.f32.partialorder %v2685, 8.507059e+37
    %v2687 = vand.u32 %v2645, 2147483648
    %v2688 = vor.u32 1.1754944e-38, %v2687
    %v2689 = vsel %vm2686, %v2688, %v2684
    %v2690 = vmul.f32 1.0, %v2689
    %v2691 = vtanh.pop %v2622
    %v2692 = vxor.u32 %v2630, 2147483648
    %v2693 = vxor.u32 %v2631, 2147483648
    %v2694 = vxor.u32 %v2632, 2147483648
    %v2695 = vmul.f32 %v2692, 1.442695
    %v2696 = vpow.pop %v2695
    %v2697 = vmul.f32 %v2693, 1.442695
    %v2698 = vpow.pop %v2697
    %v2699 = vmul.f32 %v2694, 1.442695
    %v2700 = vpow.pop %v2699
    %v2701 = vadd.f32 %v2696, 1.0
    %v2702 = vadd.f32 %v2698, 1.0
    %v2703 = vadd.f32 %v2700, 1.0
    %v2704 = vrcp.pop %v2701
    %v2705 = vmul.f32 %v2701, %v2704
    %v2706 = vsub.f32 1.0, %v2705
    %v2707 = vmul.f32 %v2704, %v2706
    %v2708 = vadd.f32 %v2704, %v2707
    %vm2709 = vweird.f32 %v2701
    %vm2710 = vweird.f32 %v2704
    %vm2711 = vmor %vm2709, %vm2710
    %v2712 = vsel %vm2711, %v2704, %v2708
    %v2713 = vand.u32 2147483647, %v2701
    %vm2714 = vcmp.eq.f32.partialorder %v2713, 8.507059e+37
    %v2715 = vand.u32 %v2701, 2147483648
    %v2716 = vor.u32 1.1754944e-38, %v2715
    %v2717 = vsel %vm2714, %v2716, %v2712
    %v2718 = vmul.f32 1.0, %v2717
    %v2719 = vrcp.pop %v2702
    %v2720 = vmul.f32 %v2702, %v2719
    %v2721 = vsub.f32 1.0, %v2720
    %v2722 = vmul.f32 %v2719, %v2721
    %v2723 = vadd.f32 %v2719, %v2722
    %vm2724 = vweird.f32 %v2702
    %vm2725 = vweird.f32 %v2719
    %vm2726 = vmor %vm2724, %vm2725
    %v2727 = vsel %vm2726, %v2719, %v2723
    %v2728 = vand.u32 2147483647, %v2702
    %vm2729 = vcmp.eq.f32.partialorder %v2728, 8.507059e+37
    %v2730 = vand.u32 %v2702, 2147483648
    %v2731 = vor.u32 1.1754944e-38, %v2730
    %v2732 = vsel %vm2729, %v2731, %v2727
    %v2733 = vmul.f32 1.0, %v2732
    %v2734 = vrcp.pop %v2703
    %v2735 = vmul.f32 %v2703, %v2734
    %v2736 = vsub.f32 1.0, %v2735
    %v2737 = vmul.f32 %v2734, %v2736
    %v2738 = vadd.f32 %v2734, %v2737
    %vm2739 = vweird.f32 %v2703
    %vm2740 = vweird.f32 %v2734
    %vm2741 = vmor %vm2739, %vm2740
    %v2742 = vsel %vm2741, %v2734, %v2738
    %v2743 = vand.u32 2147483647, %v2703
    %vm2744 = vcmp.eq.f32.partialorder %v2743, 8.507059e+37
    %v2745 = vand.u32 %v2703, 2147483648
    %v2746 = vor.u32 1.1754944e-38, %v2745
    %v2747 = vsel %vm2744, %v2746, %v2742
    %v2748 = vmul.f32 1.0, %v2747
    %v2749 = vtanh.pop %v2633
    %v2750 = vmul.f32 %v2675, %v2386
    %v2751 = vmul.f32 %v2660, %v2691
    %v2752 = vadd.f32 %v2750, %v2751
    %v2753 = vmul.f32 %v2733, %v2389
    %v2754 = vmul.f32 %v2718, %v2749
    %v2755 = vadd.f32 %v2753, %v2754
    %v2756 = vtanh.pop %v2752
    %v2757 = vmul.f32 %v2690, %v2756
    %v2758 = vtanh.pop %v2755
    %v2759 = vmul.f32 %v2748, %v2758
    %s2760 = smul.u32 3, 2
    %s2761 = smul.addr %s2760, 8
    %s2762 = scalar_lea.vmem [#allocation3], %s2761
    %2763 = vst [vmem:[%s2762] sm:$0xff] %v2757
    %s2764 = smul.u32 4, 2
    %s2765 = smul.addr %s2764, 8
    %s2766 = scalar_lea.vmem [#allocation3], %s2765
    %2767 = vst [vmem:[%s2766 + $0x8] sm:$0xff] %v2759
    %v2768 = vpack.c.bf16 %v2757, %v2757
    %v2769 = vpack.c.bf16 %v2759, %v2759
    %2770 = vmatpush.bf16.msra.mxu0 %v1106
    %2771 = vmatpush.bf16.msra.mxu0 %v1098
    %2772 = vmatpush.bf16.msra.mxu0 %v1090
    %2773 = vmatpush.bf16.msra.mxu0 %v1082
    %2774 = vmatpush.bf16.msra.mxu0 %v1074
    %2775 = vmatpush.bf16.msra.mxu0 %v1066
    %2776 = vmatpush.bf16.msra.mxu0 %v1058
    %2777 = vmatpush.bf16.msra.mxu0 %v1050
    %2778 = vmatmul.bf16.gmra.mxu0 %v2768
    %v2779 = vpop.f32.mrf.mxu0
    %v2780 = vadd.f32 0.0, %v2779
    %v2781 = vpop.f32.mrf.mxu0
    %2782 = vdwg.mxu0
    %2783 = vmatpush.bf16.msra.mxu0 %v1170
    %2784 = vmatpush.bf16.msra.mxu0 %v1162
    %2785 = vmatpush.bf16.msra.mxu0 %v1154
    %2786 = vmatpush.bf16.msra.mxu0 %v1146
    %2787 = vmatpush.bf16.msra.mxu0 %v1138
    %2788 = vmatpush.bf16.msra.mxu0 %v1130
    %2789 = vmatpush.bf16.msra.mxu0 %v1122
    %2790 = vmatpush.bf16.msra.mxu0 %v1114
    %2791 = vmatmul.bf16.gmra.mxu0 %v2769
    %v2792 = vpop.f32.mrf.mxu0
    %v2793 = vadd.f32 %v2780, %v2792
    %v2794 = vpop.f32.mrf.mxu0
    %2795 = vdwg.mxu0
    %2796 = vmatpush.bf16.msra.mxu0 %v1107
    %2797 = vmatpush.bf16.msra.mxu0 %v1099
    %2798 = vmatpush.bf16.msra.mxu0 %v1091
    %2799 = vmatpush.bf16.msra.mxu0 %v1083
    %2800 = vmatpush.bf16.msra.mxu0 %v1075
    %2801 = vmatpush.bf16.msra.mxu0 %v1067
    %2802 = vmatpush.bf16.msra.mxu0 %v1059
    %2803 = vmatpush.bf16.msra.mxu0 %v1051
    %2804 = vmatmul.bf16.gmra.mxu0 %v2768
    %v2805 = vpop.f32.mrf.mxu0
    %v2806 = vadd.f32 0.0, %v2805
    %v2807 = vpop.f32.mrf.mxu0
    %2808 = vdwg.mxu0
    %2809 = vmatpush.bf16.msra.mxu0 %v1171
    %2810 = vmatpush.bf16.msra.mxu0 %v1163
    %2811 = vmatpush.bf16.msra.mxu0 %v1155
    %2812 = vmatpush.bf16.msra.mxu0 %v1147
    %2813 = vmatpush.bf16.msra.mxu0 %v1139
    %2814 = vmatpush.bf16.msra.mxu0 %v1131
    %2815 = vmatpush.bf16.msra.mxu0 %v1123
    %2816 = vmatpush.bf16.msra.mxu0 %v1115
    %2817 = vmatmul.bf16.gmra.mxu0 %v2769
    %v2818 = vpop.f32.mrf.mxu0
    %v2819 = vadd.f32 %v2806, %v2818
    %v2820 = vpop.f32.mrf.mxu0
    %2821 = vdwg.mxu0
    %2822 = vmatpush.bf16.msra.mxu0 %v1108
    %2823 = vmatpush.bf16.msra.mxu0 %v1100
    %2824 = vmatpush.bf16.msra.mxu0 %v1092
    %2825 = vmatpush.bf16.msra.mxu0 %v1084
    %2826 = vmatpush.bf16.msra.mxu0 %v1076
    %2827 = vmatpush.bf16.msra.mxu0 %v1068
    %2828 = vmatpush.bf16.msra.mxu0 %v1060
    %2829 = vmatpush.bf16.msra.mxu0 %v1052
    %2830 = vmatmul.bf16.gmra.mxu0 %v2768
    %v2831 = vpop.f32.mrf.mxu0
    %v2832 = vadd.f32 0.0, %v2831
    %v2833 = vpop.f32.mrf.mxu0
    %2834 = vdwg.mxu0
    %2835 = vmatpush.bf16.msra.mxu0 %v1172
    %2836 = vmatpush.bf16.msra.mxu0 %v1164
    %2837 = vmatpush.bf16.msra.mxu0 %v1156
    %2838 = vmatpush.bf16.msra.mxu0 %v1148
    %2839 = vmatpush.bf16.msra.mxu0 %v1140
    %2840 = vmatpush.bf16.msra.mxu0 %v1132
    %2841 = vmatpush.bf16.msra.mxu0 %v1124
    %2842 = vmatpush.bf16.msra.mxu0 %v1116
    %2843 = vmatmul.bf16.gmra.mxu0 %v2769
    %v2844 = vpop.f32.mrf.mxu0
    %v2845 = vadd.f32 %v2832, %v2844
    %v2846 = vpop.f32.mrf.mxu0
    %2847 = vdwg.mxu0
    %2848 = vmatpush.bf16.msra.mxu0 %v1109
    %2849 = vmatpush.bf16.msra.mxu0 %v1101
    %2850 = vmatpush.bf16.msra.mxu0 %v1093
    %2851 = vmatpush.bf16.msra.mxu0 %v1085
    %2852 = vmatpush.bf16.msra.mxu0 %v1077
    %2853 = vmatpush.bf16.msra.mxu0 %v1069
    %2854 = vmatpush.bf16.msra.mxu0 %v1061
    %2855 = vmatpush.bf16.msra.mxu0 %v1053
    %2856 = vmatmul.bf16.gmra.mxu0 %v2768
    %v2857 = vpop.f32.mrf.mxu0
    %v2858 = vadd.f32 0.0, %v2857
    %v2859 = vpop.f32.mrf.mxu0
    %2860 = vdwg.mxu0
    %2861 = vmatpush.bf16.msra.mxu0 %v1173
    %2862 = vmatpush.bf16.msra.mxu0 %v1165
    %2863 = vmatpush.bf16.msra.mxu0 %v1157
    %2864 = vmatpush.bf16.msra.mxu0 %v1149
    %2865 = vmatpush.bf16.msra.mxu0 %v1141
    %2866 = vmatpush.bf16.msra.mxu0 %v1133
    %2867 = vmatpush.bf16.msra.mxu0 %v1125
    %2868 = vmatpush.bf16.msra.mxu0 %v1117
    %2869 = vmatmul.bf16.gmra.mxu0 %v2769
    %v2870 = vpop.f32.mrf.mxu0
    %v2871 = vadd.f32 %v2858, %v2870
    %v2872 = vpop.f32.mrf.mxu0
    %2873 = vdwg.mxu0
    %2874 = vmatpush.bf16.msra.mxu0 %v1110
    %2875 = vmatpush.bf16.msra.mxu0 %v1102
    %2876 = vmatpush.bf16.msra.mxu0 %v1094
    %2877 = vmatpush.bf16.msra.mxu0 %v1086
    %2878 = vmatpush.bf16.msra.mxu0 %v1078
    %2879 = vmatpush.bf16.msra.mxu0 %v1070
    %2880 = vmatpush.bf16.msra.mxu0 %v1062
    %2881 = vmatpush.bf16.msra.mxu0 %v1054
    %2882 = vmatmul.bf16.gmra.mxu0 %v2768
    %v2883 = vpop.f32.mrf.mxu0
    %v2884 = vadd.f32 0.0, %v2883
    %v2885 = vpop.f32.mrf.mxu0
    %2886 = vdwg.mxu0
    %2887 = vmatpush.bf16.msra.mxu0 %v1174
    %2888 = vmatpush.bf16.msra.mxu0 %v1166
    %2889 = vmatpush.bf16.msra.mxu0 %v1158
    %2890 = vmatpush.bf16.msra.mxu0 %v1150
    %2891 = vmatpush.bf16.msra.mxu0 %v1142
    %2892 = vmatpush.bf16.msra.mxu0 %v1134
    %2893 = vmatpush.bf16.msra.mxu0 %v1126
    %2894 = vmatpush.bf16.msra.mxu0 %v1118
    %2895 = vmatmul.bf16.gmra.mxu0 %v2769
    %v2896 = vpop.f32.mrf.mxu0
    %v2897 = vadd.f32 %v2884, %v2896
    %v2898 = vpop.f32.mrf.mxu0
    %2899 = vdwg.mxu0
    %2900 = vmatpush.bf16.msra.mxu0 %v1111
    %2901 = vmatpush.bf16.msra.mxu0 %v1103
    %2902 = vmatpush.bf16.msra.mxu0 %v1095
    %2903 = vmatpush.bf16.msra.mxu0 %v1087
    %2904 = vmatpush.bf16.msra.mxu0 %v1079
    %2905 = vmatpush.bf16.msra.mxu0 %v1071
    %2906 = vmatpush.bf16.msra.mxu0 %v1063
    %2907 = vmatpush.bf16.msra.mxu0 %v1055
    %2908 = vmatmul.bf16.gmra.mxu0 %v2768
    %v2909 = vpop.f32.mrf.mxu0
    %v2910 = vadd.f32 0.0, %v2909
    %v2911 = vpop.f32.mrf.mxu0
    %2912 = vdwg.mxu0
    %2913 = vmatpush.bf16.msra.mxu0 %v1175
    %2914 = vmatpush.bf16.msra.mxu0 %v1167
    %2915 = vmatpush.bf16.msra.mxu0 %v1159
    %2916 = vmatpush.bf16.msra.mxu0 %v1151
    %2917 = vmatpush.bf16.msra.mxu0 %v1143
    %2918 = vmatpush.bf16.msra.mxu0 %v1135
    %2919 = vmatpush.bf16.msra.mxu0 %v1127
    %2920 = vmatpush.bf16.msra.mxu0 %v1119
    %2921 = vmatmul.bf16.gmra.mxu0 %v2769
    %v2922 = vpop.f32.mrf.mxu0
    %v2923 = vadd.f32 %v2910, %v2922
    %v2924 = vpop.f32.mrf.mxu0
    %2925 = vdwg.mxu0
    %2926 = vmatpush.bf16.msra.mxu0 %v1112
    %2927 = vmatpush.bf16.msra.mxu0 %v1104
    %2928 = vmatpush.bf16.msra.mxu0 %v1096
    %2929 = vmatpush.bf16.msra.mxu0 %v1088
    %2930 = vmatpush.bf16.msra.mxu0 %v1080
    %2931 = vmatpush.bf16.msra.mxu0 %v1072
    %2932 = vmatpush.bf16.msra.mxu0 %v1064
    %2933 = vmatpush.bf16.msra.mxu0 %v1056
    %2934 = vmatmul.bf16.gmra.mxu0 %v2768
    %v2935 = vpop.f32.mrf.mxu0
    %v2936 = vadd.f32 0.0, %v2935
    %v2937 = vpop.f32.mrf.mxu0
    %2938 = vdwg.mxu0
    %2939 = vmatpush.bf16.msra.mxu0 %v1176
    %2940 = vmatpush.bf16.msra.mxu0 %v1168
    %2941 = vmatpush.bf16.msra.mxu0 %v1160
    %2942 = vmatpush.bf16.msra.mxu0 %v1152
    %2943 = vmatpush.bf16.msra.mxu0 %v1144
    %2944 = vmatpush.bf16.msra.mxu0 %v1136
    %2945 = vmatpush.bf16.msra.mxu0 %v1128
    %2946 = vmatpush.bf16.msra.mxu0 %v1120
    %2947 = vmatmul.bf16.gmra.mxu0 %v2769
    %v2948 = vpop.f32.mrf.mxu0
    %v2949 = vadd.f32 %v2936, %v2948
    %v2950 = vpop.f32.mrf.mxu0
    %2951 = vdwg.mxu0
    %2952 = vmatpush.bf16.msra.mxu0 %v1113
    %2953 = vmatpush.bf16.msra.mxu0 %v1105
    %2954 = vmatpush.bf16.msra.mxu0 %v1097
    %2955 = vmatpush.bf16.msra.mxu0 %v1089
    %2956 = vmatpush.bf16.msra.mxu0 %v1081
    %2957 = vmatpush.bf16.msra.mxu0 %v1073
    %2958 = vmatpush.bf16.msra.mxu0 %v1065
    %2959 = vmatpush.bf16.msra.mxu0 %v1057
    %2960 = vmatmul.bf16.gmra.mxu0 %v2768
    %v2961 = vpop.f32.mrf.mxu0
    %v2962 = vadd.f32 0.0, %v2961
    %v2963 = vpop.f32.mrf.mxu0
    %2964 = vdwg.mxu0
    %2965 = vmatpush.bf16.msra.mxu0 %v1177
    %2966 = vmatpush.bf16.msra.mxu0 %v1169
    %2967 = vmatpush.bf16.msra.mxu0 %v1161
    %2968 = vmatpush.bf16.msra.mxu0 %v1153
    %2969 = vmatpush.bf16.msra.mxu0 %v1145
    %2970 = vmatpush.bf16.msra.mxu0 %v1137
    %2971 = vmatpush.bf16.msra.mxu0 %v1129
    %2972 = vmatpush.bf16.msra.mxu0 %v1121
    %2973 = vmatmul.bf16.gmra.mxu0 %v2769
    %v2974 = vpop.f32.mrf.mxu0
    %v2975 = vadd.f32 %v2962, %v2974
    %v2976 = vpop.f32.mrf.mxu0
    %2977 = vdwg.mxu0
    %v2978 = vld [vmem:[%s2625] sm:$0xff]
    %v2979 = vld [vmem:[%s2625 + $0x8] sm:$0xff]
    %v2980 = vld [vmem:[%s2625 + $0x10] sm:$0xff]
    %v2981 = vld [vmem:[%s2625 + $0x18] sm:$0xff]
    %v2982 = vadd.f32 %v2978, %v2793
    %v2983 = vadd.f32 %v2979, %v2819
    %v2984 = vadd.f32 %v2980, %v2845
    %v2985 = vadd.f32 %v2981, %v2871
    %v2986 = vld [vmem:[%s2614 + $0x20] sm:$0xff]
    %v2987 = vld [vmem:[%s2614 + $0x28] sm:$0xff]
    %v2988 = vld [vmem:[%s2614 + $0x30] sm:$0xff]
    %v2989 = vld [vmem:[%s2614 + $0x38] sm:$0xff]
    %v2990 = vadd.f32 %v2986, %v2897
    %v2991 = vadd.f32 %v2987, %v2923
    %v2992 = vadd.f32 %v2988, %v2949
    %v2993 = vadd.f32 %v2989, %v2975
    %v2994 = vxor.u32 %v2982, 2147483648
    %v2995 = vxor.u32 %v2983, 2147483648
    %v2996 = vxor.u32 %v2984, 2147483648
    %v2997 = vmul.f32 %v2994, 1.442695
    %v2998 = vpow.pop %v2997
    %v2999 = vmul.f32 %v2995, 1.442695
    %v3000 = vpow.pop %v2999
    %v3001 = vmul.f32 %v2996, 1.442695
    %v3002 = vpow.pop %v3001
    %v3003 = vadd.f32 %v2998, 1.0
    %v3004 = vadd.f32 %v3000, 1.0
    %v3005 = vadd.f32 %v3002, 1.0
    %v3006 = vrcp.pop %v3003
    %v3007 = vmul.f32 %v3003, %v3006
    %v3008 = vsub.f32 1.0, %v3007
    %v3009 = vmul.f32 %v3006, %v3008
    %v3010 = vadd.f32 %v3006, %v3009
    %vm3011 = vweird.f32 %v3003
    %vm3012 = vweird.f32 %v3006
    %vm3013 = vmor %vm3011, %vm3012
    %v3014 = vsel %vm3013, %v3006, %v3010
    %v3015 = vand.u32 2147483647, %v3003
    %vm3016 = vcmp.eq.f32.partialorder %v3015, 8.507059e+37
    %v3017 = vand.u32 %v3003, 2147483648
    %v3018 = vor.u32 1.1754944e-38, %v3017
    %v3019 = vsel %vm3016, %v3018, %v3014
    %v3020 = vmul.f32 1.0, %v3019
    %v3021 = vrcp.pop %v3004
    %v3022 = vmul.f32 %v3004, %v3021
    %v3023 = vsub.f32 1.0, %v3022
    %v3024 = vmul.f32 %v3021, %v3023
    %v3025 = vadd.f32 %v3021, %v3024
    %vm3026 = vweird.f32 %v3004
    %vm3027 = vweird.f32 %v3021
    %vm3028 = vmor %vm3026, %vm3027
    %v3029 = vsel %vm3028, %v3021, %v3025
    %v3030 = vand.u32 2147483647, %v3004
    %vm3031 = vcmp.eq.f32.partialorder %v3030, 8.507059e+37
    %v3032 = vand.u32 %v3004, 2147483648
    %v3033 = vor.u32 1.1754944e-38, %v3032
    %v3034 = vsel %vm3031, %v3033, %v3029
    %v3035 = vmul.f32 1.0, %v3034
    %v3036 = vrcp.pop %v3005
    %v3037 = vmul.f32 %v3005, %v3036
    %v3038 = vsub.f32 1.0, %v3037
    %v3039 = vmul.f32 %v3036, %v3038
    %v3040 = vadd.f32 %v3036, %v3039
    %vm3041 = vweird.f32 %v3005
    %vm3042 = vweird.f32 %v3036
    %vm3043 = vmor %vm3041, %vm3042
    %v3044 = vsel %vm3043, %v3036, %v3040
    %v3045 = vand.u32 2147483647, %v3005
    %vm3046 = vcmp.eq.f32.partialorder %v3045, 8.507059e+37
    %v3047 = vand.u32 %v3005, 2147483648
    %v3048 = vor.u32 1.1754944e-38, %v3047
    %v3049 = vsel %vm3046, %v3048, %v3044
    %v3050 = vmul.f32 1.0, %v3049
    %v3051 = vtanh.pop %v2985
    %v3052 = vxor.u32 %v2990, 2147483648
    %v3053 = vxor.u32 %v2991, 2147483648
    %v3054 = vxor.u32 %v2992, 2147483648
    %v3055 = vmul.f32 %v3052, 1.442695
    %v3056 = vpow.pop %v3055
    %v3057 = vmul.f32 %v3053, 1.442695
    %v3058 = vpow.pop %v3057
    %v3059 = vmul.f32 %v3054, 1.442695
    %v3060 = vpow.pop %v3059
    %v3061 = vadd.f32 %v3056, 1.0
    %v3062 = vadd.f32 %v3058, 1.0
    %v3063 = vadd.f32 %v3060, 1.0
    %v3064 = vrcp.pop %v3061
    %v3065 = vmul.f32 %v3061, %v3064
    %v3066 = vsub.f32 1.0, %v3065
    %v3067 = vmul.f32 %v3064, %v3066
    %v3068 = vadd.f32 %v3064, %v3067
    %vm3069 = vweird.f32 %v3061
    %vm3070 = vweird.f32 %v3064
    %vm3071 = vmor %vm3069, %vm3070
    %v3072 = vsel %vm3071, %v3064, %v3068
    %v3073 = vand.u32 2147483647, %v3061
    %vm3074 = vcmp.eq.f32.partialorder %v3073, 8.507059e+37
    %v3075 = vand.u32 %v3061, 2147483648
    %v3076 = vor.u32 1.1754944e-38, %v3075
    %v3077 = vsel %vm3074, %v3076, %v3072
    %v3078 = vmul.f32 1.0, %v3077
    %v3079 = vrcp.pop %v3062
    %v3080 = vmul.f32 %v3062, %v3079
    %v3081 = vsub.f32 1.0, %v3080
    %v3082 = vmul.f32 %v3079, %v3081
    %v3083 = vadd.f32 %v3079, %v3082
    %vm3084 = vweird.f32 %v3062
    %vm3085 = vweird.f32 %v3079
    %vm3086 = vmor %vm3084, %vm3085
    %v3087 = vsel %vm3086, %v3079, %v3083
    %v3088 = vand.u32 2147483647, %v3062
    %vm3089 = vcmp.eq.f32.partialorder %v3088, 8.507059e+37
    %v3090 = vand.u32 %v3062, 2147483648
    %v3091 = vor.u32 1.1754944e-38, %v3090
    %v3092 = vsel %vm3089, %v3091, %v3087
    %v3093 = vmul.f32 1.0, %v3092
    %v3094 = vrcp.pop %v3063
    %v3095 = vmul.f32 %v3063, %v3094
    %v3096 = vsub.f32 1.0, %v3095
    %v3097 = vmul.f32 %v3094, %v3096
    %v3098 = vadd.f32 %v3094, %v3097
    %vm3099 = vweird.f32 %v3063
    %vm3100 = vweird.f32 %v3094
    %vm3101 = vmor %vm3099, %vm3100
    %v3102 = vsel %vm3101, %v3094, %v3098
    %v3103 = vand.u32 2147483647, %v3063
    %vm3104 = vcmp.eq.f32.partialorder %v3103, 8.507059e+37
    %v3105 = vand.u32 %v3063, 2147483648
    %v3106 = vor.u32 1.1754944e-38, %v3105
    %v3107 = vsel %vm3104, %v3106, %v3102
    %v3108 = vmul.f32 1.0, %v3107
    %v3109 = vtanh.pop %v2993
    %v3110 = vmul.f32 %v3035, %v2752
    %v3111 = vmul.f32 %v3020, %v3051
    %v3112 = vadd.f32 %v3110, %v3111
    %v3113 = vmul.f32 %v3093, %v2755
    %v3114 = vmul.f32 %v3078, %v3109
    %v3115 = vadd.f32 %v3113, %v3114
    %v3116 = vtanh.pop %v3112
    %v3117 = vmul.f32 %v3050, %v3116
    %v3118 = vtanh.pop %v3115
    %v3119 = vmul.f32 %v3108, %v3118
    %3120 = vst [vmem:[%s2766] sm:$0xff] %v3117
    %3121 = vst [vmem:[%s2762 + $0x8] sm:$0xff] %v3119
    %v3122 = vpack.c.bf16 %v3117, %v3117
    %v3123 = vpack.c.bf16 %v3119, %v3119
    %3124 = vmatpush.bf16.msra.mxu0 %v1106
    %3125 = vmatpush.bf16.msra.mxu0 %v1098
    %3126 = vmatpush.bf16.msra.mxu0 %v1090
    %3127 = vmatpush.bf16.msra.mxu0 %v1082
    %3128 = vmatpush.bf16.msra.mxu0 %v1074
    %3129 = vmatpush.bf16.msra.mxu0 %v1066
    %3130 = vmatpush.bf16.msra.mxu0 %v1058
    %3131 = vmatpush.bf16.msra.mxu0 %v1050
    %3132 = vmatmul.bf16.gmra.mxu0 %v3122
    %v3133 = vpop.f32.mrf.mxu0
    %v3134 = vadd.f32 0.0, %v3133
    %v3135 = vpop.f32.mrf.mxu0
    %3136 = vdwg.mxu0
    %3137 = vmatpush.bf16.msra.mxu0 %v1170
    %3138 = vmatpush.bf16.msra.mxu0 %v1162
    %3139 = vmatpush.bf16.msra.mxu0 %v1154
    %3140 = vmatpush.bf16.msra.mxu0 %v1146
    %3141 = vmatpush.bf16.msra.mxu0 %v1138
    %3142 = vmatpush.bf16.msra.mxu0 %v1130
    %3143 = vmatpush.bf16.msra.mxu0 %v1122
    %3144 = vmatpush.bf16.msra.mxu0 %v1114
    %3145 = vmatmul.bf16.gmra.mxu0 %v3123
    %v3146 = vpop.f32.mrf.mxu0
    %v3147 = vadd.f32 %v3134, %v3146
    %v3148 = vpop.f32.mrf.mxu0
    %3149 = vdwg.mxu0
    %3150 = vmatpush.bf16.msra.mxu0 %v1107
    %3151 = vmatpush.bf16.msra.mxu0 %v1099
    %3152 = vmatpush.bf16.msra.mxu0 %v1091
    %3153 = vmatpush.bf16.msra.mxu0 %v1083
    %3154 = vmatpush.bf16.msra.mxu0 %v1075
    %3155 = vmatpush.bf16.msra.mxu0 %v1067
    %3156 = vmatpush.bf16.msra.mxu0 %v1059
    %3157 = vmatpush.bf16.msra.mxu0 %v1051
    %3158 = vmatmul.bf16.gmra.mxu0 %v3122
    %v3159 = vpop.f32.mrf.mxu0
    %v3160 = vadd.f32 0.0, %v3159
    %v3161 = vpop.f32.mrf.mxu0
    %3162 = vdwg.mxu0
    %3163 = vmatpush.bf16.msra.mxu0 %v1171
    %3164 = vmatpush.bf16.msra.mxu0 %v1163
    %3165 = vmatpush.bf16.msra.mxu0 %v1155
    %3166 = vmatpush.bf16.msra.mxu0 %v1147
    %3167 = vmatpush.bf16.msra.mxu0 %v1139
    %3168 = vmatpush.bf16.msra.mxu0 %v1131
    %3169 = vmatpush.bf16.msra.mxu0 %v1123
    %3170 = vmatpush.bf16.msra.mxu0 %v1115
    %3171 = vmatmul.bf16.gmra.mxu0 %v3123
    %v3172 = vpop.f32.mrf.mxu0
    %v3173 = vadd.f32 %v3160, %v3172
    %v3174 = vpop.f32.mrf.mxu0
    %3175 = vdwg.mxu0
    %3176 = vmatpush.bf16.msra.mxu0 %v1108
    %3177 = vmatpush.bf16.msra.mxu0 %v1100
    %3178 = vmatpush.bf16.msra.mxu0 %v1092
    %3179 = vmatpush.bf16.msra.mxu0 %v1084
    %3180 = vmatpush.bf16.msra.mxu0 %v1076
    %3181 = vmatpush.bf16.msra.mxu0 %v1068
    %3182 = vmatpush.bf16.msra.mxu0 %v1060
    %3183 = vmatpush.bf16.msra.mxu0 %v1052
    %3184 = vmatmul.bf16.gmra.mxu0 %v3122
    %v3185 = vpop.f32.mrf.mxu0
    %v3186 = vadd.f32 0.0, %v3185
    %v3187 = vpop.f32.mrf.mxu0
    %3188 = vdwg.mxu0
    %3189 = vmatpush.bf16.msra.mxu0 %v1172
    %3190 = vmatpush.bf16.msra.mxu0 %v1164
    %3191 = vmatpush.bf16.msra.mxu0 %v1156
    %3192 = vmatpush.bf16.msra.mxu0 %v1148
    %3193 = vmatpush.bf16.msra.mxu0 %v1140
    %3194 = vmatpush.bf16.msra.mxu0 %v1132
    %3195 = vmatpush.bf16.msra.mxu0 %v1124
    %3196 = vmatpush.bf16.msra.mxu0 %v1116
    %3197 = vmatmul.bf16.gmra.mxu0 %v3123
    %v3198 = vpop.f32.mrf.mxu0
    %v3199 = vadd.f32 %v3186, %v3198
    %v3200 = vpop.f32.mrf.mxu0
    %3201 = vdwg.mxu0
    %3202 = vmatpush.bf16.msra.mxu0 %v1109
    %3203 = vmatpush.bf16.msra.mxu0 %v1101
    %3204 = vmatpush.bf16.msra.mxu0 %v1093
    %3205 = vmatpush.bf16.msra.mxu0 %v1085
    %3206 = vmatpush.bf16.msra.mxu0 %v1077
    %3207 = vmatpush.bf16.msra.mxu0 %v1069
    %3208 = vmatpush.bf16.msra.mxu0 %v1061
    %3209 = vmatpush.bf16.msra.mxu0 %v1053
    %3210 = vmatmul.bf16.gmra.mxu0 %v3122
    %v3211 = vpop.f32.mrf.mxu0
    %v3212 = vadd.f32 0.0, %v3211
    %v3213 = vpop.f32.mrf.mxu0
    %3214 = vdwg.mxu0
    %3215 = vmatpush.bf16.msra.mxu0 %v1173
    %3216 = vmatpush.bf16.msra.mxu0 %v1165
    %3217 = vmatpush.bf16.msra.mxu0 %v1157
    %3218 = vmatpush.bf16.msra.mxu0 %v1149
    %3219 = vmatpush.bf16.msra.mxu0 %v1141
    %3220 = vmatpush.bf16.msra.mxu0 %v1133
    %3221 = vmatpush.bf16.msra.mxu0 %v1125
    %3222 = vmatpush.bf16.msra.mxu0 %v1117
    %3223 = vmatmul.bf16.gmra.mxu0 %v3123
    %v3224 = vpop.f32.mrf.mxu0
    %v3225 = vadd.f32 %v3212, %v3224
    %v3226 = vpop.f32.mrf.mxu0
    %3227 = vdwg.mxu0
    %3228 = vmatpush.bf16.msra.mxu0 %v1110
    %3229 = vmatpush.bf16.msra.mxu0 %v1102
    %3230 = vmatpush.bf16.msra.mxu0 %v1094
    %3231 = vmatpush.bf16.msra.mxu0 %v1086
    %3232 = vmatpush.bf16.msra.mxu0 %v1078
    %3233 = vmatpush.bf16.msra.mxu0 %v1070
    %3234 = vmatpush.bf16.msra.mxu0 %v1062
    %3235 = vmatpush.bf16.msra.mxu0 %v1054
    %3236 = vmatmul.bf16.gmra.mxu0 %v3122
    %v3237 = vpop.f32.mrf.mxu0
    %v3238 = vadd.f32 0.0, %v3237
    %v3239 = vpop.f32.mrf.mxu0
    %3240 = vdwg.mxu0
    %3241 = vmatpush.bf16.msra.mxu0 %v1174
    %3242 = vmatpush.bf16.msra.mxu0 %v1166
    %3243 = vmatpush.bf16.msra.mxu0 %v1158
    %3244 = vmatpush.bf16.msra.mxu0 %v1150
    %3245 = vmatpush.bf16.msra.mxu0 %v1142
    %3246 = vmatpush.bf16.msra.mxu0 %v1134
    %3247 = vmatpush.bf16.msra.mxu0 %v1126
    %3248 = vmatpush.bf16.msra.mxu0 %v1118
    %3249 = vmatmul.bf16.gmra.mxu0 %v3123
    %v3250 = vpop.f32.mrf.mxu0
    %v3251 = vadd.f32 %v3238, %v3250
    %v3252 = vpop.f32.mrf.mxu0
    %3253 = vdwg.mxu0
    %3254 = vmatpush.bf16.msra.mxu0 %v1111
    %3255 = vmatpush.bf16.msra.mxu0 %v1103
    %3256 = vmatpush.bf16.msra.mxu0 %v1095
    %3257 = vmatpush.bf16.msra.mxu0 %v1087
    %3258 = vmatpush.bf16.msra.mxu0 %v1079
    %3259 = vmatpush.bf16.msra.mxu0 %v1071
    %3260 = vmatpush.bf16.msra.mxu0 %v1063
    %3261 = vmatpush.bf16.msra.mxu0 %v1055
    %3262 = vmatmul.bf16.gmra.mxu0 %v3122
    %v3263 = vpop.f32.mrf.mxu0
    %v3264 = vadd.f32 0.0, %v3263
    %v3265 = vpop.f32.mrf.mxu0
    %3266 = vdwg.mxu0
    %3267 = vmatpush.bf16.msra.mxu0 %v1175
    %3268 = vmatpush.bf16.msra.mxu0 %v1167
    %3269 = vmatpush.bf16.msra.mxu0 %v1159
    %3270 = vmatpush.bf16.msra.mxu0 %v1151
    %3271 = vmatpush.bf16.msra.mxu0 %v1143
    %3272 = vmatpush.bf16.msra.mxu0 %v1135
    %3273 = vmatpush.bf16.msra.mxu0 %v1127
    %3274 = vmatpush.bf16.msra.mxu0 %v1119
    %3275 = vmatmul.bf16.gmra.mxu0 %v3123
    %v3276 = vpop.f32.mrf.mxu0
    %v3277 = vadd.f32 %v3264, %v3276
    %v3278 = vpop.f32.mrf.mxu0
    %3279 = vdwg.mxu0
    %3280 = vmatpush.bf16.msra.mxu0 %v1112
    %3281 = vmatpush.bf16.msra.mxu0 %v1104
    %3282 = vmatpush.bf16.msra.mxu0 %v1096
    %3283 = vmatpush.bf16.msra.mxu0 %v1088
    %3284 = vmatpush.bf16.msra.mxu0 %v1080
    %3285 = vmatpush.bf16.msra.mxu0 %v1072
    %3286 = vmatpush.bf16.msra.mxu0 %v1064
    %3287 = vmatpush.bf16.msra.mxu0 %v1056
    %3288 = vmatmul.bf16.gmra.mxu0 %v3122
    %v3289 = vpop.f32.mrf.mxu0
    %v3290 = vadd.f32 0.0, %v3289
    %v3291 = vpop.f32.mrf.mxu0
    %3292 = vdwg.mxu0
    %3293 = vmatpush.bf16.msra.mxu0 %v1176
    %3294 = vmatpush.bf16.msra.mxu0 %v1168
    %3295 = vmatpush.bf16.msra.mxu0 %v1160
    %3296 = vmatpush.bf16.msra.mxu0 %v1152
    %3297 = vmatpush.bf16.msra.mxu0 %v1144
    %3298 = vmatpush.bf16.msra.mxu0 %v1136
    %3299 = vmatpush.bf16.msra.mxu0 %v1128
    %3300 = vmatpush.bf16.msra.mxu0 %v1120
    %3301 = vmatmul.bf16.gmra.mxu0 %v3123
    %v3302 = vpop.f32.mrf.mxu0
    %v3303 = vadd.f32 %v3290, %v3302
    %v3304 = vpop.f32.mrf.mxu0
    %3305 = vdwg.mxu0
    %3306 = vmatpush.bf16.msra.mxu0 %v1113
    %3307 = vmatpush.bf16.msra.mxu0 %v1105
    %3308 = vmatpush.bf16.msra.mxu0 %v1097
    %3309 = vmatpush.bf16.msra.mxu0 %v1089
    %3310 = vmatpush.bf16.msra.mxu0 %v1081
    %3311 = vmatpush.bf16.msra.mxu0 %v1073
    %3312 = vmatpush.bf16.msra.mxu0 %v1065
    %3313 = vmatpush.bf16.msra.mxu0 %v1057
    %3314 = vmatmul.bf16.gmra.mxu0 %v3122
    %v3315 = vpop.f32.mrf.mxu0
    %v3316 = vadd.f32 0.0, %v3315
    %v3317 = vpop.f32.mrf.mxu0
    %3318 = vdwg.mxu0
    %3319 = vmatpush.bf16.msra.mxu0 %v1177
    %3320 = vmatpush.bf16.msra.mxu0 %v1169
    %3321 = vmatpush.bf16.msra.mxu0 %v1161
    %3322 = vmatpush.bf16.msra.mxu0 %v1153
    %3323 = vmatpush.bf16.msra.mxu0 %v1145
    %3324 = vmatpush.bf16.msra.mxu0 %v1137
    %3325 = vmatpush.bf16.msra.mxu0 %v1129
    %3326 = vmatpush.bf16.msra.mxu0 %v1121
    %3327 = vmatmul.bf16.gmra.mxu0 %v3123
    %v3328 = vpop.f32.mrf.mxu0
    %v3329 = vadd.f32 %v3316, %v3328
    %v3330 = vpop.f32.mrf.mxu0
    %3331 = vdwg.mxu0
    %v3332 = vld [vmem:[%s2259] sm:$0xff]
    %v3333 = vld [vmem:[%s2259 + $0x8] sm:$0xff]
    %v3334 = vld [vmem:[%s2259 + $0x10] sm:$0xff]
    %v3335 = vld [vmem:[%s2259 + $0x18] sm:$0xff]
    %v3336 = vadd.f32 %v3332, %v3147
    %v3337 = vadd.f32 %v3333, %v3173
    %v3338 = vadd.f32 %v3334, %v3199
    %v3339 = vadd.f32 %v3335, %v3225
    %v3340 = vld [vmem:[%s2248 + $0x20] sm:$0xff]
    %v3341 = vld [vmem:[%s2248 + $0x28] sm:$0xff]
    %v3342 = vld [vmem:[%s2248 + $0x30] sm:$0xff]
    %v3343 = vld [vmem:[%s2248 + $0x38] sm:$0xff]
    %v3344 = vadd.f32 %v3340, %v3251
    %v3345 = vadd.f32 %v3341, %v3277
    %v3346 = vadd.f32 %v3342, %v3303
    %v3347 = vadd.f32 %v3343, %v3329
    %v3348 = vxor.u32 %v3336, 2147483648
    %v3349 = vxor.u32 %v3337, 2147483648
    %v3350 = vxor.u32 %v3338, 2147483648
    %v3351 = vmul.f32 %v3348, 1.442695
    %v3352 = vpow.pop %v3351
    %v3353 = vmul.f32 %v3349, 1.442695
    %v3354 = vpow.pop %v3353
    %v3355 = vmul.f32 %v3350, 1.442695
    %v3356 = vpow.pop %v3355
    %v3357 = vadd.f32 %v3352, 1.0
    %v3358 = vadd.f32 %v3354, 1.0
    %v3359 = vadd.f32 %v3356, 1.0
    %v3360 = vrcp.pop %v3357
    %v3361 = vmul.f32 %v3357, %v3360
    %v3362 = vsub.f32 1.0, %v3361
    %v3363 = vmul.f32 %v3360, %v3362
    %v3364 = vadd.f32 %v3360, %v3363
    %vm3365 = vweird.f32 %v3357
    %vm3366 = vweird.f32 %v3360
    %vm3367 = vmor %vm3365, %vm3366
    %v3368 = vsel %vm3367, %v3360, %v3364
    %v3369 = vand.u32 2147483647, %v3357
    %vm3370 = vcmp.eq.f32.partialorder %v3369, 8.507059e+37
    %v3371 = vand.u32 %v3357, 2147483648
    %v3372 = vor.u32 1.1754944e-38, %v3371
    %v3373 = vsel %vm3370, %v3372, %v3368
    %v3374 = vmul.f32 1.0, %v3373
    %v3375 = vrcp.pop %v3358
    %v3376 = vmul.f32 %v3358, %v3375
    %v3377 = vsub.f32 1.0, %v3376
    %v3378 = vmul.f32 %v3375, %v3377
    %v3379 = vadd.f32 %v3375, %v3378
    %vm3380 = vweird.f32 %v3358
    %vm3381 = vweird.f32 %v3375
    %vm3382 = vmor %vm3380, %vm3381
    %v3383 = vsel %vm3382, %v3375, %v3379
    %v3384 = vand.u32 2147483647, %v3358
    %vm3385 = vcmp.eq.f32.partialorder %v3384, 8.507059e+37
    %v3386 = vand.u32 %v3358, 2147483648
    %v3387 = vor.u32 1.1754944e-38, %v3386
    %v3388 = vsel %vm3385, %v3387, %v3383
    %v3389 = vmul.f32 1.0, %v3388
    %v3390 = vrcp.pop %v3359
    %v3391 = vmul.f32 %v3359, %v3390
    %v3392 = vsub.f32 1.0, %v3391
    %v3393 = vmul.f32 %v3390, %v3392
    %v3394 = vadd.f32 %v3390, %v3393
    %vm3395 = vweird.f32 %v3359
    %vm3396 = vweird.f32 %v3390
    %vm3397 = vmor %vm3395, %vm3396
    %v3398 = vsel %vm3397, %v3390, %v3394
    %v3399 = vand.u32 2147483647, %v3359
    %vm3400 = vcmp.eq.f32.partialorder %v3399, 8.507059e+37
    %v3401 = vand.u32 %v3359, 2147483648
    %v3402 = vor.u32 1.1754944e-38, %v3401
    %v3403 = vsel %vm3400, %v3402, %v3398
    %v3404 = vmul.f32 1.0, %v3403
    %v3405 = vtanh.pop %v3339
    %v3406 = vxor.u32 %v3344, 2147483648
    %v3407 = vxor.u32 %v3345, 2147483648
    %v3408 = vxor.u32 %v3346, 2147483648
    %v3409 = vmul.f32 %v3406, 1.442695
    %v3410 = vpow.pop %v3409
    %v3411 = vmul.f32 %v3407, 1.442695
    %v3412 = vpow.pop %v3411
    %v3413 = vmul.f32 %v3408, 1.442695
    %v3414 = vpow.pop %v3413
    %v3415 = vadd.f32 %v3410, 1.0
    %v3416 = vadd.f32 %v3412, 1.0
    %v3417 = vadd.f32 %v3414, 1.0
    %v3418 = vrcp.pop %v3415
    %v3419 = vmul.f32 %v3415, %v3418
    %v3420 = vsub.f32 1.0, %v3419
    %v3421 = vmul.f32 %v3418, %v3420
    %v3422 = vadd.f32 %v3418, %v3421
    %vm3423 = vweird.f32 %v3415
    %vm3424 = vweird.f32 %v3418
    %vm3425 = vmor %vm3423, %vm3424
    %v3426 = vsel %vm3425, %v3418, %v3422
    %v3427 = vand.u32 2147483647, %v3415
    %vm3428 = vcmp.eq.f32.partialorder %v3427, 8.507059e+37
    %v3429 = vand.u32 %v3415, 2147483648
    %v3430 = vor.u32 1.1754944e-38, %v3429
    %v3431 = vsel %vm3428, %v3430, %v3426
    %v3432 = vmul.f32 1.0, %v3431
    %v3433 = vrcp.pop %v3416
    %v3434 = vmul.f32 %v3416, %v3433
    %v3435 = vsub.f32 1.0, %v3434
    %v3436 = vmul.f32 %v3433, %v3435
    %v3437 = vadd.f32 %v3433, %v3436
    %vm3438 = vweird.f32 %v3416
    %vm3439 = vweird.f32 %v3433
    %vm3440 = vmor %vm3438, %vm3439
    %v3441 = vsel %vm3440, %v3433, %v3437
    %v3442 = vand.u32 2147483647, %v3416
    %vm3443 = vcmp.eq.f32.partialorder %v3442, 8.507059e+37
    %v3444 = vand.u32 %v3416, 2147483648
    %v3445 = vor.u32 1.1754944e-38, %v3444
    %v3446 = vsel %vm3443, %v3445, %v3441
    %v3447 = vmul.f32 1.0, %v3446
    %v3448 = vrcp.pop %v3417
    %v3449 = vmul.f32 %v3417, %v3448
    %v3450 = vsub.f32 1.0, %v3449
    %v3451 = vmul.f32 %v3448, %v3450
    %v3452 = vadd.f32 %v3448, %v3451
    %vm3453 = vweird.f32 %v3417
    %vm3454 = vweird.f32 %v3448
    %vm3455 = vmor %vm3453, %vm3454
    %v3456 = vsel %vm3455, %v3448, %v3452
    %v3457 = vand.u32 2147483647, %v3417
    %vm3458 = vcmp.eq.f32.partialorder %v3457, 8.507059e+37
    %v3459 = vand.u32 %v3417, 2147483648
    %v3460 = vor.u32 1.1754944e-38, %v3459
    %v3461 = vsel %vm3458, %v3460, %v3456
    %v3462 = vmul.f32 1.0, %v3461
    %v3463 = vtanh.pop %v3347
    %v3464 = vmul.f32 %v3389, %v3112
    %v3465 = vmul.f32 %v3374, %v3405
    %v3466 = vadd.f32 %v3464, %v3465
    %v3467 = vmul.f32 %v3447, %v3115
    %v3468 = vmul.f32 %v3432, %v3463
    %v3469 = vadd.f32 %v3467, %v3468
    %v3470 = vtanh.pop %v3466
    %v3471 = vmul.f32 %v3404, %v3470
    %v3472 = vtanh.pop %v3469
    %v3473 = vmul.f32 %v3462, %v3472
    %3474 = vst [vmem:[%s2400] sm:$0xff] %v3471
    %3475 = vst [vmem:[%s2396 + $0x8] sm:$0xff] %v3473
    %v3476 = vpack.c.bf16 %v3471, %v3471
    %v3477 = vpack.c.bf16 %v3473, %v3473
    %3478 = vmatpush.bf16.msra.mxu0 %v1106
    %3479 = vmatpush.bf16.msra.mxu0 %v1098
    %3480 = vmatpush.bf16.msra.mxu0 %v1090
    %3481 = vmatpush.bf16.msra.mxu0 %v1082
    %3482 = vmatpush.bf16.msra.mxu0 %v1074
    %3483 = vmatpush.bf16.msra.mxu0 %v1066
    %3484 = vmatpush.bf16.msra.mxu0 %v1058
    %3485 = vmatpush.bf16.msra.mxu0 %v1050
    %3486 = vmatmul.bf16.gmra.mxu0 %v3476
    %v3487 = vpop.f32.mrf.mxu0
    %v3488 = vadd.f32 0.0, %v3487
    %v3489 = vpop.f32.mrf.mxu0
    %3490 = vdwg.mxu0
    %3491 = vmatpush.bf16.msra.mxu0 %v1170
    %3492 = vmatpush.bf16.msra.mxu0 %v1162
    %3493 = vmatpush.bf16.msra.mxu0 %v1154
    %3494 = vmatpush.bf16.msra.mxu0 %v1146
    %3495 = vmatpush.bf16.msra.mxu0 %v1138
    %3496 = vmatpush.bf16.msra.mxu0 %v1130
    %3497 = vmatpush.bf16.msra.mxu0 %v1122
    %3498 = vmatpush.bf16.msra.mxu0 %v1114
    %3499 = vmatmul.bf16.gmra.mxu0 %v3477
    %v3500 = vpop.f32.mrf.mxu0
    %v3501 = vadd.f32 %v3488, %v3500
    %v3502 = vpop.f32.mrf.mxu0
    %3503 = vdwg.mxu0
    %3504 = vmatpush.bf16.msra.mxu0 %v1107
    %3505 = vmatpush.bf16.msra.mxu0 %v1099
    %3506 = vmatpush.bf16.msra.mxu0 %v1091
    %3507 = vmatpush.bf16.msra.mxu0 %v1083
    %3508 = vmatpush.bf16.msra.mxu0 %v1075
    %3509 = vmatpush.bf16.msra.mxu0 %v1067
    %3510 = vmatpush.bf16.msra.mxu0 %v1059
    %3511 = vmatpush.bf16.msra.mxu0 %v1051
    %3512 = vmatmul.bf16.gmra.mxu0 %v3476
    %v3513 = vpop.f32.mrf.mxu0
    %v3514 = vadd.f32 0.0, %v3513
    %v3515 = vpop.f32.mrf.mxu0
    %3516 = vdwg.mxu0
    %3517 = vmatpush.bf16.msra.mxu0 %v1171
    %3518 = vmatpush.bf16.msra.mxu0 %v1163
    %3519 = vmatpush.bf16.msra.mxu0 %v1155
    %3520 = vmatpush.bf16.msra.mxu0 %v1147
    %3521 = vmatpush.bf16.msra.mxu0 %v1139
    %3522 = vmatpush.bf16.msra.mxu0 %v1131
    %3523 = vmatpush.bf16.msra.mxu0 %v1123
    %3524 = vmatpush.bf16.msra.mxu0 %v1115
    %3525 = vmatmul.bf16.gmra.mxu0 %v3477
    %v3526 = vpop.f32.mrf.mxu0
    %v3527 = vadd.f32 %v3514, %v3526
    %v3528 = vpop.f32.mrf.mxu0
    %3529 = vdwg.mxu0
    %3530 = vmatpush.bf16.msra.mxu0 %v1108
    %3531 = vmatpush.bf16.msra.mxu0 %v1100
    %3532 = vmatpush.bf16.msra.mxu0 %v1092
    %3533 = vmatpush.bf16.msra.mxu0 %v1084
    %3534 = vmatpush.bf16.msra.mxu0 %v1076
    %3535 = vmatpush.bf16.msra.mxu0 %v1068
    %3536 = vmatpush.bf16.msra.mxu0 %v1060
    %3537 = vmatpush.bf16.msra.mxu0 %v1052
    %3538 = vmatmul.bf16.gmra.mxu0 %v3476
    %v3539 = vpop.f32.mrf.mxu0
    %v3540 = vadd.f32 0.0, %v3539
    %v3541 = vpop.f32.mrf.mxu0
    %3542 = vdwg.mxu0
    %3543 = vmatpush.bf16.msra.mxu0 %v1172
    %3544 = vmatpush.bf16.msra.mxu0 %v1164
    %3545 = vmatpush.bf16.msra.mxu0 %v1156
    %3546 = vmatpush.bf16.msra.mxu0 %v1148
    %3547 = vmatpush.bf16.msra.mxu0 %v1140
    %3548 = vmatpush.bf16.msra.mxu0 %v1132
    %3549 = vmatpush.bf16.msra.mxu0 %v1124
    %3550 = vmatpush.bf16.msra.mxu0 %v1116
    %3551 = vmatmul.bf16.gmra.mxu0 %v3477
    %v3552 = vpop.f32.mrf.mxu0
    %v3553 = vadd.f32 %v3540, %v3552
    %v3554 = vpop.f32.mrf.mxu0
    %3555 = vdwg.mxu0
    %3556 = vmatpush.bf16.msra.mxu0 %v1109
    %3557 = vmatpush.bf16.msra.mxu0 %v1101
    %3558 = vmatpush.bf16.msra.mxu0 %v1093
    %3559 = vmatpush.bf16.msra.mxu0 %v1085
    %3560 = vmatpush.bf16.msra.mxu0 %v1077
    %3561 = vmatpush.bf16.msra.mxu0 %v1069
    %3562 = vmatpush.bf16.msra.mxu0 %v1061
    %3563 = vmatpush.bf16.msra.mxu0 %v1053
    %3564 = vmatmul.bf16.gmra.mxu0 %v3476
    %v3565 = vpop.f32.mrf.mxu0
    %v3566 = vadd.f32 0.0, %v3565
    %v3567 = vpop.f32.mrf.mxu0
    %3568 = vdwg.mxu0
    %3569 = vmatpush.bf16.msra.mxu0 %v1173
    %3570 = vmatpush.bf16.msra.mxu0 %v1165
    %3571 = vmatpush.bf16.msra.mxu0 %v1157
    %3572 = vmatpush.bf16.msra.mxu0 %v1149
    %3573 = vmatpush.bf16.msra.mxu0 %v1141
    %3574 = vmatpush.bf16.msra.mxu0 %v1133
    %3575 = vmatpush.bf16.msra.mxu0 %v1125
    %3576 = vmatpush.bf16.msra.mxu0 %v1117
    %3577 = vmatmul.bf16.gmra.mxu0 %v3477
    %v3578 = vpop.f32.mrf.mxu0
    %v3579 = vadd.f32 %v3566, %v3578
    %v3580 = vpop.f32.mrf.mxu0
    %3581 = vdwg.mxu0
    %3582 = vmatpush.bf16.msra.mxu0 %v1110
    %3583 = vmatpush.bf16.msra.mxu0 %v1102
    %3584 = vmatpush.bf16.msra.mxu0 %v1094
    %3585 = vmatpush.bf16.msra.mxu0 %v1086
    %3586 = vmatpush.bf16.msra.mxu0 %v1078
    %3587 = vmatpush.bf16.msra.mxu0 %v1070
    %3588 = vmatpush.bf16.msra.mxu0 %v1062
    %3589 = vmatpush.bf16.msra.mxu0 %v1054
    %3590 = vmatmul.bf16.gmra.mxu0 %v3476
    %v3591 = vpop.f32.mrf.mxu0
    %v3592 = vadd.f32 0.0, %v3591
    %v3593 = vpop.f32.mrf.mxu0
    %3594 = vdwg.mxu0
    %3595 = vmatpush.bf16.msra.mxu0 %v1174
    %3596 = vmatpush.bf16.msra.mxu0 %v1166
    %3597 = vmatpush.bf16.msra.mxu0 %v1158
    %3598 = vmatpush.bf16.msra.mxu0 %v1150
    %3599 = vmatpush.bf16.msra.mxu0 %v1142
    %3600 = vmatpush.bf16.msra.mxu0 %v1134
    %3601 = vmatpush.bf16.msra.mxu0 %v1126
    %3602 = vmatpush.bf16.msra.mxu0 %v1118
    %3603 = vmatmul.bf16.gmra.mxu0 %v3477
    %v3604 = vpop.f32.mrf.mxu0
    %v3605 = vadd.f32 %v3592, %v3604
    %v3606 = vpop.f32.mrf.mxu0
    %3607 = vdwg.mxu0
    %3608 = vmatpush.bf16.msra.mxu0 %v1111
    %3609 = vmatpush.bf16.msra.mxu0 %v1103
    %3610 = vmatpush.bf16.msra.mxu0 %v1095
    %3611 = vmatpush.bf16.msra.mxu0 %v1087
    %3612 = vmatpush.bf16.msra.mxu0 %v1079
    %3613 = vmatpush.bf16.msra.mxu0 %v1071
    %3614 = vmatpush.bf16.msra.mxu0 %v1063
    %3615 = vmatpush.bf16.msra.mxu0 %v1055
    %3616 = vmatmul.bf16.gmra.mxu0 %v3476
    %v3617 = vpop.f32.mrf.mxu0
    %v3618 = vadd.f32 0.0, %v3617
    %v3619 = vpop.f32.mrf.mxu0
    %3620 = vdwg.mxu0
    %3621 = vmatpush.bf16.msra.mxu0 %v1175
    %3622 = vmatpush.bf16.msra.mxu0 %v1167
    %3623 = vmatpush.bf16.msra.mxu0 %v1159
    %3624 = vmatpush.bf16.msra.mxu0 %v1151
    %3625 = vmatpush.bf16.msra.mxu0 %v1143
    %3626 = vmatpush.bf16.msra.mxu0 %v1135
    %3627 = vmatpush.bf16.msra.mxu0 %v1127
    %3628 = vmatpush.bf16.msra.mxu0 %v1119
    %3629 = vmatmul.bf16.gmra.mxu0 %v3477
    %v3630 = vpop.f32.mrf.mxu0
    %v3631 = vadd.f32 %v3618, %v3630
    %v3632 = vpop.f32.mrf.mxu0
    %3633 = vdwg.mxu0
    %3634 = vmatpush.bf16.msra.mxu0 %v1112
    %3635 = vmatpush.bf16.msra.mxu0 %v1104
    %3636 = vmatpush.bf16.msra.mxu0 %v1096
    %3637 = vmatpush.bf16.msra.mxu0 %v1088
    %3638 = vmatpush.bf16.msra.mxu0 %v1080
    %3639 = vmatpush.bf16.msra.mxu0 %v1072
    %3640 = vmatpush.bf16.msra.mxu0 %v1064
    %3641 = vmatpush.bf16.msra.mxu0 %v1056
    %3642 = vmatmul.bf16.gmra.mxu0 %v3476
    %v3643 = vpop.f32.mrf.mxu0
    %v3644 = vadd.f32 0.0, %v3643
    %v3645 = vpop.f32.mrf.mxu0
    %3646 = vdwg.mxu0
    %3647 = vmatpush.bf16.msra.mxu0 %v1176
    %3648 = vmatpush.bf16.msra.mxu0 %v1168
    %3649 = vmatpush.bf16.msra.mxu0 %v1160
    %3650 = vmatpush.bf16.msra.mxu0 %v1152
    %3651 = vmatpush.bf16.msra.mxu0 %v1144
    %3652 = vmatpush.bf16.msra.mxu0 %v1136
    %3653 = vmatpush.bf16.msra.mxu0 %v1128
    %3654 = vmatpush.bf16.msra.mxu0 %v1120
    %3655 = vmatmul.bf16.gmra.mxu0 %v3477
    %v3656 = vpop.f32.mrf.mxu0
    %v3657 = vadd.f32 %v3644, %v3656
    %v3658 = vpop.f32.mrf.mxu0
    %3659 = vdwg.mxu0
    %3660 = vmatpush.bf16.msra.mxu0 %v1113
    %3661 = vmatpush.bf16.msra.mxu0 %v1105
    %3662 = vmatpush.bf16.msra.mxu0 %v1097
    %3663 = vmatpush.bf16.msra.mxu0 %v1089
    %3664 = vmatpush.bf16.msra.mxu0 %v1081
    %3665 = vmatpush.bf16.msra.mxu0 %v1073
    %3666 = vmatpush.bf16.msra.mxu0 %v1065
    %3667 = vmatpush.bf16.msra.mxu0 %v1057
    %3668 = vmatmul.bf16.gmra.mxu0 %v3476
    %v3669 = vpop.f32.mrf.mxu0
    %v3670 = vadd.f32 0.0, %v3669
    %v3671 = vpop.f32.mrf.mxu0
    %3672 = vdwg.mxu0
    %3673 = vmatpush.bf16.msra.mxu0 %v1177
    %3674 = vmatpush.bf16.msra.mxu0 %v1169
    %3675 = vmatpush.bf16.msra.mxu0 %v1161
    %3676 = vmatpush.bf16.msra.mxu0 %v1153
    %3677 = vmatpush.bf16.msra.mxu0 %v1145
    %3678 = vmatpush.bf16.msra.mxu0 %v1137
    %3679 = vmatpush.bf16.msra.mxu0 %v1129
    %3680 = vmatpush.bf16.msra.mxu0 %v1121
    %3681 = vmatmul.bf16.gmra.mxu0 %v3477
    %v3682 = vpop.f32.mrf.mxu0
    %v3683 = vadd.f32 %v3670, %v3682
    %v3684 = vpop.f32.mrf.mxu0
    %3685 = vdwg.mxu0
    %v3686 = vld [vmem:[%s1893] sm:$0xff]
    %v3687 = vld [vmem:[%s1893 + $0x8] sm:$0xff]
    %v3688 = vld [vmem:[%s1893 + $0x10] sm:$0xff]
    %v3689 = vld [vmem:[%s1893 + $0x18] sm:$0xff]
    %v3690 = vadd.f32 %v3686, %v3501
    %v3691 = vadd.f32 %v3687, %v3527
    %v3692 = vadd.f32 %v3688, %v3553
    %v3693 = vadd.f32 %v3689, %v3579
    %v3694 = vld [vmem:[%s1882 + $0x20] sm:$0xff]
    %v3695 = vld [vmem:[%s1882 + $0x28] sm:$0xff]
    %v3696 = vld [vmem:[%s1882 + $0x30] sm:$0xff]
    %v3697 = vld [vmem:[%s1882 + $0x38] sm:$0xff]
    %v3698 = vadd.f32 %v3694, %v3605
    %v3699 = vadd.f32 %v3695, %v3631
    %v3700 = vadd.f32 %v3696, %v3657
    %v3701 = vadd.f32 %v3697, %v3683
    %v3702 = vxor.u32 %v3690, 2147483648
    %v3703 = vxor.u32 %v3691, 2147483648
    %v3704 = vxor.u32 %v3692, 2147483648
    %v3705 = vmul.f32 %v3702, 1.442695
    %v3706 = vpow.pop %v3705
    %v3707 = vmul.f32 %v3703, 1.442695
    %v3708 = vpow.pop %v3707
    %v3709 = vmul.f32 %v3704, 1.442695
    %v3710 = vpow.pop %v3709
    %v3711 = vadd.f32 %v3706, 1.0
    %v3712 = vadd.f32 %v3708, 1.0
    %v3713 = vadd.f32 %v3710, 1.0
    %v3714 = vrcp.pop %v3711
    %v3715 = vmul.f32 %v3711, %v3714
    %v3716 = vsub.f32 1.0, %v3715
    %v3717 = vmul.f32 %v3714, %v3716
    %v3718 = vadd.f32 %v3714, %v3717
    %vm3719 = vweird.f32 %v3711
    %vm3720 = vweird.f32 %v3714
    %vm3721 = vmor %vm3719, %vm3720
    %v3722 = vsel %vm3721, %v3714, %v3718
    %v3723 = vand.u32 2147483647, %v3711
    %vm3724 = vcmp.eq.f32.partialorder %v3723, 8.507059e+37
    %v3725 = vand.u32 %v3711, 2147483648
    %v3726 = vor.u32 1.1754944e-38, %v3725
    %v3727 = vsel %vm3724, %v3726, %v3722
    %v3728 = vmul.f32 1.0, %v3727
    %v3729 = vrcp.pop %v3712
    %v3730 = vmul.f32 %v3712, %v3729
    %v3731 = vsub.f32 1.0, %v3730
    %v3732 = vmul.f32 %v3729, %v3731
    %v3733 = vadd.f32 %v3729, %v3732
    %vm3734 = vweird.f32 %v3712
    %vm3735 = vweird.f32 %v3729
    %vm3736 = vmor %vm3734, %vm3735
    %v3737 = vsel %vm3736, %v3729, %v3733
    %v3738 = vand.u32 2147483647, %v3712
    %vm3739 = vcmp.eq.f32.partialorder %v3738, 8.507059e+37
    %v3740 = vand.u32 %v3712, 2147483648
    %v3741 = vor.u32 1.1754944e-38, %v3740
    %v3742 = vsel %vm3739, %v3741, %v3737
    %v3743 = vmul.f32 1.0, %v3742
    %v3744 = vrcp.pop %v3713
    %v3745 = vmul.f32 %v3713, %v3744
    %v3746 = vsub.f32 1.0, %v3745
    %v3747 = vmul.f32 %v3744, %v3746
    %v3748 = vadd.f32 %v3744, %v3747
    %vm3749 = vweird.f32 %v3713
    %vm3750 = vweird.f32 %v3744
    %vm3751 = vmor %vm3749, %vm3750
    %v3752 = vsel %vm3751, %v3744, %v3748
    %v3753 = vand.u32 2147483647, %v3713
    %vm3754 = vcmp.eq.f32.partialorder %v3753, 8.507059e+37
    %v3755 = vand.u32 %v3713, 2147483648
    %v3756 = vor.u32 1.1754944e-38, %v3755
    %v3757 = vsel %vm3754, %v3756, %v3752
    %v3758 = vmul.f32 1.0, %v3757
    %v3759 = vtanh.pop %v3693
    %v3760 = vxor.u32 %v3698, 2147483648
    %v3761 = vxor.u32 %v3699, 2147483648
    %v3762 = vxor.u32 %v3700, 2147483648
    %v3763 = vmul.f32 %v3760, 1.442695
    %v3764 = vpow.pop %v3763
    %v3765 = vmul.f32 %v3761, 1.442695
    %v3766 = vpow.pop %v3765
    %v3767 = vmul.f32 %v3762, 1.442695
    %v3768 = vpow.pop %v3767
    %v3769 = vadd.f32 %v3764, 1.0
    %v3770 = vadd.f32 %v3766, 1.0
    %v3771 = vadd.f32 %v3768, 1.0
    %v3772 = vrcp.pop %v3769
    %v3773 = vmul.f32 %v3769, %v3772
    %v3774 = vsub.f32 1.0, %v3773
    %v3775 = vmul.f32 %v3772, %v3774
    %v3776 = vadd.f32 %v3772, %v3775
    %vm3777 = vweird.f32 %v3769
    %vm3778 = vweird.f32 %v3772
    %vm3779 = vmor %vm3777, %vm3778
    %v3780 = vsel %vm3779, %v3772, %v3776
    %v3781 = vand.u32 2147483647, %v3769
    %vm3782 = vcmp.eq.f32.partialorder %v3781, 8.507059e+37
    %v3783 = vand.u32 %v3769, 2147483648
    %v3784 = vor.u32 1.1754944e-38, %v3783
    %v3785 = vsel %vm3782, %v3784, %v3780
    %v3786 = vmul.f32 1.0, %v3785
    %v3787 = vrcp.pop %v3770
    %v3788 = vmul.f32 %v3770, %v3787
    %v3789 = vsub.f32 1.0, %v3788
    %v3790 = vmul.f32 %v3787, %v3789
    %v3791 = vadd.f32 %v3787, %v3790
    %vm3792 = vweird.f32 %v3770
    %vm3793 = vweird.f32 %v3787
    %vm3794 = vmor %vm3792, %vm3793
    %v3795 = vsel %vm3794, %v3787, %v3791
    %v3796 = vand.u32 2147483647, %v3770
    %vm3797 = vcmp.eq.f32.partialorder %v3796, 8.507059e+37
    %v3798 = vand.u32 %v3770, 2147483648
    %v3799 = vor.u32 1.1754944e-38, %v3798
    %v3800 = vsel %vm3797, %v3799, %v3795
    %v3801 = vmul.f32 1.0, %v3800
    %v3802 = vrcp.pop %v3771
    %v3803 = vmul.f32 %v3771, %v3802
    %v3804 = vsub.f32 1.0, %v3803
    %v3805 = vmul.f32 %v3802, %v3804
    %v3806 = vadd.f32 %v3802, %v3805
    %vm3807 = vweird.f32 %v3771
    %vm3808 = vweird.f32 %v3802
    %vm3809 = vmor %vm3807, %vm3808
    %v3810 = vsel %vm3809, %v3802, %v3806
    %v3811 = vand.u32 2147483647, %v3771
    %vm3812 = vcmp.eq.f32.partialorder %v3811, 8.507059e+37
    %v3813 = vand.u32 %v3771, 2147483648
    %v3814 = vor.u32 1.1754944e-38, %v3813
    %v3815 = vsel %vm3812, %v3814, %v3810
    %v3816 = vmul.f32 1.0, %v3815
    %v3817 = vtanh.pop %v3701
    %v3818 = vmul.f32 %v3743, %v3466
    %v3819 = vmul.f32 %v3728, %v3759
    %v3820 = vadd.f32 %v3818, %v3819
    %v3821 = vmul.f32 %v3801, %v3469
    %v3822 = vmul.f32 %v3786, %v3817
    %v3823 = vadd.f32 %v3821, %v3822
    %v3824 = vtanh.pop %v3820
    %v3825 = vmul.f32 %v3758, %v3824
    %v3826 = vtanh.pop %v3823
    %v3827 = vmul.f32 %v3816, %v3826
    %3828 = vst [vmem:[%s2034] sm:$0xff] %v3825
    %3829 = vst [vmem:[%s2030 + $0x8] sm:$0xff] %v3827
    %v3830 = vpack.c.bf16 %v3825, %v3825
    %v3831 = vpack.c.bf16 %v3827, %v3827
    %3832 = vmatpush.bf16.msra.mxu0 %v1106
    %3833 = vmatpush.bf16.msra.mxu0 %v1098
    %3834 = vmatpush.bf16.msra.mxu0 %v1090
    %3835 = vmatpush.bf16.msra.mxu0 %v1082
    %3836 = vmatpush.bf16.msra.mxu0 %v1074
    %3837 = vmatpush.bf16.msra.mxu0 %v1066
    %3838 = vmatpush.bf16.msra.mxu0 %v1058
    %3839 = vmatpush.bf16.msra.mxu0 %v1050
    %3840 = vmatmul.bf16.gmra.mxu0 %v3830
    %v3841 = vpop.f32.mrf.mxu0
    %v3842 = vadd.f32 0.0, %v3841
    %v3843 = vpop.f32.mrf.mxu0
    %3844 = vdwg.mxu0
    %3845 = vmatpush.bf16.msra.mxu0 %v1170
    %3846 = vmatpush.bf16.msra.mxu0 %v1162
    %3847 = vmatpush.bf16.msra.mxu0 %v1154
    %3848 = vmatpush.bf16.msra.mxu0 %v1146
    %3849 = vmatpush.bf16.msra.mxu0 %v1138
    %3850 = vmatpush.bf16.msra.mxu0 %v1130
    %3851 = vmatpush.bf16.msra.mxu0 %v1122
    %3852 = vmatpush.bf16.msra.mxu0 %v1114
    %3853 = vmatmul.bf16.gmra.mxu0 %v3831
    %v3854 = vpop.f32.mrf.mxu0
    %v3855 = vadd.f32 %v3842, %v3854
    %v3856 = vpop.f32.mrf.mxu0
    %3857 = vdwg.mxu0
    %3858 = vmatpush.bf16.msra.mxu0 %v1107
    %3859 = vmatpush.bf16.msra.mxu0 %v1099
    %3860 = vmatpush.bf16.msra.mxu0 %v1091
    %3861 = vmatpush.bf16.msra.mxu0 %v1083
    %3862 = vmatpush.bf16.msra.mxu0 %v1075
    %3863 = vmatpush.bf16.msra.mxu0 %v1067
    %3864 = vmatpush.bf16.msra.mxu0 %v1059
    %3865 = vmatpush.bf16.msra.mxu0 %v1051
    %3866 = vmatmul.bf16.gmra.mxu0 %v3830
    %v3867 = vpop.f32.mrf.mxu0
    %v3868 = vadd.f32 0.0, %v3867
    %v3869 = vpop.f32.mrf.mxu0
    %3870 = vdwg.mxu0
    %3871 = vmatpush.bf16.msra.mxu0 %v1171
    %3872 = vmatpush.bf16.msra.mxu0 %v1163
    %3873 = vmatpush.bf16.msra.mxu0 %v1155
    %3874 = vmatpush.bf16.msra.mxu0 %v1147
    %3875 = vmatpush.bf16.msra.mxu0 %v1139
    %3876 = vmatpush.bf16.msra.mxu0 %v1131
    %3877 = vmatpush.bf16.msra.mxu0 %v1123
    %3878 = vmatpush.bf16.msra.mxu0 %v1115
    %3879 = vmatmul.bf16.gmra.mxu0 %v3831
    %v3880 = vpop.f32.mrf.mxu0
    %v3881 = vadd.f32 %v3868, %v3880
    %v3882 = vpop.f32.mrf.mxu0
    %3883 = vdwg.mxu0
    %3884 = vmatpush.bf16.msra.mxu0 %v1108
    %3885 = vmatpush.bf16.msra.mxu0 %v1100
    %3886 = vmatpush.bf16.msra.mxu0 %v1092
    %3887 = vmatpush.bf16.msra.mxu0 %v1084
    %3888 = vmatpush.bf16.msra.mxu0 %v1076
    %3889 = vmatpush.bf16.msra.mxu0 %v1068
    %3890 = vmatpush.bf16.msra.mxu0 %v1060
    %3891 = vmatpush.bf16.msra.mxu0 %v1052
    %3892 = vmatmul.bf16.gmra.mxu0 %v3830
    %v3893 = vpop.f32.mrf.mxu0
    %v3894 = vadd.f32 0.0, %v3893
    %v3895 = vpop.f32.mrf.mxu0
    %3896 = vdwg.mxu0
    %3897 = vmatpush.bf16.msra.mxu0 %v1172
    %3898 = vmatpush.bf16.msra.mxu0 %v1164
    %3899 = vmatpush.bf16.msra.mxu0 %v1156
    %3900 = vmatpush.bf16.msra.mxu0 %v1148
    %3901 = vmatpush.bf16.msra.mxu0 %v1140
    %3902 = vmatpush.bf16.msra.mxu0 %v1132
    %3903 = vmatpush.bf16.msra.mxu0 %v1124
    %3904 = vmatpush.bf16.msra.mxu0 %v1116
    %3905 = vmatmul.bf16.gmra.mxu0 %v3831
    %v3906 = vpop.f32.mrf.mxu0
    %v3907 = vadd.f32 %v3894, %v3906
    %v3908 = vpop.f32.mrf.mxu0
    %3909 = vdwg.mxu0
    %3910 = vmatpush.bf16.msra.mxu0 %v1109
    %3911 = vmatpush.bf16.msra.mxu0 %v1101
    %3912 = vmatpush.bf16.msra.mxu0 %v1093
    %3913 = vmatpush.bf16.msra.mxu0 %v1085
    %3914 = vmatpush.bf16.msra.mxu0 %v1077
    %3915 = vmatpush.bf16.msra.mxu0 %v1069
    %3916 = vmatpush.bf16.msra.mxu0 %v1061
    %3917 = vmatpush.bf16.msra.mxu0 %v1053
    %3918 = vmatmul.bf16.gmra.mxu0 %v3830
    %v3919 = vpop.f32.mrf.mxu0
    %v3920 = vadd.f32 0.0, %v3919
    %v3921 = vpop.f32.mrf.mxu0
    %3922 = vdwg.mxu0
    %3923 = vmatpush.bf16.msra.mxu0 %v1173
    %3924 = vmatpush.bf16.msra.mxu0 %v1165
    %3925 = vmatpush.bf16.msra.mxu0 %v1157
    %3926 = vmatpush.bf16.msra.mxu0 %v1149
    %3927 = vmatpush.bf16.msra.mxu0 %v1141
    %3928 = vmatpush.bf16.msra.mxu0 %v1133
    %3929 = vmatpush.bf16.msra.mxu0 %v1125
    %3930 = vmatpush.bf16.msra.mxu0 %v1117
    %3931 = vmatmul.bf16.gmra.mxu0 %v3831
    %v3932 = vpop.f32.mrf.mxu0
    %v3933 = vadd.f32 %v3920, %v3932
    %v3934 = vpop.f32.mrf.mxu0
    %3935 = vdwg.mxu0
    %3936 = vmatpush.bf16.msra.mxu0 %v1110
    %3937 = vmatpush.bf16.msra.mxu0 %v1102
    %3938 = vmatpush.bf16.msra.mxu0 %v1094
    %3939 = vmatpush.bf16.msra.mxu0 %v1086
    %3940 = vmatpush.bf16.msra.mxu0 %v1078
    %3941 = vmatpush.bf16.msra.mxu0 %v1070
    %3942 = vmatpush.bf16.msra.mxu0 %v1062
    %3943 = vmatpush.bf16.msra.mxu0 %v1054
    %3944 = vmatmul.bf16.gmra.mxu0 %v3830
    %v3945 = vpop.f32.mrf.mxu0
    %v3946 = vadd.f32 0.0, %v3945
    %v3947 = vpop.f32.mrf.mxu0
    %3948 = vdwg.mxu0
    %3949 = vmatpush.bf16.msra.mxu0 %v1174
    %3950 = vmatpush.bf16.msra.mxu0 %v1166
    %3951 = vmatpush.bf16.msra.mxu0 %v1158
    %3952 = vmatpush.bf16.msra.mxu0 %v1150
    %3953 = vmatpush.bf16.msra.mxu0 %v1142
    %3954 = vmatpush.bf16.msra.mxu0 %v1134
    %3955 = vmatpush.bf16.msra.mxu0 %v1126
    %3956 = vmatpush.bf16.msra.mxu0 %v1118
    %3957 = vmatmul.bf16.gmra.mxu0 %v3831
    %v3958 = vpop.f32.mrf.mxu0
    %v3959 = vadd.f32 %v3946, %v3958
    %v3960 = vpop.f32.mrf.mxu0
    %3961 = vdwg.mxu0
    %3962 = vmatpush.bf16.msra.mxu0 %v1111
    %3963 = vmatpush.bf16.msra.mxu0 %v1103
    %3964 = vmatpush.bf16.msra.mxu0 %v1095
    %3965 = vmatpush.bf16.msra.mxu0 %v1087
    %3966 = vmatpush.bf16.msra.mxu0 %v1079
    %3967 = vmatpush.bf16.msra.mxu0 %v1071
    %3968 = vmatpush.bf16.msra.mxu0 %v1063
    %3969 = vmatpush.bf16.msra.mxu0 %v1055
    %3970 = vmatmul.bf16.gmra.mxu0 %v3830
    %v3971 = vpop.f32.mrf.mxu0
    %v3972 = vadd.f32 0.0, %v3971
    %v3973 = vpop.f32.mrf.mxu0
    %3974 = vdwg.mxu0
    %3975 = vmatpush.bf16.msra.mxu0 %v1175
    %3976 = vmatpush.bf16.msra.mxu0 %v1167
    %3977 = vmatpush.bf16.msra.mxu0 %v1159
    %3978 = vmatpush.bf16.msra.mxu0 %v1151
    %3979 = vmatpush.bf16.msra.mxu0 %v1143
    %3980 = vmatpush.bf16.msra.mxu0 %v1135
    %3981 = vmatpush.bf16.msra.mxu0 %v1127
    %3982 = vmatpush.bf16.msra.mxu0 %v1119
    %3983 = vmatmul.bf16.gmra.mxu0 %v3831
    %v3984 = vpop.f32.mrf.mxu0
    %v3985 = vadd.f32 %v3972, %v3984
    %v3986 = vpop.f32.mrf.mxu0
    %3987 = vdwg.mxu0
    %3988 = vmatpush.bf16.msra.mxu0 %v1112
    %3989 = vmatpush.bf16.msra.mxu0 %v1104
    %3990 = vmatpush.bf16.msra.mxu0 %v1096
    %3991 = vmatpush.bf16.msra.mxu0 %v1088
    %3992 = vmatpush.bf16.msra.mxu0 %v1080
    %3993 = vmatpush.bf16.msra.mxu0 %v1072
    %3994 = vmatpush.bf16.msra.mxu0 %v1064
    %3995 = vmatpush.bf16.msra.mxu0 %v1056
    %3996 = vmatmul.bf16.gmra.mxu0 %v3830
    %v3997 = vpop.f32.mrf.mxu0
    %v3998 = vadd.f32 0.0, %v3997
    %v3999 = vpop.f32.mrf.mxu0
    %4000 = vdwg.mxu0
    %4001 = vmatpush.bf16.msra.mxu0 %v1176
    %4002 = vmatpush.bf16.msra.mxu0 %v1168
    %4003 = vmatpush.bf16.msra.mxu0 %v1160
    %4004 = vmatpush.bf16.msra.mxu0 %v1152
    %4005 = vmatpush.bf16.msra.mxu0 %v1144
    %4006 = vmatpush.bf16.msra.mxu0 %v1136
    %4007 = vmatpush.bf16.msra.mxu0 %v1128
    %4008 = vmatpush.bf16.msra.mxu0 %v1120
    %4009 = vmatmul.bf16.gmra.mxu0 %v3831
    %v4010 = vpop.f32.mrf.mxu0
    %v4011 = vadd.f32 %v3998, %v4010
    %v4012 = vpop.f32.mrf.mxu0
    %4013 = vdwg.mxu0
    %4014 = vmatpush.bf16.msra.mxu0 %v1113
    %4015 = vmatpush.bf16.msra.mxu0 %v1105
    %4016 = vmatpush.bf16.msra.mxu0 %v1097
    %4017 = vmatpush.bf16.msra.mxu0 %v1089
    %4018 = vmatpush.bf16.msra.mxu0 %v1081
    %4019 = vmatpush.bf16.msra.mxu0 %v1073
    %4020 = vmatpush.bf16.msra.mxu0 %v1065
    %4021 = vmatpush.bf16.msra.mxu0 %v1057
    %4022 = vmatmul.bf16.gmra.mxu0 %v3830
    %v4023 = vpop.f32.mrf.mxu0
    %v4024 = vadd.f32 0.0, %v4023
    %v4025 = vpop.f32.mrf.mxu0
    %4026 = vdwg.mxu0
    %4027 = vmatpush.bf16.msra.mxu0 %v1177
    %4028 = vmatpush.bf16.msra.mxu0 %v1169
    %4029 = vmatpush.bf16.msra.mxu0 %v1161
    %4030 = vmatpush.bf16.msra.mxu0 %v1153
    %4031 = vmatpush.bf16.msra.mxu0 %v1145
    %4032 = vmatpush.bf16.msra.mxu0 %v1137
    %4033 = vmatpush.bf16.msra.mxu0 %v1129
    %4034 = vmatpush.bf16.msra.mxu0 %v1121
    %4035 = vmatmul.bf16.gmra.mxu0 %v3831
    %v4036 = vpop.f32.mrf.mxu0
    %v4037 = vadd.f32 %v4024, %v4036
    %v4038 = vpop.f32.mrf.mxu0
    %4039 = vdwg.mxu0
    %v4040 = vld [vmem:[%s1527] sm:$0xff]
    %v4041 = vld [vmem:[%s1527 + $0x8] sm:$0xff]
    %v4042 = vld [vmem:[%s1527 + $0x10] sm:$0xff]
    %v4043 = vld [vmem:[%s1527 + $0x18] sm:$0xff]
    %v4044 = vadd.f32 %v4040, %v3855
    %v4045 = vadd.f32 %v4041, %v3881
    %v4046 = vadd.f32 %v4042, %v3907
    %v4047 = vadd.f32 %v4043, %v3933
    %v4048 = vld [vmem:[%s1516 + $0x20] sm:$0xff]
    %v4049 = vld [vmem:[%s1516 + $0x28] sm:$0xff]
    %v4050 = vld [vmem:[%s1516 + $0x30] sm:$0xff]
    %v4051 = vld [vmem:[%s1516 + $0x38] sm:$0xff]
    %v4052 = vadd.f32 %v4048, %v3959
    %v4053 = vadd.f32 %v4049, %v3985
    %v4054 = vadd.f32 %v4050, %v4011
    %v4055 = vadd.f32 %v4051, %v4037
    %v4056 = vxor.u32 %v4044, 2147483648
    %v4057 = vxor.u32 %v4045, 2147483648
    %v4058 = vxor.u32 %v4046, 2147483648
    %v4059 = vmul.f32 %v4056, 1.442695
    %v4060 = vpow.pop %v4059
    %v4061 = vmul.f32 %v4057, 1.442695
    %v4062 = vpow.pop %v4061
    %v4063 = vmul.f32 %v4058, 1.442695
    %v4064 = vpow.pop %v4063
    %v4065 = vadd.f32 %v4060, 1.0
    %v4066 = vadd.f32 %v4062, 1.0
    %v4067 = vadd.f32 %v4064, 1.0
    %v4068 = vrcp.pop %v4065
    %v4069 = vmul.f32 %v4065, %v4068
    %v4070 = vsub.f32 1.0, %v4069
    %v4071 = vmul.f32 %v4068, %v4070
    %v4072 = vadd.f32 %v4068, %v4071
    %vm4073 = vweird.f32 %v4065
    %vm4074 = vweird.f32 %v4068
    %vm4075 = vmor %vm4073, %vm4074
    %v4076 = vsel %vm4075, %v4068, %v4072
    %v4077 = vand.u32 2147483647, %v4065
    %vm4078 = vcmp.eq.f32.partialorder %v4077, 8.507059e+37
    %v4079 = vand.u32 %v4065, 2147483648
    %v4080 = vor.u32 1.1754944e-38, %v4079
    %v4081 = vsel %vm4078, %v4080, %v4076
    %v4082 = vmul.f32 1.0, %v4081
    %v4083 = vrcp.pop %v4066
    %v4084 = vmul.f32 %v4066, %v4083
    %v4085 = vsub.f32 1.0, %v4084
    %v4086 = vmul.f32 %v4083, %v4085
    %v4087 = vadd.f32 %v4083, %v4086
    %vm4088 = vweird.f32 %v4066
    %vm4089 = vweird.f32 %v4083
    %vm4090 = vmor %vm4088, %vm4089
    %v4091 = vsel %vm4090, %v4083, %v4087
    %v4092 = vand.u32 2147483647, %v4066
    %vm4093 = vcmp.eq.f32.partialorder %v4092, 8.507059e+37
    %v4094 = vand.u32 %v4066, 2147483648
    %v4095 = vor.u32 1.1754944e-38, %v4094
    %v4096 = vsel %vm4093, %v4095, %v4091
    %v4097 = vmul.f32 1.0, %v4096
    %v4098 = vrcp.pop %v4067
    %v4099 = vmul.f32 %v4067, %v4098
    %v4100 = vsub.f32 1.0, %v4099
    %v4101 = vmul.f32 %v4098, %v4100
    %v4102 = vadd.f32 %v4098, %v4101
    %vm4103 = vweird.f32 %v4067
    %vm4104 = vweird.f32 %v4098
    %vm4105 = vmor %vm4103, %vm4104
    %v4106 = vsel %vm4105, %v4098, %v4102
    %v4107 = vand.u32 2147483647, %v4067
    %vm4108 = vcmp.eq.f32.partialorder %v4107, 8.507059e+37
    %v4109 = vand.u32 %v4067, 2147483648
    %v4110 = vor.u32 1.1754944e-38, %v4109
    %v4111 = vsel %vm4108, %v4110, %v4106
    %v4112 = vmul.f32 1.0, %v4111
    %v4113 = vtanh.pop %v4047
    %v4114 = vxor.u32 %v4052, 2147483648
    %v4115 = vxor.u32 %v4053, 2147483648
    %v4116 = vxor.u32 %v4054, 2147483648
    %v4117 = vmul.f32 %v4114, 1.442695
    %v4118 = vpow.pop %v4117
    %v4119 = vmul.f32 %v4115, 1.442695
    %v4120 = vpow.pop %v4119
    %v4121 = vmul.f32 %v4116, 1.442695
    %v4122 = vpow.pop %v4121
    %v4123 = vadd.f32 %v4118, 1.0
    %v4124 = vadd.f32 %v4120, 1.0
    %v4125 = vadd.f32 %v4122, 1.0
    %v4126 = vrcp.pop %v4123
    %v4127 = vmul.f32 %v4123, %v4126
    %v4128 = vsub.f32 1.0, %v4127
    %v4129 = vmul.f32 %v4126, %v4128
    %v4130 = vadd.f32 %v4126, %v4129
    %vm4131 = vweird.f32 %v4123
    %vm4132 = vweird.f32 %v4126
    %vm4133 = vmor %vm4131, %vm4132
    %v4134 = vsel %vm4133, %v4126, %v4130
    %v4135 = vand.u32 2147483647, %v4123
    %vm4136 = vcmp.eq.f32.partialorder %v4135, 8.507059e+37
    %v4137 = vand.u32 %v4123, 2147483648
    %v4138 = vor.u32 1.1754944e-38, %v4137
    %v4139 = vsel %vm4136, %v4138, %v4134
    %v4140 = vmul.f32 1.0, %v4139
    %v4141 = vrcp.pop %v4124
    %v4142 = vmul.f32 %v4124, %v4141
    %v4143 = vsub.f32 1.0, %v4142
    %v4144 = vmul.f32 %v4141, %v4143
    %v4145 = vadd.f32 %v4141, %v4144
    %vm4146 = vweird.f32 %v4124
    %vm4147 = vweird.f32 %v4141
    %vm4148 = vmor %vm4146, %vm4147
    %v4149 = vsel %vm4148, %v4141, %v4145
    %v4150 = vand.u32 2147483647, %v4124
    %vm4151 = vcmp.eq.f32.partialorder %v4150, 8.507059e+37
    %v4152 = vand.u32 %v4124, 2147483648
    %v4153 = vor.u32 1.1754944e-38, %v4152
    %v4154 = vsel %vm4151, %v4153, %v4149
    %v4155 = vmul.f32 1.0, %v4154
    %v4156 = vrcp.pop %v4125
    %v4157 = vmul.f32 %v4125, %v4156
    %v4158 = vsub.f32 1.0, %v4157
    %v4159 = vmul.f32 %v4156, %v4158
    %v4160 = vadd.f32 %v4156, %v4159
    %vm4161 = vweird.f32 %v4125
    %vm4162 = vweird.f32 %v4156
    %vm4163 = vmor %vm4161, %vm4162
    %v4164 = vsel %vm4163, %v4156, %v4160
    %v4165 = vand.u32 2147483647, %v4125
    %vm4166 = vcmp.eq.f32.partialorder %v4165, 8.507059e+37
    %v4167 = vand.u32 %v4125, 2147483648
    %v4168 = vor.u32 1.1754944e-38, %v4167
    %v4169 = vsel %vm4166, %v4168, %v4164
    %v4170 = vmul.f32 1.0, %v4169
    %v4171 = vtanh.pop %v4055
    %v4172 = vmul.f32 %v4097, %v3820
    %v4173 = vmul.f32 %v4082, %v4113
    %v4174 = vadd.f32 %v4172, %v4173
    %v4175 = vmul.f32 %v4155, %v3823
    %v4176 = vmul.f32 %v4140, %v4171
    %v4177 = vadd.f32 %v4175, %v4176
    %v4178 = vtanh.pop %v4174
    %v4179 = vmul.f32 %v4112, %v4178
    %v4180 = vtanh.pop %v4177
    %v4181 = vmul.f32 %v4170, %v4180
    %4182 = vst [vmem:[%s1668] sm:$0xff] %v4179
    %4183 = vst [vmem:[%s1664 + $0x8] sm:$0xff] %v4181
    %v4184 = vld [vmem:[#allocation3] sm:$0xff]
    %v4185 = vld [vmem:[#allocation3 + $0x8] sm:$0xff]
    %v4186 = vld [vmem:[#allocation3 + $0x10] sm:$0xff]
    %v4187 = vld [vmem:[#allocation3 + $0x18] sm:$0xff]
    %v4188 = vld [vmem:[#allocation3 + $0x20] sm:$0xff]
    %v4189 = vld [vmem:[#allocation3 + $0x28] sm:$0xff]
    %v4190 = vld [vmem:[#allocation3 + $0x30] sm:$0xff]
    %v4191 = vld [vmem:[#allocation3 + $0x38] sm:$0xff]
    %v4192 = vld [vmem:[#allocation3 + $0x40] sm:$0xff]
    %v4193 = vld [vmem:[#allocation3 + $0x48] sm:$0xff]
    %v4194 = vld [vmem:[#allocation3 + $0x50] sm:$0xff]
    %v4195 = vld [vmem:[#allocation3 + $0x58] sm:$0xff]
    %v4196 = vld [vmem:[#allocation3 + $0x60] sm:$0xff]
    %v4197 = vld [vmem:[#allocation3 + $0x68] sm:$0xff]
    %v4198 = vld [vmem:[#allocation3 + $0x70] sm:$0xff]
    %v4199 = vld [vmem:[#allocation3 + $0x78] sm:$0xff]
    %v4200 = vpack.c.bf16 %v4186, %v4184
    %v4201 = vpack.c.bf16 %v4187, %v4185
    %v4202 = vpack.c.bf16 %v4190, %v4188
    %v4203 = vpack.c.bf16 %v4191, %v4189
    %v4204 = vpack.c.bf16 %v4194, %v4192
    %v4205 = vpack.c.bf16 %v4195, %v4193
    %v4206 = vpack.c.bf16 %v4198, %v4196
    %v4207 = vpack.c.bf16 %v4199, %v4197
    %v4208 = vld [vmem:[#allocation7] sm:$0xff]
    %v4209 = vld [vmem:[#allocation7 + $0x8] sm:$0xff]
    %v4210 = vld [vmem:[#allocation7 + $0x10] sm:$0xff]
    %v4211 = vld [vmem:[#allocation7 + $0x18] sm:$0xff]
    %v4212 = vld [vmem:[#allocation7 + $0x20] sm:$0xff]
    %v4213 = vld [vmem:[#allocation7 + $0x28] sm:$0xff]
    %v4214 = vld [vmem:[#allocation7 + $0x30] sm:$0xff]
    %v4215 = vld [vmem:[#allocation7 + $0x38] sm:$0xff]
    %v4216 = vld [vmem:[#allocation7 + $0x40] sm:$0xff]
    %v4217 = vld [vmem:[#allocation7 + $0x48] sm:$0xff]
    %v4218 = vld [vmem:[#allocation7 + $0x50] sm:$0xff]
    %v4219 = vld [vmem:[#allocation7 + $0x58] sm:$0xff]
    %v4220 = vld [vmem:[#allocation7 + $0x60] sm:$0xff]
    %v4221 = vld [vmem:[#allocation7 + $0x68] sm:$0xff]
    %v4222 = vld [vmem:[#allocation7 + $0x70] sm:$0xff]
    %v4223 = vld [vmem:[#allocation7 + $0x78] sm:$0xff]
    %v4224 = vld [vmem:[#allocation7 + $0x80] sm:$0xff]
    %v4225 = vld [vmem:[#allocation7 + $0x88] sm:$0xff]
    %v4226 = vld [vmem:[#allocation7 + $0x90] sm:$0xff]
    %v4227 = vld [vmem:[#allocation7 + $0x98] sm:$0xff]
    %v4228 = vld [vmem:[#allocation7 + $0xa0] sm:$0xff]
    %v4229 = vld [vmem:[#allocation7 + $0xa8] sm:$0xff]
    %v4230 = vld [vmem:[#allocation7 + $0xb0] sm:$0xff]
    %v4231 = vld [vmem:[#allocation7 + $0xb8] sm:$0xff]
    %v4232 = vld [vmem:[#allocation7 + $0xc0] sm:$0xff]
    %v4233 = vld [vmem:[#allocation7 + $0xc8] sm:$0xff]
    %v4234 = vld [vmem:[#allocation7 + $0xd0] sm:$0xff]
    %v4235 = vld [vmem:[#allocation7 + $0xd8] sm:$0xff]
    %v4236 = vld [vmem:[#allocation7 + $0xe0] sm:$0xff]
    %v4237 = vld [vmem:[#allocation7 + $0xe8] sm:$0xff]
    %v4238 = vld [vmem:[#allocation7 + $0xf0] sm:$0xff]
    %v4239 = vld [vmem:[#allocation7 + $0xf8] sm:$0xff]
    %v4240 = vld [vmem:[#allocation7 + $0x100] sm:$0xff]
    %v4241 = vld [vmem:[#allocation7 + $0x108] sm:$0xff]
    %v4242 = vld [vmem:[#allocation7 + $0x110] sm:$0xff]
    %v4243 = vld [vmem:[#allocation7 + $0x118] sm:$0xff]
    %v4244 = vld [vmem:[#allocation7 + $0x120] sm:$0xff]
    %v4245 = vld [vmem:[#allocation7 + $0x128] sm:$0xff]
    %v4246 = vld [vmem:[#allocation7 + $0x130] sm:$0xff]
    %v4247 = vld [vmem:[#allocation7 + $0x138] sm:$0xff]
    %v4248 = vld [vmem:[#allocation7 + $0x140] sm:$0xff]
    %v4249 = vld [vmem:[#allocation7 + $0x148] sm:$0xff]
    %v4250 = vld [vmem:[#allocation7 + $0x150] sm:$0xff]
    %v4251 = vld [vmem:[#allocation7 + $0x158] sm:$0xff]
    %v4252 = vld [vmem:[#allocation7 + $0x160] sm:$0xff]
    %v4253 = vld [vmem:[#allocation7 + $0x168] sm:$0xff]
    %v4254 = vld [vmem:[#allocation7 + $0x170] sm:$0xff]
    %v4255 = vld [vmem:[#allocation7 + $0x178] sm:$0xff]
    %v4256 = vld [vmem:[#allocation7 + $0x180] sm:$0xff]
    %v4257 = vld [vmem:[#allocation7 + $0x188] sm:$0xff]
    %v4258 = vld [vmem:[#allocation7 + $0x190] sm:$0xff]
    %v4259 = vld [vmem:[#allocation7 + $0x198] sm:$0xff]
    %v4260 = vld [vmem:[#allocation7 + $0x1a0] sm:$0xff]
    %v4261 = vld [vmem:[#allocation7 + $0x1a8] sm:$0xff]
    %v4262 = vld [vmem:[#allocation7 + $0x1b0] sm:$0xff]
    %v4263 = vld [vmem:[#allocation7 + $0x1b8] sm:$0xff]
    %v4264 = vld [vmem:[#allocation7 + $0x1c0] sm:$0xff]
    %v4265 = vld [vmem:[#allocation7 + $0x1c8] sm:$0xff]
    %v4266 = vld [vmem:[#allocation7 + $0x1d0] sm:$0xff]
    %v4267 = vld [vmem:[#allocation7 + $0x1d8] sm:$0xff]
    %v4268 = vld [vmem:[#allocation7 + $0x1e0] sm:$0xff]
    %v4269 = vld [vmem:[#allocation7 + $0x1e8] sm:$0xff]
    %v4270 = vld [vmem:[#allocation7 + $0x1f0] sm:$0xff]
    %v4271 = vld [vmem:[#allocation7 + $0x1f8] sm:$0xff]
    %v4272 = vld [vmem:[#allocation7 + $0x200] sm:$0xff]
    %v4273 = vld [vmem:[#allocation7 + $0x208] sm:$0xff]
    %v4274 = vld [vmem:[#allocation7 + $0x210] sm:$0xff]
    %v4275 = vld [vmem:[#allocation7 + $0x218] sm:$0xff]
    %v4276 = vld [vmem:[#allocation7 + $0x220] sm:$0xff]
    %v4277 = vld [vmem:[#allocation7 + $0x228] sm:$0xff]
    %v4278 = vld [vmem:[#allocation7 + $0x230] sm:$0xff]
    %v4279 = vld [vmem:[#allocation7 + $0x238] sm:$0xff]
    %v4280 = vld [vmem:[#allocation7 + $0x240] sm:$0xff]
    %v4281 = vld [vmem:[#allocation7 + $0x248] sm:$0xff]
    %v4282 = vld [vmem:[#allocation7 + $0x250] sm:$0xff]
    %v4283 = vld [vmem:[#allocation7 + $0x258] sm:$0xff]
    %v4284 = vld [vmem:[#allocation7 + $0x260] sm:$0xff]
    %v4285 = vld [vmem:[#allocation7 + $0x268] sm:$0xff]
    %v4286 = vld [vmem:[#allocation7 + $0x270] sm:$0xff]
    %v4287 = vld [vmem:[#allocation7 + $0x278] sm:$0xff]
    %v4288 = vld [vmem:[#allocation7 + $0x280] sm:$0xff]
    %v4289 = vld [vmem:[#allocation7 + $0x288] sm:$0xff]
    %v4290 = vld [vmem:[#allocation7 + $0x290] sm:$0xff]
    %v4291 = vld [vmem:[#allocation7 + $0x298] sm:$0xff]
    %v4292 = vld [vmem:[#allocation7 + $0x2a0] sm:$0xff]
    %v4293 = vld [vmem:[#allocation7 + $0x2a8] sm:$0xff]
    %v4294 = vld [vmem:[#allocation7 + $0x2b0] sm:$0xff]
    %v4295 = vld [vmem:[#allocation7 + $0x2b8] sm:$0xff]
    %v4296 = vld [vmem:[#allocation7 + $0x2c0] sm:$0xff]
    %v4297 = vld [vmem:[#allocation7 + $0x2c8] sm:$0xff]
    %v4298 = vld [vmem:[#allocation7 + $0x2d0] sm:$0xff]
    %v4299 = vld [vmem:[#allocation7 + $0x2d8] sm:$0xff]
    %v4300 = vld [vmem:[#allocation7 + $0x2e0] sm:$0xff]
    %v4301 = vld [vmem:[#allocation7 + $0x2e8] sm:$0xff]
    %v4302 = vld [vmem:[#allocation7 + $0x2f0] sm:$0xff]
    %v4303 = vld [vmem:[#allocation7 + $0x2f8] sm:$0xff]
    %v4304 = vld [vmem:[#allocation7 + $0x300] sm:$0xff]
    %v4305 = vld [vmem:[#allocation7 + $0x308] sm:$0xff]
    %v4306 = vld [vmem:[#allocation7 + $0x310] sm:$0xff]
    %v4307 = vld [vmem:[#allocation7 + $0x318] sm:$0xff]
    %v4308 = vld [vmem:[#allocation7 + $0x320] sm:$0xff]
    %v4309 = vld [vmem:[#allocation7 + $0x328] sm:$0xff]
    %v4310 = vld [vmem:[#allocation7 + $0x330] sm:$0xff]
    %v4311 = vld [vmem:[#allocation7 + $0x338] sm:$0xff]
    %v4312 = vld [vmem:[#allocation7 + $0x340] sm:$0xff]
    %v4313 = vld [vmem:[#allocation7 + $0x348] sm:$0xff]
    %v4314 = vld [vmem:[#allocation7 + $0x350] sm:$0xff]
    %v4315 = vld [vmem:[#allocation7 + $0x358] sm:$0xff]
    %v4316 = vld [vmem:[#allocation7 + $0x360] sm:$0xff]
    %v4317 = vld [vmem:[#allocation7 + $0x368] sm:$0xff]
    %v4318 = vld [vmem:[#allocation7 + $0x370] sm:$0xff]
    %v4319 = vld [vmem:[#allocation7 + $0x378] sm:$0xff]
    %v4320 = vld [vmem:[#allocation7 + $0x380] sm:$0xff]
    %v4321 = vld [vmem:[#allocation7 + $0x388] sm:$0xff]
    %v4322 = vld [vmem:[#allocation7 + $0x390] sm:$0xff]
    %v4323 = vld [vmem:[#allocation7 + $0x398] sm:$0xff]
    %v4324 = vld [vmem:[#allocation7 + $0x3a0] sm:$0xff]
    %v4325 = vld [vmem:[#allocation7 + $0x3a8] sm:$0xff]
    %v4326 = vld [vmem:[#allocation7 + $0x3b0] sm:$0xff]
    %v4327 = vld [vmem:[#allocation7 + $0x3b8] sm:$0xff]
    %v4328 = vld [vmem:[#allocation7 + $0x3c0] sm:$0xff]
    %v4329 = vld [vmem:[#allocation7 + $0x3c8] sm:$0xff]
    %v4330 = vld [vmem:[#allocation7 + $0x3d0] sm:$0xff]
    %v4331 = vld [vmem:[#allocation7 + $0x3d8] sm:$0xff]
    %v4332 = vld [vmem:[#allocation7 + $0x3e0] sm:$0xff]
    %v4333 = vld [vmem:[#allocation7 + $0x3e8] sm:$0xff]
    %v4334 = vld [vmem:[#allocation7 + $0x3f0] sm:$0xff]
    %v4335 = vld [vmem:[#allocation7 + $0x3f8] sm:$0xff]
    %v4336 = vld [vmem:[%s6] sm:$0xff]
    %v4338 = vperm.slane %v4336, 0
    %v4339 = vperm.slane %v4336, 1
    %v4340 = vperm.slane %v4336, 2
    %v4341 = vperm.slane %v4336, 3
    %v4342 = vperm.slane %v4336, 4
    %v4343 = vperm.slane %v4336, 5
    %v4344 = vperm.slane %v4336, 6
    %v4345 = vperm.slane %v4336, 7
    %v4482 = vunpack.c.l.b16 %v4208
    %v4483 = vunpack.c.h.b16 %v4208
    %v4484 = vunpack.c.l.b16 %v4209
    %v4485 = vunpack.c.h.b16 %v4209
    %v4486 = vunpack.c.l.b16 %v4210
    %v4487 = vunpack.c.h.b16 %v4210
    %v4488 = vunpack.c.l.b16 %v4211
    %v4489 = vunpack.c.h.b16 %v4211
    %v4490 = vunpack.c.l.b16 %v4212
    %v4491 = vunpack.c.h.b16 %v4212
    %v4492 = vunpack.c.l.b16 %v4213
    %v4493 = vunpack.c.h.b16 %v4213
    %v4494 = vunpack.c.l.b16 %v4214
    %v4495 = vunpack.c.h.b16 %v4214
    %v4496 = vunpack.c.l.b16 %v4215
    %v4497 = vunpack.c.h.b16 %v4215
    %v4498 = vunpack.c.l.b16 %v4216
    %v4499 = vunpack.c.h.b16 %v4216
    %v4500 = vunpack.c.l.b16 %v4217
    %v4501 = vunpack.c.h.b16 %v4217
    %v4502 = vunpack.c.l.b16 %v4218
    %v4503 = vunpack.c.h.b16 %v4218
    %v4504 = vunpack.c.l.b16 %v4219
    %v4505 = vunpack.c.h.b16 %v4219
    %v4506 = vunpack.c.l.b16 %v4220
    %v4507 = vunpack.c.h.b16 %v4220
    %v4508 = vunpack.c.l.b16 %v4221
    %v4509 = vunpack.c.h.b16 %v4221
    %v4510 = vunpack.c.l.b16 %v4222
    %v4511 = vunpack.c.h.b16 %v4222
    %v4512 = vunpack.c.l.b16 %v4223
    %v4513 = vunpack.c.h.b16 %v4223
    %v4514 = vunpack.c.l.b16 %v4224
    %v4515 = vunpack.c.h.b16 %v4224
    %v4516 = vunpack.c.l.b16 %v4225
    %v4517 = vunpack.c.h.b16 %v4225
    %v4518 = vunpack.c.l.b16 %v4226
    %v4519 = vunpack.c.h.b16 %v4226
    %v4520 = vunpack.c.l.b16 %v4227
    %v4521 = vunpack.c.h.b16 %v4227
    %v4522 = vunpack.c.l.b16 %v4228
    %v4523 = vunpack.c.h.b16 %v4228
    %v4524 = vunpack.c.l.b16 %v4229
    %v4525 = vunpack.c.h.b16 %v4229
    %v4526 = vunpack.c.l.b16 %v4230
    %v4527 = vunpack.c.h.b16 %v4230
    %v4528 = vunpack.c.l.b16 %v4231
    %v4529 = vunpack.c.h.b16 %v4231
    %v4530 = vunpack.c.l.b16 %v4232
    %v4531 = vunpack.c.h.b16 %v4232
    %v4532 = vunpack.c.l.b16 %v4233
    %v4533 = vunpack.c.h.b16 %v4233
    %v4534 = vunpack.c.l.b16 %v4234
    %v4535 = vunpack.c.h.b16 %v4234
    %v4536 = vunpack.c.l.b16 %v4235
    %v4537 = vunpack.c.h.b16 %v4235
    %v4538 = vunpack.c.l.b16 %v4236
    %v4539 = vunpack.c.h.b16 %v4236
    %v4540 = vunpack.c.l.b16 %v4237
    %v4541 = vunpack.c.h.b16 %v4237
    %v4542 = vunpack.c.l.b16 %v4238
    %v4543 = vunpack.c.h.b16 %v4238
    %v4544 = vunpack.c.l.b16 %v4239
    %v4545 = vunpack.c.h.b16 %v4239
    %v4546 = vunpack.c.l.b16 %v4240
    %v4547 = vunpack.c.h.b16 %v4240
    %v4548 = vunpack.c.l.b16 %v4241
    %v4549 = vunpack.c.h.b16 %v4241
    %v4550 = vunpack.c.l.b16 %v4242
    %v4551 = vunpack.c.h.b16 %v4242
    %v4552 = vunpack.c.l.b16 %v4243
    %v4553 = vunpack.c.h.b16 %v4243
    %v4554 = vunpack.c.l.b16 %v4244
    %v4555 = vunpack.c.h.b16 %v4244
    %v4556 = vunpack.c.l.b16 %v4245
    %v4557 = vunpack.c.h.b16 %v4245
    %v4558 = vunpack.c.l.b16 %v4246
    %v4559 = vunpack.c.h.b16 %v4246
    %v4560 = vunpack.c.l.b16 %v4247
    %v4561 = vunpack.c.h.b16 %v4247
    %v4562 = vunpack.c.l.b16 %v4248
    %v4563 = vunpack.c.h.b16 %v4248
    %v4564 = vunpack.c.l.b16 %v4249
    %v4565 = vunpack.c.h.b16 %v4249
    %v4566 = vunpack.c.l.b16 %v4250
    %v4567 = vunpack.c.h.b16 %v4250
    %v4568 = vunpack.c.l.b16 %v4251
    %v4569 = vunpack.c.h.b16 %v4251
    %v4570 = vunpack.c.l.b16 %v4252
    %v4571 = vunpack.c.h.b16 %v4252
    %v4572 = vunpack.c.l.b16 %v4253
    %v4573 = vunpack.c.h.b16 %v4253
    %v4574 = vunpack.c.l.b16 %v4254
    %v4575 = vunpack.c.h.b16 %v4254
    %v4576 = vunpack.c.l.b16 %v4255
    %v4577 = vunpack.c.h.b16 %v4255
    %v4578 = vunpack.c.l.b16 %v4256
    %v4579 = vunpack.c.h.b16 %v4256
    %v4580 = vunpack.c.l.b16 %v4257
    %v4581 = vunpack.c.h.b16 %v4257
    %v4582 = vunpack.c.l.b16 %v4258
    %v4583 = vunpack.c.h.b16 %v4258
    %v4584 = vunpack.c.l.b16 %v4259
    %v4585 = vunpack.c.h.b16 %v4259
    %v4586 = vunpack.c.l.b16 %v4260
    %v4587 = vunpack.c.h.b16 %v4260
    %v4588 = vunpack.c.l.b16 %v4261
    %v4589 = vunpack.c.h.b16 %v4261
    %v4590 = vunpack.c.l.b16 %v4262
    %v4591 = vunpack.c.h.b16 %v4262
    %v4592 = vunpack.c.l.b16 %v4263
    %v4593 = vunpack.c.h.b16 %v4263
    %v4594 = vunpack.c.l.b16 %v4264
    %v4595 = vunpack.c.h.b16 %v4264
    %v4596 = vunpack.c.l.b16 %v4265
    %v4597 = vunpack.c.h.b16 %v4265
    %v4598 = vunpack.c.l.b16 %v4266
    %v4599 = vunpack.c.h.b16 %v4266
    %v4600 = vunpack.c.l.b16 %v4267
    %v4601 = vunpack.c.h.b16 %v4267
    %v4602 = vunpack.c.l.b16 %v4268
    %v4603 = vunpack.c.h.b16 %v4268
    %v4604 = vunpack.c.l.b16 %v4269
    %v4605 = vunpack.c.h.b16 %v4269
    %v4606 = vunpack.c.l.b16 %v4270
    %v4607 = vunpack.c.h.b16 %v4270
    %v4608 = vunpack.c.l.b16 %v4271
    %v4609 = vunpack.c.h.b16 %v4271
    %v4610 = vunpack.c.l.b16 %v4272
    %v4611 = vunpack.c.h.b16 %v4272
    %v4612 = vunpack.c.l.b16 %v4273
    %v4613 = vunpack.c.h.b16 %v4273
    %v4614 = vunpack.c.l.b16 %v4274
    %v4615 = vunpack.c.h.b16 %v4274
    %v4616 = vunpack.c.l.b16 %v4275
    %v4617 = vunpack.c.h.b16 %v4275
    %v4618 = vunpack.c.l.b16 %v4276
    %v4619 = vunpack.c.h.b16 %v4276
    %v4620 = vunpack.c.l.b16 %v4277
    %v4621 = vunpack.c.h.b16 %v4277
    %v4622 = vunpack.c.l.b16 %v4278
    %v4623 = vunpack.c.h.b16 %v4278
    %v4624 = vunpack.c.l.b16 %v4279
    %v4625 = vunpack.c.h.b16 %v4279
    %v4626 = vunpack.c.l.b16 %v4280
    %v4627 = vunpack.c.h.b16 %v4280
    %v4628 = vunpack.c.l.b16 %v4281
    %v4629 = vunpack.c.h.b16 %v4281
    %v4630 = vunpack.c.l.b16 %v4282
    %v4631 = vunpack.c.h.b16 %v4282
    %v4632 = vunpack.c.l.b16 %v4283
    %v4633 = vunpack.c.h.b16 %v4283
    %v4634 = vunpack.c.l.b16 %v4284
    %v4635 = vunpack.c.h.b16 %v4284
    %v4636 = vunpack.c.l.b16 %v4285
    %v4637 = vunpack.c.h.b16 %v4285
    %v4638 = vunpack.c.l.b16 %v4286
    %v4639 = vunpack.c.h.b16 %v4286
    %v4640 = vunpack.c.l.b16 %v4287
    %v4641 = vunpack.c.h.b16 %v4287
    %v4642 = vunpack.c.l.b16 %v4288
    %v4643 = vunpack.c.h.b16 %v4288
    %v4644 = vunpack.c.l.b16 %v4289
    %v4645 = vunpack.c.h.b16 %v4289
    %v4646 = vunpack.c.l.b16 %v4290
    %v4647 = vunpack.c.h.b16 %v4290
    %v4648 = vunpack.c.l.b16 %v4291
    %v4649 = vunpack.c.h.b16 %v4291
    %v4650 = vunpack.c.l.b16 %v4292
    %v4651 = vunpack.c.h.b16 %v4292
    %v4652 = vunpack.c.l.b16 %v4293
    %v4653 = vunpack.c.h.b16 %v4293
    %v4654 = vunpack.c.l.b16 %v4294
    %v4655 = vunpack.c.h.b16 %v4294
    %v4656 = vunpack.c.l.b16 %v4295
    %v4657 = vunpack.c.h.b16 %v4295
    %v4658 = vunpack.c.l.b16 %v4296
    %v4659 = vunpack.c.h.b16 %v4296
    %v4660 = vunpack.c.l.b16 %v4297
    %v4661 = vunpack.c.h.b16 %v4297
    %v4662 = vunpack.c.l.b16 %v4298
    %v4663 = vunpack.c.h.b16 %v4298
    %v4664 = vunpack.c.l.b16 %v4299
    %v4665 = vunpack.c.h.b16 %v4299
    %v4666 = vunpack.c.l.b16 %v4300
    %v4667 = vunpack.c.h.b16 %v4300
    %v4668 = vunpack.c.l.b16 %v4301
    %v4669 = vunpack.c.h.b16 %v4301
    %v4670 = vunpack.c.l.b16 %v4302
    %v4671 = vunpack.c.h.b16 %v4302
    %v4672 = vunpack.c.l.b16 %v4303
    %v4673 = vunpack.c.h.b16 %v4303
    %v4674 = vunpack.c.l.b16 %v4304
    %v4675 = vunpack.c.h.b16 %v4304
    %v4676 = vunpack.c.l.b16 %v4305
    %v4677 = vunpack.c.h.b16 %v4305
    %v4678 = vunpack.c.l.b16 %v4306
    %v4679 = vunpack.c.h.b16 %v4306
    %v4680 = vunpack.c.l.b16 %v4307
    %v4681 = vunpack.c.h.b16 %v4307
    %v4682 = vunpack.c.l.b16 %v4308
    %v4683 = vunpack.c.h.b16 %v4308
    %v4684 = vunpack.c.l.b16 %v4309
    %v4685 = vunpack.c.h.b16 %v4309
    %v4686 = vunpack.c.l.b16 %v4310
    %v4687 = vunpack.c.h.b16 %v4310
    %v4688 = vunpack.c.l.b16 %v4311
    %v4689 = vunpack.c.h.b16 %v4311
    %v4690 = vunpack.c.l.b16 %v4312
    %v4691 = vunpack.c.h.b16 %v4312
    %v4692 = vunpack.c.l.b16 %v4313
    %v4693 = vunpack.c.h.b16 %v4313
    %v4694 = vunpack.c.l.b16 %v4314
    %v4695 = vunpack.c.h.b16 %v4314
    %v4696 = vunpack.c.l.b16 %v4315
    %v4697 = vunpack.c.h.b16 %v4315
    %v4698 = vunpack.c.l.b16 %v4316
    %v4699 = vunpack.c.h.b16 %v4316
    %v4700 = vunpack.c.l.b16 %v4317
    %v4701 = vunpack.c.h.b16 %v4317
    %v4702 = vunpack.c.l.b16 %v4318
    %v4703 = vunpack.c.h.b16 %v4318
    %v4704 = vunpack.c.l.b16 %v4319
    %v4705 = vunpack.c.h.b16 %v4319
    %v4706 = vunpack.c.l.b16 %v4320
    %v4707 = vunpack.c.h.b16 %v4320
    %v4708 = vunpack.c.l.b16 %v4321
    %v4709 = vunpack.c.h.b16 %v4321
    %v4710 = vunpack.c.l.b16 %v4322
    %v4711 = vunpack.c.h.b16 %v4322
    %v4712 = vunpack.c.l.b16 %v4323
    %v4713 = vunpack.c.h.b16 %v4323
    %v4714 = vunpack.c.l.b16 %v4324
    %v4715 = vunpack.c.h.b16 %v4324
    %v4716 = vunpack.c.l.b16 %v4325
    %v4717 = vunpack.c.h.b16 %v4325
    %v4718 = vunpack.c.l.b16 %v4326
    %v4719 = vunpack.c.h.b16 %v4326
    %v4720 = vunpack.c.l.b16 %v4327
    %v4721 = vunpack.c.h.b16 %v4327
    %v4722 = vunpack.c.l.b16 %v4328
    %v4723 = vunpack.c.h.b16 %v4328
    %v4724 = vunpack.c.l.b16 %v4329
    %v4725 = vunpack.c.h.b16 %v4329
    %v4726 = vunpack.c.l.b16 %v4330
    %v4727 = vunpack.c.h.b16 %v4330
    %v4728 = vunpack.c.l.b16 %v4331
    %v4729 = vunpack.c.h.b16 %v4331
    %v4730 = vunpack.c.l.b16 %v4332
    %v4731 = vunpack.c.h.b16 %v4332
    %v4732 = vunpack.c.l.b16 %v4333
    %v4733 = vunpack.c.h.b16 %v4333
    %v4734 = vunpack.c.l.b16 %v4334
    %v4735 = vunpack.c.h.b16 %v4334
    %v4736 = vunpack.c.l.b16 %v4335
    %v4737 = vunpack.c.h.b16 %v4335
    %v4738 = vpack.c.b16 %v4490, %v4482
    %v4739 = vpack.c.b16 %v4491, %v4483
    %v4740 = vpack.c.b16 %v4492, %v4484
    %v4741 = vpack.c.b16 %v4493, %v4485
    %v4742 = vpack.c.b16 %v4494, %v4486
    %v4743 = vpack.c.b16 %v4495, %v4487
    %v4744 = vpack.c.b16 %v4496, %v4488
    %v4745 = vpack.c.b16 %v4497, %v4489
    %v4746 = vpack.c.b16 %v4506, %v4498
    %v4747 = vpack.c.b16 %v4507, %v4499
    %v4748 = vpack.c.b16 %v4508, %v4500
    %v4749 = vpack.c.b16 %v4509, %v4501
    %v4750 = vpack.c.b16 %v4510, %v4502
    %v4751 = vpack.c.b16 %v4511, %v4503
    %v4752 = vpack.c.b16 %v4512, %v4504
    %v4753 = vpack.c.b16 %v4513, %v4505
    %v4754 = vpack.c.b16 %v4522, %v4514
    %v4755 = vpack.c.b16 %v4523, %v4515
    %v4756 = vpack.c.b16 %v4524, %v4516
    %v4757 = vpack.c.b16 %v4525, %v4517
    %v4758 = vpack.c.b16 %v4526, %v4518
    %v4759 = vpack.c.b16 %v4527, %v4519
    %v4760 = vpack.c.b16 %v4528, %v4520
    %v4761 = vpack.c.b16 %v4529, %v4521
    %v4762 = vpack.c.b16 %v4538, %v4530
    %v4763 = vpack.c.b16 %v4539, %v4531
    %v4764 = vpack.c.b16 %v4540, %v4532
    %v4765 = vpack.c.b16 %v4541, %v4533
    %v4766 = vpack.c.b16 %v4542, %v4534
    %v4767 = vpack.c.b16 %v4543, %v4535
    %v4768 = vpack.c.b16 %v4544, %v4536
    %v4769 = vpack.c.b16 %v4545, %v4537
    %v4770 = vpack.c.b16 %v4554, %v4546
    %v4771 = vpack.c.b16 %v4555, %v4547
    %v4772 = vpack.c.b16 %v4556, %v4548
    %v4773 = vpack.c.b16 %v4557, %v4549
    %v4774 = vpack.c.b16 %v4558, %v4550
    %v4775 = vpack.c.b16 %v4559, %v4551
    %v4776 = vpack.c.b16 %v4560, %v4552
    %v4777 = vpack.c.b16 %v4561, %v4553
    %v4778 = vpack.c.b16 %v4570, %v4562
    %v4779 = vpack.c.b16 %v4571, %v4563
    %v4780 = vpack.c.b16 %v4572, %v4564
    %v4781 = vpack.c.b16 %v4573, %v4565
    %v4782 = vpack.c.b16 %v4574, %v4566
    %v4783 = vpack.c.b16 %v4575, %v4567
    %v4784 = vpack.c.b16 %v4576, %v4568
    %v4785 = vpack.c.b16 %v4577, %v4569
    %v4786 = vpack.c.b16 %v4586, %v4578
    %v4787 = vpack.c.b16 %v4587, %v4579
    %v4788 = vpack.c.b16 %v4588, %v4580
    %v4789 = vpack.c.b16 %v4589, %v4581
    %v4790 = vpack.c.b16 %v4590, %v4582
    %v4791 = vpack.c.b16 %v4591, %v4583
    %v4792 = vpack.c.b16 %v4592, %v4584
    %v4793 = vpack.c.b16 %v4593, %v4585
    %v4794 = vpack.c.b16 %v4602, %v4594
    %v4795 = vpack.c.b16 %v4603, %v4595
    %v4796 = vpack.c.b16 %v4604, %v4596
    %v4797 = vpack.c.b16 %v4605, %v4597
    %v4798 = vpack.c.b16 %v4606, %v4598
    %v4799 = vpack.c.b16 %v4607, %v4599
    %v4800 = vpack.c.b16 %v4608, %v4600
    %v4801 = vpack.c.b16 %v4609, %v4601
    %v4802 = vpack.c.b16 %v4618, %v4610
    %v4803 = vpack.c.b16 %v4619, %v4611
    %v4804 = vpack.c.b16 %v4620, %v4612
    %v4805 = vpack.c.b16 %v4621, %v4613
    %v4806 = vpack.c.b16 %v4622, %v4614
    %v4807 = vpack.c.b16 %v4623, %v4615
    %v4808 = vpack.c.b16 %v4624, %v4616
    %v4809 = vpack.c.b16 %v4625, %v4617
    %v4810 = vpack.c.b16 %v4634, %v4626
    %v4811 = vpack.c.b16 %v4635, %v4627
    %v4812 = vpack.c.b16 %v4636, %v4628
    %v4813 = vpack.c.b16 %v4637, %v4629
    %v4814 = vpack.c.b16 %v4638, %v4630
    %v4815 = vpack.c.b16 %v4639, %v4631
    %v4816 = vpack.c.b16 %v4640, %v4632
    %v4817 = vpack.c.b16 %v4641, %v4633
    %v4818 = vpack.c.b16 %v4650, %v4642
    %v4819 = vpack.c.b16 %v4651, %v4643
    %v4820 = vpack.c.b16 %v4652, %v4644
    %v4821 = vpack.c.b16 %v4653, %v4645
    %v4822 = vpack.c.b16 %v4654, %v4646
    %v4823 = vpack.c.b16 %v4655, %v4647
    %v4824 = vpack.c.b16 %v4656, %v4648
    %v4825 = vpack.c.b16 %v4657, %v4649
    %v4826 = vpack.c.b16 %v4666, %v4658
    %v4827 = vpack.c.b16 %v4667, %v4659
    %v4828 = vpack.c.b16 %v4668, %v4660
    %v4829 = vpack.c.b16 %v4669, %v4661
    %v4830 = vpack.c.b16 %v4670, %v4662
    %v4831 = vpack.c.b16 %v4671, %v4663
    %v4832 = vpack.c.b16 %v4672, %v4664
    %v4833 = vpack.c.b16 %v4673, %v4665
    %v4834 = vpack.c.b16 %v4682, %v4674
    %v4835 = vpack.c.b16 %v4683, %v4675
    %v4836 = vpack.c.b16 %v4684, %v4676
    %v4837 = vpack.c.b16 %v4685, %v4677
    %v4838 = vpack.c.b16 %v4686, %v4678
    %v4839 = vpack.c.b16 %v4687, %v4679
    %v4840 = vpack.c.b16 %v4688, %v4680
    %v4841 = vpack.c.b16 %v4689, %v4681
    %v4842 = vpack.c.b16 %v4698, %v4690
    %v4843 = vpack.c.b16 %v4699, %v4691
    %v4844 = vpack.c.b16 %v4700, %v4692
    %v4845 = vpack.c.b16 %v4701, %v4693
    %v4846 = vpack.c.b16 %v4702, %v4694
    %v4847 = vpack.c.b16 %v4703, %v4695
    %v4848 = vpack.c.b16 %v4704, %v4696
    %v4849 = vpack.c.b16 %v4705, %v4697
    %v4850 = vpack.c.b16 %v4714, %v4706
    %v4851 = vpack.c.b16 %v4715, %v4707
    %v4852 = vpack.c.b16 %v4716, %v4708
    %v4853 = vpack.c.b16 %v4717, %v4709
    %v4854 = vpack.c.b16 %v4718, %v4710
    %v4855 = vpack.c.b16 %v4719, %v4711
    %v4856 = vpack.c.b16 %v4720, %v4712
    %v4857 = vpack.c.b16 %v4721, %v4713
    %v4858 = vpack.c.b16 %v4730, %v4722
    %v4859 = vpack.c.b16 %v4731, %v4723
    %v4860 = vpack.c.b16 %v4732, %v4724
    %v4861 = vpack.c.b16 %v4733, %v4725
    %v4862 = vpack.c.b16 %v4734, %v4726
    %v4863 = vpack.c.b16 %v4735, %v4727
    %v4864 = vpack.c.b16 %v4736, %v4728
    %v4865 = vpack.c.b16 %v4737, %v4729
    %4994 = vmatpush.bf16.msra.mxu0 %v4794
    %4995 = vmatpush.bf16.msra.mxu0 %v4786
    %4996 = vmatpush.bf16.msra.mxu0 %v4778
    %4997 = vmatpush.bf16.msra.mxu0 %v4770
    %4998 = vmatpush.bf16.msra.mxu0 %v4762
    %4999 = vmatpush.bf16.msra.mxu0 %v4754
    %5000 = vmatpush.bf16.msra.mxu0 %v4746
    %5001 = vmatpush.bf16.msra.mxu0 %v4738
    %5002 = vmatmul.bf16.gmra.mxu0 %v4200
    %v5003 = vpop.f32.mrf.mxu0
    %v5004 = vadd.f32 %v4338, %v5003
    %v5005 = vpop.f32.mrf.mxu0
    %v5006 = vadd.f32 %v4338, %v5005
    %5007 = vmatmul.bf16.gmra.mxu0 %v4202
    %v5008 = vpop.f32.mrf.mxu0
    %v5009 = vadd.f32 %v4338, %v5008
    %v5010 = vpop.f32.mrf.mxu0
    %v5011 = vadd.f32 %v4338, %v5010
    %5012 = vmatmul.bf16.gmra.mxu0 %v4204
    %v5013 = vpop.f32.mrf.mxu0
    %v5014 = vadd.f32 %v4338, %v5013
    %v5015 = vpop.f32.mrf.mxu0
    %v5016 = vadd.f32 %v4338, %v5015
    %5017 = vmatmul.bf16.gmra.mxu0 %v4206
    %v5018 = vpop.f32.mrf.mxu0
    %v5019 = vadd.f32 %v4338, %v5018
    %v5020 = vpop.f32.mrf.mxu0
    %v5021 = vadd.f32 %v4338, %v5020
    %5022 = vdwg.mxu0
    %5023 = vmatpush.bf16.msra.mxu0 %v4858
    %5024 = vmatpush.bf16.msra.mxu0 %v4850
    %5025 = vmatpush.bf16.msra.mxu0 %v4842
    %5026 = vmatpush.bf16.msra.mxu0 %v4834
    %5027 = vmatpush.bf16.msra.mxu0 %v4826
    %5028 = vmatpush.bf16.msra.mxu0 %v4818
    %5029 = vmatpush.bf16.msra.mxu0 %v4810
    %5030 = vmatpush.bf16.msra.mxu0 %v4802
    %5031 = vmatmul.bf16.gmra.mxu0 %v4201
    %v5032 = vpop.f32.mrf.mxu0
    %v5033 = vadd.f32 %v5004, %v5032
    %v5034 = vpop.f32.mrf.mxu0
    %v5035 = vadd.f32 %v5006, %v5034
    %5036 = vmatmul.bf16.gmra.mxu0 %v4203
    %v5037 = vpop.f32.mrf.mxu0
    %v5038 = vadd.f32 %v5009, %v5037
    %v5039 = vpop.f32.mrf.mxu0
    %v5040 = vadd.f32 %v5011, %v5039
    %5041 = vmatmul.bf16.gmra.mxu0 %v4205
    %v5042 = vpop.f32.mrf.mxu0
    %v5043 = vadd.f32 %v5014, %v5042
    %v5044 = vpop.f32.mrf.mxu0
    %v5045 = vadd.f32 %v5016, %v5044
    %5046 = vmatmul.bf16.gmra.mxu0 %v4207
    %v5047 = vpop.f32.mrf.mxu0
    %v5048 = vadd.f32 %v5019, %v5047
    %v5049 = vpop.f32.mrf.mxu0
    %v5050 = vadd.f32 %v5021, %v5049
    %5051 = vdwg.mxu0
    %5052 = vmatpush.bf16.msra.mxu0 %v4795
    %5053 = vmatpush.bf16.msra.mxu0 %v4787
    %5054 = vmatpush.bf16.msra.mxu0 %v4779
    %5055 = vmatpush.bf16.msra.mxu0 %v4771
    %5056 = vmatpush.bf16.msra.mxu0 %v4763
    %5057 = vmatpush.bf16.msra.mxu0 %v4755
    %5058 = vmatpush.bf16.msra.mxu0 %v4747
    %5059 = vmatpush.bf16.msra.mxu0 %v4739
    %5060 = vmatmul.bf16.gmra.mxu0 %v4200
    %v5061 = vpop.f32.mrf.mxu0
    %v5062 = vadd.f32 %v4339, %v5061
    %v5063 = vpop.f32.mrf.mxu0
    %v5064 = vadd.f32 %v4339, %v5063
    %5065 = vmatmul.bf16.gmra.mxu0 %v4202
    %v5066 = vpop.f32.mrf.mxu0
    %v5067 = vadd.f32 %v4339, %v5066
    %v5068 = vpop.f32.mrf.mxu0
    %v5069 = vadd.f32 %v4339, %v5068
    %5070 = vmatmul.bf16.gmra.mxu0 %v4204
    %v5071 = vpop.f32.mrf.mxu0
    %v5072 = vadd.f32 %v4339, %v5071
    %v5073 = vpop.f32.mrf.mxu0
    %v5074 = vadd.f32 %v4339, %v5073
    %5075 = vmatmul.bf16.gmra.mxu0 %v4206
    %v5076 = vpop.f32.mrf.mxu0
    %v5077 = vadd.f32 %v4339, %v5076
    %v5078 = vpop.f32.mrf.mxu0
    %v5079 = vadd.f32 %v4339, %v5078
    %5080 = vdwg.mxu0
    %5081 = vmatpush.bf16.msra.mxu0 %v4859
    %5082 = vmatpush.bf16.msra.mxu0 %v4851
    %5083 = vmatpush.bf16.msra.mxu0 %v4843
    %5084 = vmatpush.bf16.msra.mxu0 %v4835
    %5085 = vmatpush.bf16.msra.mxu0 %v4827
    %5086 = vmatpush.bf16.msra.mxu0 %v4819
    %5087 = vmatpush.bf16.msra.mxu0 %v4811
    %5088 = vmatpush.bf16.msra.mxu0 %v4803
    %5089 = vmatmul.bf16.gmra.mxu0 %v4201
    %v5090 = vpop.f32.mrf.mxu0
    %v5091 = vadd.f32 %v5062, %v5090
    %v5092 = vpop.f32.mrf.mxu0
    %v5093 = vadd.f32 %v5064, %v5092
    %5094 = vmatmul.bf16.gmra.mxu0 %v4203
    %v5095 = vpop.f32.mrf.mxu0
    %v5096 = vadd.f32 %v5067, %v5095
    %v5097 = vpop.f32.mrf.mxu0
    %v5098 = vadd.f32 %v5069, %v5097
    %5099 = vmatmul.bf16.gmra.mxu0 %v4205
    %v5100 = vpop.f32.mrf.mxu0
    %v5101 = vadd.f32 %v5072, %v5100
    %v5102 = vpop.f32.mrf.mxu0
    %v5103 = vadd.f32 %v5074, %v5102
    %5104 = vmatmul.bf16.gmra.mxu0 %v4207
    %v5105 = vpop.f32.mrf.mxu0
    %v5106 = vadd.f32 %v5077, %v5105
    %v5107 = vpop.f32.mrf.mxu0
    %v5108 = vadd.f32 %v5079, %v5107
    %5109 = vdwg.mxu0
    %5110 = vmatpush.bf16.msra.mxu0 %v4796
    %5111 = vmatpush.bf16.msra.mxu0 %v4788
    %5112 = vmatpush.bf16.msra.mxu0 %v4780
    %5113 = vmatpush.bf16.msra.mxu0 %v4772
    %5114 = vmatpush.bf16.msra.mxu0 %v4764
    %5115 = vmatpush.bf16.msra.mxu0 %v4756
    %5116 = vmatpush.bf16.msra.mxu0 %v4748
    %5117 = vmatpush.bf16.msra.mxu0 %v4740
    %5118 = vmatmul.bf16.gmra.mxu0 %v4200
    %v5119 = vpop.f32.mrf.mxu0
    %v5120 = vadd.f32 %v4340, %v5119
    %v5121 = vpop.f32.mrf.mxu0
    %v5122 = vadd.f32 %v4340, %v5121
    %5123 = vmatmul.bf16.gmra.mxu0 %v4202
    %v5124 = vpop.f32.mrf.mxu0
    %v5125 = vadd.f32 %v4340, %v5124
    %v5126 = vpop.f32.mrf.mxu0
    %v5127 = vadd.f32 %v4340, %v5126
    %5128 = vmatmul.bf16.gmra.mxu0 %v4204
    %v5129 = vpop.f32.mrf.mxu0
    %v5130 = vadd.f32 %v4340, %v5129
    %v5131 = vpop.f32.mrf.mxu0
    %v5132 = vadd.f32 %v4340, %v5131
    %5133 = vmatmul.bf16.gmra.mxu0 %v4206
    %v5134 = vpop.f32.mrf.mxu0
    %v5135 = vadd.f32 %v4340, %v5134
    %v5136 = vpop.f32.mrf.mxu0
    %v5137 = vadd.f32 %v4340, %v5136
    %5138 = vdwg.mxu0
    %5139 = vmatpush.bf16.msra.mxu0 %v4860
    %5140 = vmatpush.bf16.msra.mxu0 %v4852
    %5141 = vmatpush.bf16.msra.mxu0 %v4844
    %5142 = vmatpush.bf16.msra.mxu0 %v4836
    %5143 = vmatpush.bf16.msra.mxu0 %v4828
    %5144 = vmatpush.bf16.msra.mxu0 %v4820
    %5145 = vmatpush.bf16.msra.mxu0 %v4812
    %5146 = vmatpush.bf16.msra.mxu0 %v4804
    %5147 = vmatmul.bf16.gmra.mxu0 %v4201
    %v5148 = vpop.f32.mrf.mxu0
    %v5149 = vadd.f32 %v5120, %v5148
    %v5150 = vpop.f32.mrf.mxu0
    %v5151 = vadd.f32 %v5122, %v5150
    %5152 = vmatmul.bf16.gmra.mxu0 %v4203
    %v5153 = vpop.f32.mrf.mxu0
    %v5154 = vadd.f32 %v5125, %v5153
    %v5155 = vpop.f32.mrf.mxu0
    %v5156 = vadd.f32 %v5127, %v5155
    %5157 = vmatmul.bf16.gmra.mxu0 %v4205
    %v5158 = vpop.f32.mrf.mxu0
    %v5159 = vadd.f32 %v5130, %v5158
    %v5160 = vpop.f32.mrf.mxu0
    %v5161 = vadd.f32 %v5132, %v5160
    %5162 = vmatmul.bf16.gmra.mxu0 %v4207
    %v5163 = vpop.f32.mrf.mxu0
    %v5164 = vadd.f32 %v5135, %v5163
    %v5165 = vpop.f32.mrf.mxu0
    %v5166 = vadd.f32 %v5137, %v5165
    %5167 = vdwg.mxu0
    %5168 = vmatpush.bf16.msra.mxu0 %v4797
    %5169 = vmatpush.bf16.msra.mxu0 %v4789
    %5170 = vmatpush.bf16.msra.mxu0 %v4781
    %5171 = vmatpush.bf16.msra.mxu0 %v4773
    %5172 = vmatpush.bf16.msra.mxu0 %v4765
    %5173 = vmatpush.bf16.msra.mxu0 %v4757
    %5174 = vmatpush.bf16.msra.mxu0 %v4749
    %5175 = vmatpush.bf16.msra.mxu0 %v4741
    %5176 = vmatmul.bf16.gmra.mxu0 %v4200
    %v5177 = vpop.f32.mrf.mxu0
    %v5178 = vadd.f32 %v4341, %v5177
    %v5179 = vpop.f32.mrf.mxu0
    %v5180 = vadd.f32 %v4341, %v5179
    %5181 = vmatmul.bf16.gmra.mxu0 %v4202
    %v5182 = vpop.f32.mrf.mxu0
    %v5183 = vadd.f32 %v4341, %v5182
    %v5184 = vpop.f32.mrf.mxu0
    %v5185 = vadd.f32 %v4341, %v5184
    %5186 = vmatmul.bf16.gmra.mxu0 %v4204
    %v5187 = vpop.f32.mrf.mxu0
    %v5188 = vadd.f32 %v4341, %v5187
    %v5189 = vpop.f32.mrf.mxu0
    %v5190 = vadd.f32 %v4341, %v5189
    %5191 = vmatmul.bf16.gmra.mxu0 %v4206
    %v5192 = vpop.f32.mrf.mxu0
    %v5193 = vadd.f32 %v4341, %v5192
    %v5194 = vpop.f32.mrf.mxu0
    %v5195 = vadd.f32 %v4341, %v5194
    %5196 = vdwg.mxu0
    %5197 = vmatpush.bf16.msra.mxu0 %v4861
    %5198 = vmatpush.bf16.msra.mxu0 %v4853
    %5199 = vmatpush.bf16.msra.mxu0 %v4845
    %5200 = vmatpush.bf16.msra.mxu0 %v4837
    %5201 = vmatpush.bf16.msra.mxu0 %v4829
    %5202 = vmatpush.bf16.msra.mxu0 %v4821
    %5203 = vmatpush.bf16.msra.mxu0 %v4813
    %5204 = vmatpush.bf16.msra.mxu0 %v4805
    %5205 = vmatmul.bf16.gmra.mxu0 %v4201
    %v5206 = vpop.f32.mrf.mxu0
    %v5207 = vadd.f32 %v5178, %v5206
    %v5208 = vpop.f32.mrf.mxu0
    %v5209 = vadd.f32 %v5180, %v5208
    %5210 = vmatmul.bf16.gmra.mxu0 %v4203
    %v5211 = vpop.f32.mrf.mxu0
    %v5212 = vadd.f32 %v5183, %v5211
    %v5213 = vpop.f32.mrf.mxu0
    %v5214 = vadd.f32 %v5185, %v5213
    %5215 = vmatmul.bf16.gmra.mxu0 %v4205
    %v5216 = vpop.f32.mrf.mxu0
    %v5217 = vadd.f32 %v5188, %v5216
    %v5218 = vpop.f32.mrf.mxu0
    %v5219 = vadd.f32 %v5190, %v5218
    %5220 = vmatmul.bf16.gmra.mxu0 %v4207
    %v5221 = vpop.f32.mrf.mxu0
    %v5222 = vadd.f32 %v5193, %v5221
    %v5223 = vpop.f32.mrf.mxu0
    %v5224 = vadd.f32 %v5195, %v5223
    %5225 = vdwg.mxu0
    %5226 = vmatpush.bf16.msra.mxu0 %v4798
    %5227 = vmatpush.bf16.msra.mxu0 %v4790
    %5228 = vmatpush.bf16.msra.mxu0 %v4782
    %5229 = vmatpush.bf16.msra.mxu0 %v4774
    %5230 = vmatpush.bf16.msra.mxu0 %v4766
    %5231 = vmatpush.bf16.msra.mxu0 %v4758
    %5232 = vmatpush.bf16.msra.mxu0 %v4750
    %5233 = vmatpush.bf16.msra.mxu0 %v4742
    %5234 = vmatmul.bf16.gmra.mxu0 %v4200
    %v5235 = vpop.f32.mrf.mxu0
    %v5236 = vadd.f32 %v4342, %v5235
    %v5237 = vpop.f32.mrf.mxu0
    %v5238 = vadd.f32 %v4342, %v5237
    %5239 = vmatmul.bf16.gmra.mxu0 %v4202
    %v5240 = vpop.f32.mrf.mxu0
    %v5241 = vadd.f32 %v4342, %v5240
    %v5242 = vpop.f32.mrf.mxu0
    %v5243 = vadd.f32 %v4342, %v5242
    %5244 = vmatmul.bf16.gmra.mxu0 %v4204
    %v5245 = vpop.f32.mrf.mxu0
    %v5246 = vadd.f32 %v4342, %v5245
    %v5247 = vpop.f32.mrf.mxu0
    %v5248 = vadd.f32 %v4342, %v5247
    %5249 = vmatmul.bf16.gmra.mxu0 %v4206
    %v5250 = vpop.f32.mrf.mxu0
    %v5251 = vadd.f32 %v4342, %v5250
    %v5252 = vpop.f32.mrf.mxu0
    %v5253 = vadd.f32 %v4342, %v5252
    %5254 = vdwg.mxu0
    %5255 = vmatpush.bf16.msra.mxu0 %v4862
    %5256 = vmatpush.bf16.msra.mxu0 %v4854
    %5257 = vmatpush.bf16.msra.mxu0 %v4846
    %5258 = vmatpush.bf16.msra.mxu0 %v4838
    %5259 = vmatpush.bf16.msra.mxu0 %v4830
    %5260 = vmatpush.bf16.msra.mxu0 %v4822
    %5261 = vmatpush.bf16.msra.mxu0 %v4814
    %5262 = vmatpush.bf16.msra.mxu0 %v4806
    %5263 = vmatmul.bf16.gmra.mxu0 %v4201
    %v5264 = vpop.f32.mrf.mxu0
    %v5265 = vadd.f32 %v5236, %v5264
    %v5266 = vpop.f32.mrf.mxu0
    %v5267 = vadd.f32 %v5238, %v5266
    %5268 = vmatmul.bf16.gmra.mxu0 %v4203
    %v5269 = vpop.f32.mrf.mxu0
    %v5270 = vadd.f32 %v5241, %v5269
    %v5271 = vpop.f32.mrf.mxu0
    %v5272 = vadd.f32 %v5243, %v5271
    %5273 = vmatmul.bf16.gmra.mxu0 %v4205
    %v5274 = vpop.f32.mrf.mxu0
    %v5275 = vadd.f32 %v5246, %v5274
    %v5276 = vpop.f32.mrf.mxu0
    %v5277 = vadd.f32 %v5248, %v5276
    %5278 = vmatmul.bf16.gmra.mxu0 %v4207
    %v5279 = vpop.f32.mrf.mxu0
    %v5280 = vadd.f32 %v5251, %v5279
    %v5281 = vpop.f32.mrf.mxu0
    %v5282 = vadd.f32 %v5253, %v5281
    %5283 = vdwg.mxu0
    %5284 = vmatpush.bf16.msra.mxu0 %v4799
    %5285 = vmatpush.bf16.msra.mxu0 %v4791
    %5286 = vmatpush.bf16.msra.mxu0 %v4783
    %5287 = vmatpush.bf16.msra.mxu0 %v4775
    %5288 = vmatpush.bf16.msra.mxu0 %v4767
    %5289 = vmatpush.bf16.msra.mxu0 %v4759
    %5290 = vmatpush.bf16.msra.mxu0 %v4751
    %5291 = vmatpush.bf16.msra.mxu0 %v4743
    %5292 = vmatmul.bf16.gmra.mxu0 %v4200
    %v5293 = vpop.f32.mrf.mxu0
    %v5294 = vadd.f32 %v4343, %v5293
    %v5295 = vpop.f32.mrf.mxu0
    %v5296 = vadd.f32 %v4343, %v5295
    %5297 = vmatmul.bf16.gmra.mxu0 %v4202
    %v5298 = vpop.f32.mrf.mxu0
    %v5299 = vadd.f32 %v4343, %v5298
    %v5300 = vpop.f32.mrf.mxu0
    %v5301 = vadd.f32 %v4343, %v5300
    %5302 = vmatmul.bf16.gmra.mxu0 %v4204
    %v5303 = vpop.f32.mrf.mxu0
    %v5304 = vadd.f32 %v4343, %v5303
    %v5305 = vpop.f32.mrf.mxu0
    %v5306 = vadd.f32 %v4343, %v5305
    %5307 = vmatmul.bf16.gmra.mxu0 %v4206
    %v5308 = vpop.f32.mrf.mxu0
    %v5309 = vadd.f32 %v4343, %v5308
    %v5310 = vpop.f32.mrf.mxu0
    %v5311 = vadd.f32 %v4343, %v5310
    %5312 = vdwg.mxu0
    %5313 = vmatpush.bf16.msra.mxu0 %v4863
    %5314 = vmatpush.bf16.msra.mxu0 %v4855
    %5315 = vmatpush.bf16.msra.mxu0 %v4847
    %5316 = vmatpush.bf16.msra.mxu0 %v4839
    %5317 = vmatpush.bf16.msra.mxu0 %v4831
    %5318 = vmatpush.bf16.msra.mxu0 %v4823
    %5319 = vmatpush.bf16.msra.mxu0 %v4815
    %5320 = vmatpush.bf16.msra.mxu0 %v4807
    %5321 = vmatmul.bf16.gmra.mxu0 %v4201
    %v5322 = vpop.f32.mrf.mxu0
    %v5323 = vadd.f32 %v5294, %v5322
    %v5324 = vpop.f32.mrf.mxu0
    %v5325 = vadd.f32 %v5296, %v5324
    %5326 = vmatmul.bf16.gmra.mxu0 %v4203
    %v5327 = vpop.f32.mrf.mxu0
    %v5328 = vadd.f32 %v5299, %v5327
    %v5329 = vpop.f32.mrf.mxu0
    %v5330 = vadd.f32 %v5301, %v5329
    %5331 = vmatmul.bf16.gmra.mxu0 %v4205
    %v5332 = vpop.f32.mrf.mxu0
    %v5333 = vadd.f32 %v5304, %v5332
    %v5334 = vpop.f32.mrf.mxu0
    %v5335 = vadd.f32 %v5306, %v5334
    %5336 = vmatmul.bf16.gmra.mxu0 %v4207
    %v5337 = vpop.f32.mrf.mxu0
    %v5338 = vadd.f32 %v5309, %v5337
    %v5339 = vpop.f32.mrf.mxu0
    %v5340 = vadd.f32 %v5311, %v5339
    %5341 = vdwg.mxu0
    %5342 = vmatpush.bf16.msra.mxu0 %v4800
    %5343 = vmatpush.bf16.msra.mxu0 %v4792
    %5344 = vmatpush.bf16.msra.mxu0 %v4784
    %5345 = vmatpush.bf16.msra.mxu0 %v4776
    %5346 = vmatpush.bf16.msra.mxu0 %v4768
    %5347 = vmatpush.bf16.msra.mxu0 %v4760
    %5348 = vmatpush.bf16.msra.mxu0 %v4752
    %5349 = vmatpush.bf16.msra.mxu0 %v4744
    %5350 = vmatmul.bf16.gmra.mxu0 %v4200
    %v5351 = vpop.f32.mrf.mxu0
    %v5352 = vadd.f32 %v4344, %v5351
    %v5353 = vpop.f32.mrf.mxu0
    %v5354 = vadd.f32 %v4344, %v5353
    %5355 = vmatmul.bf16.gmra.mxu0 %v4202
    %v5356 = vpop.f32.mrf.mxu0
    %v5357 = vadd.f32 %v4344, %v5356
    %v5358 = vpop.f32.mrf.mxu0
    %v5359 = vadd.f32 %v4344, %v5358
    %5360 = vmatmul.bf16.gmra.mxu0 %v4204
    %v5361 = vpop.f32.mrf.mxu0
    %v5362 = vadd.f32 %v4344, %v5361
    %v5363 = vpop.f32.mrf.mxu0
    %v5364 = vadd.f32 %v4344, %v5363
    %5365 = vmatmul.bf16.gmra.mxu0 %v4206
    %v5366 = vpop.f32.mrf.mxu0
    %v5367 = vadd.f32 %v4344, %v5366
    %v5368 = vpop.f32.mrf.mxu0
    %v5369 = vadd.f32 %v4344, %v5368
    %5370 = vdwg.mxu0
    %5371 = vmatpush.bf16.msra.mxu0 %v4864
    %5372 = vmatpush.bf16.msra.mxu0 %v4856
    %5373 = vmatpush.bf16.msra.mxu0 %v4848
    %5374 = vmatpush.bf16.msra.mxu0 %v4840
    %5375 = vmatpush.bf16.msra.mxu0 %v4832
    %5376 = vmatpush.bf16.msra.mxu0 %v4824
    %5377 = vmatpush.bf16.msra.mxu0 %v4816
    %5378 = vmatpush.bf16.msra.mxu0 %v4808
    %5379 = vmatmul.bf16.gmra.mxu0 %v4201
    %v5380 = vpop.f32.mrf.mxu0
    %v5381 = vadd.f32 %v5352, %v5380
    %v5382 = vpop.f32.mrf.mxu0
    %v5383 = vadd.f32 %v5354, %v5382
    %5384 = vmatmul.bf16.gmra.mxu0 %v4203
    %v5385 = vpop.f32.mrf.mxu0
    %v5386 = vadd.f32 %v5357, %v5385
    %v5387 = vpop.f32.mrf.mxu0
    %v5388 = vadd.f32 %v5359, %v5387
    %5389 = vmatmul.bf16.gmra.mxu0 %v4205
    %v5390 = vpop.f32.mrf.mxu0
    %v5391 = vadd.f32 %v5362, %v5390
    %v5392 = vpop.f32.mrf.mxu0
    %v5393 = vadd.f32 %v5364, %v5392
    %5394 = vmatmul.bf16.gmra.mxu0 %v4207
    %v5395 = vpop.f32.mrf.mxu0
    %v5396 = vadd.f32 %v5367, %v5395
    %v5397 = vpop.f32.mrf.mxu0
    %v5398 = vadd.f32 %v5369, %v5397
    %5399 = vdwg.mxu0
    %5400 = vmatpush.bf16.msra.mxu0 %v4801
    %5401 = vmatpush.bf16.msra.mxu0 %v4793
    %5402 = vmatpush.bf16.msra.mxu0 %v4785
    %5403 = vmatpush.bf16.msra.mxu0 %v4777
    %5404 = vmatpush.bf16.msra.mxu0 %v4769
    %5405 = vmatpush.bf16.msra.mxu0 %v4761
    %5406 = vmatpush.bf16.msra.mxu0 %v4753
    %5407 = vmatpush.bf16.msra.mxu0 %v4745
    %5408 = vmatmul.bf16.gmra.mxu0 %v4200
    %v5409 = vpop.f32.mrf.mxu0
    %v5410 = vadd.f32 %v4345, %v5409
    %v5411 = vpop.f32.mrf.mxu0
    %v5412 = vadd.f32 %v4345, %v5411
    %5413 = vmatmul.bf16.gmra.mxu0 %v4202
    %v5414 = vpop.f32.mrf.mxu0
    %v5415 = vadd.f32 %v4345, %v5414
    %v5416 = vpop.f32.mrf.mxu0
    %v5417 = vadd.f32 %v4345, %v5416
    %5418 = vmatmul.bf16.gmra.mxu0 %v4204
    %v5419 = vpop.f32.mrf.mxu0
    %v5420 = vadd.f32 %v4345, %v5419
    %v5421 = vpop.f32.mrf.mxu0
    %v5422 = vadd.f32 %v4345, %v5421
    %5423 = vmatmul.bf16.gmra.mxu0 %v4206
    %v5424 = vpop.f32.mrf.mxu0
    %v5425 = vadd.f32 %v4345, %v5424
    %v5426 = vpop.f32.mrf.mxu0
    %v5427 = vadd.f32 %v4345, %v5426
    %5428 = vdwg.mxu0
    %5429 = vmatpush.bf16.msra.mxu0 %v4865
    %5430 = vmatpush.bf16.msra.mxu0 %v4857
    %5431 = vmatpush.bf16.msra.mxu0 %v4849
    %5432 = vmatpush.bf16.msra.mxu0 %v4841
    %5433 = vmatpush.bf16.msra.mxu0 %v4833
    %5434 = vmatpush.bf16.msra.mxu0 %v4825
    %5435 = vmatpush.bf16.msra.mxu0 %v4817
    %5436 = vmatpush.bf16.msra.mxu0 %v4809
    %5437 = vmatmul.bf16.gmra.mxu0 %v4201
    %v5438 = vpop.f32.mrf.mxu0
    %v5439 = vadd.f32 %v5410, %v5438
    %v5440 = vpop.f32.mrf.mxu0
    %v5441 = vadd.f32 %v5412, %v5440
    %5442 = vmatmul.bf16.gmra.mxu0 %v4203
    %v5443 = vpop.f32.mrf.mxu0
    %v5444 = vadd.f32 %v5415, %v5443
    %v5445 = vpop.f32.mrf.mxu0
    %v5446 = vadd.f32 %v5417, %v5445
    %5447 = vmatmul.bf16.gmra.mxu0 %v4205
    %v5448 = vpop.f32.mrf.mxu0
    %v5449 = vadd.f32 %v5420, %v5448
    %v5450 = vpop.f32.mrf.mxu0
    %v5451 = vadd.f32 %v5422, %v5450
    %5452 = vmatmul.bf16.gmra.mxu0 %v4207
    %v5453 = vpop.f32.mrf.mxu0
    %v5454 = vadd.f32 %v5425, %v5453
    %v5455 = vpop.f32.mrf.mxu0
    %v5456 = vadd.f32 %v5427, %v5455
    %5457 = vdwg.mxu0
    %5458 = vst [vmem:[#allocation2] sm:$0xff] %v5033
    %5459 = vst [vmem:[#allocation2 + $0x8] sm:$0xff] %v5091
    %5460 = vst [vmem:[#allocation2 + $0x10] sm:$0xff] %v5149
    %5461 = vst [vmem:[#allocation2 + $0x18] sm:$0xff] %v5207
    %5462 = vst [vmem:[#allocation2 + $0x20] sm:$0xff] %v5265
    %5463 = vst [vmem:[#allocation2 + $0x28] sm:$0xff] %v5323
    %5464 = vst [vmem:[#allocation2 + $0x30] sm:$0xff] %v5381
    %5465 = vst [vmem:[#allocation2 + $0x38] sm:$0xff] %v5439
    %5466 = vst [vmem:[#allocation2 + $0x40] sm:$0xff] %v5035
    %5467 = vst [vmem:[#allocation2 + $0x48] sm:$0xff] %v5093
    %5468 = vst [vmem:[#allocation2 + $0x50] sm:$0xff] %v5151
    %5469 = vst [vmem:[#allocation2 + $0x58] sm:$0xff] %v5209
    %5470 = vst [vmem:[#allocation2 + $0x60] sm:$0xff] %v5267
    %5471 = vst [vmem:[#allocation2 + $0x68] sm:$0xff] %v5325
    %5472 = vst [vmem:[#allocation2 + $0x70] sm:$0xff] %v5383
    %5473 = vst [vmem:[#allocation2 + $0x78] sm:$0xff] %v5441
    %5474 = vst [vmem:[#allocation2 + $0x80] sm:$0xff] %v5038
    %5475 = vst [vmem:[#allocation2 + $0x88] sm:$0xff] %v5096
    %5476 = vst [vmem:[#allocation2 + $0x90] sm:$0xff] %v5154
    %5477 = vst [vmem:[#allocation2 + $0x98] sm:$0xff] %v5212
    %5478 = vst [vmem:[#allocation2 + $0xa0] sm:$0xff] %v5270
    %5479 = vst [vmem:[#allocation2 + $0xa8] sm:$0xff] %v5328
    %5480 = vst [vmem:[#allocation2 + $0xb0] sm:$0xff] %v5386
    %5481 = vst [vmem:[#allocation2 + $0xb8] sm:$0xff] %v5444
    %5482 = vst [vmem:[#allocation2 + $0xc0] sm:$0xff] %v5040
    %5483 = vst [vmem:[#allocation2 + $0xc8] sm:$0xff] %v5098
    %5484 = vst [vmem:[#allocation2 + $0xd0] sm:$0xff] %v5156
    %5485 = vst [vmem:[#allocation2 + $0xd8] sm:$0xff] %v5214
    %5486 = vst [vmem:[#allocation2 + $0xe0] sm:$0xff] %v5272
    %5487 = vst [vmem:[#allocation2 + $0xe8] sm:$0xff] %v5330
    %5488 = vst [vmem:[#allocation2 + $0xf0] sm:$0xff] %v5388
    %5489 = vst [vmem:[#allocation2 + $0xf8] sm:$0xff] %v5446
    %5490 = vst [vmem:[#allocation2 + $0x100] sm:$0xff] %v5043
    %5491 = vst [vmem:[#allocation2 + $0x108] sm:$0xff] %v5101
    %5492 = vst [vmem:[#allocation2 + $0x110] sm:$0xff] %v5159
    %5493 = vst [vmem:[#allocation2 + $0x118] sm:$0xff] %v5217
    %5494 = vst [vmem:[#allocation2 + $0x120] sm:$0xff] %v5275
    %5495 = vst [vmem:[#allocation2 + $0x128] sm:$0xff] %v5333
    %5496 = vst [vmem:[#allocation2 + $0x130] sm:$0xff] %v5391
    %5497 = vst [vmem:[#allocation2 + $0x138] sm:$0xff] %v5449
    %5498 = vst [vmem:[#allocation2 + $0x140] sm:$0xff] %v5045
    %5499 = vst [vmem:[#allocation2 + $0x148] sm:$0xff] %v5103
    %5500 = vst [vmem:[#allocation2 + $0x150] sm:$0xff] %v5161
    %5501 = vst [vmem:[#allocation2 + $0x158] sm:$0xff] %v5219
    %5502 = vst [vmem:[#allocation2 + $0x160] sm:$0xff] %v5277
    %5503 = vst [vmem:[#allocation2 + $0x168] sm:$0xff] %v5335
    %5504 = vst [vmem:[#allocation2 + $0x170] sm:$0xff] %v5393
    %5505 = vst [vmem:[#allocation2 + $0x178] sm:$0xff] %v5451
    %5506 = vst [vmem:[#allocation2 + $0x180] sm:$0xff] %v5048
    %5507 = vst [vmem:[#allocation2 + $0x188] sm:$0xff] %v5106
    %5508 = vst [vmem:[#allocation2 + $0x190] sm:$0xff] %v5164
    %5509 = vst [vmem:[#allocation2 + $0x198] sm:$0xff] %v5222
    %5510 = vst [vmem:[#allocation2 + $0x1a0] sm:$0xff] %v5280
    %5511 = vst [vmem:[#allocation2 + $0x1a8] sm:$0xff] %v5338
    %5512 = vst [vmem:[#allocation2 + $0x1b0] sm:$0xff] %v5396
    %5513 = vst [vmem:[#allocation2 + $0x1b8] sm:$0xff] %v5454
    %5514 = vst [vmem:[#allocation2 + $0x1c0] sm:$0xff] %v5050
    %5515 = vst [vmem:[#allocation2 + $0x1c8] sm:$0xff] %v5108
    %5516 = vst [vmem:[#allocation2 + $0x1d0] sm:$0xff] %v5166
    %5517 = vst [vmem:[#allocation2 + $0x1d8] sm:$0xff] %v5224
    %5518 = vst [vmem:[#allocation2 + $0x1e0] sm:$0xff] %v5282
    %5519 = vst [vmem:[#allocation2 + $0x1e8] sm:$0xff] %v5340
    %5520 = vst [vmem:[#allocation2 + $0x1f0] sm:$0xff] %v5398
    %5521 = vst [vmem:[#allocation2 + $0x1f8] sm:$0xff] %v5456
    %v5522 = vld [vmem:[#allocation9] sm:$0xff]
    %v5523 = vld [vmem:[#allocation9 + $0x8] sm:$0xff]
    %v5524 = vld [vmem:[#allocation9 + $0x10] sm:$0xff]
    %v5525 = vld [vmem:[#allocation9 + $0x18] sm:$0xff]
    %v5526 = vld [vmem:[#allocation9 + $0x20] sm:$0xff]
    %v5527 = vld [vmem:[#allocation9 + $0x28] sm:$0xff]
    %v5528 = vld [vmem:[#allocation9 + $0x30] sm:$0xff]
    %v5529 = vld [vmem:[#allocation9 + $0x38] sm:$0xff]
    %v5530 = vld [vmem:[#allocation9 + $0x40] sm:$0xff]
    %v5531 = vld [vmem:[#allocation9 + $0x48] sm:$0xff]
    %v5532 = vld [vmem:[#allocation9 + $0x50] sm:$0xff]
    %v5533 = vld [vmem:[#allocation9 + $0x58] sm:$0xff]
    %v5534 = vld [vmem:[#allocation9 + $0x60] sm:$0xff]
    %v5535 = vld [vmem:[#allocation9 + $0x68] sm:$0xff]
    %v5536 = vld [vmem:[#allocation9 + $0x70] sm:$0xff]
    %v5537 = vld [vmem:[#allocation9 + $0x78] sm:$0xff]
    %v5538 = vld [vmem:[#allocation9 + $0x80] sm:$0xff]
    %v5539 = vld [vmem:[#allocation9 + $0x88] sm:$0xff]
    %v5540 = vld [vmem:[#allocation9 + $0x90] sm:$0xff]
    %v5541 = vld [vmem:[#allocation9 + $0x98] sm:$0xff]
    %v5542 = vld [vmem:[#allocation9 + $0xa0] sm:$0xff]
    %v5543 = vld [vmem:[#allocation9 + $0xa8] sm:$0xff]
    %v5544 = vld [vmem:[#allocation9 + $0xb0] sm:$0xff]
    %v5545 = vld [vmem:[#allocation9 + $0xb8] sm:$0xff]
    %v5546 = vld [vmem:[#allocation9 + $0xc0] sm:$0xff]
    %v5547 = vld [vmem:[#allocation9 + $0xc8] sm:$0xff]
    %v5548 = vld [vmem:[#allocation9 + $0xd0] sm:$0xff]
    %v5549 = vld [vmem:[#allocation9 + $0xd8] sm:$0xff]
    %v5550 = vld [vmem:[#allocation9 + $0xe0] sm:$0xff]
    %v5551 = vld [vmem:[#allocation9 + $0xe8] sm:$0xff]
    %v5552 = vld [vmem:[#allocation9 + $0xf0] sm:$0xff]
    %v5553 = vld [vmem:[#allocation9 + $0xf8] sm:$0xff]
    %v5554 = vld [vmem:[#allocation9 + $0x100] sm:$0xff]
    %v5555 = vld [vmem:[#allocation9 + $0x108] sm:$0xff]
    %v5556 = vld [vmem:[#allocation9 + $0x110] sm:$0xff]
    %v5557 = vld [vmem:[#allocation9 + $0x118] sm:$0xff]
    %v5558 = vld [vmem:[#allocation9 + $0x120] sm:$0xff]
    %v5559 = vld [vmem:[#allocation9 + $0x128] sm:$0xff]
    %v5560 = vld [vmem:[#allocation9 + $0x130] sm:$0xff]
    %v5561 = vld [vmem:[#allocation9 + $0x138] sm:$0xff]
    %v5562 = vld [vmem:[#allocation9 + $0x140] sm:$0xff]
    %v5563 = vld [vmem:[#allocation9 + $0x148] sm:$0xff]
    %v5564 = vld [vmem:[#allocation9 + $0x150] sm:$0xff]
    %v5565 = vld [vmem:[#allocation9 + $0x158] sm:$0xff]
    %v5566 = vld [vmem:[#allocation9 + $0x160] sm:$0xff]
    %v5567 = vld [vmem:[#allocation9 + $0x168] sm:$0xff]
    %v5568 = vld [vmem:[#allocation9 + $0x170] sm:$0xff]
    %v5569 = vld [vmem:[#allocation9 + $0x178] sm:$0xff]
    %v5570 = vld [vmem:[#allocation9 + $0x180] sm:$0xff]
    %v5571 = vld [vmem:[#allocation9 + $0x188] sm:$0xff]
    %v5572 = vld [vmem:[#allocation9 + $0x190] sm:$0xff]
    %v5573 = vld [vmem:[#allocation9 + $0x198] sm:$0xff]
    %v5574 = vld [vmem:[#allocation9 + $0x1a0] sm:$0xff]
    %v5575 = vld [vmem:[#allocation9 + $0x1a8] sm:$0xff]
    %v5576 = vld [vmem:[#allocation9 + $0x1b0] sm:$0xff]
    %v5577 = vld [vmem:[#allocation9 + $0x1b8] sm:$0xff]
    %v5578 = vld [vmem:[#allocation9 + $0x1c0] sm:$0xff]
    %v5579 = vld [vmem:[#allocation9 + $0x1c8] sm:$0xff]
    %v5580 = vld [vmem:[#allocation9 + $0x1d0] sm:$0xff]
    %v5581 = vld [vmem:[#allocation9 + $0x1d8] sm:$0xff]
    %v5582 = vld [vmem:[#allocation9 + $0x1e0] sm:$0xff]
    %v5583 = vld [vmem:[#allocation9 + $0x1e8] sm:$0xff]
    %v5584 = vld [vmem:[#allocation9 + $0x1f0] sm:$0xff]
    %v5585 = vld [vmem:[#allocation9 + $0x1f8] sm:$0xff]
    %v5586 = vld [vmem:[#allocation9 + $0x200] sm:$0xff]
    %v5587 = vld [vmem:[#allocation9 + $0x208] sm:$0xff]
    %v5588 = vld [vmem:[#allocation9 + $0x210] sm:$0xff]
    %v5589 = vld [vmem:[#allocation9 + $0x218] sm:$0xff]
    %v5590 = vld [vmem:[#allocation9 + $0x220] sm:$0xff]
    %v5591 = vld [vmem:[#allocation9 + $0x228] sm:$0xff]
    %v5592 = vld [vmem:[#allocation9 + $0x230] sm:$0xff]
    %v5593 = vld [vmem:[#allocation9 + $0x238] sm:$0xff]
    %v5594 = vld [vmem:[#allocation9 + $0x240] sm:$0xff]
    %v5595 = vld [vmem:[#allocation9 + $0x248] sm:$0xff]
    %v5596 = vld [vmem:[#allocation9 + $0x250] sm:$0xff]
    %v5597 = vld [vmem:[#allocation9 + $0x258] sm:$0xff]
    %v5598 = vld [vmem:[#allocation9 + $0x260] sm:$0xff]
    %v5599 = vld [vmem:[#allocation9 + $0x268] sm:$0xff]
    %v5600 = vld [vmem:[#allocation9 + $0x270] sm:$0xff]
    %v5601 = vld [vmem:[#allocation9 + $0x278] sm:$0xff]
    %v5602 = vld [vmem:[#allocation9 + $0x280] sm:$0xff]
    %v5603 = vld [vmem:[#allocation9 + $0x288] sm:$0xff]
    %v5604 = vld [vmem:[#allocation9 + $0x290] sm:$0xff]
    %v5605 = vld [vmem:[#allocation9 + $0x298] sm:$0xff]
    %v5606 = vld [vmem:[#allocation9 + $0x2a0] sm:$0xff]
    %v5607 = vld [vmem:[#allocation9 + $0x2a8] sm:$0xff]
    %v5608 = vld [vmem:[#allocation9 + $0x2b0] sm:$0xff]
    %v5609 = vld [vmem:[#allocation9 + $0x2b8] sm:$0xff]
    %v5610 = vld [vmem:[#allocation9 + $0x2c0] sm:$0xff]
    %v5611 = vld [vmem:[#allocation9 + $0x2c8] sm:$0xff]
    %v5612 = vld [vmem:[#allocation9 + $0x2d0] sm:$0xff]
    %v5613 = vld [vmem:[#allocation9 + $0x2d8] sm:$0xff]
    %v5614 = vld [vmem:[#allocation9 + $0x2e0] sm:$0xff]
    %v5615 = vld [vmem:[#allocation9 + $0x2e8] sm:$0xff]
    %v5616 = vld [vmem:[#allocation9 + $0x2f0] sm:$0xff]
    %v5617 = vld [vmem:[#allocation9 + $0x2f8] sm:$0xff]
    %v5618 = vld [vmem:[#allocation9 + $0x300] sm:$0xff]
    %v5619 = vld [vmem:[#allocation9 + $0x308] sm:$0xff]
    %v5620 = vld [vmem:[#allocation9 + $0x310] sm:$0xff]
    %v5621 = vld [vmem:[#allocation9 + $0x318] sm:$0xff]
    %v5622 = vld [vmem:[#allocation9 + $0x320] sm:$0xff]
    %v5623 = vld [vmem:[#allocation9 + $0x328] sm:$0xff]
    %v5624 = vld [vmem:[#allocation9 + $0x330] sm:$0xff]
    %v5625 = vld [vmem:[#allocation9 + $0x338] sm:$0xff]
    %v5626 = vld [vmem:[#allocation9 + $0x340] sm:$0xff]
    %v5627 = vld [vmem:[#allocation9 + $0x348] sm:$0xff]
    %v5628 = vld [vmem:[#allocation9 + $0x350] sm:$0xff]
    %v5629 = vld [vmem:[#allocation9 + $0x358] sm:$0xff]
    %v5630 = vld [vmem:[#allocation9 + $0x360] sm:$0xff]
    %v5631 = vld [vmem:[#allocation9 + $0x368] sm:$0xff]
    %v5632 = vld [vmem:[#allocation9 + $0x370] sm:$0xff]
    %v5633 = vld [vmem:[#allocation9 + $0x378] sm:$0xff]
    %v5634 = vld [vmem:[#allocation9 + $0x380] sm:$0xff]
    %v5635 = vld [vmem:[#allocation9 + $0x388] sm:$0xff]
    %v5636 = vld [vmem:[#allocation9 + $0x390] sm:$0xff]
    %v5637 = vld [vmem:[#allocation9 + $0x398] sm:$0xff]
    %v5638 = vld [vmem:[#allocation9 + $0x3a0] sm:$0xff]
    %v5639 = vld [vmem:[#allocation9 + $0x3a8] sm:$0xff]
    %v5640 = vld [vmem:[#allocation9 + $0x3b0] sm:$0xff]
    %v5641 = vld [vmem:[#allocation9 + $0x3b8] sm:$0xff]
    %v5642 = vld [vmem:[#allocation9 + $0x3c0] sm:$0xff]
    %v5643 = vld [vmem:[#allocation9 + $0x3c8] sm:$0xff]
    %v5644 = vld [vmem:[#allocation9 + $0x3d0] sm:$0xff]
    %v5645 = vld [vmem:[#allocation9 + $0x3d8] sm:$0xff]
    %v5646 = vld [vmem:[#allocation9 + $0x3e0] sm:$0xff]
    %v5647 = vld [vmem:[#allocation9 + $0x3e8] sm:$0xff]
    %v5648 = vld [vmem:[#allocation9 + $0x3f0] sm:$0xff]
    %v5649 = vld [vmem:[#allocation9 + $0x3f8] sm:$0xff]
    %v5778 = vunpack.c.l.b16 %v5522
    %v5779 = vunpack.c.h.b16 %v5522
    %v5780 = vunpack.c.l.b16 %v5523
    %v5781 = vunpack.c.h.b16 %v5523
    %v5782 = vunpack.c.l.b16 %v5524
    %v5783 = vunpack.c.h.b16 %v5524
    %v5784 = vunpack.c.l.b16 %v5525
    %v5785 = vunpack.c.h.b16 %v5525
    %v5786 = vunpack.c.l.b16 %v5526
    %v5787 = vunpack.c.h.b16 %v5526
    %v5788 = vunpack.c.l.b16 %v5527
    %v5789 = vunpack.c.h.b16 %v5527
    %v5790 = vunpack.c.l.b16 %v5528
    %v5791 = vunpack.c.h.b16 %v5528
    %v5792 = vunpack.c.l.b16 %v5529
    %v5793 = vunpack.c.h.b16 %v5529
    %v5794 = vunpack.c.l.b16 %v5530
    %v5795 = vunpack.c.h.b16 %v5530
    %v5796 = vunpack.c.l.b16 %v5531
    %v5797 = vunpack.c.h.b16 %v5531
    %v5798 = vunpack.c.l.b16 %v5532
    %v5799 = vunpack.c.h.b16 %v5532
    %v5800 = vunpack.c.l.b16 %v5533
    %v5801 = vunpack.c.h.b16 %v5533
    %v5802 = vunpack.c.l.b16 %v5534
    %v5803 = vunpack.c.h.b16 %v5534
    %v5804 = vunpack.c.l.b16 %v5535
    %v5805 = vunpack.c.h.b16 %v5535
    %v5806 = vunpack.c.l.b16 %v5536
    %v5807 = vunpack.c.h.b16 %v5536
    %v5808 = vunpack.c.l.b16 %v5537
    %v5809 = vunpack.c.h.b16 %v5537
    %v5810 = vunpack.c.l.b16 %v5538
    %v5811 = vunpack.c.h.b16 %v5538
    %v5812 = vunpack.c.l.b16 %v5539
    %v5813 = vunpack.c.h.b16 %v5539
    %v5814 = vunpack.c.l.b16 %v5540
    %v5815 = vunpack.c.h.b16 %v5540
    %v5816 = vunpack.c.l.b16 %v5541
    %v5817 = vunpack.c.h.b16 %v5541
    %v5818 = vunpack.c.l.b16 %v5542
    %v5819 = vunpack.c.h.b16 %v5542
    %v5820 = vunpack.c.l.b16 %v5543
    %v5821 = vunpack.c.h.b16 %v5543
    %v5822 = vunpack.c.l.b16 %v5544
    %v5823 = vunpack.c.h.b16 %v5544
    %v5824 = vunpack.c.l.b16 %v5545
    %v5825 = vunpack.c.h.b16 %v5545
    %v5826 = vunpack.c.l.b16 %v5546
    %v5827 = vunpack.c.h.b16 %v5546
    %v5828 = vunpack.c.l.b16 %v5547
    %v5829 = vunpack.c.h.b16 %v5547
    %v5830 = vunpack.c.l.b16 %v5548
    %v5831 = vunpack.c.h.b16 %v5548
    %v5832 = vunpack.c.l.b16 %v5549
    %v5833 = vunpack.c.h.b16 %v5549
    %v5834 = vunpack.c.l.b16 %v5550
    %v5835 = vunpack.c.h.b16 %v5550
    %v5836 = vunpack.c.l.b16 %v5551
    %v5837 = vunpack.c.h.b16 %v5551
    %v5838 = vunpack.c.l.b16 %v5552
    %v5839 = vunpack.c.h.b16 %v5552
    %v5840 = vunpack.c.l.b16 %v5553
    %v5841 = vunpack.c.h.b16 %v5553
    %v5842 = vunpack.c.l.b16 %v5554
    %v5843 = vunpack.c.h.b16 %v5554
    %v5844 = vunpack.c.l.b16 %v5555
    %v5845 = vunpack.c.h.b16 %v5555
    %v5846 = vunpack.c.l.b16 %v5556
    %v5847 = vunpack.c.h.b16 %v5556
    %v5848 = vunpack.c.l.b16 %v5557
    %v5849 = vunpack.c.h.b16 %v5557
    %v5850 = vunpack.c.l.b16 %v5558
    %v5851 = vunpack.c.h.b16 %v5558
    %v5852 = vunpack.c.l.b16 %v5559
    %v5853 = vunpack.c.h.b16 %v5559
    %v5854 = vunpack.c.l.b16 %v5560
    %v5855 = vunpack.c.h.b16 %v5560
    %v5856 = vunpack.c.l.b16 %v5561
    %v5857 = vunpack.c.h.b16 %v5561
    %v5858 = vunpack.c.l.b16 %v5562
    %v5859 = vunpack.c.h.b16 %v5562
    %v5860 = vunpack.c.l.b16 %v5563
    %v5861 = vunpack.c.h.b16 %v5563
    %v5862 = vunpack.c.l.b16 %v5564
    %v5863 = vunpack.c.h.b16 %v5564
    %v5864 = vunpack.c.l.b16 %v5565
    %v5865 = vunpack.c.h.b16 %v5565
    %v5866 = vunpack.c.l.b16 %v5566
    %v5867 = vunpack.c.h.b16 %v5566
    %v5868 = vunpack.c.l.b16 %v5567
    %v5869 = vunpack.c.h.b16 %v5567
    %v5870 = vunpack.c.l.b16 %v5568
    %v5871 = vunpack.c.h.b16 %v5568
    %v5872 = vunpack.c.l.b16 %v5569
    %v5873 = vunpack.c.h.b16 %v5569
    %v5874 = vunpack.c.l.b16 %v5570
    %v5875 = vunpack.c.h.b16 %v5570
    %v5876 = vunpack.c.l.b16 %v5571
    %v5877 = vunpack.c.h.b16 %v5571
    %v5878 = vunpack.c.l.b16 %v5572
    %v5879 = vunpack.c.h.b16 %v5572
    %v5880 = vunpack.c.l.b16 %v5573
    %v5881 = vunpack.c.h.b16 %v5573
    %v5882 = vunpack.c.l.b16 %v5574
    %v5883 = vunpack.c.h.b16 %v5574
    %v5884 = vunpack.c.l.b16 %v5575
    %v5885 = vunpack.c.h.b16 %v5575
    %v5886 = vunpack.c.l.b16 %v5576
    %v5887 = vunpack.c.h.b16 %v5576
    %v5888 = vunpack.c.l.b16 %v5577
    %v5889 = vunpack.c.h.b16 %v5577
    %v5890 = vunpack.c.l.b16 %v5578
    %v5891 = vunpack.c.h.b16 %v5578
    %v5892 = vunpack.c.l.b16 %v5579
    %v5893 = vunpack.c.h.b16 %v5579
    %v5894 = vunpack.c.l.b16 %v5580
    %v5895 = vunpack.c.h.b16 %v5580
    %v5896 = vunpack.c.l.b16 %v5581
    %v5897 = vunpack.c.h.b16 %v5581
    %v5898 = vunpack.c.l.b16 %v5582
    %v5899 = vunpack.c.h.b16 %v5582
    %v5900 = vunpack.c.l.b16 %v5583
    %v5901 = vunpack.c.h.b16 %v5583
    %v5902 = vunpack.c.l.b16 %v5584
    %v5903 = vunpack.c.h.b16 %v5584
    %v5904 = vunpack.c.l.b16 %v5585
    %v5905 = vunpack.c.h.b16 %v5585
    %v5906 = vunpack.c.l.b16 %v5586
    %v5907 = vunpack.c.h.b16 %v5586
    %v5908 = vunpack.c.l.b16 %v5587
    %v5909 = vunpack.c.h.b16 %v5587
    %v5910 = vunpack.c.l.b16 %v5588
    %v5911 = vunpack.c.h.b16 %v5588
    %v5912 = vunpack.c.l.b16 %v5589
    %v5913 = vunpack.c.h.b16 %v5589
    %v5914 = vunpack.c.l.b16 %v5590
    %v5915 = vunpack.c.h.b16 %v5590
    %v5916 = vunpack.c.l.b16 %v5591
    %v5917 = vunpack.c.h.b16 %v5591
    %v5918 = vunpack.c.l.b16 %v5592
    %v5919 = vunpack.c.h.b16 %v5592
    %v5920 = vunpack.c.l.b16 %v5593
    %v5921 = vunpack.c.h.b16 %v5593
    %v5922 = vunpack.c.l.b16 %v5594
    %v5923 = vunpack.c.h.b16 %v5594
    %v5924 = vunpack.c.l.b16 %v5595
    %v5925 = vunpack.c.h.b16 %v5595
    %v5926 = vunpack.c.l.b16 %v5596
    %v5927 = vunpack.c.h.b16 %v5596
    %v5928 = vunpack.c.l.b16 %v5597
    %v5929 = vunpack.c.h.b16 %v5597
    %v5930 = vunpack.c.l.b16 %v5598
    %v5931 = vunpack.c.h.b16 %v5598
    %v5932 = vunpack.c.l.b16 %v5599
    %v5933 = vunpack.c.h.b16 %v5599
    %v5934 = vunpack.c.l.b16 %v5600
    %v5935 = vunpack.c.h.b16 %v5600
    %v5936 = vunpack.c.l.b16 %v5601
    %v5937 = vunpack.c.h.b16 %v5601
    %v5938 = vunpack.c.l.b16 %v5602
    %v5939 = vunpack.c.h.b16 %v5602
    %v5940 = vunpack.c.l.b16 %v5603
    %v5941 = vunpack.c.h.b16 %v5603
    %v5942 = vunpack.c.l.b16 %v5604
    %v5943 = vunpack.c.h.b16 %v5604
    %v5944 = vunpack.c.l.b16 %v5605
    %v5945 = vunpack.c.h.b16 %v5605
    %v5946 = vunpack.c.l.b16 %v5606
    %v5947 = vunpack.c.h.b16 %v5606
    %v5948 = vunpack.c.l.b16 %v5607
    %v5949 = vunpack.c.h.b16 %v5607
    %v5950 = vunpack.c.l.b16 %v5608
    %v5951 = vunpack.c.h.b16 %v5608
    %v5952 = vunpack.c.l.b16 %v5609
    %v5953 = vunpack.c.h.b16 %v5609
    %v5954 = vunpack.c.l.b16 %v5610
    %v5955 = vunpack.c.h.b16 %v5610
    %v5956 = vunpack.c.l.b16 %v5611
    %v5957 = vunpack.c.h.b16 %v5611
    %v5958 = vunpack.c.l.b16 %v5612
    %v5959 = vunpack.c.h.b16 %v5612
    %v5960 = vunpack.c.l.b16 %v5613
    %v5961 = vunpack.c.h.b16 %v5613
    %v5962 = vunpack.c.l.b16 %v5614
    %v5963 = vunpack.c.h.b16 %v5614
    %v5964 = vunpack.c.l.b16 %v5615
    %v5965 = vunpack.c.h.b16 %v5615
    %v5966 = vunpack.c.l.b16 %v5616
    %v5967 = vunpack.c.h.b16 %v5616
    %v5968 = vunpack.c.l.b16 %v5617
    %v5969 = vunpack.c.h.b16 %v5617
    %v5970 = vunpack.c.l.b16 %v5618
    %v5971 = vunpack.c.h.b16 %v5618
    %v5972 = vunpack.c.l.b16 %v5619
    %v5973 = vunpack.c.h.b16 %v5619
    %v5974 = vunpack.c.l.b16 %v5620
    %v5975 = vunpack.c.h.b16 %v5620
    %v5976 = vunpack.c.l.b16 %v5621
    %v5977 = vunpack.c.h.b16 %v5621
    %v5978 = vunpack.c.l.b16 %v5622
    %v5979 = vunpack.c.h.b16 %v5622
    %v5980 = vunpack.c.l.b16 %v5623
    %v5981 = vunpack.c.h.b16 %v5623
    %v5982 = vunpack.c.l.b16 %v5624
    %v5983 = vunpack.c.h.b16 %v5624
    %v5984 = vunpack.c.l.b16 %v5625
    %v5985 = vunpack.c.h.b16 %v5625
    %v5986 = vunpack.c.l.b16 %v5626
    %v5987 = vunpack.c.h.b16 %v5626
    %v5988 = vunpack.c.l.b16 %v5627
    %v5989 = vunpack.c.h.b16 %v5627
    %v5990 = vunpack.c.l.b16 %v5628
    %v5991 = vunpack.c.h.b16 %v5628
    %v5992 = vunpack.c.l.b16 %v5629
    %v5993 = vunpack.c.h.b16 %v5629
    %v5994 = vunpack.c.l.b16 %v5630
    %v5995 = vunpack.c.h.b16 %v5630
    %v5996 = vunpack.c.l.b16 %v5631
    %v5997 = vunpack.c.h.b16 %v5631
    %v5998 = vunpack.c.l.b16 %v5632
    %v5999 = vunpack.c.h.b16 %v5632
    %v6000 = vunpack.c.l.b16 %v5633
    %v6001 = vunpack.c.h.b16 %v5633
    %v6002 = vunpack.c.l.b16 %v5634
    %v6003 = vunpack.c.h.b16 %v5634
    %v6004 = vunpack.c.l.b16 %v5635
    %v6005 = vunpack.c.h.b16 %v5635
    %v6006 = vunpack.c.l.b16 %v5636
    %v6007 = vunpack.c.h.b16 %v5636
    %v6008 = vunpack.c.l.b16 %v5637
    %v6009 = vunpack.c.h.b16 %v5637
    %v6010 = vunpack.c.l.b16 %v5638
    %v6011 = vunpack.c.h.b16 %v5638
    %v6012 = vunpack.c.l.b16 %v5639
    %v6013 = vunpack.c.h.b16 %v5639
    %v6014 = vunpack.c.l.b16 %v5640
    %v6015 = vunpack.c.h.b16 %v5640
    %v6016 = vunpack.c.l.b16 %v5641
    %v6017 = vunpack.c.h.b16 %v5641
    %v6018 = vunpack.c.l.b16 %v5642
    %v6019 = vunpack.c.h.b16 %v5642
    %v6020 = vunpack.c.l.b16 %v5643
    %v6021 = vunpack.c.h.b16 %v5643
    %v6022 = vunpack.c.l.b16 %v5644
    %v6023 = vunpack.c.h.b16 %v5644
    %v6024 = vunpack.c.l.b16 %v5645
    %v6025 = vunpack.c.h.b16 %v5645
    %v6026 = vunpack.c.l.b16 %v5646
    %v6027 = vunpack.c.h.b16 %v5646
    %v6028 = vunpack.c.l.b16 %v5647
    %v6029 = vunpack.c.h.b16 %v5647
    %v6030 = vunpack.c.l.b16 %v5648
    %v6031 = vunpack.c.h.b16 %v5648
    %v6032 = vunpack.c.l.b16 %v5649
    %v6033 = vunpack.c.h.b16 %v5649
    %v6034 = vpack.c.b16 %v5786, %v5778
    %v6035 = vpack.c.b16 %v5787, %v5779
    %v6036 = vpack.c.b16 %v5788, %v5780
    %v6037 = vpack.c.b16 %v5789, %v5781
    %v6038 = vpack.c.b16 %v5790, %v5782
    %v6039 = vpack.c.b16 %v5791, %v5783
    %v6040 = vpack.c.b16 %v5792, %v5784
    %v6041 = vpack.c.b16 %v5793, %v5785
    %v6042 = vpack.c.b16 %v5802, %v5794
    %v6043 = vpack.c.b16 %v5803, %v5795
    %v6044 = vpack.c.b16 %v5804, %v5796
    %v6045 = vpack.c.b16 %v5805, %v5797
    %v6046 = vpack.c.b16 %v5806, %v5798
    %v6047 = vpack.c.b16 %v5807, %v5799
    %v6048 = vpack.c.b16 %v5808, %v5800
    %v6049 = vpack.c.b16 %v5809, %v5801
    %v6050 = vpack.c.b16 %v5818, %v5810
    %v6051 = vpack.c.b16 %v5819, %v5811
    %v6052 = vpack.c.b16 %v5820, %v5812
    %v6053 = vpack.c.b16 %v5821, %v5813
    %v6054 = vpack.c.b16 %v5822, %v5814
    %v6055 = vpack.c.b16 %v5823, %v5815
    %v6056 = vpack.c.b16 %v5824, %v5816
    %v6057 = vpack.c.b16 %v5825, %v5817
    %v6058 = vpack.c.b16 %v5834, %v5826
    %v6059 = vpack.c.b16 %v5835, %v5827
    %v6060 = vpack.c.b16 %v5836, %v5828
    %v6061 = vpack.c.b16 %v5837, %v5829
    %v6062 = vpack.c.b16 %v5838, %v5830
    %v6063 = vpack.c.b16 %v5839, %v5831
    %v6064 = vpack.c.b16 %v5840, %v5832
    %v6065 = vpack.c.b16 %v5841, %v5833
    %v6066 = vpack.c.b16 %v5850, %v5842
    %v6067 = vpack.c.b16 %v5851, %v5843
    %v6068 = vpack.c.b16 %v5852, %v5844
    %v6069 = vpack.c.b16 %v5853, %v5845
    %v6070 = vpack.c.b16 %v5854, %v5846
    %v6071 = vpack.c.b16 %v5855, %v5847
    %v6072 = vpack.c.b16 %v5856, %v5848
    %v6073 = vpack.c.b16 %v5857, %v5849
    %v6074 = vpack.c.b16 %v5866, %v5858
    %v6075 = vpack.c.b16 %v5867, %v5859
    %v6076 = vpack.c.b16 %v5868, %v5860
    %v6077 = vpack.c.b16 %v5869, %v5861
    %v6078 = vpack.c.b16 %v5870, %v5862
    %v6079 = vpack.c.b16 %v5871, %v5863
    %v6080 = vpack.c.b16 %v5872, %v5864
    %v6081 = vpack.c.b16 %v5873, %v5865
    %v6082 = vpack.c.b16 %v5882, %v5874
    %v6083 = vpack.c.b16 %v5883, %v5875
    %v6084 = vpack.c.b16 %v5884, %v5876
    %v6085 = vpack.c.b16 %v5885, %v5877
    %v6086 = vpack.c.b16 %v5886, %v5878
    %v6087 = vpack.c.b16 %v5887, %v5879
    %v6088 = vpack.c.b16 %v5888, %v5880
    %v6089 = vpack.c.b16 %v5889, %v5881
    %v6090 = vpack.c.b16 %v5898, %v5890
    %v6091 = vpack.c.b16 %v5899, %v5891
    %v6092 = vpack.c.b16 %v5900, %v5892
    %v6093 = vpack.c.b16 %v5901, %v5893
    %v6094 = vpack.c.b16 %v5902, %v5894
    %v6095 = vpack.c.b16 %v5903, %v5895
    %v6096 = vpack.c.b16 %v5904, %v5896
    %v6097 = vpack.c.b16 %v5905, %v5897
    %v6098 = vpack.c.b16 %v5914, %v5906
    %v6099 = vpack.c.b16 %v5915, %v5907
    %v6100 = vpack.c.b16 %v5916, %v5908
    %v6101 = vpack.c.b16 %v5917, %v5909
    %v6102 = vpack.c.b16 %v5918, %v5910
    %v6103 = vpack.c.b16 %v5919, %v5911
    %v6104 = vpack.c.b16 %v5920, %v5912
    %v6105 = vpack.c.b16 %v5921, %v5913
    %v6106 = vpack.c.b16 %v5930, %v5922
    %v6107 = vpack.c.b16 %v5931, %v5923
    %v6108 = vpack.c.b16 %v5932, %v5924
    %v6109 = vpack.c.b16 %v5933, %v5925
    %v6110 = vpack.c.b16 %v5934, %v5926
    %v6111 = vpack.c.b16 %v5935, %v5927
    %v6112 = vpack.c.b16 %v5936, %v5928
    %v6113 = vpack.c.b16 %v5937, %v5929
    %v6114 = vpack.c.b16 %v5946, %v5938
    %v6115 = vpack.c.b16 %v5947, %v5939
    %v6116 = vpack.c.b16 %v5948, %v5940
    %v6117 = vpack.c.b16 %v5949, %v5941
    %v6118 = vpack.c.b16 %v5950, %v5942
    %v6119 = vpack.c.b16 %v5951, %v5943
    %v6120 = vpack.c.b16 %v5952, %v5944
    %v6121 = vpack.c.b16 %v5953, %v5945
    %v6122 = vpack.c.b16 %v5962, %v5954
    %v6123 = vpack.c.b16 %v5963, %v5955
    %v6124 = vpack.c.b16 %v5964, %v5956
    %v6125 = vpack.c.b16 %v5965, %v5957
    %v6126 = vpack.c.b16 %v5966, %v5958
    %v6127 = vpack.c.b16 %v5967, %v5959
    %v6128 = vpack.c.b16 %v5968, %v5960
    %v6129 = vpack.c.b16 %v5969, %v5961
    %v6130 = vpack.c.b16 %v5978, %v5970
    %v6131 = vpack.c.b16 %v5979, %v5971
    %v6132 = vpack.c.b16 %v5980, %v5972
    %v6133 = vpack.c.b16 %v5981, %v5973
    %v6134 = vpack.c.b16 %v5982, %v5974
    %v6135 = vpack.c.b16 %v5983, %v5975
    %v6136 = vpack.c.b16 %v5984, %v5976
    %v6137 = vpack.c.b16 %v5985, %v5977
    %v6138 = vpack.c.b16 %v5994, %v5986
    %v6139 = vpack.c.b16 %v5995, %v5987
    %v6140 = vpack.c.b16 %v5996, %v5988
    %v6141 = vpack.c.b16 %v5997, %v5989
    %v6142 = vpack.c.b16 %v5998, %v5990
    %v6143 = vpack.c.b16 %v5999, %v5991
    %v6144 = vpack.c.b16 %v6000, %v5992
    %v6145 = vpack.c.b16 %v6001, %v5993
    %v6146 = vpack.c.b16 %v6010, %v6002
    %v6147 = vpack.c.b16 %v6011, %v6003
    %v6148 = vpack.c.b16 %v6012, %v6004
    %v6149 = vpack.c.b16 %v6013, %v6005
    %v6150 = vpack.c.b16 %v6014, %v6006
    %v6151 = vpack.c.b16 %v6015, %v6007
    %v6152 = vpack.c.b16 %v6016, %v6008
    %v6153 = vpack.c.b16 %v6017, %v6009
    %v6154 = vpack.c.b16 %v6026, %v6018
    %v6155 = vpack.c.b16 %v6027, %v6019
    %v6156 = vpack.c.b16 %v6028, %v6020
    %v6157 = vpack.c.b16 %v6029, %v6021
    %v6158 = vpack.c.b16 %v6030, %v6022
    %v6159 = vpack.c.b16 %v6031, %v6023
    %v6160 = vpack.c.b16 %v6032, %v6024
    %v6161 = vpack.c.b16 %v6033, %v6025
    %6290 = vmatpush.bf16.msra.mxu0 %v6090
    %6291 = vmatpush.bf16.msra.mxu0 %v6082
    %6292 = vmatpush.bf16.msra.mxu0 %v6074
    %6293 = vmatpush.bf16.msra.mxu0 %v6066
    %6294 = vmatpush.bf16.msra.mxu0 %v6058
    %6295 = vmatpush.bf16.msra.mxu0 %v6050
    %6296 = vmatpush.bf16.msra.mxu0 %v6042
    %6297 = vmatpush.bf16.msra.mxu0 %v6034
    %6298 = vmatmul.bf16.gmra.mxu0 0
    %v6299 = vpop.f32.mrf.mxu0
    %v6300 = vadd.f32 0.0, %v6299
    %v6301 = vpop.f32.mrf.mxu0
    %6302 = vdwg.mxu0
    %6303 = vmatpush.bf16.msra.mxu0 %v6154
    %6304 = vmatpush.bf16.msra.mxu0 %v6146
    %6305 = vmatpush.bf16.msra.mxu0 %v6138
    %6306 = vmatpush.bf16.msra.mxu0 %v6130
    %6307 = vmatpush.bf16.msra.mxu0 %v6122
    %6308 = vmatpush.bf16.msra.mxu0 %v6114
    %6309 = vmatpush.bf16.msra.mxu0 %v6106
    %6310 = vmatpush.bf16.msra.mxu0 %v6098
    %6311 = vmatmul.bf16.gmra.mxu0 0
    %v6312 = vpop.f32.mrf.mxu0
    %v6313 = vadd.f32 %v6300, %v6312
    %v6314 = vpop.f32.mrf.mxu0
    %6315 = vdwg.mxu0
    %6316 = vmatpush.bf16.msra.mxu0 %v6091
    %6317 = vmatpush.bf16.msra.mxu0 %v6083
    %6318 = vmatpush.bf16.msra.mxu0 %v6075
    %6319 = vmatpush.bf16.msra.mxu0 %v6067
    %6320 = vmatpush.bf16.msra.mxu0 %v6059
    %6321 = vmatpush.bf16.msra.mxu0 %v6051
    %6322 = vmatpush.bf16.msra.mxu0 %v6043
    %6323 = vmatpush.bf16.msra.mxu0 %v6035
    %6324 = vmatmul.bf16.gmra.mxu0 0
    %v6325 = vpop.f32.mrf.mxu0
    %v6326 = vadd.f32 0.0, %v6325
    %v6327 = vpop.f32.mrf.mxu0
    %6328 = vdwg.mxu0
    %6329 = vmatpush.bf16.msra.mxu0 %v6155
    %6330 = vmatpush.bf16.msra.mxu0 %v6147
    %6331 = vmatpush.bf16.msra.mxu0 %v6139
    %6332 = vmatpush.bf16.msra.mxu0 %v6131
    %6333 = vmatpush.bf16.msra.mxu0 %v6123
    %6334 = vmatpush.bf16.msra.mxu0 %v6115
    %6335 = vmatpush.bf16.msra.mxu0 %v6107
    %6336 = vmatpush.bf16.msra.mxu0 %v6099
    %6337 = vmatmul.bf16.gmra.mxu0 0
    %v6338 = vpop.f32.mrf.mxu0
    %v6339 = vadd.f32 %v6326, %v6338
    %v6340 = vpop.f32.mrf.mxu0
    %6341 = vdwg.mxu0
    %6342 = vmatpush.bf16.msra.mxu0 %v6092
    %6343 = vmatpush.bf16.msra.mxu0 %v6084
    %6344 = vmatpush.bf16.msra.mxu0 %v6076
    %6345 = vmatpush.bf16.msra.mxu0 %v6068
    %6346 = vmatpush.bf16.msra.mxu0 %v6060
    %6347 = vmatpush.bf16.msra.mxu0 %v6052
    %6348 = vmatpush.bf16.msra.mxu0 %v6044
    %6349 = vmatpush.bf16.msra.mxu0 %v6036
    %6350 = vmatmul.bf16.gmra.mxu0 0
    %v6351 = vpop.f32.mrf.mxu0
    %v6352 = vadd.f32 0.0, %v6351
    %v6353 = vpop.f32.mrf.mxu0
    %6354 = vdwg.mxu0
    %6355 = vmatpush.bf16.msra.mxu0 %v6156
    %6356 = vmatpush.bf16.msra.mxu0 %v6148
    %6357 = vmatpush.bf16.msra.mxu0 %v6140
    %6358 = vmatpush.bf16.msra.mxu0 %v6132
    %6359 = vmatpush.bf16.msra.mxu0 %v6124
    %6360 = vmatpush.bf16.msra.mxu0 %v6116
    %6361 = vmatpush.bf16.msra.mxu0 %v6108
    %6362 = vmatpush.bf16.msra.mxu0 %v6100
    %6363 = vmatmul.bf16.gmra.mxu0 0
    %v6364 = vpop.f32.mrf.mxu0
    %v6365 = vadd.f32 %v6352, %v6364
    %v6366 = vpop.f32.mrf.mxu0
    %6367 = vdwg.mxu0
    %6368 = vmatpush.bf16.msra.mxu0 %v6093
    %6369 = vmatpush.bf16.msra.mxu0 %v6085
    %6370 = vmatpush.bf16.msra.mxu0 %v6077
    %6371 = vmatpush.bf16.msra.mxu0 %v6069
    %6372 = vmatpush.bf16.msra.mxu0 %v6061
    %6373 = vmatpush.bf16.msra.mxu0 %v6053
    %6374 = vmatpush.bf16.msra.mxu0 %v6045
    %6375 = vmatpush.bf16.msra.mxu0 %v6037
    %6376 = vmatmul.bf16.gmra.mxu0 0
    %v6377 = vpop.f32.mrf.mxu0
    %v6378 = vadd.f32 0.0, %v6377
    %v6379 = vpop.f32.mrf.mxu0
    %6380 = vdwg.mxu0
    %6381 = vmatpush.bf16.msra.mxu0 %v6157
    %6382 = vmatpush.bf16.msra.mxu0 %v6149
    %6383 = vmatpush.bf16.msra.mxu0 %v6141
    %6384 = vmatpush.bf16.msra.mxu0 %v6133
    %6385 = vmatpush.bf16.msra.mxu0 %v6125
    %6386 = vmatpush.bf16.msra.mxu0 %v6117
    %6387 = vmatpush.bf16.msra.mxu0 %v6109
    %6388 = vmatpush.bf16.msra.mxu0 %v6101
    %6389 = vmatmul.bf16.gmra.mxu0 0
    %v6390 = vpop.f32.mrf.mxu0
    %v6391 = vadd.f32 %v6378, %v6390
    %v6392 = vpop.f32.mrf.mxu0
    %6393 = vdwg.mxu0
    %6394 = vmatpush.bf16.msra.mxu0 %v6094
    %6395 = vmatpush.bf16.msra.mxu0 %v6086
    %6396 = vmatpush.bf16.msra.mxu0 %v6078
    %6397 = vmatpush.bf16.msra.mxu0 %v6070
    %6398 = vmatpush.bf16.msra.mxu0 %v6062
    %6399 = vmatpush.bf16.msra.mxu0 %v6054
    %6400 = vmatpush.bf16.msra.mxu0 %v6046
    %6401 = vmatpush.bf16.msra.mxu0 %v6038
    %6402 = vmatmul.bf16.gmra.mxu0 0
    %v6403 = vpop.f32.mrf.mxu0
    %v6404 = vadd.f32 0.0, %v6403
    %v6405 = vpop.f32.mrf.mxu0
    %6406 = vdwg.mxu0
    %6407 = vmatpush.bf16.msra.mxu0 %v6158
    %6408 = vmatpush.bf16.msra.mxu0 %v6150
    %6409 = vmatpush.bf16.msra.mxu0 %v6142
    %6410 = vmatpush.bf16.msra.mxu0 %v6134
    %6411 = vmatpush.bf16.msra.mxu0 %v6126
    %6412 = vmatpush.bf16.msra.mxu0 %v6118
    %6413 = vmatpush.bf16.msra.mxu0 %v6110
    %6414 = vmatpush.bf16.msra.mxu0 %v6102
    %6415 = vmatmul.bf16.gmra.mxu0 0
    %v6416 = vpop.f32.mrf.mxu0
    %v6417 = vadd.f32 %v6404, %v6416
    %v6418 = vpop.f32.mrf.mxu0
    %6419 = vdwg.mxu0
    %6420 = vmatpush.bf16.msra.mxu0 %v6095
    %6421 = vmatpush.bf16.msra.mxu0 %v6087
    %6422 = vmatpush.bf16.msra.mxu0 %v6079
    %6423 = vmatpush.bf16.msra.mxu0 %v6071
    %6424 = vmatpush.bf16.msra.mxu0 %v6063
    %6425 = vmatpush.bf16.msra.mxu0 %v6055
    %6426 = vmatpush.bf16.msra.mxu0 %v6047
    %6427 = vmatpush.bf16.msra.mxu0 %v6039
    %6428 = vmatmul.bf16.gmra.mxu0 0
    %v6429 = vpop.f32.mrf.mxu0
    %v6430 = vadd.f32 0.0, %v6429
    %v6431 = vpop.f32.mrf.mxu0
    %6432 = vdwg.mxu0
    %6433 = vmatpush.bf16.msra.mxu0 %v6159
    %6434 = vmatpush.bf16.msra.mxu0 %v6151
    %6435 = vmatpush.bf16.msra.mxu0 %v6143
    %6436 = vmatpush.bf16.msra.mxu0 %v6135
    %6437 = vmatpush.bf16.msra.mxu0 %v6127
    %6438 = vmatpush.bf16.msra.mxu0 %v6119
    %6439 = vmatpush.bf16.msra.mxu0 %v6111
    %6440 = vmatpush.bf16.msra.mxu0 %v6103
    %6441 = vmatmul.bf16.gmra.mxu0 0
    %v6442 = vpop.f32.mrf.mxu0
    %v6443 = vadd.f32 %v6430, %v6442
    %v6444 = vpop.f32.mrf.mxu0
    %6445 = vdwg.mxu0
    %6446 = vmatpush.bf16.msra.mxu0 %v6096
    %6447 = vmatpush.bf16.msra.mxu0 %v6088
    %6448 = vmatpush.bf16.msra.mxu0 %v6080
    %6449 = vmatpush.bf16.msra.mxu0 %v6072
    %6450 = vmatpush.bf16.msra.mxu0 %v6064
    %6451 = vmatpush.bf16.msra.mxu0 %v6056
    %6452 = vmatpush.bf16.msra.mxu0 %v6048
    %6453 = vmatpush.bf16.msra.mxu0 %v6040
    %6454 = vmatmul.bf16.gmra.mxu0 0
    %v6455 = vpop.f32.mrf.mxu0
    %v6456 = vadd.f32 0.0, %v6455
    %v6457 = vpop.f32.mrf.mxu0
    %6458 = vdwg.mxu0
    %6459 = vmatpush.bf16.msra.mxu0 %v6160
    %6460 = vmatpush.bf16.msra.mxu0 %v6152
    %6461 = vmatpush.bf16.msra.mxu0 %v6144
    %6462 = vmatpush.bf16.msra.mxu0 %v6136
    %6463 = vmatpush.bf16.msra.mxu0 %v6128
    %6464 = vmatpush.bf16.msra.mxu0 %v6120
    %6465 = vmatpush.bf16.msra.mxu0 %v6112
    %6466 = vmatpush.bf16.msra.mxu0 %v6104
    %6467 = vmatmul.bf16.gmra.mxu0 0
    %v6468 = vpop.f32.mrf.mxu0
    %v6469 = vadd.f32 %v6456, %v6468
    %v6470 = vpop.f32.mrf.mxu0
    %6471 = vdwg.mxu0
    %6472 = vmatpush.bf16.msra.mxu0 %v6097
    %6473 = vmatpush.bf16.msra.mxu0 %v6089
    %6474 = vmatpush.bf16.msra.mxu0 %v6081
    %6475 = vmatpush.bf16.msra.mxu0 %v6073
    %6476 = vmatpush.bf16.msra.mxu0 %v6065
    %6477 = vmatpush.bf16.msra.mxu0 %v6057
    %6478 = vmatpush.bf16.msra.mxu0 %v6049
    %6479 = vmatpush.bf16.msra.mxu0 %v6041
    %6480 = vmatmul.bf16.gmra.mxu0 0
    %v6481 = vpop.f32.mrf.mxu0
    %v6482 = vadd.f32 0.0, %v6481
    %v6483 = vpop.f32.mrf.mxu0
    %6484 = vdwg.mxu0
    %6485 = vmatpush.bf16.msra.mxu0 %v6161
    %6486 = vmatpush.bf16.msra.mxu0 %v6153
    %6487 = vmatpush.bf16.msra.mxu0 %v6145
    %6488 = vmatpush.bf16.msra.mxu0 %v6137
    %6489 = vmatpush.bf16.msra.mxu0 %v6129
    %6490 = vmatpush.bf16.msra.mxu0 %v6121
    %6491 = vmatpush.bf16.msra.mxu0 %v6113
    %6492 = vmatpush.bf16.msra.mxu0 %v6105
    %6493 = vmatmul.bf16.gmra.mxu0 0
    %v6494 = vpop.f32.mrf.mxu0
    %v6495 = vadd.f32 %v6482, %v6494
    %v6496 = vpop.f32.mrf.mxu0
    %6497 = vdwg.mxu0
    %v6498 = vld [vmem:[%s1516] sm:$0xff]
    %v6499 = vld [vmem:[%s1516 + $0x8] sm:$0xff]
    %v6500 = vld [vmem:[%s1516 + $0x10] sm:$0xff]
    %v6501 = vld [vmem:[%s1516 + $0x18] sm:$0xff]
    %v6502 = vadd.f32 %v6498, %v6313
    %v6503 = vadd.f32 %v6499, %v6339
    %v6504 = vadd.f32 %v6500, %v6365
    %v6505 = vadd.f32 %v6501, %v6391
    %v6506 = vld [vmem:[%s1527 + $0x20] sm:$0xff]
    %v6507 = vld [vmem:[%s1527 + $0x28] sm:$0xff]
    %v6508 = vld [vmem:[%s1527 + $0x30] sm:$0xff]
    %v6509 = vld [vmem:[%s1527 + $0x38] sm:$0xff]
    %v6510 = vadd.f32 %v6506, %v6417
    %v6511 = vadd.f32 %v6507, %v6443
    %v6512 = vadd.f32 %v6508, %v6469
    %v6513 = vadd.f32 %v6509, %v6495
    %v6514 = vxor.u32 %v6502, 2147483648
    %v6515 = vxor.u32 %v6503, 2147483648
    %v6516 = vxor.u32 %v6504, 2147483648
    %v6517 = vmul.f32 %v6514, 1.442695
    %v6518 = vpow.pop %v6517
    %v6519 = vmul.f32 %v6515, 1.442695
    %v6520 = vpow.pop %v6519
    %v6521 = vmul.f32 %v6516, 1.442695
    %v6522 = vpow.pop %v6521
    %v6523 = vadd.f32 %v6518, 1.0
    %v6524 = vadd.f32 %v6520, 1.0
    %v6525 = vadd.f32 %v6522, 1.0
    %v6526 = vrcp.pop %v6523
    %v6527 = vmul.f32 %v6523, %v6526
    %v6528 = vsub.f32 1.0, %v6527
    %v6529 = vmul.f32 %v6526, %v6528
    %v6530 = vadd.f32 %v6526, %v6529
    %vm6531 = vweird.f32 %v6523
    %vm6532 = vweird.f32 %v6526
    %vm6533 = vmor %vm6531, %vm6532
    %v6534 = vsel %vm6533, %v6526, %v6530
    %v6535 = vand.u32 2147483647, %v6523
    %vm6536 = vcmp.eq.f32.partialorder %v6535, 8.507059e+37
    %v6537 = vand.u32 %v6523, 2147483648
    %v6538 = vor.u32 1.1754944e-38, %v6537
    %v6539 = vsel %vm6536, %v6538, %v6534
    %v6540 = vmul.f32 1.0, %v6539
    %v6541 = vrcp.pop %v6524
    %v6542 = vmul.f32 %v6524, %v6541
    %v6543 = vsub.f32 1.0, %v6542
    %v6544 = vmul.f32 %v6541, %v6543
    %v6545 = vadd.f32 %v6541, %v6544
    %vm6546 = vweird.f32 %v6524
    %vm6547 = vweird.f32 %v6541
    %vm6548 = vmor %vm6546, %vm6547
    %v6549 = vsel %vm6548, %v6541, %v6545
    %v6550 = vand.u32 2147483647, %v6524
    %vm6551 = vcmp.eq.f32.partialorder %v6550, 8.507059e+37
    %v6552 = vand.u32 %v6524, 2147483648
    %v6553 = vor.u32 1.1754944e-38, %v6552
    %v6554 = vsel %vm6551, %v6553, %v6549
    %v6555 = vmul.f32 1.0, %v6554
    %v6556 = vrcp.pop %v6525
    %v6557 = vmul.f32 %v6525, %v6556
    %v6558 = vsub.f32 1.0, %v6557
    %v6559 = vmul.f32 %v6556, %v6558
    %v6560 = vadd.f32 %v6556, %v6559
    %vm6561 = vweird.f32 %v6525
    %vm6562 = vweird.f32 %v6556
    %vm6563 = vmor %vm6561, %vm6562
    %v6564 = vsel %vm6563, %v6556, %v6560
    %v6565 = vand.u32 2147483647, %v6525
    %vm6566 = vcmp.eq.f32.partialorder %v6565, 8.507059e+37
    %v6567 = vand.u32 %v6525, 2147483648
    %v6568 = vor.u32 1.1754944e-38, %v6567
    %v6569 = vsel %vm6566, %v6568, %v6564
    %v6570 = vmul.f32 1.0, %v6569
    %v6571 = vtanh.pop %v6505
    %v6572 = vxor.u32 %v6510, 2147483648
    %v6573 = vxor.u32 %v6511, 2147483648
    %v6574 = vxor.u32 %v6512, 2147483648
    %v6575 = vmul.f32 %v6572, 1.442695
    %v6576 = vpow.pop %v6575
    %v6577 = vmul.f32 %v6573, 1.442695
    %v6578 = vpow.pop %v6577
    %v6579 = vmul.f32 %v6574, 1.442695
    %v6580 = vpow.pop %v6579
    %v6581 = vadd.f32 %v6576, 1.0
    %v6582 = vadd.f32 %v6578, 1.0
    %v6583 = vadd.f32 %v6580, 1.0
    %v6584 = vrcp.pop %v6581
    %v6585 = vmul.f32 %v6581, %v6584
    %v6586 = vsub.f32 1.0, %v6585
    %v6587 = vmul.f32 %v6584, %v6586
    %v6588 = vadd.f32 %v6584, %v6587
    %vm6589 = vweird.f32 %v6581
    %vm6590 = vweird.f32 %v6584
    %vm6591 = vmor %vm6589, %vm6590
    %v6592 = vsel %vm6591, %v6584, %v6588
    %v6593 = vand.u32 2147483647, %v6581
    %vm6594 = vcmp.eq.f32.partialorder %v6593, 8.507059e+37
    %v6595 = vand.u32 %v6581, 2147483648
    %v6596 = vor.u32 1.1754944e-38, %v6595
    %v6597 = vsel %vm6594, %v6596, %v6592
    %v6598 = vmul.f32 1.0, %v6597
    %v6599 = vrcp.pop %v6582
    %v6600 = vmul.f32 %v6582, %v6599
    %v6601 = vsub.f32 1.0, %v6600
    %v6602 = vmul.f32 %v6599, %v6601
    %v6603 = vadd.f32 %v6599, %v6602
    %vm6604 = vweird.f32 %v6582
    %vm6605 = vweird.f32 %v6599
    %vm6606 = vmor %vm6604, %vm6605
    %v6607 = vsel %vm6606, %v6599, %v6603
    %v6608 = vand.u32 2147483647, %v6582
    %vm6609 = vcmp.eq.f32.partialorder %v6608, 8.507059e+37
    %v6610 = vand.u32 %v6582, 2147483648
    %v6611 = vor.u32 1.1754944e-38, %v6610
    %v6612 = vsel %vm6609, %v6611, %v6607
    %v6613 = vmul.f32 1.0, %v6612
    %v6614 = vrcp.pop %v6583
    %v6615 = vmul.f32 %v6583, %v6614
    %v6616 = vsub.f32 1.0, %v6615
    %v6617 = vmul.f32 %v6614, %v6616
    %v6618 = vadd.f32 %v6614, %v6617
    %vm6619 = vweird.f32 %v6583
    %vm6620 = vweird.f32 %v6614
    %vm6621 = vmor %vm6619, %vm6620
    %v6622 = vsel %vm6621, %v6614, %v6618
    %v6623 = vand.u32 2147483647, %v6583
    %vm6624 = vcmp.eq.f32.partialorder %v6623, 8.507059e+37
    %v6625 = vand.u32 %v6583, 2147483648
    %v6626 = vor.u32 1.1754944e-38, %v6625
    %v6627 = vsel %vm6624, %v6626, %v6622
    %v6628 = vmul.f32 1.0, %v6627
    %v6629 = vtanh.pop %v6513
    %v6630 = vmul.f32 %v6555, 0.0
    %v6631 = vmul.f32 %v6540, %v6571
    %v6632 = vadd.f32 %v6630, %v6631
    %v6633 = vmul.f32 %v6613, 0.0
    %v6634 = vmul.f32 %v6598, %v6629
    %v6635 = vadd.f32 %v6633, %v6634
    %v6636 = vtanh.pop %v6632
    %v6637 = vmul.f32 %v6570, %v6636
    %v6638 = vtanh.pop %v6635
    %v6639 = vmul.f32 %v6628, %v6638
    %6640 = vst [vmem:[%s1664] sm:$0xff] %v6637
    %6641 = vst [vmem:[%s1668 + $0x8] sm:$0xff] %v6639
    %v6642 = vpack.c.bf16 %v6637, %v6637
    %v6643 = vpack.c.bf16 %v6639, %v6639
    %6644 = vmatpush.bf16.msra.mxu0 %v6090
    %6645 = vmatpush.bf16.msra.mxu0 %v6082
    %6646 = vmatpush.bf16.msra.mxu0 %v6074
    %6647 = vmatpush.bf16.msra.mxu0 %v6066
    %6648 = vmatpush.bf16.msra.mxu0 %v6058
    %6649 = vmatpush.bf16.msra.mxu0 %v6050
    %6650 = vmatpush.bf16.msra.mxu0 %v6042
    %6651 = vmatpush.bf16.msra.mxu0 %v6034
    %6652 = vmatmul.bf16.gmra.mxu0 %v6642
    %v6653 = vpop.f32.mrf.mxu0
    %v6654 = vadd.f32 0.0, %v6653
    %v6655 = vpop.f32.mrf.mxu0
    %6656 = vdwg.mxu0
    %6657 = vmatpush.bf16.msra.mxu0 %v6154
    %6658 = vmatpush.bf16.msra.mxu0 %v6146
    %6659 = vmatpush.bf16.msra.mxu0 %v6138
    %6660 = vmatpush.bf16.msra.mxu0 %v6130
    %6661 = vmatpush.bf16.msra.mxu0 %v6122
    %6662 = vmatpush.bf16.msra.mxu0 %v6114
    %6663 = vmatpush.bf16.msra.mxu0 %v6106
    %6664 = vmatpush.bf16.msra.mxu0 %v6098
    %6665 = vmatmul.bf16.gmra.mxu0 %v6643
    %v6666 = vpop.f32.mrf.mxu0
    %v6667 = vadd.f32 %v6654, %v6666
    %v6668 = vpop.f32.mrf.mxu0
    %6669 = vdwg.mxu0
    %6670 = vmatpush.bf16.msra.mxu0 %v6091
    %6671 = vmatpush.bf16.msra.mxu0 %v6083
    %6672 = vmatpush.bf16.msra.mxu0 %v6075
    %6673 = vmatpush.bf16.msra.mxu0 %v6067
    %6674 = vmatpush.bf16.msra.mxu0 %v6059
    %6675 = vmatpush.bf16.msra.mxu0 %v6051
    %6676 = vmatpush.bf16.msra.mxu0 %v6043
    %6677 = vmatpush.bf16.msra.mxu0 %v6035
    %6678 = vmatmul.bf16.gmra.mxu0 %v6642
    %v6679 = vpop.f32.mrf.mxu0
    %v6680 = vadd.f32 0.0, %v6679
    %v6681 = vpop.f32.mrf.mxu0
    %6682 = vdwg.mxu0
    %6683 = vmatpush.bf16.msra.mxu0 %v6155
    %6684 = vmatpush.bf16.msra.mxu0 %v6147
    %6685 = vmatpush.bf16.msra.mxu0 %v6139
    %6686 = vmatpush.bf16.msra.mxu0 %v6131
    %6687 = vmatpush.bf16.msra.mxu0 %v6123
    %6688 = vmatpush.bf16.msra.mxu0 %v6115
    %6689 = vmatpush.bf16.msra.mxu0 %v6107
    %6690 = vmatpush.bf16.msra.mxu0 %v6099
    %6691 = vmatmul.bf16.gmra.mxu0 %v6643
    %v6692 = vpop.f32.mrf.mxu0
    %v6693 = vadd.f32 %v6680, %v6692
    %v6694 = vpop.f32.mrf.mxu0
    %6695 = vdwg.mxu0
    %6696 = vmatpush.bf16.msra.mxu0 %v6092
    %6697 = vmatpush.bf16.msra.mxu0 %v6084
    %6698 = vmatpush.bf16.msra.mxu0 %v6076
    %6699 = vmatpush.bf16.msra.mxu0 %v6068
    %6700 = vmatpush.bf16.msra.mxu0 %v6060
    %6701 = vmatpush.bf16.msra.mxu0 %v6052
    %6702 = vmatpush.bf16.msra.mxu0 %v6044
    %6703 = vmatpush.bf16.msra.mxu0 %v6036
    %6704 = vmatmul.bf16.gmra.mxu0 %v6642
    %v6705 = vpop.f32.mrf.mxu0
    %v6706 = vadd.f32 0.0, %v6705
    %v6707 = vpop.f32.mrf.mxu0
    %6708 = vdwg.mxu0
    %6709 = vmatpush.bf16.msra.mxu0 %v6156
    %6710 = vmatpush.bf16.msra.mxu0 %v6148
    %6711 = vmatpush.bf16.msra.mxu0 %v6140
    %6712 = vmatpush.bf16.msra.mxu0 %v6132
    %6713 = vmatpush.bf16.msra.mxu0 %v6124
    %6714 = vmatpush.bf16.msra.mxu0 %v6116
    %6715 = vmatpush.bf16.msra.mxu0 %v6108
    %6716 = vmatpush.bf16.msra.mxu0 %v6100
    %6717 = vmatmul.bf16.gmra.mxu0 %v6643
    %v6718 = vpop.f32.mrf.mxu0
    %v6719 = vadd.f32 %v6706, %v6718
    %v6720 = vpop.f32.mrf.mxu0
    %6721 = vdwg.mxu0
    %6722 = vmatpush.bf16.msra.mxu0 %v6093
    %6723 = vmatpush.bf16.msra.mxu0 %v6085
    %6724 = vmatpush.bf16.msra.mxu0 %v6077
    %6725 = vmatpush.bf16.msra.mxu0 %v6069
    %6726 = vmatpush.bf16.msra.mxu0 %v6061
    %6727 = vmatpush.bf16.msra.mxu0 %v6053
    %6728 = vmatpush.bf16.msra.mxu0 %v6045
    %6729 = vmatpush.bf16.msra.mxu0 %v6037
    %6730 = vmatmul.bf16.gmra.mxu0 %v6642
    %v6731 = vpop.f32.mrf.mxu0
    %v6732 = vadd.f32 0.0, %v6731
    %v6733 = vpop.f32.mrf.mxu0
    %6734 = vdwg.mxu0
    %6735 = vmatpush.bf16.msra.mxu0 %v6157
    %6736 = vmatpush.bf16.msra.mxu0 %v6149
    %6737 = vmatpush.bf16.msra.mxu0 %v6141
    %6738 = vmatpush.bf16.msra.mxu0 %v6133
    %6739 = vmatpush.bf16.msra.mxu0 %v6125
    %6740 = vmatpush.bf16.msra.mxu0 %v6117
    %6741 = vmatpush.bf16.msra.mxu0 %v6109
    %6742 = vmatpush.bf16.msra.mxu0 %v6101
    %6743 = vmatmul.bf16.gmra.mxu0 %v6643
    %v6744 = vpop.f32.mrf.mxu0
    %v6745 = vadd.f32 %v6732, %v6744
    %v6746 = vpop.f32.mrf.mxu0
    %6747 = vdwg.mxu0
    %6748 = vmatpush.bf16.msra.mxu0 %v6094
    %6749 = vmatpush.bf16.msra.mxu0 %v6086
    %6750 = vmatpush.bf16.msra.mxu0 %v6078
    %6751 = vmatpush.bf16.msra.mxu0 %v6070
    %6752 = vmatpush.bf16.msra.mxu0 %v6062
    %6753 = vmatpush.bf16.msra.mxu0 %v6054
    %6754 = vmatpush.bf16.msra.mxu0 %v6046
    %6755 = vmatpush.bf16.msra.mxu0 %v6038
    %6756 = vmatmul.bf16.gmra.mxu0 %v6642
    %v6757 = vpop.f32.mrf.mxu0
    %v6758 = vadd.f32 0.0, %v6757
    %v6759 = vpop.f32.mrf.mxu0
    %6760 = vdwg.mxu0
    %6761 = vmatpush.bf16.msra.mxu0 %v6158
    %6762 = vmatpush.bf16.msra.mxu0 %v6150
    %6763 = vmatpush.bf16.msra.mxu0 %v6142
    %6764 = vmatpush.bf16.msra.mxu0 %v6134
    %6765 = vmatpush.bf16.msra.mxu0 %v6126
    %6766 = vmatpush.bf16.msra.mxu0 %v6118
    %6767 = vmatpush.bf16.msra.mxu0 %v6110
    %6768 = vmatpush.bf16.msra.mxu0 %v6102
    %6769 = vmatmul.bf16.gmra.mxu0 %v6643
    %v6770 = vpop.f32.mrf.mxu0
    %v6771 = vadd.f32 %v6758, %v6770
    %v6772 = vpop.f32.mrf.mxu0
    %6773 = vdwg.mxu0
    %6774 = vmatpush.bf16.msra.mxu0 %v6095
    %6775 = vmatpush.bf16.msra.mxu0 %v6087
    %6776 = vmatpush.bf16.msra.mxu0 %v6079
    %6777 = vmatpush.bf16.msra.mxu0 %v6071
    %6778 = vmatpush.bf16.msra.mxu0 %v6063
    %6779 = vmatpush.bf16.msra.mxu0 %v6055
    %6780 = vmatpush.bf16.msra.mxu0 %v6047
    %6781 = vmatpush.bf16.msra.mxu0 %v6039
    %6782 = vmatmul.bf16.gmra.mxu0 %v6642
    %v6783 = vpop.f32.mrf.mxu0
    %v6784 = vadd.f32 0.0, %v6783
    %v6785 = vpop.f32.mrf.mxu0
    %6786 = vdwg.mxu0
    %6787 = vmatpush.bf16.msra.mxu0 %v6159
    %6788 = vmatpush.bf16.msra.mxu0 %v6151
    %6789 = vmatpush.bf16.msra.mxu0 %v6143
    %6790 = vmatpush.bf16.msra.mxu0 %v6135
    %6791 = vmatpush.bf16.msra.mxu0 %v6127
    %6792 = vmatpush.bf16.msra.mxu0 %v6119
    %6793 = vmatpush.bf16.msra.mxu0 %v6111
    %6794 = vmatpush.bf16.msra.mxu0 %v6103
    %6795 = vmatmul.bf16.gmra.mxu0 %v6643
    %v6796 = vpop.f32.mrf.mxu0
    %v6797 = vadd.f32 %v6784, %v6796
    %v6798 = vpop.f32.mrf.mxu0
    %6799 = vdwg.mxu0
    %6800 = vmatpush.bf16.msra.mxu0 %v6096
    %6801 = vmatpush.bf16.msra.mxu0 %v6088
    %6802 = vmatpush.bf16.msra.mxu0 %v6080
    %6803 = vmatpush.bf16.msra.mxu0 %v6072
    %6804 = vmatpush.bf16.msra.mxu0 %v6064
    %6805 = vmatpush.bf16.msra.mxu0 %v6056
    %6806 = vmatpush.bf16.msra.mxu0 %v6048
    %6807 = vmatpush.bf16.msra.mxu0 %v6040
    %6808 = vmatmul.bf16.gmra.mxu0 %v6642
    %v6809 = vpop.f32.mrf.mxu0
    %v6810 = vadd.f32 0.0, %v6809
    %v6811 = vpop.f32.mrf.mxu0
    %6812 = vdwg.mxu0
    %6813 = vmatpush.bf16.msra.mxu0 %v6160
    %6814 = vmatpush.bf16.msra.mxu0 %v6152
    %6815 = vmatpush.bf16.msra.mxu0 %v6144
    %6816 = vmatpush.bf16.msra.mxu0 %v6136
    %6817 = vmatpush.bf16.msra.mxu0 %v6128
    %6818 = vmatpush.bf16.msra.mxu0 %v6120
    %6819 = vmatpush.bf16.msra.mxu0 %v6112
    %6820 = vmatpush.bf16.msra.mxu0 %v6104
    %6821 = vmatmul.bf16.gmra.mxu0 %v6643
    %v6822 = vpop.f32.mrf.mxu0
    %v6823 = vadd.f32 %v6810, %v6822
    %v6824 = vpop.f32.mrf.mxu0
    %6825 = vdwg.mxu0
    %6826 = vmatpush.bf16.msra.mxu0 %v6097
    %6827 = vmatpush.bf16.msra.mxu0 %v6089
    %6828 = vmatpush.bf16.msra.mxu0 %v6081
    %6829 = vmatpush.bf16.msra.mxu0 %v6073
    %6830 = vmatpush.bf16.msra.mxu0 %v6065
    %6831 = vmatpush.bf16.msra.mxu0 %v6057
    %6832 = vmatpush.bf16.msra.mxu0 %v6049
    %6833 = vmatpush.bf16.msra.mxu0 %v6041
    %6834 = vmatmul.bf16.gmra.mxu0 %v6642
    %v6835 = vpop.f32.mrf.mxu0
    %v6836 = vadd.f32 0.0, %v6835
    %v6837 = vpop.f32.mrf.mxu0
    %6838 = vdwg.mxu0
    %6839 = vmatpush.bf16.msra.mxu0 %v6161
    %6840 = vmatpush.bf16.msra.mxu0 %v6153
    %6841 = vmatpush.bf16.msra.mxu0 %v6145
    %6842 = vmatpush.bf16.msra.mxu0 %v6137
    %6843 = vmatpush.bf16.msra.mxu0 %v6129
    %6844 = vmatpush.bf16.msra.mxu0 %v6121
    %6845 = vmatpush.bf16.msra.mxu0 %v6113
    %6846 = vmatpush.bf16.msra.mxu0 %v6105
    %6847 = vmatmul.bf16.gmra.mxu0 %v6643
    %v6848 = vpop.f32.mrf.mxu0
    %v6849 = vadd.f32 %v6836, %v6848
    %v6850 = vpop.f32.mrf.mxu0
    %6851 = vdwg.mxu0
    %v6852 = vld [vmem:[%s1882] sm:$0xff]
    %v6853 = vld [vmem:[%s1882 + $0x8] sm:$0xff]
    %v6854 = vld [vmem:[%s1882 + $0x10] sm:$0xff]
    %v6855 = vld [vmem:[%s1882 + $0x18] sm:$0xff]
    %v6856 = vadd.f32 %v6852, %v6667
    %v6857 = vadd.f32 %v6853, %v6693
    %v6858 = vadd.f32 %v6854, %v6719
    %v6859 = vadd.f32 %v6855, %v6745
    %v6860 = vld [vmem:[%s1893 + $0x20] sm:$0xff]
    %v6861 = vld [vmem:[%s1893 + $0x28] sm:$0xff]
    %v6862 = vld [vmem:[%s1893 + $0x30] sm:$0xff]
    %v6863 = vld [vmem:[%s1893 + $0x38] sm:$0xff]
    %v6864 = vadd.f32 %v6860, %v6771
    %v6865 = vadd.f32 %v6861, %v6797
    %v6866 = vadd.f32 %v6862, %v6823
    %v6867 = vadd.f32 %v6863, %v6849
    %v6868 = vxor.u32 %v6856, 2147483648
    %v6869 = vxor.u32 %v6857, 2147483648
    %v6870 = vxor.u32 %v6858, 2147483648
    %v6871 = vmul.f32 %v6868, 1.442695
    %v6872 = vpow.pop %v6871
    %v6873 = vmul.f32 %v6869, 1.442695
    %v6874 = vpow.pop %v6873
    %v6875 = vmul.f32 %v6870, 1.442695
    %v6876 = vpow.pop %v6875
    %v6877 = vadd.f32 %v6872, 1.0
    %v6878 = vadd.f32 %v6874, 1.0
    %v6879 = vadd.f32 %v6876, 1.0
    %v6880 = vrcp.pop %v6877
    %v6881 = vmul.f32 %v6877, %v6880
    %v6882 = vsub.f32 1.0, %v6881
    %v6883 = vmul.f32 %v6880, %v6882
    %v6884 = vadd.f32 %v6880, %v6883
    %vm6885 = vweird.f32 %v6877
    %vm6886 = vweird.f32 %v6880
    %vm6887 = vmor %vm6885, %vm6886
    %v6888 = vsel %vm6887, %v6880, %v6884
    %v6889 = vand.u32 2147483647, %v6877
    %vm6890 = vcmp.eq.f32.partialorder %v6889, 8.507059e+37
    %v6891 = vand.u32 %v6877, 2147483648
    %v6892 = vor.u32 1.1754944e-38, %v6891
    %v6893 = vsel %vm6890, %v6892, %v6888
    %v6894 = vmul.f32 1.0, %v6893
    %v6895 = vrcp.pop %v6878
    %v6896 = vmul.f32 %v6878, %v6895
    %v6897 = vsub.f32 1.0, %v6896
    %v6898 = vmul.f32 %v6895, %v6897
    %v6899 = vadd.f32 %v6895, %v6898
    %vm6900 = vweird.f32 %v6878
    %vm6901 = vweird.f32 %v6895
    %vm6902 = vmor %vm6900, %vm6901
    %v6903 = vsel %vm6902, %v6895, %v6899
    %v6904 = vand.u32 2147483647, %v6878
    %vm6905 = vcmp.eq.f32.partialorder %v6904, 8.507059e+37
    %v6906 = vand.u32 %v6878, 2147483648
    %v6907 = vor.u32 1.1754944e-38, %v6906
    %v6908 = vsel %vm6905, %v6907, %v6903
    %v6909 = vmul.f32 1.0, %v6908
    %v6910 = vrcp.pop %v6879
    %v6911 = vmul.f32 %v6879, %v6910
    %v6912 = vsub.f32 1.0, %v6911
    %v6913 = vmul.f32 %v6910, %v6912
    %v6914 = vadd.f32 %v6910, %v6913
    %vm6915 = vweird.f32 %v6879
    %vm6916 = vweird.f32 %v6910
    %vm6917 = vmor %vm6915, %vm6916
    %v6918 = vsel %vm6917, %v6910, %v6914
    %v6919 = vand.u32 2147483647, %v6879
    %vm6920 = vcmp.eq.f32.partialorder %v6919, 8.507059e+37
    %v6921 = vand.u32 %v6879, 2147483648
    %v6922 = vor.u32 1.1754944e-38, %v6921
    %v6923 = vsel %vm6920, %v6922, %v6918
    %v6924 = vmul.f32 1.0, %v6923
    %v6925 = vtanh.pop %v6859
    %v6926 = vxor.u32 %v6864, 2147483648
    %v6927 = vxor.u32 %v6865, 2147483648
    %v6928 = vxor.u32 %v6866, 2147483648
    %v6929 = vmul.f32 %v6926, 1.442695
    %v6930 = vpow.pop %v6929
    %v6931 = vmul.f32 %v6927, 1.442695
    %v6932 = vpow.pop %v6931
    %v6933 = vmul.f32 %v6928, 1.442695
    %v6934 = vpow.pop %v6933
    %v6935 = vadd.f32 %v6930, 1.0
    %v6936 = vadd.f32 %v6932, 1.0
    %v6937 = vadd.f32 %v6934, 1.0
    %v6938 = vrcp.pop %v6935
    %v6939 = vmul.f32 %v6935, %v6938
    %v6940 = vsub.f32 1.0, %v6939
    %v6941 = vmul.f32 %v6938, %v6940
    %v6942 = vadd.f32 %v6938, %v6941
    %vm6943 = vweird.f32 %v6935
    %vm6944 = vweird.f32 %v6938
    %vm6945 = vmor %vm6943, %vm6944
    %v6946 = vsel %vm6945, %v6938, %v6942
    %v6947 = vand.u32 2147483647, %v6935
    %vm6948 = vcmp.eq.f32.partialorder %v6947, 8.507059e+37
    %v6949 = vand.u32 %v6935, 2147483648
    %v6950 = vor.u32 1.1754944e-38, %v6949
    %v6951 = vsel %vm6948, %v6950, %v6946
    %v6952 = vmul.f32 1.0, %v6951
    %v6953 = vrcp.pop %v6936
    %v6954 = vmul.f32 %v6936, %v6953
    %v6955 = vsub.f32 1.0, %v6954
    %v6956 = vmul.f32 %v6953, %v6955
    %v6957 = vadd.f32 %v6953, %v6956
    %vm6958 = vweird.f32 %v6936
    %vm6959 = vweird.f32 %v6953
    %vm6960 = vmor %vm6958, %vm6959
    %v6961 = vsel %vm6960, %v6953, %v6957
    %v6962 = vand.u32 2147483647, %v6936
    %vm6963 = vcmp.eq.f32.partialorder %v6962, 8.507059e+37
    %v6964 = vand.u32 %v6936, 2147483648
    %v6965 = vor.u32 1.1754944e-38, %v6964
    %v6966 = vsel %vm6963, %v6965, %v6961
    %v6967 = vmul.f32 1.0, %v6966
    %v6968 = vrcp.pop %v6937
    %v6969 = vmul.f32 %v6937, %v6968
    %v6970 = vsub.f32 1.0, %v6969
    %v6971 = vmul.f32 %v6968, %v6970
    %v6972 = vadd.f32 %v6968, %v6971
    %vm6973 = vweird.f32 %v6937
    %vm6974 = vweird.f32 %v6968
    %vm6975 = vmor %vm6973, %vm6974
    %v6976 = vsel %vm6975, %v6968, %v6972
    %v6977 = vand.u32 2147483647, %v6937
    %vm6978 = vcmp.eq.f32.partialorder %v6977, 8.507059e+37
    %v6979 = vand.u32 %v6937, 2147483648
    %v6980 = vor.u32 1.1754944e-38, %v6979
    %v6981 = vsel %vm6978, %v6980, %v6976
    %v6982 = vmul.f32 1.0, %v6981
    %v6983 = vtanh.pop %v6867
    %v6984 = vmul.f32 %v6909, %v6632
    %v6985 = vmul.f32 %v6894, %v6925
    %v6986 = vadd.f32 %v6984, %v6985
    %v6987 = vmul.f32 %v6967, %v6635
    %v6988 = vmul.f32 %v6952, %v6983
    %v6989 = vadd.f32 %v6987, %v6988
    %v6990 = vtanh.pop %v6986
    %v6991 = vmul.f32 %v6924, %v6990
    %v6992 = vtanh.pop %v6989
    %v6993 = vmul.f32 %v6982, %v6992
    %6994 = vst [vmem:[%s2030] sm:$0xff] %v6991
    %6995 = vst [vmem:[%s2034 + $0x8] sm:$0xff] %v6993
    %v6996 = vpack.c.bf16 %v6991, %v6991
    %v6997 = vpack.c.bf16 %v6993, %v6993
    %6998 = vmatpush.bf16.msra.mxu0 %v6090
    %6999 = vmatpush.bf16.msra.mxu0 %v6082
    %7000 = vmatpush.bf16.msra.mxu0 %v6074
    %7001 = vmatpush.bf16.msra.mxu0 %v6066
    %7002 = vmatpush.bf16.msra.mxu0 %v6058
    %7003 = vmatpush.bf16.msra.mxu0 %v6050
    %7004 = vmatpush.bf16.msra.mxu0 %v6042
    %7005 = vmatpush.bf16.msra.mxu0 %v6034
    %7006 = vmatmul.bf16.gmra.mxu0 %v6996
    %v7007 = vpop.f32.mrf.mxu0
    %v7008 = vadd.f32 0.0, %v7007
    %v7009 = vpop.f32.mrf.mxu0
    %7010 = vdwg.mxu0
    %7011 = vmatpush.bf16.msra.mxu0 %v6154
    %7012 = vmatpush.bf16.msra.mxu0 %v6146
    %7013 = vmatpush.bf16.msra.mxu0 %v6138
    %7014 = vmatpush.bf16.msra.mxu0 %v6130
    %7015 = vmatpush.bf16.msra.mxu0 %v6122
    %7016 = vmatpush.bf16.msra.mxu0 %v6114
    %7017 = vmatpush.bf16.msra.mxu0 %v6106
    %7018 = vmatpush.bf16.msra.mxu0 %v6098
    %7019 = vmatmul.bf16.gmra.mxu0 %v6997
    %v7020 = vpop.f32.mrf.mxu0
    %v7021 = vadd.f32 %v7008, %v7020
    %v7022 = vpop.f32.mrf.mxu0
    %7023 = vdwg.mxu0
    %7024 = vmatpush.bf16.msra.mxu0 %v6091
    %7025 = vmatpush.bf16.msra.mxu0 %v6083
    %7026 = vmatpush.bf16.msra.mxu0 %v6075
    %7027 = vmatpush.bf16.msra.mxu0 %v6067
    %7028 = vmatpush.bf16.msra.mxu0 %v6059
    %7029 = vmatpush.bf16.msra.mxu0 %v6051
    %7030 = vmatpush.bf16.msra.mxu0 %v6043
    %7031 = vmatpush.bf16.msra.mxu0 %v6035
    %7032 = vmatmul.bf16.gmra.mxu0 %v6996
    %v7033 = vpop.f32.mrf.mxu0
    %v7034 = vadd.f32 0.0, %v7033
    %v7035 = vpop.f32.mrf.mxu0
    %7036 = vdwg.mxu0
    %7037 = vmatpush.bf16.msra.mxu0 %v6155
    %7038 = vmatpush.bf16.msra.mxu0 %v6147
    %7039 = vmatpush.bf16.msra.mxu0 %v6139
    %7040 = vmatpush.bf16.msra.mxu0 %v6131
    %7041 = vmatpush.bf16.msra.mxu0 %v6123
    %7042 = vmatpush.bf16.msra.mxu0 %v6115
    %7043 = vmatpush.bf16.msra.mxu0 %v6107
    %7044 = vmatpush.bf16.msra.mxu0 %v6099
    %7045 = vmatmul.bf16.gmra.mxu0 %v6997
    %v7046 = vpop.f32.mrf.mxu0
    %v7047 = vadd.f32 %v7034, %v7046
    %v7048 = vpop.f32.mrf.mxu0
    %7049 = vdwg.mxu0
    %7050 = vmatpush.bf16.msra.mxu0 %v6092
    %7051 = vmatpush.bf16.msra.mxu0 %v6084
    %7052 = vmatpush.bf16.msra.mxu0 %v6076
    %7053 = vmatpush.bf16.msra.mxu0 %v6068
    %7054 = vmatpush.bf16.msra.mxu0 %v6060
    %7055 = vmatpush.bf16.msra.mxu0 %v6052
    %7056 = vmatpush.bf16.msra.mxu0 %v6044
    %7057 = vmatpush.bf16.msra.mxu0 %v6036
    %7058 = vmatmul.bf16.gmra.mxu0 %v6996
    %v7059 = vpop.f32.mrf.mxu0
    %v7060 = vadd.f32 0.0, %v7059
    %v7061 = vpop.f32.mrf.mxu0
    %7062 = vdwg.mxu0
    %7063 = vmatpush.bf16.msra.mxu0 %v6156
    %7064 = vmatpush.bf16.msra.mxu0 %v6148
    %7065 = vmatpush.bf16.msra.mxu0 %v6140
    %7066 = vmatpush.bf16.msra.mxu0 %v6132
    %7067 = vmatpush.bf16.msra.mxu0 %v6124
    %7068 = vmatpush.bf16.msra.mxu0 %v6116
    %7069 = vmatpush.bf16.msra.mxu0 %v6108
    %7070 = vmatpush.bf16.msra.mxu0 %v6100
    %7071 = vmatmul.bf16.gmra.mxu0 %v6997
    %v7072 = vpop.f32.mrf.mxu0
    %v7073 = vadd.f32 %v7060, %v7072
    %v7074 = vpop.f32.mrf.mxu0
    %7075 = vdwg.mxu0
    %7076 = vmatpush.bf16.msra.mxu0 %v6093
    %7077 = vmatpush.bf16.msra.mxu0 %v6085
    %7078 = vmatpush.bf16.msra.mxu0 %v6077
    %7079 = vmatpush.bf16.msra.mxu0 %v6069
    %7080 = vmatpush.bf16.msra.mxu0 %v6061
    %7081 = vmatpush.bf16.msra.mxu0 %v6053
    %7082 = vmatpush.bf16.msra.mxu0 %v6045
    %7083 = vmatpush.bf16.msra.mxu0 %v6037
    %7084 = vmatmul.bf16.gmra.mxu0 %v6996
    %v7085 = vpop.f32.mrf.mxu0
    %v7086 = vadd.f32 0.0, %v7085
    %v7087 = vpop.f32.mrf.mxu0
    %7088 = vdwg.mxu0
    %7089 = vmatpush.bf16.msra.mxu0 %v6157
    %7090 = vmatpush.bf16.msra.mxu0 %v6149
    %7091 = vmatpush.bf16.msra.mxu0 %v6141
    %7092 = vmatpush.bf16.msra.mxu0 %v6133
    %7093 = vmatpush.bf16.msra.mxu0 %v6125
    %7094 = vmatpush.bf16.msra.mxu0 %v6117
    %7095 = vmatpush.bf16.msra.mxu0 %v6109
    %7096 = vmatpush.bf16.msra.mxu0 %v6101
    %7097 = vmatmul.bf16.gmra.mxu0 %v6997
    %v7098 = vpop.f32.mrf.mxu0
    %v7099 = vadd.f32 %v7086, %v7098
    %v7100 = vpop.f32.mrf.mxu0
    %7101 = vdwg.mxu0
    %7102 = vmatpush.bf16.msra.mxu0 %v6094
    %7103 = vmatpush.bf16.msra.mxu0 %v6086
    %7104 = vmatpush.bf16.msra.mxu0 %v6078
    %7105 = vmatpush.bf16.msra.mxu0 %v6070
    %7106 = vmatpush.bf16.msra.mxu0 %v6062
    %7107 = vmatpush.bf16.msra.mxu0 %v6054
    %7108 = vmatpush.bf16.msra.mxu0 %v6046
    %7109 = vmatpush.bf16.msra.mxu0 %v6038
    %7110 = vmatmul.bf16.gmra.mxu0 %v6996
    %v7111 = vpop.f32.mrf.mxu0
    %v7112 = vadd.f32 0.0, %v7111
    %v7113 = vpop.f32.mrf.mxu0
    %7114 = vdwg.mxu0
    %7115 = vmatpush.bf16.msra.mxu0 %v6158
    %7116 = vmatpush.bf16.msra.mxu0 %v6150
    %7117 = vmatpush.bf16.msra.mxu0 %v6142
    %7118 = vmatpush.bf16.msra.mxu0 %v6134
    %7119 = vmatpush.bf16.msra.mxu0 %v6126
    %7120 = vmatpush.bf16.msra.mxu0 %v6118
    %7121 = vmatpush.bf16.msra.mxu0 %v6110
    %7122 = vmatpush.bf16.msra.mxu0 %v6102
    %7123 = vmatmul.bf16.gmra.mxu0 %v6997
    %v7124 = vpop.f32.mrf.mxu0
    %v7125 = vadd.f32 %v7112, %v7124
    %v7126 = vpop.f32.mrf.mxu0
    %7127 = vdwg.mxu0
    %7128 = vmatpush.bf16.msra.mxu0 %v6095
    %7129 = vmatpush.bf16.msra.mxu0 %v6087
    %7130 = vmatpush.bf16.msra.mxu0 %v6079
    %7131 = vmatpush.bf16.msra.mxu0 %v6071
    %7132 = vmatpush.bf16.msra.mxu0 %v6063
    %7133 = vmatpush.bf16.msra.mxu0 %v6055
    %7134 = vmatpush.bf16.msra.mxu0 %v6047
    %7135 = vmatpush.bf16.msra.mxu0 %v6039
    %7136 = vmatmul.bf16.gmra.mxu0 %v6996
    %v7137 = vpop.f32.mrf.mxu0
    %v7138 = vadd.f32 0.0, %v7137
    %v7139 = vpop.f32.mrf.mxu0
    %7140 = vdwg.mxu0
    %7141 = vmatpush.bf16.msra.mxu0 %v6159
    %7142 = vmatpush.bf16.msra.mxu0 %v6151
    %7143 = vmatpush.bf16.msra.mxu0 %v6143
    %7144 = vmatpush.bf16.msra.mxu0 %v6135
    %7145 = vmatpush.bf16.msra.mxu0 %v6127
    %7146 = vmatpush.bf16.msra.mxu0 %v6119
    %7147 = vmatpush.bf16.msra.mxu0 %v6111
    %7148 = vmatpush.bf16.msra.mxu0 %v6103
    %7149 = vmatmul.bf16.gmra.mxu0 %v6997
    %v7150 = vpop.f32.mrf.mxu0
    %v7151 = vadd.f32 %v7138, %v7150
    %v7152 = vpop.f32.mrf.mxu0
    %7153 = vdwg.mxu0
    %7154 = vmatpush.bf16.msra.mxu0 %v6096
    %7155 = vmatpush.bf16.msra.mxu0 %v6088
    %7156 = vmatpush.bf16.msra.mxu0 %v6080
    %7157 = vmatpush.bf16.msra.mxu0 %v6072
    %7158 = vmatpush.bf16.msra.mxu0 %v6064
    %7159 = vmatpush.bf16.msra.mxu0 %v6056
    %7160 = vmatpush.bf16.msra.mxu0 %v6048
    %7161 = vmatpush.bf16.msra.mxu0 %v6040
    %7162 = vmatmul.bf16.gmra.mxu0 %v6996
    %v7163 = vpop.f32.mrf.mxu0
    %v7164 = vadd.f32 0.0, %v7163
    %v7165 = vpop.f32.mrf.mxu0
    %7166 = vdwg.mxu0
    %7167 = vmatpush.bf16.msra.mxu0 %v6160
    %7168 = vmatpush.bf16.msra.mxu0 %v6152
    %7169 = vmatpush.bf16.msra.mxu0 %v6144
    %7170 = vmatpush.bf16.msra.mxu0 %v6136
    %7171 = vmatpush.bf16.msra.mxu0 %v6128
    %7172 = vmatpush.bf16.msra.mxu0 %v6120
    %7173 = vmatpush.bf16.msra.mxu0 %v6112
    %7174 = vmatpush.bf16.msra.mxu0 %v6104
    %7175 = vmatmul.bf16.gmra.mxu0 %v6997
    %v7176 = vpop.f32.mrf.mxu0
    %v7177 = vadd.f32 %v7164, %v7176
    %v7178 = vpop.f32.mrf.mxu0
    %7179 = vdwg.mxu0
    %7180 = vmatpush.bf16.msra.mxu0 %v6097
    %7181 = vmatpush.bf16.msra.mxu0 %v6089
    %7182 = vmatpush.bf16.msra.mxu0 %v6081
    %7183 = vmatpush.bf16.msra.mxu0 %v6073
    %7184 = vmatpush.bf16.msra.mxu0 %v6065
    %7185 = vmatpush.bf16.msra.mxu0 %v6057
    %7186 = vmatpush.bf16.msra.mxu0 %v6049
    %7187 = vmatpush.bf16.msra.mxu0 %v6041
    %7188 = vmatmul.bf16.gmra.mxu0 %v6996
    %v7189 = vpop.f32.mrf.mxu0
    %v7190 = vadd.f32 0.0, %v7189
    %v7191 = vpop.f32.mrf.mxu0
    %7192 = vdwg.mxu0
    %7193 = vmatpush.bf16.msra.mxu0 %v6161
    %7194 = vmatpush.bf16.msra.mxu0 %v6153
    %7195 = vmatpush.bf16.msra.mxu0 %v6145
    %7196 = vmatpush.bf16.msra.mxu0 %v6137
    %7197 = vmatpush.bf16.msra.mxu0 %v6129
    %7198 = vmatpush.bf16.msra.mxu0 %v6121
    %7199 = vmatpush.bf16.msra.mxu0 %v6113
    %7200 = vmatpush.bf16.msra.mxu0 %v6105
    %7201 = vmatmul.bf16.gmra.mxu0 %v6997
    %v7202 = vpop.f32.mrf.mxu0
    %v7203 = vadd.f32 %v7190, %v7202
    %v7204 = vpop.f32.mrf.mxu0
    %7205 = vdwg.mxu0
    %v7206 = vld [vmem:[%s2248] sm:$0xff]
    %v7207 = vld [vmem:[%s2248 + $0x8] sm:$0xff]
    %v7208 = vld [vmem:[%s2248 + $0x10] sm:$0xff]
    %v7209 = vld [vmem:[%s2248 + $0x18] sm:$0xff]
    %v7210 = vadd.f32 %v7206, %v7021
    %v7211 = vadd.f32 %v7207, %v7047
    %v7212 = vadd.f32 %v7208, %v7073
    %v7213 = vadd.f32 %v7209, %v7099
    %v7214 = vld [vmem:[%s2259 + $0x20] sm:$0xff]
    %v7215 = vld [vmem:[%s2259 + $0x28] sm:$0xff]
    %v7216 = vld [vmem:[%s2259 + $0x30] sm:$0xff]
    %v7217 = vld [vmem:[%s2259 + $0x38] sm:$0xff]
    %v7218 = vadd.f32 %v7214, %v7125
    %v7219 = vadd.f32 %v7215, %v7151
    %v7220 = vadd.f32 %v7216, %v7177
    %v7221 = vadd.f32 %v7217, %v7203
    %v7222 = vxor.u32 %v7210, 2147483648
    %v7223 = vxor.u32 %v7211, 2147483648
    %v7224 = vxor.u32 %v7212, 2147483648
    %v7225 = vmul.f32 %v7222, 1.442695
    %v7226 = vpow.pop %v7225
    %v7227 = vmul.f32 %v7223, 1.442695
    %v7228 = vpow.pop %v7227
    %v7229 = vmul.f32 %v7224, 1.442695
    %v7230 = vpow.pop %v7229
    %v7231 = vadd.f32 %v7226, 1.0
    %v7232 = vadd.f32 %v7228, 1.0
    %v7233 = vadd.f32 %v7230, 1.0
    %v7234 = vrcp.pop %v7231
    %v7235 = vmul.f32 %v7231, %v7234
    %v7236 = vsub.f32 1.0, %v7235
    %v7237 = vmul.f32 %v7234, %v7236
    %v7238 = vadd.f32 %v7234, %v7237
    %vm7239 = vweird.f32 %v7231
    %vm7240 = vweird.f32 %v7234
    %vm7241 = vmor %vm7239, %vm7240
    %v7242 = vsel %vm7241, %v7234, %v7238
    %v7243 = vand.u32 2147483647, %v7231
    %vm7244 = vcmp.eq.f32.partialorder %v7243, 8.507059e+37
    %v7245 = vand.u32 %v7231, 2147483648
    %v7246 = vor.u32 1.1754944e-38, %v7245
    %v7247 = vsel %vm7244, %v7246, %v7242
    %v7248 = vmul.f32 1.0, %v7247
    %v7249 = vrcp.pop %v7232
    %v7250 = vmul.f32 %v7232, %v7249
    %v7251 = vsub.f32 1.0, %v7250
    %v7252 = vmul.f32 %v7249, %v7251
    %v7253 = vadd.f32 %v7249, %v7252
    %vm7254 = vweird.f32 %v7232
    %vm7255 = vweird.f32 %v7249
    %vm7256 = vmor %vm7254, %vm7255
    %v7257 = vsel %vm7256, %v7249, %v7253
    %v7258 = vand.u32 2147483647, %v7232
    %vm7259 = vcmp.eq.f32.partialorder %v7258, 8.507059e+37
    %v7260 = vand.u32 %v7232, 2147483648
    %v7261 = vor.u32 1.1754944e-38, %v7260
    %v7262 = vsel %vm7259, %v7261, %v7257
    %v7263 = vmul.f32 1.0, %v7262
    %v7264 = vrcp.pop %v7233
    %v7265 = vmul.f32 %v7233, %v7264
    %v7266 = vsub.f32 1.0, %v7265
    %v7267 = vmul.f32 %v7264, %v7266
    %v7268 = vadd.f32 %v7264, %v7267
    %vm7269 = vweird.f32 %v7233
    %vm7270 = vweird.f32 %v7264
    %vm7271 = vmor %vm7269, %vm7270
    %v7272 = vsel %vm7271, %v7264, %v7268
    %v7273 = vand.u32 2147483647, %v7233
    %vm7274 = vcmp.eq.f32.partialorder %v7273, 8.507059e+37
    %v7275 = vand.u32 %v7233, 2147483648
    %v7276 = vor.u32 1.1754944e-38, %v7275
    %v7277 = vsel %vm7274, %v7276, %v7272
    %v7278 = vmul.f32 1.0, %v7277
    %v7279 = vtanh.pop %v7213
    %v7280 = vxor.u32 %v7218, 2147483648
    %v7281 = vxor.u32 %v7219, 2147483648
    %v7282 = vxor.u32 %v7220, 2147483648
    %v7283 = vmul.f32 %v7280, 1.442695
    %v7284 = vpow.pop %v7283
    %v7285 = vmul.f32 %v7281, 1.442695
    %v7286 = vpow.pop %v7285
    %v7287 = vmul.f32 %v7282, 1.442695
    %v7288 = vpow.pop %v7287
    %v7289 = vadd.f32 %v7284, 1.0
    %v7290 = vadd.f32 %v7286, 1.0
    %v7291 = vadd.f32 %v7288, 1.0
    %v7292 = vrcp.pop %v7289
    %v7293 = vmul.f32 %v7289, %v7292
    %v7294 = vsub.f32 1.0, %v7293
    %v7295 = vmul.f32 %v7292, %v7294
    %v7296 = vadd.f32 %v7292, %v7295
    %vm7297 = vweird.f32 %v7289
    %vm7298 = vweird.f32 %v7292
    %vm7299 = vmor %vm7297, %vm7298
    %v7300 = vsel %vm7299, %v7292, %v7296
    %v7301 = vand.u32 2147483647, %v7289
    %vm7302 = vcmp.eq.f32.partialorder %v7301, 8.507059e+37
    %v7303 = vand.u32 %v7289, 2147483648
    %v7304 = vor.u32 1.1754944e-38, %v7303
    %v7305 = vsel %vm7302, %v7304, %v7300
    %v7306 = vmul.f32 1.0, %v7305
    %v7307 = vrcp.pop %v7290
    %v7308 = vmul.f32 %v7290, %v7307
    %v7309 = vsub.f32 1.0, %v7308
    %v7310 = vmul.f32 %v7307, %v7309
    %v7311 = vadd.f32 %v7307, %v7310
    %vm7312 = vweird.f32 %v7290
    %vm7313 = vweird.f32 %v7307
    %vm7314 = vmor %vm7312, %vm7313
    %v7315 = vsel %vm7314, %v7307, %v7311
    %v7316 = vand.u32 2147483647, %v7290
    %vm7317 = vcmp.eq.f32.partialorder %v7316, 8.507059e+37
    %v7318 = vand.u32 %v7290, 2147483648
    %v7319 = vor.u32 1.1754944e-38, %v7318
    %v7320 = vsel %vm7317, %v7319, %v7315
    %v7321 = vmul.f32 1.0, %v7320
    %v7322 = vrcp.pop %v7291
    %v7323 = vmul.f32 %v7291, %v7322
    %v7324 = vsub.f32 1.0, %v7323
    %v7325 = vmul.f32 %v7322, %v7324
    %v7326 = vadd.f32 %v7322, %v7325
    %vm7327 = vweird.f32 %v7291
    %vm7328 = vweird.f32 %v7322
    %vm7329 = vmor %vm7327, %vm7328
    %v7330 = vsel %vm7329, %v7322, %v7326
    %v7331 = vand.u32 2147483647, %v7291
    %vm7332 = vcmp.eq.f32.partialorder %v7331, 8.507059e+37
    %v7333 = vand.u32 %v7291, 2147483648
    %v7334 = vor.u32 1.1754944e-38, %v7333
    %v7335 = vsel %vm7332, %v7334, %v7330
    %v7336 = vmul.f32 1.0, %v7335
    %v7337 = vtanh.pop %v7221
    %v7338 = vmul.f32 %v7263, %v6986
    %v7339 = vmul.f32 %v7248, %v7279
    %v7340 = vadd.f32 %v7338, %v7339
    %v7341 = vmul.f32 %v7321, %v6989
    %v7342 = vmul.f32 %v7306, %v7337
    %v7343 = vadd.f32 %v7341, %v7342
    %v7344 = vtanh.pop %v7340
    %v7345 = vmul.f32 %v7278, %v7344
    %v7346 = vtanh.pop %v7343
    %v7347 = vmul.f32 %v7336, %v7346
    %7348 = vst [vmem:[%s2396] sm:$0xff] %v7345
    %7349 = vst [vmem:[%s2400 + $0x8] sm:$0xff] %v7347
    %v7350 = vpack.c.bf16 %v7345, %v7345
    %v7351 = vpack.c.bf16 %v7347, %v7347
    %7352 = vmatpush.bf16.msra.mxu0 %v6090
    %7353 = vmatpush.bf16.msra.mxu0 %v6082
    %7354 = vmatpush.bf16.msra.mxu0 %v6074
    %7355 = vmatpush.bf16.msra.mxu0 %v6066
    %7356 = vmatpush.bf16.msra.mxu0 %v6058
    %7357 = vmatpush.bf16.msra.mxu0 %v6050
    %7358 = vmatpush.bf16.msra.mxu0 %v6042
    %7359 = vmatpush.bf16.msra.mxu0 %v6034
    %7360 = vmatmul.bf16.gmra.mxu0 %v7350
    %v7361 = vpop.f32.mrf.mxu0
    %v7362 = vadd.f32 0.0, %v7361
    %v7363 = vpop.f32.mrf.mxu0
    %7364 = vdwg.mxu0
    %7365 = vmatpush.bf16.msra.mxu0 %v6154
    %7366 = vmatpush.bf16.msra.mxu0 %v6146
    %7367 = vmatpush.bf16.msra.mxu0 %v6138
    %7368 = vmatpush.bf16.msra.mxu0 %v6130
    %7369 = vmatpush.bf16.msra.mxu0 %v6122
    %7370 = vmatpush.bf16.msra.mxu0 %v6114
    %7371 = vmatpush.bf16.msra.mxu0 %v6106
    %7372 = vmatpush.bf16.msra.mxu0 %v6098
    %7373 = vmatmul.bf16.gmra.mxu0 %v7351
    %v7374 = vpop.f32.mrf.mxu0
    %v7375 = vadd.f32 %v7362, %v7374
    %v7376 = vpop.f32.mrf.mxu0
    %7377 = vdwg.mxu0
    %7378 = vmatpush.bf16.msra.mxu0 %v6091
    %7379 = vmatpush.bf16.msra.mxu0 %v6083
    %7380 = vmatpush.bf16.msra.mxu0 %v6075
    %7381 = vmatpush.bf16.msra.mxu0 %v6067
    %7382 = vmatpush.bf16.msra.mxu0 %v6059
    %7383 = vmatpush.bf16.msra.mxu0 %v6051
    %7384 = vmatpush.bf16.msra.mxu0 %v6043
    %7385 = vmatpush.bf16.msra.mxu0 %v6035
    %7386 = vmatmul.bf16.gmra.mxu0 %v7350
    %v7387 = vpop.f32.mrf.mxu0
    %v7388 = vadd.f32 0.0, %v7387
    %v7389 = vpop.f32.mrf.mxu0
    %7390 = vdwg.mxu0
    %7391 = vmatpush.bf16.msra.mxu0 %v6155
    %7392 = vmatpush.bf16.msra.mxu0 %v6147
    %7393 = vmatpush.bf16.msra.mxu0 %v6139
    %7394 = vmatpush.bf16.msra.mxu0 %v6131
    %7395 = vmatpush.bf16.msra.mxu0 %v6123
    %7396 = vmatpush.bf16.msra.mxu0 %v6115
    %7397 = vmatpush.bf16.msra.mxu0 %v6107
    %7398 = vmatpush.bf16.msra.mxu0 %v6099
    %7399 = vmatmul.bf16.gmra.mxu0 %v7351
    %v7400 = vpop.f32.mrf.mxu0
    %v7401 = vadd.f32 %v7388, %v7400
    %v7402 = vpop.f32.mrf.mxu0
    %7403 = vdwg.mxu0
    %7404 = vmatpush.bf16.msra.mxu0 %v6092
    %7405 = vmatpush.bf16.msra.mxu0 %v6084
    %7406 = vmatpush.bf16.msra.mxu0 %v6076
    %7407 = vmatpush.bf16.msra.mxu0 %v6068
    %7408 = vmatpush.bf16.msra.mxu0 %v6060
    %7409 = vmatpush.bf16.msra.mxu0 %v6052
    %7410 = vmatpush.bf16.msra.mxu0 %v6044
    %7411 = vmatpush.bf16.msra.mxu0 %v6036
    %7412 = vmatmul.bf16.gmra.mxu0 %v7350
    %v7413 = vpop.f32.mrf.mxu0
    %v7414 = vadd.f32 0.0, %v7413
    %v7415 = vpop.f32.mrf.mxu0
    %7416 = vdwg.mxu0
    %7417 = vmatpush.bf16.msra.mxu0 %v6156
    %7418 = vmatpush.bf16.msra.mxu0 %v6148
    %7419 = vmatpush.bf16.msra.mxu0 %v6140
    %7420 = vmatpush.bf16.msra.mxu0 %v6132
    %7421 = vmatpush.bf16.msra.mxu0 %v6124
    %7422 = vmatpush.bf16.msra.mxu0 %v6116
    %7423 = vmatpush.bf16.msra.mxu0 %v6108
    %7424 = vmatpush.bf16.msra.mxu0 %v6100
    %7425 = vmatmul.bf16.gmra.mxu0 %v7351
    %v7426 = vpop.f32.mrf.mxu0
    %v7427 = vadd.f32 %v7414, %v7426
    %v7428 = vpop.f32.mrf.mxu0
    %7429 = vdwg.mxu0
    %7430 = vmatpush.bf16.msra.mxu0 %v6093
    %7431 = vmatpush.bf16.msra.mxu0 %v6085
    %7432 = vmatpush.bf16.msra.mxu0 %v6077
    %7433 = vmatpush.bf16.msra.mxu0 %v6069
    %7434 = vmatpush.bf16.msra.mxu0 %v6061
    %7435 = vmatpush.bf16.msra.mxu0 %v6053
    %7436 = vmatpush.bf16.msra.mxu0 %v6045
    %7437 = vmatpush.bf16.msra.mxu0 %v6037
    %7438 = vmatmul.bf16.gmra.mxu0 %v7350
    %v7439 = vpop.f32.mrf.mxu0
    %v7440 = vadd.f32 0.0, %v7439
    %v7441 = vpop.f32.mrf.mxu0
    %7442 = vdwg.mxu0
    %7443 = vmatpush.bf16.msra.mxu0 %v6157
    %7444 = vmatpush.bf16.msra.mxu0 %v6149
    %7445 = vmatpush.bf16.msra.mxu0 %v6141
    %7446 = vmatpush.bf16.msra.mxu0 %v6133
    %7447 = vmatpush.bf16.msra.mxu0 %v6125
    %7448 = vmatpush.bf16.msra.mxu0 %v6117
    %7449 = vmatpush.bf16.msra.mxu0 %v6109
    %7450 = vmatpush.bf16.msra.mxu0 %v6101
    %7451 = vmatmul.bf16.gmra.mxu0 %v7351
    %v7452 = vpop.f32.mrf.mxu0
    %v7453 = vadd.f32 %v7440, %v7452
    %v7454 = vpop.f32.mrf.mxu0
    %7455 = vdwg.mxu0
    %7456 = vmatpush.bf16.msra.mxu0 %v6094
    %7457 = vmatpush.bf16.msra.mxu0 %v6086
    %7458 = vmatpush.bf16.msra.mxu0 %v6078
    %7459 = vmatpush.bf16.msra.mxu0 %v6070
    %7460 = vmatpush.bf16.msra.mxu0 %v6062
    %7461 = vmatpush.bf16.msra.mxu0 %v6054
    %7462 = vmatpush.bf16.msra.mxu0 %v6046
    %7463 = vmatpush.bf16.msra.mxu0 %v6038
    %7464 = vmatmul.bf16.gmra.mxu0 %v7350
    %v7465 = vpop.f32.mrf.mxu0
    %v7466 = vadd.f32 0.0, %v7465
    %v7467 = vpop.f32.mrf.mxu0
    %7468 = vdwg.mxu0
    %7469 = vmatpush.bf16.msra.mxu0 %v6158
    %7470 = vmatpush.bf16.msra.mxu0 %v6150
    %7471 = vmatpush.bf16.msra.mxu0 %v6142
    %7472 = vmatpush.bf16.msra.mxu0 %v6134
    %7473 = vmatpush.bf16.msra.mxu0 %v6126
    %7474 = vmatpush.bf16.msra.mxu0 %v6118
    %7475 = vmatpush.bf16.msra.mxu0 %v6110
    %7476 = vmatpush.bf16.msra.mxu0 %v6102
    %7477 = vmatmul.bf16.gmra.mxu0 %v7351
    %v7478 = vpop.f32.mrf.mxu0
    %v7479 = vadd.f32 %v7466, %v7478
    %v7480 = vpop.f32.mrf.mxu0
    %7481 = vdwg.mxu0
    %7482 = vmatpush.bf16.msra.mxu0 %v6095
    %7483 = vmatpush.bf16.msra.mxu0 %v6087
    %7484 = vmatpush.bf16.msra.mxu0 %v6079
    %7485 = vmatpush.bf16.msra.mxu0 %v6071
    %7486 = vmatpush.bf16.msra.mxu0 %v6063
    %7487 = vmatpush.bf16.msra.mxu0 %v6055
    %7488 = vmatpush.bf16.msra.mxu0 %v6047
    %7489 = vmatpush.bf16.msra.mxu0 %v6039
    %7490 = vmatmul.bf16.gmra.mxu0 %v7350
    %v7491 = vpop.f32.mrf.mxu0
    %v7492 = vadd.f32 0.0, %v7491
    %v7493 = vpop.f32.mrf.mxu0
    %7494 = vdwg.mxu0
    %7495 = vmatpush.bf16.msra.mxu0 %v6159
    %7496 = vmatpush.bf16.msra.mxu0 %v6151
    %7497 = vmatpush.bf16.msra.mxu0 %v6143
    %7498 = vmatpush.bf16.msra.mxu0 %v6135
    %7499 = vmatpush.bf16.msra.mxu0 %v6127
    %7500 = vmatpush.bf16.msra.mxu0 %v6119
    %7501 = vmatpush.bf16.msra.mxu0 %v6111
    %7502 = vmatpush.bf16.msra.mxu0 %v6103
    %7503 = vmatmul.bf16.gmra.mxu0 %v7351
    %v7504 = vpop.f32.mrf.mxu0
    %v7505 = vadd.f32 %v7492, %v7504
    %v7506 = vpop.f32.mrf.mxu0
    %7507 = vdwg.mxu0
    %7508 = vmatpush.bf16.msra.mxu0 %v6096
    %7509 = vmatpush.bf16.msra.mxu0 %v6088
    %7510 = vmatpush.bf16.msra.mxu0 %v6080
    %7511 = vmatpush.bf16.msra.mxu0 %v6072
    %7512 = vmatpush.bf16.msra.mxu0 %v6064
    %7513 = vmatpush.bf16.msra.mxu0 %v6056
    %7514 = vmatpush.bf16.msra.mxu0 %v6048
    %7515 = vmatpush.bf16.msra.mxu0 %v6040
    %7516 = vmatmul.bf16.gmra.mxu0 %v7350
    %v7517 = vpop.f32.mrf.mxu0
    %v7518 = vadd.f32 0.0, %v7517
    %v7519 = vpop.f32.mrf.mxu0
    %7520 = vdwg.mxu0
    %7521 = vmatpush.bf16.msra.mxu0 %v6160
    %7522 = vmatpush.bf16.msra.mxu0 %v6152
    %7523 = vmatpush.bf16.msra.mxu0 %v6144
    %7524 = vmatpush.bf16.msra.mxu0 %v6136
    %7525 = vmatpush.bf16.msra.mxu0 %v6128
    %7526 = vmatpush.bf16.msra.mxu0 %v6120
    %7527 = vmatpush.bf16.msra.mxu0 %v6112
    %7528 = vmatpush.bf16.msra.mxu0 %v6104
    %7529 = vmatmul.bf16.gmra.mxu0 %v7351
    %v7530 = vpop.f32.mrf.mxu0
    %v7531 = vadd.f32 %v7518, %v7530
    %v7532 = vpop.f32.mrf.mxu0
    %7533 = vdwg.mxu0
    %7534 = vmatpush.bf16.msra.mxu0 %v6097
    %7535 = vmatpush.bf16.msra.mxu0 %v6089
    %7536 = vmatpush.bf16.msra.mxu0 %v6081
    %7537 = vmatpush.bf16.msra.mxu0 %v6073
    %7538 = vmatpush.bf16.msra.mxu0 %v6065
    %7539 = vmatpush.bf16.msra.mxu0 %v6057
    %7540 = vmatpush.bf16.msra.mxu0 %v6049
    %7541 = vmatpush.bf16.msra.mxu0 %v6041
    %7542 = vmatmul.bf16.gmra.mxu0 %v7350
    %v7543 = vpop.f32.mrf.mxu0
    %v7544 = vadd.f32 0.0, %v7543
    %v7545 = vpop.f32.mrf.mxu0
    %7546 = vdwg.mxu0
    %7547 = vmatpush.bf16.msra.mxu0 %v6161
    %7548 = vmatpush.bf16.msra.mxu0 %v6153
    %7549 = vmatpush.bf16.msra.mxu0 %v6145
    %7550 = vmatpush.bf16.msra.mxu0 %v6137
    %7551 = vmatpush.bf16.msra.mxu0 %v6129
    %7552 = vmatpush.bf16.msra.mxu0 %v6121
    %7553 = vmatpush.bf16.msra.mxu0 %v6113
    %7554 = vmatpush.bf16.msra.mxu0 %v6105
    %7555 = vmatmul.bf16.gmra.mxu0 %v7351
    %v7556 = vpop.f32.mrf.mxu0
    %v7557 = vadd.f32 %v7544, %v7556
    %v7558 = vpop.f32.mrf.mxu0
    %7559 = vdwg.mxu0
    %v7560 = vld [vmem:[%s2614] sm:$0xff]
    %v7561 = vld [vmem:[%s2614 + $0x8] sm:$0xff]
    %v7562 = vld [vmem:[%s2614 + $0x10] sm:$0xff]
    %v7563 = vld [vmem:[%s2614 + $0x18] sm:$0xff]
    %v7564 = vadd.f32 %v7560, %v7375
    %v7565 = vadd.f32 %v7561, %v7401
    %v7566 = vadd.f32 %v7562, %v7427
    %v7567 = vadd.f32 %v7563, %v7453
    %v7568 = vld [vmem:[%s2625 + $0x20] sm:$0xff]
    %v7569 = vld [vmem:[%s2625 + $0x28] sm:$0xff]
    %v7570 = vld [vmem:[%s2625 + $0x30] sm:$0xff]
    %v7571 = vld [vmem:[%s2625 + $0x38] sm:$0xff]
    %v7572 = vadd.f32 %v7568, %v7479
    %v7573 = vadd.f32 %v7569, %v7505
    %v7574 = vadd.f32 %v7570, %v7531
    %v7575 = vadd.f32 %v7571, %v7557
    %v7576 = vxor.u32 %v7564, 2147483648
    %v7577 = vxor.u32 %v7565, 2147483648
    %v7578 = vxor.u32 %v7566, 2147483648
    %v7579 = vmul.f32 %v7576, 1.442695
    %v7580 = vpow.pop %v7579
    %v7581 = vmul.f32 %v7577, 1.442695
    %v7582 = vpow.pop %v7581
    %v7583 = vmul.f32 %v7578, 1.442695
    %v7584 = vpow.pop %v7583
    %v7585 = vadd.f32 %v7580, 1.0
    %v7586 = vadd.f32 %v7582, 1.0
    %v7587 = vadd.f32 %v7584, 1.0
    %v7588 = vrcp.pop %v7585
    %v7589 = vmul.f32 %v7585, %v7588
    %v7590 = vsub.f32 1.0, %v7589
    %v7591 = vmul.f32 %v7588, %v7590
    %v7592 = vadd.f32 %v7588, %v7591
    %vm7593 = vweird.f32 %v7585
    %vm7594 = vweird.f32 %v7588
    %vm7595 = vmor %vm7593, %vm7594
    %v7596 = vsel %vm7595, %v7588, %v7592
    %v7597 = vand.u32 2147483647, %v7585
    %vm7598 = vcmp.eq.f32.partialorder %v7597, 8.507059e+37
    %v7599 = vand.u32 %v7585, 2147483648
    %v7600 = vor.u32 1.1754944e-38, %v7599
    %v7601 = vsel %vm7598, %v7600, %v7596
    %v7602 = vmul.f32 1.0, %v7601
    %v7603 = vrcp.pop %v7586
    %v7604 = vmul.f32 %v7586, %v7603
    %v7605 = vsub.f32 1.0, %v7604
    %v7606 = vmul.f32 %v7603, %v7605
    %v7607 = vadd.f32 %v7603, %v7606
    %vm7608 = vweird.f32 %v7586
    %vm7609 = vweird.f32 %v7603
    %vm7610 = vmor %vm7608, %vm7609
    %v7611 = vsel %vm7610, %v7603, %v7607
    %v7612 = vand.u32 2147483647, %v7586
    %vm7613 = vcmp.eq.f32.partialorder %v7612, 8.507059e+37
    %v7614 = vand.u32 %v7586, 2147483648
    %v7615 = vor.u32 1.1754944e-38, %v7614
    %v7616 = vsel %vm7613, %v7615, %v7611
    %v7617 = vmul.f32 1.0, %v7616
    %v7618 = vrcp.pop %v7587
    %v7619 = vmul.f32 %v7587, %v7618
    %v7620 = vsub.f32 1.0, %v7619
    %v7621 = vmul.f32 %v7618, %v7620
    %v7622 = vadd.f32 %v7618, %v7621
    %vm7623 = vweird.f32 %v7587
    %vm7624 = vweird.f32 %v7618
    %vm7625 = vmor %vm7623, %vm7624
    %v7626 = vsel %vm7625, %v7618, %v7622
    %v7627 = vand.u32 2147483647, %v7587
    %vm7628 = vcmp.eq.f32.partialorder %v7627, 8.507059e+37
    %v7629 = vand.u32 %v7587, 2147483648
    %v7630 = vor.u32 1.1754944e-38, %v7629
    %v7631 = vsel %vm7628, %v7630, %v7626
    %v7632 = vmul.f32 1.0, %v7631
    %v7633 = vtanh.pop %v7567
    %v7634 = vxor.u32 %v7572, 2147483648
    %v7635 = vxor.u32 %v7573, 2147483648
    %v7636 = vxor.u32 %v7574, 2147483648
    %v7637 = vmul.f32 %v7634, 1.442695
    %v7638 = vpow.pop %v7637
    %v7639 = vmul.f32 %v7635, 1.442695
    %v7640 = vpow.pop %v7639
    %v7641 = vmul.f32 %v7636, 1.442695
    %v7642 = vpow.pop %v7641
    %v7643 = vadd.f32 %v7638, 1.0
    %v7644 = vadd.f32 %v7640, 1.0
    %v7645 = vadd.f32 %v7642, 1.0
    %v7646 = vrcp.pop %v7643
    %v7647 = vmul.f32 %v7643, %v7646
    %v7648 = vsub.f32 1.0, %v7647
    %v7649 = vmul.f32 %v7646, %v7648
    %v7650 = vadd.f32 %v7646, %v7649
    %vm7651 = vweird.f32 %v7643
    %vm7652 = vweird.f32 %v7646
    %vm7653 = vmor %vm7651, %vm7652
    %v7654 = vsel %vm7653, %v7646, %v7650
    %v7655 = vand.u32 2147483647, %v7643
    %vm7656 = vcmp.eq.f32.partialorder %v7655, 8.507059e+37
    %v7657 = vand.u32 %v7643, 2147483648
    %v7658 = vor.u32 1.1754944e-38, %v7657
    %v7659 = vsel %vm7656, %v7658, %v7654
    %v7660 = vmul.f32 1.0, %v7659
    %v7661 = vrcp.pop %v7644
    %v7662 = vmul.f32 %v7644, %v7661
    %v7663 = vsub.f32 1.0, %v7662
    %v7664 = vmul.f32 %v7661, %v7663
    %v7665 = vadd.f32 %v7661, %v7664
    %vm7666 = vweird.f32 %v7644
    %vm7667 = vweird.f32 %v7661
    %vm7668 = vmor %vm7666, %vm7667
    %v7669 = vsel %vm7668, %v7661, %v7665
    %v7670 = vand.u32 2147483647, %v7644
    %vm7671 = vcmp.eq.f32.partialorder %v7670, 8.507059e+37
    %v7672 = vand.u32 %v7644, 2147483648
    %v7673 = vor.u32 1.1754944e-38, %v7672
    %v7674 = vsel %vm7671, %v7673, %v7669
    %v7675 = vmul.f32 1.0, %v7674
    %v7676 = vrcp.pop %v7645
    %v7677 = vmul.f32 %v7645, %v7676
    %v7678 = vsub.f32 1.0, %v7677
    %v7679 = vmul.f32 %v7676, %v7678
    %v7680 = vadd.f32 %v7676, %v7679
    %vm7681 = vweird.f32 %v7645
    %vm7682 = vweird.f32 %v7676
    %vm7683 = vmor %vm7681, %vm7682
    %v7684 = vsel %vm7683, %v7676, %v7680
    %v7685 = vand.u32 2147483647, %v7645
    %vm7686 = vcmp.eq.f32.partialorder %v7685, 8.507059e+37
    %v7687 = vand.u32 %v7645, 2147483648
    %v7688 = vor.u32 1.1754944e-38, %v7687
    %v7689 = vsel %vm7686, %v7688, %v7684
    %v7690 = vmul.f32 1.0, %v7689
    %v7691 = vtanh.pop %v7575
    %v7692 = vmul.f32 %v7617, %v7340
    %v7693 = vmul.f32 %v7602, %v7633
    %v7694 = vadd.f32 %v7692, %v7693
    %v7695 = vmul.f32 %v7675, %v7343
    %v7696 = vmul.f32 %v7660, %v7691
    %v7697 = vadd.f32 %v7695, %v7696
    %v7698 = vtanh.pop %v7694
    %v7699 = vmul.f32 %v7632, %v7698
    %v7700 = vtanh.pop %v7697
    %v7701 = vmul.f32 %v7690, %v7700
    %7702 = vst [vmem:[%s2762] sm:$0xff] %v7699
    %7703 = vst [vmem:[%s2766 + $0x8] sm:$0xff] %v7701
    %v7704 = vpack.c.bf16 %v7699, %v7699
    %v7705 = vpack.c.bf16 %v7701, %v7701
    %7706 = vmatpush.bf16.msra.mxu0 %v6090
    %7707 = vmatpush.bf16.msra.mxu0 %v6082
    %7708 = vmatpush.bf16.msra.mxu0 %v6074
    %7709 = vmatpush.bf16.msra.mxu0 %v6066
    %7710 = vmatpush.bf16.msra.mxu0 %v6058
    %7711 = vmatpush.bf16.msra.mxu0 %v6050
    %7712 = vmatpush.bf16.msra.mxu0 %v6042
    %7713 = vmatpush.bf16.msra.mxu0 %v6034
    %7714 = vmatmul.bf16.gmra.mxu0 %v7704
    %v7715 = vpop.f32.mrf.mxu0
    %v7716 = vadd.f32 0.0, %v7715
    %v7717 = vpop.f32.mrf.mxu0
    %7718 = vdwg.mxu0
    %7719 = vmatpush.bf16.msra.mxu0 %v6154
    %7720 = vmatpush.bf16.msra.mxu0 %v6146
    %7721 = vmatpush.bf16.msra.mxu0 %v6138
    %7722 = vmatpush.bf16.msra.mxu0 %v6130
    %7723 = vmatpush.bf16.msra.mxu0 %v6122
    %7724 = vmatpush.bf16.msra.mxu0 %v6114
    %7725 = vmatpush.bf16.msra.mxu0 %v6106
    %7726 = vmatpush.bf16.msra.mxu0 %v6098
    %7727 = vmatmul.bf16.gmra.mxu0 %v7705
    %v7728 = vpop.f32.mrf.mxu0
    %v7729 = vadd.f32 %v7716, %v7728
    %v7730 = vpop.f32.mrf.mxu0
    %7731 = vdwg.mxu0
    %7732 = vmatpush.bf16.msra.mxu0 %v6091
    %7733 = vmatpush.bf16.msra.mxu0 %v6083
    %7734 = vmatpush.bf16.msra.mxu0 %v6075
    %7735 = vmatpush.bf16.msra.mxu0 %v6067
    %7736 = vmatpush.bf16.msra.mxu0 %v6059
    %7737 = vmatpush.bf16.msra.mxu0 %v6051
    %7738 = vmatpush.bf16.msra.mxu0 %v6043
    %7739 = vmatpush.bf16.msra.mxu0 %v6035
    %7740 = vmatmul.bf16.gmra.mxu0 %v7704
    %v7741 = vpop.f32.mrf.mxu0
    %v7742 = vadd.f32 0.0, %v7741
    %v7743 = vpop.f32.mrf.mxu0
    %7744 = vdwg.mxu0
    %7745 = vmatpush.bf16.msra.mxu0 %v6155
    %7746 = vmatpush.bf16.msra.mxu0 %v6147
    %7747 = vmatpush.bf16.msra.mxu0 %v6139
    %7748 = vmatpush.bf16.msra.mxu0 %v6131
    %7749 = vmatpush.bf16.msra.mxu0 %v6123
    %7750 = vmatpush.bf16.msra.mxu0 %v6115
    %7751 = vmatpush.bf16.msra.mxu0 %v6107
    %7752 = vmatpush.bf16.msra.mxu0 %v6099
    %7753 = vmatmul.bf16.gmra.mxu0 %v7705
    %v7754 = vpop.f32.mrf.mxu0
    %v7755 = vadd.f32 %v7742, %v7754
    %v7756 = vpop.f32.mrf.mxu0
    %7757 = vdwg.mxu0
    %7758 = vmatpush.bf16.msra.mxu0 %v6092
    %7759 = vmatpush.bf16.msra.mxu0 %v6084
    %7760 = vmatpush.bf16.msra.mxu0 %v6076
    %7761 = vmatpush.bf16.msra.mxu0 %v6068
    %7762 = vmatpush.bf16.msra.mxu0 %v6060
    %7763 = vmatpush.bf16.msra.mxu0 %v6052
    %7764 = vmatpush.bf16.msra.mxu0 %v6044
    %7765 = vmatpush.bf16.msra.mxu0 %v6036
    %7766 = vmatmul.bf16.gmra.mxu0 %v7704
    %v7767 = vpop.f32.mrf.mxu0
    %v7768 = vadd.f32 0.0, %v7767
    %v7769 = vpop.f32.mrf.mxu0
    %7770 = vdwg.mxu0
    %7771 = vmatpush.bf16.msra.mxu0 %v6156
    %7772 = vmatpush.bf16.msra.mxu0 %v6148
    %7773 = vmatpush.bf16.msra.mxu0 %v6140
    %7774 = vmatpush.bf16.msra.mxu0 %v6132
    %7775 = vmatpush.bf16.msra.mxu0 %v6124
    %7776 = vmatpush.bf16.msra.mxu0 %v6116
    %7777 = vmatpush.bf16.msra.mxu0 %v6108
    %7778 = vmatpush.bf16.msra.mxu0 %v6100
    %7779 = vmatmul.bf16.gmra.mxu0 %v7705
    %v7780 = vpop.f32.mrf.mxu0
    %v7781 = vadd.f32 %v7768, %v7780
    %v7782 = vpop.f32.mrf.mxu0
    %7783 = vdwg.mxu0
    %7784 = vmatpush.bf16.msra.mxu0 %v6093
    %7785 = vmatpush.bf16.msra.mxu0 %v6085
    %7786 = vmatpush.bf16.msra.mxu0 %v6077
    %7787 = vmatpush.bf16.msra.mxu0 %v6069
    %7788 = vmatpush.bf16.msra.mxu0 %v6061
    %7789 = vmatpush.bf16.msra.mxu0 %v6053
    %7790 = vmatpush.bf16.msra.mxu0 %v6045
    %7791 = vmatpush.bf16.msra.mxu0 %v6037
    %7792 = vmatmul.bf16.gmra.mxu0 %v7704
    %v7793 = vpop.f32.mrf.mxu0
    %v7794 = vadd.f32 0.0, %v7793
    %v7795 = vpop.f32.mrf.mxu0
    %7796 = vdwg.mxu0
    %7797 = vmatpush.bf16.msra.mxu0 %v6157
    %7798 = vmatpush.bf16.msra.mxu0 %v6149
    %7799 = vmatpush.bf16.msra.mxu0 %v6141
    %7800 = vmatpush.bf16.msra.mxu0 %v6133
    %7801 = vmatpush.bf16.msra.mxu0 %v6125
    %7802 = vmatpush.bf16.msra.mxu0 %v6117
    %7803 = vmatpush.bf16.msra.mxu0 %v6109
    %7804 = vmatpush.bf16.msra.mxu0 %v6101
    %7805 = vmatmul.bf16.gmra.mxu0 %v7705
    %v7806 = vpop.f32.mrf.mxu0
    %v7807 = vadd.f32 %v7794, %v7806
    %v7808 = vpop.f32.mrf.mxu0
    %7809 = vdwg.mxu0
    %7810 = vmatpush.bf16.msra.mxu0 %v6094
    %7811 = vmatpush.bf16.msra.mxu0 %v6086
    %7812 = vmatpush.bf16.msra.mxu0 %v6078
    %7813 = vmatpush.bf16.msra.mxu0 %v6070
    %7814 = vmatpush.bf16.msra.mxu0 %v6062
    %7815 = vmatpush.bf16.msra.mxu0 %v6054
    %7816 = vmatpush.bf16.msra.mxu0 %v6046
    %7817 = vmatpush.bf16.msra.mxu0 %v6038
    %7818 = vmatmul.bf16.gmra.mxu0 %v7704
    %v7819 = vpop.f32.mrf.mxu0
    %v7820 = vadd.f32 0.0, %v7819
    %v7821 = vpop.f32.mrf.mxu0
    %7822 = vdwg.mxu0
    %7823 = vmatpush.bf16.msra.mxu0 %v6158
    %7824 = vmatpush.bf16.msra.mxu0 %v6150
    %7825 = vmatpush.bf16.msra.mxu0 %v6142
    %7826 = vmatpush.bf16.msra.mxu0 %v6134
    %7827 = vmatpush.bf16.msra.mxu0 %v6126
    %7828 = vmatpush.bf16.msra.mxu0 %v6118
    %7829 = vmatpush.bf16.msra.mxu0 %v6110
    %7830 = vmatpush.bf16.msra.mxu0 %v6102
    %7831 = vmatmul.bf16.gmra.mxu0 %v7705
    %v7832 = vpop.f32.mrf.mxu0
    %v7833 = vadd.f32 %v7820, %v7832
    %v7834 = vpop.f32.mrf.mxu0
    %7835 = vdwg.mxu0
    %7836 = vmatpush.bf16.msra.mxu0 %v6095
    %7837 = vmatpush.bf16.msra.mxu0 %v6087
    %7838 = vmatpush.bf16.msra.mxu0 %v6079
    %7839 = vmatpush.bf16.msra.mxu0 %v6071
    %7840 = vmatpush.bf16.msra.mxu0 %v6063
    %7841 = vmatpush.bf16.msra.mxu0 %v6055
    %7842 = vmatpush.bf16.msra.mxu0 %v6047
    %7843 = vmatpush.bf16.msra.mxu0 %v6039
    %7844 = vmatmul.bf16.gmra.mxu0 %v7704
    %v7845 = vpop.f32.mrf.mxu0
    %v7846 = vadd.f32 0.0, %v7845
    %v7847 = vpop.f32.mrf.mxu0
    %7848 = vdwg.mxu0
    %7849 = vmatpush.bf16.msra.mxu0 %v6159
    %7850 = vmatpush.bf16.msra.mxu0 %v6151
    %7851 = vmatpush.bf16.msra.mxu0 %v6143
    %7852 = vmatpush.bf16.msra.mxu0 %v6135
    %7853 = vmatpush.bf16.msra.mxu0 %v6127
    %7854 = vmatpush.bf16.msra.mxu0 %v6119
    %7855 = vmatpush.bf16.msra.mxu0 %v6111
    %7856 = vmatpush.bf16.msra.mxu0 %v6103
    %7857 = vmatmul.bf16.gmra.mxu0 %v7705
    %v7858 = vpop.f32.mrf.mxu0
    %v7859 = vadd.f32 %v7846, %v7858
    %v7860 = vpop.f32.mrf.mxu0
    %7861 = vdwg.mxu0
    %7862 = vmatpush.bf16.msra.mxu0 %v6096
    %7863 = vmatpush.bf16.msra.mxu0 %v6088
    %7864 = vmatpush.bf16.msra.mxu0 %v6080
    %7865 = vmatpush.bf16.msra.mxu0 %v6072
    %7866 = vmatpush.bf16.msra.mxu0 %v6064
    %7867 = vmatpush.bf16.msra.mxu0 %v6056
    %7868 = vmatpush.bf16.msra.mxu0 %v6048
    %7869 = vmatpush.bf16.msra.mxu0 %v6040
    %7870 = vmatmul.bf16.gmra.mxu0 %v7704
    %v7871 = vpop.f32.mrf.mxu0
    %v7872 = vadd.f32 0.0, %v7871
    %v7873 = vpop.f32.mrf.mxu0
    %7874 = vdwg.mxu0
    %7875 = vmatpush.bf16.msra.mxu0 %v6160
    %7876 = vmatpush.bf16.msra.mxu0 %v6152
    %7877 = vmatpush.bf16.msra.mxu0 %v6144
    %7878 = vmatpush.bf16.msra.mxu0 %v6136
    %7879 = vmatpush.bf16.msra.mxu0 %v6128
    %7880 = vmatpush.bf16.msra.mxu0 %v6120
    %7881 = vmatpush.bf16.msra.mxu0 %v6112
    %7882 = vmatpush.bf16.msra.mxu0 %v6104
    %7883 = vmatmul.bf16.gmra.mxu0 %v7705
    %v7884 = vpop.f32.mrf.mxu0
    %v7885 = vadd.f32 %v7872, %v7884
    %v7886 = vpop.f32.mrf.mxu0
    %7887 = vdwg.mxu0
    %7888 = vmatpush.bf16.msra.mxu0 %v6097
    %7889 = vmatpush.bf16.msra.mxu0 %v6089
    %7890 = vmatpush.bf16.msra.mxu0 %v6081
    %7891 = vmatpush.bf16.msra.mxu0 %v6073
    %7892 = vmatpush.bf16.msra.mxu0 %v6065
    %7893 = vmatpush.bf16.msra.mxu0 %v6057
    %7894 = vmatpush.bf16.msra.mxu0 %v6049
    %7895 = vmatpush.bf16.msra.mxu0 %v6041
    %7896 = vmatmul.bf16.gmra.mxu0 %v7704
    %v7897 = vpop.f32.mrf.mxu0
    %v7898 = vadd.f32 0.0, %v7897
    %v7899 = vpop.f32.mrf.mxu0
    %7900 = vdwg.mxu0
    %7901 = vmatpush.bf16.msra.mxu0 %v6161
    %7902 = vmatpush.bf16.msra.mxu0 %v6153
    %7903 = vmatpush.bf16.msra.mxu0 %v6145
    %7904 = vmatpush.bf16.msra.mxu0 %v6137
    %7905 = vmatpush.bf16.msra.mxu0 %v6129
    %7906 = vmatpush.bf16.msra.mxu0 %v6121
    %7907 = vmatpush.bf16.msra.mxu0 %v6113
    %7908 = vmatpush.bf16.msra.mxu0 %v6105
    %7909 = vmatmul.bf16.gmra.mxu0 %v7705
    %v7910 = vpop.f32.mrf.mxu0
    %v7911 = vadd.f32 %v7898, %v7910
    %v7912 = vpop.f32.mrf.mxu0
    %7913 = vdwg.mxu0
    %v7914 = vld [vmem:[%s2625] sm:$0xff]
    %v7915 = vld [vmem:[%s2625 + $0x8] sm:$0xff]
    %v7916 = vld [vmem:[%s2625 + $0x10] sm:$0xff]
    %v7917 = vld [vmem:[%s2625 + $0x18] sm:$0xff]
    %v7918 = vadd.f32 %v7914, %v7729
    %v7919 = vadd.f32 %v7915, %v7755
    %v7920 = vadd.f32 %v7916, %v7781
    %v7921 = vadd.f32 %v7917, %v7807
    %v7922 = vld [vmem:[%s2614 + $0x20] sm:$0xff]
    %v7923 = vld [vmem:[%s2614 + $0x28] sm:$0xff]
    %v7924 = vld [vmem:[%s2614 + $0x30] sm:$0xff]
    %v7925 = vld [vmem:[%s2614 + $0x38] sm:$0xff]
    %v7926 = vadd.f32 %v7922, %v7833
    %v7927 = vadd.f32 %v7923, %v7859
    %v7928 = vadd.f32 %v7924, %v7885
    %v7929 = vadd.f32 %v7925, %v7911
    %v7930 = vxor.u32 %v7918, 2147483648
    %v7931 = vxor.u32 %v7919, 2147483648
    %v7932 = vxor.u32 %v7920, 2147483648
    %v7933 = vmul.f32 %v7930, 1.442695
    %v7934 = vpow.pop %v7933
    %v7935 = vmul.f32 %v7931, 1.442695
    %v7936 = vpow.pop %v7935
    %v7937 = vmul.f32 %v7932, 1.442695
    %v7938 = vpow.pop %v7937
    %v7939 = vadd.f32 %v7934, 1.0
    %v7940 = vadd.f32 %v7936, 1.0
    %v7941 = vadd.f32 %v7938, 1.0
    %v7942 = vrcp.pop %v7939
    %v7943 = vmul.f32 %v7939, %v7942
    %v7944 = vsub.f32 1.0, %v7943
    %v7945 = vmul.f32 %v7942, %v7944
    %v7946 = vadd.f32 %v7942, %v7945
    %vm7947 = vweird.f32 %v7939
    %vm7948 = vweird.f32 %v7942
    %vm7949 = vmor %vm7947, %vm7948
    %v7950 = vsel %vm7949, %v7942, %v7946
    %v7951 = vand.u32 2147483647, %v7939
    %vm7952 = vcmp.eq.f32.partialorder %v7951, 8.507059e+37
    %v7953 = vand.u32 %v7939, 2147483648
    %v7954 = vor.u32 1.1754944e-38, %v7953
    %v7955 = vsel %vm7952, %v7954, %v7950
    %v7956 = vmul.f32 1.0, %v7955
    %v7957 = vrcp.pop %v7940
    %v7958 = vmul.f32 %v7940, %v7957
    %v7959 = vsub.f32 1.0, %v7958
    %v7960 = vmul.f32 %v7957, %v7959
    %v7961 = vadd.f32 %v7957, %v7960
    %vm7962 = vweird.f32 %v7940
    %vm7963 = vweird.f32 %v7957
    %vm7964 = vmor %vm7962, %vm7963
    %v7965 = vsel %vm7964, %v7957, %v7961
    %v7966 = vand.u32 2147483647, %v7940
    %vm7967 = vcmp.eq.f32.partialorder %v7966, 8.507059e+37
    %v7968 = vand.u32 %v7940, 2147483648
    %v7969 = vor.u32 1.1754944e-38, %v7968
    %v7970 = vsel %vm7967, %v7969, %v7965
    %v7971 = vmul.f32 1.0, %v7970
    %v7972 = vrcp.pop %v7941
    %v7973 = vmul.f32 %v7941, %v7972
    %v7974 = vsub.f32 1.0, %v7973
    %v7975 = vmul.f32 %v7972, %v7974
    %v7976 = vadd.f32 %v7972, %v7975
    %vm7977 = vweird.f32 %v7941
    %vm7978 = vweird.f32 %v7972
    %vm7979 = vmor %vm7977, %vm7978
    %v7980 = vsel %vm7979, %v7972, %v7976
    %v7981 = vand.u32 2147483647, %v7941
    %vm7982 = vcmp.eq.f32.partialorder %v7981, 8.507059e+37
    %v7983 = vand.u32 %v7941, 2147483648
    %v7984 = vor.u32 1.1754944e-38, %v7983
    %v7985 = vsel %vm7982, %v7984, %v7980
    %v7986 = vmul.f32 1.0, %v7985
    %v7987 = vtanh.pop %v7921
    %v7988 = vxor.u32 %v7926, 2147483648
    %v7989 = vxor.u32 %v7927, 2147483648
    %v7990 = vxor.u32 %v7928, 2147483648
    %v7991 = vmul.f32 %v7988, 1.442695
    %v7992 = vpow.pop %v7991
    %v7993 = vmul.f32 %v7989, 1.442695
    %v7994 = vpow.pop %v7993
    %v7995 = vmul.f32 %v7990, 1.442695
    %v7996 = vpow.pop %v7995
    %v7997 = vadd.f32 %v7992, 1.0
    %v7998 = vadd.f32 %v7994, 1.0
    %v7999 = vadd.f32 %v7996, 1.0
    %v8000 = vrcp.pop %v7997
    %v8001 = vmul.f32 %v7997, %v8000
    %v8002 = vsub.f32 1.0, %v8001
    %v8003 = vmul.f32 %v8000, %v8002
    %v8004 = vadd.f32 %v8000, %v8003
    %vm8005 = vweird.f32 %v7997
    %vm8006 = vweird.f32 %v8000
    %vm8007 = vmor %vm8005, %vm8006
    %v8008 = vsel %vm8007, %v8000, %v8004
    %v8009 = vand.u32 2147483647, %v7997
    %vm8010 = vcmp.eq.f32.partialorder %v8009, 8.507059e+37
    %v8011 = vand.u32 %v7997, 2147483648
    %v8012 = vor.u32 1.1754944e-38, %v8011
    %v8013 = vsel %vm8010, %v8012, %v8008
    %v8014 = vmul.f32 1.0, %v8013
    %v8015 = vrcp.pop %v7998
    %v8016 = vmul.f32 %v7998, %v8015
    %v8017 = vsub.f32 1.0, %v8016
    %v8018 = vmul.f32 %v8015, %v8017
    %v8019 = vadd.f32 %v8015, %v8018
    %vm8020 = vweird.f32 %v7998
    %vm8021 = vweird.f32 %v8015
    %vm8022 = vmor %vm8020, %vm8021
    %v8023 = vsel %vm8022, %v8015, %v8019
    %v8024 = vand.u32 2147483647, %v7998
    %vm8025 = vcmp.eq.f32.partialorder %v8024, 8.507059e+37
    %v8026 = vand.u32 %v7998, 2147483648
    %v8027 = vor.u32 1.1754944e-38, %v8026
    %v8028 = vsel %vm8025, %v8027, %v8023
    %v8029 = vmul.f32 1.0, %v8028
    %v8030 = vrcp.pop %v7999
    %v8031 = vmul.f32 %v7999, %v8030
    %v8032 = vsub.f32 1.0, %v8031
    %v8033 = vmul.f32 %v8030, %v8032
    %v8034 = vadd.f32 %v8030, %v8033
    %vm8035 = vweird.f32 %v7999
    %vm8036 = vweird.f32 %v8030
    %vm8037 = vmor %vm8035, %vm8036
    %v8038 = vsel %vm8037, %v8030, %v8034
    %v8039 = vand.u32 2147483647, %v7999
    %vm8040 = vcmp.eq.f32.partialorder %v8039, 8.507059e+37
    %v8041 = vand.u32 %v7999, 2147483648
    %v8042 = vor.u32 1.1754944e-38, %v8041
    %v8043 = vsel %vm8040, %v8042, %v8038
    %v8044 = vmul.f32 1.0, %v8043
    %v8045 = vtanh.pop %v7929
    %v8046 = vmul.f32 %v7971, %v7694
    %v8047 = vmul.f32 %v7956, %v7987
    %v8048 = vadd.f32 %v8046, %v8047
    %v8049 = vmul.f32 %v8029, %v7697
    %v8050 = vmul.f32 %v8014, %v8045
    %v8051 = vadd.f32 %v8049, %v8050
    %v8052 = vtanh.pop %v8048
    %v8053 = vmul.f32 %v7986, %v8052
    %v8054 = vtanh.pop %v8051
    %v8055 = vmul.f32 %v8044, %v8054
    %8056 = vst [vmem:[%s2766] sm:$0xff] %v8053
    %8057 = vst [vmem:[%s2762 + $0x8] sm:$0xff] %v8055
    %v8058 = vpack.c.bf16 %v8053, %v8053
    %v8059 = vpack.c.bf16 %v8055, %v8055
    %8060 = vmatpush.bf16.msra.mxu0 %v6090
    %8061 = vmatpush.bf16.msra.mxu0 %v6082
    %8062 = vmatpush.bf16.msra.mxu0 %v6074
    %8063 = vmatpush.bf16.msra.mxu0 %v6066
    %8064 = vmatpush.bf16.msra.mxu0 %v6058
    %8065 = vmatpush.bf16.msra.mxu0 %v6050
    %8066 = vmatpush.bf16.msra.mxu0 %v6042
    %8067 = vmatpush.bf16.msra.mxu0 %v6034
    %8068 = vmatmul.bf16.gmra.mxu0 %v8058
    %v8069 = vpop.f32.mrf.mxu0
    %v8070 = vadd.f32 0.0, %v8069
    %v8071 = vpop.f32.mrf.mxu0
    %8072 = vdwg.mxu0
    %8073 = vmatpush.bf16.msra.mxu0 %v6154
    %8074 = vmatpush.bf16.msra.mxu0 %v6146
    %8075 = vmatpush.bf16.msra.mxu0 %v6138
    %8076 = vmatpush.bf16.msra.mxu0 %v6130
    %8077 = vmatpush.bf16.msra.mxu0 %v6122
    %8078 = vmatpush.bf16.msra.mxu0 %v6114
    %8079 = vmatpush.bf16.msra.mxu0 %v6106
    %8080 = vmatpush.bf16.msra.mxu0 %v6098
    %8081 = vmatmul.bf16.gmra.mxu0 %v8059
    %v8082 = vpop.f32.mrf.mxu0
    %v8083 = vadd.f32 %v8070, %v8082
    %v8084 = vpop.f32.mrf.mxu0
    %8085 = vdwg.mxu0
    %8086 = vmatpush.bf16.msra.mxu0 %v6091
    %8087 = vmatpush.bf16.msra.mxu0 %v6083
    %8088 = vmatpush.bf16.msra.mxu0 %v6075
    %8089 = vmatpush.bf16.msra.mxu0 %v6067
    %8090 = vmatpush.bf16.msra.mxu0 %v6059
    %8091 = vmatpush.bf16.msra.mxu0 %v6051
    %8092 = vmatpush.bf16.msra.mxu0 %v6043
    %8093 = vmatpush.bf16.msra.mxu0 %v6035
    %8094 = vmatmul.bf16.gmra.mxu0 %v8058
    %v8095 = vpop.f32.mrf.mxu0
    %v8096 = vadd.f32 0.0, %v8095
    %v8097 = vpop.f32.mrf.mxu0
    %8098 = vdwg.mxu0
    %8099 = vmatpush.bf16.msra.mxu0 %v6155
    %8100 = vmatpush.bf16.msra.mxu0 %v6147
    %8101 = vmatpush.bf16.msra.mxu0 %v6139
    %8102 = vmatpush.bf16.msra.mxu0 %v6131
    %8103 = vmatpush.bf16.msra.mxu0 %v6123
    %8104 = vmatpush.bf16.msra.mxu0 %v6115
    %8105 = vmatpush.bf16.msra.mxu0 %v6107
    %8106 = vmatpush.bf16.msra.mxu0 %v6099
    %8107 = vmatmul.bf16.gmra.mxu0 %v8059
    %v8108 = vpop.f32.mrf.mxu0
    %v8109 = vadd.f32 %v8096, %v8108
    %v8110 = vpop.f32.mrf.mxu0
    %8111 = vdwg.mxu0
    %8112 = vmatpush.bf16.msra.mxu0 %v6092
    %8113 = vmatpush.bf16.msra.mxu0 %v6084
    %8114 = vmatpush.bf16.msra.mxu0 %v6076
    %8115 = vmatpush.bf16.msra.mxu0 %v6068
    %8116 = vmatpush.bf16.msra.mxu0 %v6060
    %8117 = vmatpush.bf16.msra.mxu0 %v6052
    %8118 = vmatpush.bf16.msra.mxu0 %v6044
    %8119 = vmatpush.bf16.msra.mxu0 %v6036
    %8120 = vmatmul.bf16.gmra.mxu0 %v8058
    %v8121 = vpop.f32.mrf.mxu0
    %v8122 = vadd.f32 0.0, %v8121
    %v8123 = vpop.f32.mrf.mxu0
    %8124 = vdwg.mxu0
    %8125 = vmatpush.bf16.msra.mxu0 %v6156
    %8126 = vmatpush.bf16.msra.mxu0 %v6148
    %8127 = vmatpush.bf16.msra.mxu0 %v6140
    %8128 = vmatpush.bf16.msra.mxu0 %v6132
    %8129 = vmatpush.bf16.msra.mxu0 %v6124
    %8130 = vmatpush.bf16.msra.mxu0 %v6116
    %8131 = vmatpush.bf16.msra.mxu0 %v6108
    %8132 = vmatpush.bf16.msra.mxu0 %v6100
    %8133 = vmatmul.bf16.gmra.mxu0 %v8059
    %v8134 = vpop.f32.mrf.mxu0
    %v8135 = vadd.f32 %v8122, %v8134
    %v8136 = vpop.f32.mrf.mxu0
    %8137 = vdwg.mxu0
    %8138 = vmatpush.bf16.msra.mxu0 %v6093
    %8139 = vmatpush.bf16.msra.mxu0 %v6085
    %8140 = vmatpush.bf16.msra.mxu0 %v6077
    %8141 = vmatpush.bf16.msra.mxu0 %v6069
    %8142 = vmatpush.bf16.msra.mxu0 %v6061
    %8143 = vmatpush.bf16.msra.mxu0 %v6053
    %8144 = vmatpush.bf16.msra.mxu0 %v6045
    %8145 = vmatpush.bf16.msra.mxu0 %v6037
    %8146 = vmatmul.bf16.gmra.mxu0 %v8058
    %v8147 = vpop.f32.mrf.mxu0
    %v8148 = vadd.f32 0.0, %v8147
    %v8149 = vpop.f32.mrf.mxu0
    %8150 = vdwg.mxu0
    %8151 = vmatpush.bf16.msra.mxu0 %v6157
    %8152 = vmatpush.bf16.msra.mxu0 %v6149
    %8153 = vmatpush.bf16.msra.mxu0 %v6141
    %8154 = vmatpush.bf16.msra.mxu0 %v6133
    %8155 = vmatpush.bf16.msra.mxu0 %v6125
    %8156 = vmatpush.bf16.msra.mxu0 %v6117
    %8157 = vmatpush.bf16.msra.mxu0 %v6109
    %8158 = vmatpush.bf16.msra.mxu0 %v6101
    %8159 = vmatmul.bf16.gmra.mxu0 %v8059
    %v8160 = vpop.f32.mrf.mxu0
    %v8161 = vadd.f32 %v8148, %v8160
    %v8162 = vpop.f32.mrf.mxu0
    %8163 = vdwg.mxu0
    %8164 = vmatpush.bf16.msra.mxu0 %v6094
    %8165 = vmatpush.bf16.msra.mxu0 %v6086
    %8166 = vmatpush.bf16.msra.mxu0 %v6078
    %8167 = vmatpush.bf16.msra.mxu0 %v6070
    %8168 = vmatpush.bf16.msra.mxu0 %v6062
    %8169 = vmatpush.bf16.msra.mxu0 %v6054
    %8170 = vmatpush.bf16.msra.mxu0 %v6046
    %8171 = vmatpush.bf16.msra.mxu0 %v6038
    %8172 = vmatmul.bf16.gmra.mxu0 %v8058
    %v8173 = vpop.f32.mrf.mxu0
    %v8174 = vadd.f32 0.0, %v8173
    %v8175 = vpop.f32.mrf.mxu0
    %8176 = vdwg.mxu0
    %8177 = vmatpush.bf16.msra.mxu0 %v6158
    %8178 = vmatpush.bf16.msra.mxu0 %v6150
    %8179 = vmatpush.bf16.msra.mxu0 %v6142
    %8180 = vmatpush.bf16.msra.mxu0 %v6134
    %8181 = vmatpush.bf16.msra.mxu0 %v6126
    %8182 = vmatpush.bf16.msra.mxu0 %v6118
    %8183 = vmatpush.bf16.msra.mxu0 %v6110
    %8184 = vmatpush.bf16.msra.mxu0 %v6102
    %8185 = vmatmul.bf16.gmra.mxu0 %v8059
    %v8186 = vpop.f32.mrf.mxu0
    %v8187 = vadd.f32 %v8174, %v8186
    %v8188 = vpop.f32.mrf.mxu0
    %8189 = vdwg.mxu0
    %8190 = vmatpush.bf16.msra.mxu0 %v6095
    %8191 = vmatpush.bf16.msra.mxu0 %v6087
    %8192 = vmatpush.bf16.msra.mxu0 %v6079
    %8193 = vmatpush.bf16.msra.mxu0 %v6071
    %8194 = vmatpush.bf16.msra.mxu0 %v6063
    %8195 = vmatpush.bf16.msra.mxu0 %v6055
    %8196 = vmatpush.bf16.msra.mxu0 %v6047
    %8197 = vmatpush.bf16.msra.mxu0 %v6039
    %8198 = vmatmul.bf16.gmra.mxu0 %v8058
    %v8199 = vpop.f32.mrf.mxu0
    %v8200 = vadd.f32 0.0, %v8199
    %v8201 = vpop.f32.mrf.mxu0
    %8202 = vdwg.mxu0
    %8203 = vmatpush.bf16.msra.mxu0 %v6159
    %8204 = vmatpush.bf16.msra.mxu0 %v6151
    %8205 = vmatpush.bf16.msra.mxu0 %v6143
    %8206 = vmatpush.bf16.msra.mxu0 %v6135
    %8207 = vmatpush.bf16.msra.mxu0 %v6127
    %8208 = vmatpush.bf16.msra.mxu0 %v6119
    %8209 = vmatpush.bf16.msra.mxu0 %v6111
    %8210 = vmatpush.bf16.msra.mxu0 %v6103
    %8211 = vmatmul.bf16.gmra.mxu0 %v8059
    %v8212 = vpop.f32.mrf.mxu0
    %v8213 = vadd.f32 %v8200, %v8212
    %v8214 = vpop.f32.mrf.mxu0
    %8215 = vdwg.mxu0
    %8216 = vmatpush.bf16.msra.mxu0 %v6096
    %8217 = vmatpush.bf16.msra.mxu0 %v6088
    %8218 = vmatpush.bf16.msra.mxu0 %v6080
    %8219 = vmatpush.bf16.msra.mxu0 %v6072
    %8220 = vmatpush.bf16.msra.mxu0 %v6064
    %8221 = vmatpush.bf16.msra.mxu0 %v6056
    %8222 = vmatpush.bf16.msra.mxu0 %v6048
    %8223 = vmatpush.bf16.msra.mxu0 %v6040
    %8224 = vmatmul.bf16.gmra.mxu0 %v8058
    %v8225 = vpop.f32.mrf.mxu0
    %v8226 = vadd.f32 0.0, %v8225
    %v8227 = vpop.f32.mrf.mxu0
    %8228 = vdwg.mxu0
    %8229 = vmatpush.bf16.msra.mxu0 %v6160
    %8230 = vmatpush.bf16.msra.mxu0 %v6152
    %8231 = vmatpush.bf16.msra.mxu0 %v6144
    %8232 = vmatpush.bf16.msra.mxu0 %v6136
    %8233 = vmatpush.bf16.msra.mxu0 %v6128
    %8234 = vmatpush.bf16.msra.mxu0 %v6120
    %8235 = vmatpush.bf16.msra.mxu0 %v6112
    %8236 = vmatpush.bf16.msra.mxu0 %v6104
    %8237 = vmatmul.bf16.gmra.mxu0 %v8059
    %v8238 = vpop.f32.mrf.mxu0
    %v8239 = vadd.f32 %v8226, %v8238
    %v8240 = vpop.f32.mrf.mxu0
    %8241 = vdwg.mxu0
    %8242 = vmatpush.bf16.msra.mxu0 %v6097
    %8243 = vmatpush.bf16.msra.mxu0 %v6089
    %8244 = vmatpush.bf16.msra.mxu0 %v6081
    %8245 = vmatpush.bf16.msra.mxu0 %v6073
    %8246 = vmatpush.bf16.msra.mxu0 %v6065
    %8247 = vmatpush.bf16.msra.mxu0 %v6057
    %8248 = vmatpush.bf16.msra.mxu0 %v6049
    %8249 = vmatpush.bf16.msra.mxu0 %v6041
    %8250 = vmatmul.bf16.gmra.mxu0 %v8058
    %v8251 = vpop.f32.mrf.mxu0
    %v8252 = vadd.f32 0.0, %v8251
    %v8253 = vpop.f32.mrf.mxu0
    %8254 = vdwg.mxu0
    %8255 = vmatpush.bf16.msra.mxu0 %v6161
    %8256 = vmatpush.bf16.msra.mxu0 %v6153
    %8257 = vmatpush.bf16.msra.mxu0 %v6145
    %8258 = vmatpush.bf16.msra.mxu0 %v6137
    %8259 = vmatpush.bf16.msra.mxu0 %v6129
    %8260 = vmatpush.bf16.msra.mxu0 %v6121
    %8261 = vmatpush.bf16.msra.mxu0 %v6113
    %8262 = vmatpush.bf16.msra.mxu0 %v6105
    %8263 = vmatmul.bf16.gmra.mxu0 %v8059
    %v8264 = vpop.f32.mrf.mxu0
    %v8265 = vadd.f32 %v8252, %v8264
    %v8266 = vpop.f32.mrf.mxu0
    %8267 = vdwg.mxu0
    %v8268 = vld [vmem:[%s2259] sm:$0xff]
    %v8269 = vld [vmem:[%s2259 + $0x8] sm:$0xff]
    %v8270 = vld [vmem:[%s2259 + $0x10] sm:$0xff]
    %v8271 = vld [vmem:[%s2259 + $0x18] sm:$0xff]
    %v8272 = vadd.f32 %v8268, %v8083
    %v8273 = vadd.f32 %v8269, %v8109
    %v8274 = vadd.f32 %v8270, %v8135
    %v8275 = vadd.f32 %v8271, %v8161
    %v8276 = vld [vmem:[%s2248 + $0x20] sm:$0xff]
    %v8277 = vld [vmem:[%s2248 + $0x28] sm:$0xff]
    %v8278 = vld [vmem:[%s2248 + $0x30] sm:$0xff]
    %v8279 = vld [vmem:[%s2248 + $0x38] sm:$0xff]
    %v8280 = vadd.f32 %v8276, %v8187
    %v8281 = vadd.f32 %v8277, %v8213
    %v8282 = vadd.f32 %v8278, %v8239
    %v8283 = vadd.f32 %v8279, %v8265
    %v8284 = vxor.u32 %v8272, 2147483648
    %v8285 = vxor.u32 %v8273, 2147483648
    %v8286 = vxor.u32 %v8274, 2147483648
    %v8287 = vmul.f32 %v8284, 1.442695
    %v8288 = vpow.pop %v8287
    %v8289 = vmul.f32 %v8285, 1.442695
    %v8290 = vpow.pop %v8289
    %v8291 = vmul.f32 %v8286, 1.442695
    %v8292 = vpow.pop %v8291
    %v8293 = vadd.f32 %v8288, 1.0
    %v8294 = vadd.f32 %v8290, 1.0
    %v8295 = vadd.f32 %v8292, 1.0
    %v8296 = vrcp.pop %v8293
    %v8297 = vmul.f32 %v8293, %v8296
    %v8298 = vsub.f32 1.0, %v8297
    %v8299 = vmul.f32 %v8296, %v8298
    %v8300 = vadd.f32 %v8296, %v8299
    %vm8301 = vweird.f32 %v8293
    %vm8302 = vweird.f32 %v8296
    %vm8303 = vmor %vm8301, %vm8302
    %v8304 = vsel %vm8303, %v8296, %v8300
    %v8305 = vand.u32 2147483647, %v8293
    %vm8306 = vcmp.eq.f32.partialorder %v8305, 8.507059e+37
    %v8307 = vand.u32 %v8293, 2147483648
    %v8308 = vor.u32 1.1754944e-38, %v8307
    %v8309 = vsel %vm8306, %v8308, %v8304
    %v8310 = vmul.f32 1.0, %v8309
    %v8311 = vrcp.pop %v8294
    %v8312 = vmul.f32 %v8294, %v8311
    %v8313 = vsub.f32 1.0, %v8312
    %v8314 = vmul.f32 %v8311, %v8313
    %v8315 = vadd.f32 %v8311, %v8314
    %vm8316 = vweird.f32 %v8294
    %vm8317 = vweird.f32 %v8311
    %vm8318 = vmor %vm8316, %vm8317
    %v8319 = vsel %vm8318, %v8311, %v8315
    %v8320 = vand.u32 2147483647, %v8294
    %vm8321 = vcmp.eq.f32.partialorder %v8320, 8.507059e+37
    %v8322 = vand.u32 %v8294, 2147483648
    %v8323 = vor.u32 1.1754944e-38, %v8322
    %v8324 = vsel %vm8321, %v8323, %v8319
    %v8325 = vmul.f32 1.0, %v8324
    %v8326 = vrcp.pop %v8295
    %v8327 = vmul.f32 %v8295, %v8326
    %v8328 = vsub.f32 1.0, %v8327
    %v8329 = vmul.f32 %v8326, %v8328
    %v8330 = vadd.f32 %v8326, %v8329
    %vm8331 = vweird.f32 %v8295
    %vm8332 = vweird.f32 %v8326
    %vm8333 = vmor %vm8331, %vm8332
    %v8334 = vsel %vm8333, %v8326, %v8330
    %v8335 = vand.u32 2147483647, %v8295
    %vm8336 = vcmp.eq.f32.partialorder %v8335, 8.507059e+37
    %v8337 = vand.u32 %v8295, 2147483648
    %v8338 = vor.u32 1.1754944e-38, %v8337
    %v8339 = vsel %vm8336, %v8338, %v8334
    %v8340 = vmul.f32 1.0, %v8339
    %v8341 = vtanh.pop %v8275
    %v8342 = vxor.u32 %v8280, 2147483648
    %v8343 = vxor.u32 %v8281, 2147483648
    %v8344 = vxor.u32 %v8282, 2147483648
    %v8345 = vmul.f32 %v8342, 1.442695
    %v8346 = vpow.pop %v8345
    %v8347 = vmul.f32 %v8343, 1.442695
    %v8348 = vpow.pop %v8347
    %v8349 = vmul.f32 %v8344, 1.442695
    %v8350 = vpow.pop %v8349
    %v8351 = vadd.f32 %v8346, 1.0
    %v8352 = vadd.f32 %v8348, 1.0
    %v8353 = vadd.f32 %v8350, 1.0
    %v8354 = vrcp.pop %v8351
    %v8355 = vmul.f32 %v8351, %v8354
    %v8356 = vsub.f32 1.0, %v8355
    %v8357 = vmul.f32 %v8354, %v8356
    %v8358 = vadd.f32 %v8354, %v8357
    %vm8359 = vweird.f32 %v8351
    %vm8360 = vweird.f32 %v8354
    %vm8361 = vmor %vm8359, %vm8360
    %v8362 = vsel %vm8361, %v8354, %v8358
    %v8363 = vand.u32 2147483647, %v8351
    %vm8364 = vcmp.eq.f32.partialorder %v8363, 8.507059e+37
    %v8365 = vand.u32 %v8351, 2147483648
    %v8366 = vor.u32 1.1754944e-38, %v8365
    %v8367 = vsel %vm8364, %v8366, %v8362
    %v8368 = vmul.f32 1.0, %v8367
    %v8369 = vrcp.pop %v8352
    %v8370 = vmul.f32 %v8352, %v8369
    %v8371 = vsub.f32 1.0, %v8370
    %v8372 = vmul.f32 %v8369, %v8371
    %v8373 = vadd.f32 %v8369, %v8372
    %vm8374 = vweird.f32 %v8352
    %vm8375 = vweird.f32 %v8369
    %vm8376 = vmor %vm8374, %vm8375
    %v8377 = vsel %vm8376, %v8369, %v8373
    %v8378 = vand.u32 2147483647, %v8352
    %vm8379 = vcmp.eq.f32.partialorder %v8378, 8.507059e+37
    %v8380 = vand.u32 %v8352, 2147483648
    %v8381 = vor.u32 1.1754944e-38, %v8380
    %v8382 = vsel %vm8379, %v8381, %v8377
    %v8383 = vmul.f32 1.0, %v8382
    %v8384 = vrcp.pop %v8353
    %v8385 = vmul.f32 %v8353, %v8384
    %v8386 = vsub.f32 1.0, %v8385
    %v8387 = vmul.f32 %v8384, %v8386
    %v8388 = vadd.f32 %v8384, %v8387
    %vm8389 = vweird.f32 %v8353
    %vm8390 = vweird.f32 %v8384
    %vm8391 = vmor %vm8389, %vm8390
    %v8392 = vsel %vm8391, %v8384, %v8388
    %v8393 = vand.u32 2147483647, %v8353
    %vm8394 = vcmp.eq.f32.partialorder %v8393, 8.507059e+37
    %v8395 = vand.u32 %v8353, 2147483648
    %v8396 = vor.u32 1.1754944e-38, %v8395
    %v8397 = vsel %vm8394, %v8396, %v8392
    %v8398 = vmul.f32 1.0, %v8397
    %v8399 = vtanh.pop %v8283
    %v8400 = vmul.f32 %v8325, %v8048
    %v8401 = vmul.f32 %v8310, %v8341
    %v8402 = vadd.f32 %v8400, %v8401
    %v8403 = vmul.f32 %v8383, %v8051
    %v8404 = vmul.f32 %v8368, %v8399
    %v8405 = vadd.f32 %v8403, %v8404
    %v8406 = vtanh.pop %v8402
    %v8407 = vmul.f32 %v8340, %v8406
    %v8408 = vtanh.pop %v8405
    %v8409 = vmul.f32 %v8398, %v8408
    %8410 = vst [vmem:[%s2400] sm:$0xff] %v8407
    %8411 = vst [vmem:[%s2396 + $0x8] sm:$0xff] %v8409
    %v8412 = vpack.c.bf16 %v8407, %v8407
    %v8413 = vpack.c.bf16 %v8409, %v8409
    %8414 = vmatpush.bf16.msra.mxu0 %v6090
    %8415 = vmatpush.bf16.msra.mxu0 %v6082
    %8416 = vmatpush.bf16.msra.mxu0 %v6074
    %8417 = vmatpush.bf16.msra.mxu0 %v6066
    %8418 = vmatpush.bf16.msra.mxu0 %v6058
    %8419 = vmatpush.bf16.msra.mxu0 %v6050
    %8420 = vmatpush.bf16.msra.mxu0 %v6042
    %8421 = vmatpush.bf16.msra.mxu0 %v6034
    %8422 = vmatmul.bf16.gmra.mxu0 %v8412
    %v8423 = vpop.f32.mrf.mxu0
    %v8424 = vadd.f32 0.0, %v8423
    %v8425 = vpop.f32.mrf.mxu0
    %8426 = vdwg.mxu0
    %8427 = vmatpush.bf16.msra.mxu0 %v6154
    %8428 = vmatpush.bf16.msra.mxu0 %v6146
    %8429 = vmatpush.bf16.msra.mxu0 %v6138
    %8430 = vmatpush.bf16.msra.mxu0 %v6130
    %8431 = vmatpush.bf16.msra.mxu0 %v6122
    %8432 = vmatpush.bf16.msra.mxu0 %v6114
    %8433 = vmatpush.bf16.msra.mxu0 %v6106
    %8434 = vmatpush.bf16.msra.mxu0 %v6098
    %8435 = vmatmul.bf16.gmra.mxu0 %v8413
    %v8436 = vpop.f32.mrf.mxu0
    %v8437 = vadd.f32 %v8424, %v8436
    %v8438 = vpop.f32.mrf.mxu0
    %8439 = vdwg.mxu0
    %8440 = vmatpush.bf16.msra.mxu0 %v6091
    %8441 = vmatpush.bf16.msra.mxu0 %v6083
    %8442 = vmatpush.bf16.msra.mxu0 %v6075
    %8443 = vmatpush.bf16.msra.mxu0 %v6067
    %8444 = vmatpush.bf16.msra.mxu0 %v6059
    %8445 = vmatpush.bf16.msra.mxu0 %v6051
    %8446 = vmatpush.bf16.msra.mxu0 %v6043
    %8447 = vmatpush.bf16.msra.mxu0 %v6035
    %8448 = vmatmul.bf16.gmra.mxu0 %v8412
    %v8449 = vpop.f32.mrf.mxu0
    %v8450 = vadd.f32 0.0, %v8449
    %v8451 = vpop.f32.mrf.mxu0
    %8452 = vdwg.mxu0
    %8453 = vmatpush.bf16.msra.mxu0 %v6155
    %8454 = vmatpush.bf16.msra.mxu0 %v6147
    %8455 = vmatpush.bf16.msra.mxu0 %v6139
    %8456 = vmatpush.bf16.msra.mxu0 %v6131
    %8457 = vmatpush.bf16.msra.mxu0 %v6123
    %8458 = vmatpush.bf16.msra.mxu0 %v6115
    %8459 = vmatpush.bf16.msra.mxu0 %v6107
    %8460 = vmatpush.bf16.msra.mxu0 %v6099
    %8461 = vmatmul.bf16.gmra.mxu0 %v8413
    %v8462 = vpop.f32.mrf.mxu0
    %v8463 = vadd.f32 %v8450, %v8462
    %v8464 = vpop.f32.mrf.mxu0
    %8465 = vdwg.mxu0
    %8466 = vmatpush.bf16.msra.mxu0 %v6092
    %8467 = vmatpush.bf16.msra.mxu0 %v6084
    %8468 = vmatpush.bf16.msra.mxu0 %v6076
    %8469 = vmatpush.bf16.msra.mxu0 %v6068
    %8470 = vmatpush.bf16.msra.mxu0 %v6060
    %8471 = vmatpush.bf16.msra.mxu0 %v6052
    %8472 = vmatpush.bf16.msra.mxu0 %v6044
    %8473 = vmatpush.bf16.msra.mxu0 %v6036
    %8474 = vmatmul.bf16.gmra.mxu0 %v8412
    %v8475 = vpop.f32.mrf.mxu0
    %v8476 = vadd.f32 0.0, %v8475
    %v8477 = vpop.f32.mrf.mxu0
    %8478 = vdwg.mxu0
    %8479 = vmatpush.bf16.msra.mxu0 %v6156
    %8480 = vmatpush.bf16.msra.mxu0 %v6148
    %8481 = vmatpush.bf16.msra.mxu0 %v6140
    %8482 = vmatpush.bf16.msra.mxu0 %v6132
    %8483 = vmatpush.bf16.msra.mxu0 %v6124
    %8484 = vmatpush.bf16.msra.mxu0 %v6116
    %8485 = vmatpush.bf16.msra.mxu0 %v6108
    %8486 = vmatpush.bf16.msra.mxu0 %v6100
    %8487 = vmatmul.bf16.gmra.mxu0 %v8413
    %v8488 = vpop.f32.mrf.mxu0
    %v8489 = vadd.f32 %v8476, %v8488
    %v8490 = vpop.f32.mrf.mxu0
    %8491 = vdwg.mxu0
    %8492 = vmatpush.bf16.msra.mxu0 %v6093
    %8493 = vmatpush.bf16.msra.mxu0 %v6085
    %8494 = vmatpush.bf16.msra.mxu0 %v6077
    %8495 = vmatpush.bf16.msra.mxu0 %v6069
    %8496 = vmatpush.bf16.msra.mxu0 %v6061
    %8497 = vmatpush.bf16.msra.mxu0 %v6053
    %8498 = vmatpush.bf16.msra.mxu0 %v6045
    %8499 = vmatpush.bf16.msra.mxu0 %v6037
    %8500 = vmatmul.bf16.gmra.mxu0 %v8412
    %v8501 = vpop.f32.mrf.mxu0
    %v8502 = vadd.f32 0.0, %v8501
    %v8503 = vpop.f32.mrf.mxu0
    %8504 = vdwg.mxu0
    %8505 = vmatpush.bf16.msra.mxu0 %v6157
    %8506 = vmatpush.bf16.msra.mxu0 %v6149
    %8507 = vmatpush.bf16.msra.mxu0 %v6141
    %8508 = vmatpush.bf16.msra.mxu0 %v6133
    %8509 = vmatpush.bf16.msra.mxu0 %v6125
    %8510 = vmatpush.bf16.msra.mxu0 %v6117
    %8511 = vmatpush.bf16.msra.mxu0 %v6109
    %8512 = vmatpush.bf16.msra.mxu0 %v6101
    %8513 = vmatmul.bf16.gmra.mxu0 %v8413
    %v8514 = vpop.f32.mrf.mxu0
    %v8515 = vadd.f32 %v8502, %v8514
    %v8516 = vpop.f32.mrf.mxu0
    %8517 = vdwg.mxu0
    %8518 = vmatpush.bf16.msra.mxu0 %v6094
    %8519 = vmatpush.bf16.msra.mxu0 %v6086
    %8520 = vmatpush.bf16.msra.mxu0 %v6078
    %8521 = vmatpush.bf16.msra.mxu0 %v6070
    %8522 = vmatpush.bf16.msra.mxu0 %v6062
    %8523 = vmatpush.bf16.msra.mxu0 %v6054
    %8524 = vmatpush.bf16.msra.mxu0 %v6046
    %8525 = vmatpush.bf16.msra.mxu0 %v6038
    %8526 = vmatmul.bf16.gmra.mxu0 %v8412
    %v8527 = vpop.f32.mrf.mxu0
    %v8528 = vadd.f32 0.0, %v8527
    %v8529 = vpop.f32.mrf.mxu0
    %8530 = vdwg.mxu0
    %8531 = vmatpush.bf16.msra.mxu0 %v6158
    %8532 = vmatpush.bf16.msra.mxu0 %v6150
    %8533 = vmatpush.bf16.msra.mxu0 %v6142
    %8534 = vmatpush.bf16.msra.mxu0 %v6134
    %8535 = vmatpush.bf16.msra.mxu0 %v6126
    %8536 = vmatpush.bf16.msra.mxu0 %v6118
    %8537 = vmatpush.bf16.msra.mxu0 %v6110
    %8538 = vmatpush.bf16.msra.mxu0 %v6102
    %8539 = vmatmul.bf16.gmra.mxu0 %v8413
    %v8540 = vpop.f32.mrf.mxu0
    %v8541 = vadd.f32 %v8528, %v8540
    %v8542 = vpop.f32.mrf.mxu0
    %8543 = vdwg.mxu0
    %8544 = vmatpush.bf16.msra.mxu0 %v6095
    %8545 = vmatpush.bf16.msra.mxu0 %v6087
    %8546 = vmatpush.bf16.msra.mxu0 %v6079
    %8547 = vmatpush.bf16.msra.mxu0 %v6071
    %8548 = vmatpush.bf16.msra.mxu0 %v6063
    %8549 = vmatpush.bf16.msra.mxu0 %v6055
    %8550 = vmatpush.bf16.msra.mxu0 %v6047
    %8551 = vmatpush.bf16.msra.mxu0 %v6039
    %8552 = vmatmul.bf16.gmra.mxu0 %v8412
    %v8553 = vpop.f32.mrf.mxu0
    %v8554 = vadd.f32 0.0, %v8553
    %v8555 = vpop.f32.mrf.mxu0
    %8556 = vdwg.mxu0
    %8557 = vmatpush.bf16.msra.mxu0 %v6159
    %8558 = vmatpush.bf16.msra.mxu0 %v6151
    %8559 = vmatpush.bf16.msra.mxu0 %v6143
    %8560 = vmatpush.bf16.msra.mxu0 %v6135
    %8561 = vmatpush.bf16.msra.mxu0 %v6127
    %8562 = vmatpush.bf16.msra.mxu0 %v6119
    %8563 = vmatpush.bf16.msra.mxu0 %v6111
    %8564 = vmatpush.bf16.msra.mxu0 %v6103
    %8565 = vmatmul.bf16.gmra.mxu0 %v8413
    %v8566 = vpop.f32.mrf.mxu0
    %v8567 = vadd.f32 %v8554, %v8566
    %v8568 = vpop.f32.mrf.mxu0
    %8569 = vdwg.mxu0
    %8570 = vmatpush.bf16.msra.mxu0 %v6096
    %8571 = vmatpush.bf16.msra.mxu0 %v6088
    %8572 = vmatpush.bf16.msra.mxu0 %v6080
    %8573 = vmatpush.bf16.msra.mxu0 %v6072
    %8574 = vmatpush.bf16.msra.mxu0 %v6064
    %8575 = vmatpush.bf16.msra.mxu0 %v6056
    %8576 = vmatpush.bf16.msra.mxu0 %v6048
    %8577 = vmatpush.bf16.msra.mxu0 %v6040
    %8578 = vmatmul.bf16.gmra.mxu0 %v8412
    %v8579 = vpop.f32.mrf.mxu0
    %v8580 = vadd.f32 0.0, %v8579
    %v8581 = vpop.f32.mrf.mxu0
    %8582 = vdwg.mxu0
    %8583 = vmatpush.bf16.msra.mxu0 %v6160
    %8584 = vmatpush.bf16.msra.mxu0 %v6152
    %8585 = vmatpush.bf16.msra.mxu0 %v6144
    %8586 = vmatpush.bf16.msra.mxu0 %v6136
    %8587 = vmatpush.bf16.msra.mxu0 %v6128
    %8588 = vmatpush.bf16.msra.mxu0 %v6120
    %8589 = vmatpush.bf16.msra.mxu0 %v6112
    %8590 = vmatpush.bf16.msra.mxu0 %v6104
    %8591 = vmatmul.bf16.gmra.mxu0 %v8413
    %v8592 = vpop.f32.mrf.mxu0
    %v8593 = vadd.f32 %v8580, %v8592
    %v8594 = vpop.f32.mrf.mxu0
    %8595 = vdwg.mxu0
    %8596 = vmatpush.bf16.msra.mxu0 %v6097
    %8597 = vmatpush.bf16.msra.mxu0 %v6089
    %8598 = vmatpush.bf16.msra.mxu0 %v6081
    %8599 = vmatpush.bf16.msra.mxu0 %v6073
    %8600 = vmatpush.bf16.msra.mxu0 %v6065
    %8601 = vmatpush.bf16.msra.mxu0 %v6057
    %8602 = vmatpush.bf16.msra.mxu0 %v6049
    %8603 = vmatpush.bf16.msra.mxu0 %v6041
    %8604 = vmatmul.bf16.gmra.mxu0 %v8412
    %v8605 = vpop.f32.mrf.mxu0
    %v8606 = vadd.f32 0.0, %v8605
    %v8607 = vpop.f32.mrf.mxu0
    %8608 = vdwg.mxu0
    %8609 = vmatpush.bf16.msra.mxu0 %v6161
    %8610 = vmatpush.bf16.msra.mxu0 %v6153
    %8611 = vmatpush.bf16.msra.mxu0 %v6145
    %8612 = vmatpush.bf16.msra.mxu0 %v6137
    %8613 = vmatpush.bf16.msra.mxu0 %v6129
    %8614 = vmatpush.bf16.msra.mxu0 %v6121
    %8615 = vmatpush.bf16.msra.mxu0 %v6113
    %8616 = vmatpush.bf16.msra.mxu0 %v6105
    %8617 = vmatmul.bf16.gmra.mxu0 %v8413
    %v8618 = vpop.f32.mrf.mxu0
    %v8619 = vadd.f32 %v8606, %v8618
    %v8620 = vpop.f32.mrf.mxu0
    %8621 = vdwg.mxu0
    %v8622 = vld [vmem:[%s1893] sm:$0xff]
    %v8623 = vld [vmem:[%s1893 + $0x8] sm:$0xff]
    %v8624 = vld [vmem:[%s1893 + $0x10] sm:$0xff]
    %v8625 = vld [vmem:[%s1893 + $0x18] sm:$0xff]
    %v8626 = vadd.f32 %v8622, %v8437
    %v8627 = vadd.f32 %v8623, %v8463
    %v8628 = vadd.f32 %v8624, %v8489
    %v8629 = vadd.f32 %v8625, %v8515
    %v8630 = vld [vmem:[%s1882 + $0x20] sm:$0xff]
    %v8631 = vld [vmem:[%s1882 + $0x28] sm:$0xff]
    %v8632 = vld [vmem:[%s1882 + $0x30] sm:$0xff]
    %v8633 = vld [vmem:[%s1882 + $0x38] sm:$0xff]
    %v8634 = vadd.f32 %v8630, %v8541
    %v8635 = vadd.f32 %v8631, %v8567
    %v8636 = vadd.f32 %v8632, %v8593
    %v8637 = vadd.f32 %v8633, %v8619
    %v8638 = vxor.u32 %v8626, 2147483648
    %v8639 = vxor.u32 %v8627, 2147483648
    %v8640 = vxor.u32 %v8628, 2147483648
    %v8641 = vmul.f32 %v8638, 1.442695
    %v8642 = vpow.pop %v8641
    %v8643 = vmul.f32 %v8639, 1.442695
    %v8644 = vpow.pop %v8643
    %v8645 = vmul.f32 %v8640, 1.442695
    %v8646 = vpow.pop %v8645
    %v8647 = vadd.f32 %v8642, 1.0
    %v8648 = vadd.f32 %v8644, 1.0
    %v8649 = vadd.f32 %v8646, 1.0
    %v8650 = vrcp.pop %v8647
    %v8651 = vmul.f32 %v8647, %v8650
    %v8652 = vsub.f32 1.0, %v8651
    %v8653 = vmul.f32 %v8650, %v8652
    %v8654 = vadd.f32 %v8650, %v8653
    %vm8655 = vweird.f32 %v8647
    %vm8656 = vweird.f32 %v8650
    %vm8657 = vmor %vm8655, %vm8656
    %v8658 = vsel %vm8657, %v8650, %v8654
    %v8659 = vand.u32 2147483647, %v8647
    %vm8660 = vcmp.eq.f32.partialorder %v8659, 8.507059e+37
    %v8661 = vand.u32 %v8647, 2147483648
    %v8662 = vor.u32 1.1754944e-38, %v8661
    %v8663 = vsel %vm8660, %v8662, %v8658
    %v8664 = vmul.f32 1.0, %v8663
    %v8665 = vrcp.pop %v8648
    %v8666 = vmul.f32 %v8648, %v8665
    %v8667 = vsub.f32 1.0, %v8666
    %v8668 = vmul.f32 %v8665, %v8667
    %v8669 = vadd.f32 %v8665, %v8668
    %vm8670 = vweird.f32 %v8648
    %vm8671 = vweird.f32 %v8665
    %vm8672 = vmor %vm8670, %vm8671
    %v8673 = vsel %vm8672, %v8665, %v8669
    %v8674 = vand.u32 2147483647, %v8648
    %vm8675 = vcmp.eq.f32.partialorder %v8674, 8.507059e+37
    %v8676 = vand.u32 %v8648, 2147483648
    %v8677 = vor.u32 1.1754944e-38, %v8676
    %v8678 = vsel %vm8675, %v8677, %v8673
    %v8679 = vmul.f32 1.0, %v8678
    %v8680 = vrcp.pop %v8649
    %v8681 = vmul.f32 %v8649, %v8680
    %v8682 = vsub.f32 1.0, %v8681
    %v8683 = vmul.f32 %v8680, %v8682
    %v8684 = vadd.f32 %v8680, %v8683
    %vm8685 = vweird.f32 %v8649
    %vm8686 = vweird.f32 %v8680
    %vm8687 = vmor %vm8685, %vm8686
    %v8688 = vsel %vm8687, %v8680, %v8684
    %v8689 = vand.u32 2147483647, %v8649
    %vm8690 = vcmp.eq.f32.partialorder %v8689, 8.507059e+37
    %v8691 = vand.u32 %v8649, 2147483648
    %v8692 = vor.u32 1.1754944e-38, %v8691
    %v8693 = vsel %vm8690, %v8692, %v8688
    %v8694 = vmul.f32 1.0, %v8693
    %v8695 = vtanh.pop %v8629
    %v8696 = vxor.u32 %v8634, 2147483648
    %v8697 = vxor.u32 %v8635, 2147483648
    %v8698 = vxor.u32 %v8636, 2147483648
    %v8699 = vmul.f32 %v8696, 1.442695
    %v8700 = vpow.pop %v8699
    %v8701 = vmul.f32 %v8697, 1.442695
    %v8702 = vpow.pop %v8701
    %v8703 = vmul.f32 %v8698, 1.442695
    %v8704 = vpow.pop %v8703
    %v8705 = vadd.f32 %v8700, 1.0
    %v8706 = vadd.f32 %v8702, 1.0
    %v8707 = vadd.f32 %v8704, 1.0
    %v8708 = vrcp.pop %v8705
    %v8709 = vmul.f32 %v8705, %v8708
    %v8710 = vsub.f32 1.0, %v8709
    %v8711 = vmul.f32 %v8708, %v8710
    %v8712 = vadd.f32 %v8708, %v8711
    %vm8713 = vweird.f32 %v8705
    %vm8714 = vweird.f32 %v8708
    %vm8715 = vmor %vm8713, %vm8714
    %v8716 = vsel %vm8715, %v8708, %v8712
    %v8717 = vand.u32 2147483647, %v8705
    %vm8718 = vcmp.eq.f32.partialorder %v8717, 8.507059e+37
    %v8719 = vand.u32 %v8705, 2147483648
    %v8720 = vor.u32 1.1754944e-38, %v8719
    %v8721 = vsel %vm8718, %v8720, %v8716
    %v8722 = vmul.f32 1.0, %v8721
    %v8723 = vrcp.pop %v8706
    %v8724 = vmul.f32 %v8706, %v8723
    %v8725 = vsub.f32 1.0, %v8724
    %v8726 = vmul.f32 %v8723, %v8725
    %v8727 = vadd.f32 %v8723, %v8726
    %vm8728 = vweird.f32 %v8706
    %vm8729 = vweird.f32 %v8723
    %vm8730 = vmor %vm8728, %vm8729
    %v8731 = vsel %vm8730, %v8723, %v8727
    %v8732 = vand.u32 2147483647, %v8706
    %vm8733 = vcmp.eq.f32.partialorder %v8732, 8.507059e+37
    %v8734 = vand.u32 %v8706, 2147483648
    %v8735 = vor.u32 1.1754944e-38, %v8734
    %v8736 = vsel %vm8733, %v8735, %v8731
    %v8737 = vmul.f32 1.0, %v8736
    %v8738 = vrcp.pop %v8707
    %v8739 = vmul.f32 %v8707, %v8738
    %v8740 = vsub.f32 1.0, %v8739
    %v8741 = vmul.f32 %v8738, %v8740
    %v8742 = vadd.f32 %v8738, %v8741
    %vm8743 = vweird.f32 %v8707
    %vm8744 = vweird.f32 %v8738
    %vm8745 = vmor %vm8743, %vm8744
    %v8746 = vsel %vm8745, %v8738, %v8742
    %v8747 = vand.u32 2147483647, %v8707
    %vm8748 = vcmp.eq.f32.partialorder %v8747, 8.507059e+37
    %v8749 = vand.u32 %v8707, 2147483648
    %v8750 = vor.u32 1.1754944e-38, %v8749
    %v8751 = vsel %vm8748, %v8750, %v8746
    %v8752 = vmul.f32 1.0, %v8751
    %v8753 = vtanh.pop %v8637
    %v8754 = vmul.f32 %v8679, %v8402
    %v8755 = vmul.f32 %v8664, %v8695
    %v8756 = vadd.f32 %v8754, %v8755
    %v8757 = vmul.f32 %v8737, %v8405
    %v8758 = vmul.f32 %v8722, %v8753
    %v8759 = vadd.f32 %v8757, %v8758
    %v8760 = vtanh.pop %v8756
    %v8761 = vmul.f32 %v8694, %v8760
    %v8762 = vtanh.pop %v8759
    %v8763 = vmul.f32 %v8752, %v8762
    %8764 = vst [vmem:[%s2034] sm:$0xff] %v8761
    %8765 = vst [vmem:[%s2030 + $0x8] sm:$0xff] %v8763
    %v8766 = vpack.c.bf16 %v8761, %v8761
    %v8767 = vpack.c.bf16 %v8763, %v8763
    %8768 = vmatpush.bf16.msra.mxu0 %v6090
    %8769 = vmatpush.bf16.msra.mxu0 %v6082
    %8770 = vmatpush.bf16.msra.mxu0 %v6074
    %8771 = vmatpush.bf16.msra.mxu0 %v6066
    %8772 = vmatpush.bf16.msra.mxu0 %v6058
    %8773 = vmatpush.bf16.msra.mxu0 %v6050
    %8774 = vmatpush.bf16.msra.mxu0 %v6042
    %8775 = vmatpush.bf16.msra.mxu0 %v6034
    %8776 = vmatmul.bf16.gmra.mxu0 %v8766
    %v8777 = vpop.f32.mrf.mxu0
    %v8778 = vadd.f32 0.0, %v8777
    %v8779 = vpop.f32.mrf.mxu0
    %8780 = vdwg.mxu0
    %8781 = vmatpush.bf16.msra.mxu0 %v6154
    %8782 = vmatpush.bf16.msra.mxu0 %v6146
    %8783 = vmatpush.bf16.msra.mxu0 %v6138
    %8784 = vmatpush.bf16.msra.mxu0 %v6130
    %8785 = vmatpush.bf16.msra.mxu0 %v6122
    %8786 = vmatpush.bf16.msra.mxu0 %v6114
    %8787 = vmatpush.bf16.msra.mxu0 %v6106
    %8788 = vmatpush.bf16.msra.mxu0 %v6098
    %8789 = vmatmul.bf16.gmra.mxu0 %v8767
    %v8790 = vpop.f32.mrf.mxu0
    %v8791 = vadd.f32 %v8778, %v8790
    %v8792 = vpop.f32.mrf.mxu0
    %8793 = vdwg.mxu0
    %8794 = vmatpush.bf16.msra.mxu0 %v6091
    %8795 = vmatpush.bf16.msra.mxu0 %v6083
    %8796 = vmatpush.bf16.msra.mxu0 %v6075
    %8797 = vmatpush.bf16.msra.mxu0 %v6067
    %8798 = vmatpush.bf16.msra.mxu0 %v6059
    %8799 = vmatpush.bf16.msra.mxu0 %v6051
    %8800 = vmatpush.bf16.msra.mxu0 %v6043
    %8801 = vmatpush.bf16.msra.mxu0 %v6035
    %8802 = vmatmul.bf16.gmra.mxu0 %v8766
    %v8803 = vpop.f32.mrf.mxu0
    %v8804 = vadd.f32 0.0, %v8803
    %v8805 = vpop.f32.mrf.mxu0
    %8806 = vdwg.mxu0
    %8807 = vmatpush.bf16.msra.mxu0 %v6155
    %8808 = vmatpush.bf16.msra.mxu0 %v6147
    %8809 = vmatpush.bf16.msra.mxu0 %v6139
    %8810 = vmatpush.bf16.msra.mxu0 %v6131
    %8811 = vmatpush.bf16.msra.mxu0 %v6123
    %8812 = vmatpush.bf16.msra.mxu0 %v6115
    %8813 = vmatpush.bf16.msra.mxu0 %v6107
    %8814 = vmatpush.bf16.msra.mxu0 %v6099
    %8815 = vmatmul.bf16.gmra.mxu0 %v8767
    %v8816 = vpop.f32.mrf.mxu0
    %v8817 = vadd.f32 %v8804, %v8816
    %v8818 = vpop.f32.mrf.mxu0
    %8819 = vdwg.mxu0
    %8820 = vmatpush.bf16.msra.mxu0 %v6092
    %8821 = vmatpush.bf16.msra.mxu0 %v6084
    %8822 = vmatpush.bf16.msra.mxu0 %v6076
    %8823 = vmatpush.bf16.msra.mxu0 %v6068
    %8824 = vmatpush.bf16.msra.mxu0 %v6060
    %8825 = vmatpush.bf16.msra.mxu0 %v6052
    %8826 = vmatpush.bf16.msra.mxu0 %v6044
    %8827 = vmatpush.bf16.msra.mxu0 %v6036
    %8828 = vmatmul.bf16.gmra.mxu0 %v8766
    %v8829 = vpop.f32.mrf.mxu0
    %v8830 = vadd.f32 0.0, %v8829
    %v8831 = vpop.f32.mrf.mxu0
    %8832 = vdwg.mxu0
    %8833 = vmatpush.bf16.msra.mxu0 %v6156
    %8834 = vmatpush.bf16.msra.mxu0 %v6148
    %8835 = vmatpush.bf16.msra.mxu0 %v6140
    %8836 = vmatpush.bf16.msra.mxu0 %v6132
    %8837 = vmatpush.bf16.msra.mxu0 %v6124
    %8838 = vmatpush.bf16.msra.mxu0 %v6116
    %8839 = vmatpush.bf16.msra.mxu0 %v6108
    %8840 = vmatpush.bf16.msra.mxu0 %v6100
    %8841 = vmatmul.bf16.gmra.mxu0 %v8767
    %v8842 = vpop.f32.mrf.mxu0
    %v8843 = vadd.f32 %v8830, %v8842
    %v8844 = vpop.f32.mrf.mxu0
    %8845 = vdwg.mxu0
    %8846 = vmatpush.bf16.msra.mxu0 %v6093
    %8847 = vmatpush.bf16.msra.mxu0 %v6085
    %8848 = vmatpush.bf16.msra.mxu0 %v6077
    %8849 = vmatpush.bf16.msra.mxu0 %v6069
    %8850 = vmatpush.bf16.msra.mxu0 %v6061
    %8851 = vmatpush.bf16.msra.mxu0 %v6053
    %8852 = vmatpush.bf16.msra.mxu0 %v6045
    %8853 = vmatpush.bf16.msra.mxu0 %v6037
    %8854 = vmatmul.bf16.gmra.mxu0 %v8766
    %v8855 = vpop.f32.mrf.mxu0
    %v8856 = vadd.f32 0.0, %v8855
    %v8857 = vpop.f32.mrf.mxu0
    %8858 = vdwg.mxu0
    %8859 = vmatpush.bf16.msra.mxu0 %v6157
    %8860 = vmatpush.bf16.msra.mxu0 %v6149
    %8861 = vmatpush.bf16.msra.mxu0 %v6141
    %8862 = vmatpush.bf16.msra.mxu0 %v6133
    %8863 = vmatpush.bf16.msra.mxu0 %v6125
    %8864 = vmatpush.bf16.msra.mxu0 %v6117
    %8865 = vmatpush.bf16.msra.mxu0 %v6109
    %8866 = vmatpush.bf16.msra.mxu0 %v6101
    %8867 = vmatmul.bf16.gmra.mxu0 %v8767
    %v8868 = vpop.f32.mrf.mxu0
    %v8869 = vadd.f32 %v8856, %v8868
    %v8870 = vpop.f32.mrf.mxu0
    %8871 = vdwg.mxu0
    %8872 = vmatpush.bf16.msra.mxu0 %v6094
    %8873 = vmatpush.bf16.msra.mxu0 %v6086
    %8874 = vmatpush.bf16.msra.mxu0 %v6078
    %8875 = vmatpush.bf16.msra.mxu0 %v6070
    %8876 = vmatpush.bf16.msra.mxu0 %v6062
    %8877 = vmatpush.bf16.msra.mxu0 %v6054
    %8878 = vmatpush.bf16.msra.mxu0 %v6046
    %8879 = vmatpush.bf16.msra.mxu0 %v6038
    %8880 = vmatmul.bf16.gmra.mxu0 %v8766
    %v8881 = vpop.f32.mrf.mxu0
    %v8882 = vadd.f32 0.0, %v8881
    %v8883 = vpop.f32.mrf.mxu0
    %8884 = vdwg.mxu0
    %8885 = vmatpush.bf16.msra.mxu0 %v6158
    %8886 = vmatpush.bf16.msra.mxu0 %v6150
    %8887 = vmatpush.bf16.msra.mxu0 %v6142
    %8888 = vmatpush.bf16.msra.mxu0 %v6134
    %8889 = vmatpush.bf16.msra.mxu0 %v6126
    %8890 = vmatpush.bf16.msra.mxu0 %v6118
    %8891 = vmatpush.bf16.msra.mxu0 %v6110
    %8892 = vmatpush.bf16.msra.mxu0 %v6102
    %8893 = vmatmul.bf16.gmra.mxu0 %v8767
    %v8894 = vpop.f32.mrf.mxu0
    %v8895 = vadd.f32 %v8882, %v8894
    %v8896 = vpop.f32.mrf.mxu0
    %8897 = vdwg.mxu0
    %8898 = vmatpush.bf16.msra.mxu0 %v6095
    %8899 = vmatpush.bf16.msra.mxu0 %v6087
    %8900 = vmatpush.bf16.msra.mxu0 %v6079
    %8901 = vmatpush.bf16.msra.mxu0 %v6071
    %8902 = vmatpush.bf16.msra.mxu0 %v6063
    %8903 = vmatpush.bf16.msra.mxu0 %v6055
    %8904 = vmatpush.bf16.msra.mxu0 %v6047
    %8905 = vmatpush.bf16.msra.mxu0 %v6039
    %8906 = vmatmul.bf16.gmra.mxu0 %v8766
    %v8907 = vpop.f32.mrf.mxu0
    %v8908 = vadd.f32 0.0, %v8907
    %v8909 = vpop.f32.mrf.mxu0
    %8910 = vdwg.mxu0
    %8911 = vmatpush.bf16.msra.mxu0 %v6159
    %8912 = vmatpush.bf16.msra.mxu0 %v6151
    %8913 = vmatpush.bf16.msra.mxu0 %v6143
    %8914 = vmatpush.bf16.msra.mxu0 %v6135
    %8915 = vmatpush.bf16.msra.mxu0 %v6127
    %8916 = vmatpush.bf16.msra.mxu0 %v6119
    %8917 = vmatpush.bf16.msra.mxu0 %v6111
    %8918 = vmatpush.bf16.msra.mxu0 %v6103
    %8919 = vmatmul.bf16.gmra.mxu0 %v8767
    %v8920 = vpop.f32.mrf.mxu0
    %v8921 = vadd.f32 %v8908, %v8920
    %v8922 = vpop.f32.mrf.mxu0
    %8923 = vdwg.mxu0
    %8924 = vmatpush.bf16.msra.mxu0 %v6096
    %8925 = vmatpush.bf16.msra.mxu0 %v6088
    %8926 = vmatpush.bf16.msra.mxu0 %v6080
    %8927 = vmatpush.bf16.msra.mxu0 %v6072
    %8928 = vmatpush.bf16.msra.mxu0 %v6064
    %8929 = vmatpush.bf16.msra.mxu0 %v6056
    %8930 = vmatpush.bf16.msra.mxu0 %v6048
    %8931 = vmatpush.bf16.msra.mxu0 %v6040
    %8932 = vmatmul.bf16.gmra.mxu0 %v8766
    %v8933 = vpop.f32.mrf.mxu0
    %v8934 = vadd.f32 0.0, %v8933
    %v8935 = vpop.f32.mrf.mxu0
    %8936 = vdwg.mxu0
    %8937 = vmatpush.bf16.msra.mxu0 %v6160
    %8938 = vmatpush.bf16.msra.mxu0 %v6152
    %8939 = vmatpush.bf16.msra.mxu0 %v6144
    %8940 = vmatpush.bf16.msra.mxu0 %v6136
    %8941 = vmatpush.bf16.msra.mxu0 %v6128
    %8942 = vmatpush.bf16.msra.mxu0 %v6120
    %8943 = vmatpush.bf16.msra.mxu0 %v6112
    %8944 = vmatpush.bf16.msra.mxu0 %v6104
    %8945 = vmatmul.bf16.gmra.mxu0 %v8767
    %v8946 = vpop.f32.mrf.mxu0
    %v8947 = vadd.f32 %v8934, %v8946
    %v8948 = vpop.f32.mrf.mxu0
    %8949 = vdwg.mxu0
    %8950 = vmatpush.bf16.msra.mxu0 %v6097
    %8951 = vmatpush.bf16.msra.mxu0 %v6089
    %8952 = vmatpush.bf16.msra.mxu0 %v6081
    %8953 = vmatpush.bf16.msra.mxu0 %v6073
    %8954 = vmatpush.bf16.msra.mxu0 %v6065
    %8955 = vmatpush.bf16.msra.mxu0 %v6057
    %8956 = vmatpush.bf16.msra.mxu0 %v6049
    %8957 = vmatpush.bf16.msra.mxu0 %v6041
    %8958 = vmatmul.bf16.gmra.mxu0 %v8766
    %v8959 = vpop.f32.mrf.mxu0
    %v8960 = vadd.f32 0.0, %v8959
    %v8961 = vpop.f32.mrf.mxu0
    %8962 = vdwg.mxu0
    %8963 = vmatpush.bf16.msra.mxu0 %v6161
    %8964 = vmatpush.bf16.msra.mxu0 %v6153
    %8965 = vmatpush.bf16.msra.mxu0 %v6145
    %8966 = vmatpush.bf16.msra.mxu0 %v6137
    %8967 = vmatpush.bf16.msra.mxu0 %v6129
    %8968 = vmatpush.bf16.msra.mxu0 %v6121
    %8969 = vmatpush.bf16.msra.mxu0 %v6113
    %8970 = vmatpush.bf16.msra.mxu0 %v6105
    %8971 = vmatmul.bf16.gmra.mxu0 %v8767
    %v8972 = vpop.f32.mrf.mxu0
    %v8973 = vadd.f32 %v8960, %v8972
    %v8974 = vpop.f32.mrf.mxu0
    %8975 = vdwg.mxu0
    %v8976 = vld [vmem:[%s1527] sm:$0xff]
    %v8977 = vld [vmem:[%s1527 + $0x8] sm:$0xff]
    %v8978 = vld [vmem:[%s1527 + $0x10] sm:$0xff]
    %v8979 = vld [vmem:[%s1527 + $0x18] sm:$0xff]
    %v8980 = vadd.f32 %v8976, %v8791
    %v8981 = vadd.f32 %v8977, %v8817
    %v8982 = vadd.f32 %v8978, %v8843
    %v8983 = vadd.f32 %v8979, %v8869
    %v8984 = vld [vmem:[%s1516 + $0x20] sm:$0xff]
    %v8985 = vld [vmem:[%s1516 + $0x28] sm:$0xff]
    %v8986 = vld [vmem:[%s1516 + $0x30] sm:$0xff]
    %v8987 = vld [vmem:[%s1516 + $0x38] sm:$0xff]
    %v8988 = vadd.f32 %v8984, %v8895
    %v8989 = vadd.f32 %v8985, %v8921
    %v8990 = vadd.f32 %v8986, %v8947
    %v8991 = vadd.f32 %v8987, %v8973
    %v8992 = vxor.u32 %v8980, 2147483648
    %v8993 = vxor.u32 %v8981, 2147483648
    %v8994 = vxor.u32 %v8982, 2147483648
    %v8995 = vmul.f32 %v8992, 1.442695
    %v8996 = vpow.pop %v8995
    %v8997 = vmul.f32 %v8993, 1.442695
    %v8998 = vpow.pop %v8997
    %v8999 = vmul.f32 %v8994, 1.442695
    %v9000 = vpow.pop %v8999
    %v9001 = vadd.f32 %v8996, 1.0
    %v9002 = vadd.f32 %v8998, 1.0
    %v9003 = vadd.f32 %v9000, 1.0
    %v9004 = vrcp.pop %v9001
    %v9005 = vmul.f32 %v9001, %v9004
    %v9006 = vsub.f32 1.0, %v9005
    %v9007 = vmul.f32 %v9004, %v9006
    %v9008 = vadd.f32 %v9004, %v9007
    %vm9009 = vweird.f32 %v9001
    %vm9010 = vweird.f32 %v9004
    %vm9011 = vmor %vm9009, %vm9010
    %v9012 = vsel %vm9011, %v9004, %v9008
    %v9013 = vand.u32 2147483647, %v9001
    %vm9014 = vcmp.eq.f32.partialorder %v9013, 8.507059e+37
    %v9015 = vand.u32 %v9001, 2147483648
    %v9016 = vor.u32 1.1754944e-38, %v9015
    %v9017 = vsel %vm9014, %v9016, %v9012
    %v9018 = vmul.f32 1.0, %v9017
    %v9019 = vrcp.pop %v9002
    %v9020 = vmul.f32 %v9002, %v9019
    %v9021 = vsub.f32 1.0, %v9020
    %v9022 = vmul.f32 %v9019, %v9021
    %v9023 = vadd.f32 %v9019, %v9022
    %vm9024 = vweird.f32 %v9002
    %vm9025 = vweird.f32 %v9019
    %vm9026 = vmor %vm9024, %vm9025
    %v9027 = vsel %vm9026, %v9019, %v9023
    %v9028 = vand.u32 2147483647, %v9002
    %vm9029 = vcmp.eq.f32.partialorder %v9028, 8.507059e+37
    %v9030 = vand.u32 %v9002, 2147483648
    %v9031 = vor.u32 1.1754944e-38, %v9030
    %v9032 = vsel %vm9029, %v9031, %v9027
    %v9033 = vmul.f32 1.0, %v9032
    %v9034 = vrcp.pop %v9003
    %v9035 = vmul.f32 %v9003, %v9034
    %v9036 = vsub.f32 1.0, %v9035
    %v9037 = vmul.f32 %v9034, %v9036
    %v9038 = vadd.f32 %v9034, %v9037
    %vm9039 = vweird.f32 %v9003
    %vm9040 = vweird.f32 %v9034
    %vm9041 = vmor %vm9039, %vm9040
    %v9042 = vsel %vm9041, %v9034, %v9038
    %v9043 = vand.u32 2147483647, %v9003
    %vm9044 = vcmp.eq.f32.partialorder %v9043, 8.507059e+37
    %v9045 = vand.u32 %v9003, 2147483648
    %v9046 = vor.u32 1.1754944e-38, %v9045
    %v9047 = vsel %vm9044, %v9046, %v9042
    %v9048 = vmul.f32 1.0, %v9047
    %v9049 = vtanh.pop %v8983
    %v9050 = vxor.u32 %v8988, 2147483648
    %v9051 = vxor.u32 %v8989, 2147483648
    %v9052 = vxor.u32 %v8990, 2147483648
    %v9053 = vmul.f32 %v9050, 1.442695
    %v9054 = vpow.pop %v9053
    %v9055 = vmul.f32 %v9051, 1.442695
    %v9056 = vpow.pop %v9055
    %v9057 = vmul.f32 %v9052, 1.442695
    %v9058 = vpow.pop %v9057
    %v9059 = vadd.f32 %v9054, 1.0
    %v9060 = vadd.f32 %v9056, 1.0
    %v9061 = vadd.f32 %v9058, 1.0
    %v9062 = vrcp.pop %v9059
    %v9063 = vmul.f32 %v9059, %v9062
    %v9064 = vsub.f32 1.0, %v9063
    %v9065 = vmul.f32 %v9062, %v9064
    %v9066 = vadd.f32 %v9062, %v9065
    %vm9067 = vweird.f32 %v9059
    %vm9068 = vweird.f32 %v9062
    %vm9069 = vmor %vm9067, %vm9068
    %v9070 = vsel %vm9069, %v9062, %v9066
    %v9071 = vand.u32 2147483647, %v9059
    %vm9072 = vcmp.eq.f32.partialorder %v9071, 8.507059e+37
    %v9073 = vand.u32 %v9059, 2147483648
    %v9074 = vor.u32 1.1754944e-38, %v9073
    %v9075 = vsel %vm9072, %v9074, %v9070
    %v9076 = vmul.f32 1.0, %v9075
    %v9077 = vrcp.pop %v9060
    %v9078 = vmul.f32 %v9060, %v9077
    %v9079 = vsub.f32 1.0, %v9078
    %v9080 = vmul.f32 %v9077, %v9079
    %v9081 = vadd.f32 %v9077, %v9080
    %vm9082 = vweird.f32 %v9060
    %vm9083 = vweird.f32 %v9077
    %vm9084 = vmor %vm9082, %vm9083
    %v9085 = vsel %vm9084, %v9077, %v9081
    %v9086 = vand.u32 2147483647, %v9060
    %vm9087 = vcmp.eq.f32.partialorder %v9086, 8.507059e+37
    %v9088 = vand.u32 %v9060, 2147483648
    %v9089 = vor.u32 1.1754944e-38, %v9088
    %v9090 = vsel %vm9087, %v9089, %v9085
    %v9091 = vmul.f32 1.0, %v9090
    %v9092 = vrcp.pop %v9061
    %v9093 = vmul.f32 %v9061, %v9092
    %v9094 = vsub.f32 1.0, %v9093
    %v9095 = vmul.f32 %v9092, %v9094
    %v9096 = vadd.f32 %v9092, %v9095
    %vm9097 = vweird.f32 %v9061
    %vm9098 = vweird.f32 %v9092
    %vm9099 = vmor %vm9097, %vm9098
    %v9100 = vsel %vm9099, %v9092, %v9096
    %v9101 = vand.u32 2147483647, %v9061
    %vm9102 = vcmp.eq.f32.partialorder %v9101, 8.507059e+37
    %v9103 = vand.u32 %v9061, 2147483648
    %v9104 = vor.u32 1.1754944e-38, %v9103
    %v9105 = vsel %vm9102, %v9104, %v9100
    %v9106 = vmul.f32 1.0, %v9105
    %v9107 = vtanh.pop %v8991
    %v9108 = vmul.f32 %v9033, %v8756
    %v9109 = vmul.f32 %v9018, %v9049
    %v9110 = vadd.f32 %v9108, %v9109
    %v9111 = vmul.f32 %v9091, %v8759
    %v9112 = vmul.f32 %v9076, %v9107
    %v9113 = vadd.f32 %v9111, %v9112
    %v9114 = vtanh.pop %v9110
    %v9115 = vmul.f32 %v9048, %v9114
    %v9116 = vtanh.pop %v9113
    %v9117 = vmul.f32 %v9106, %v9116
    %9118 = vst [vmem:[%s1668] sm:$0xff] %v9115
    %9119 = vst [vmem:[%s1664 + $0x8] sm:$0xff] %v9117
    %v9120 = vld [vmem:[#allocation3 + $0x70] sm:$0xff]
    %v9121 = vld [vmem:[#allocation3 + $0x78] sm:$0xff]
    %vm9122 = vcmp.gt.f32.partialorder %v9120, 0.0
    %vm9123 = vcmp.gt.f32.partialorder %v9121, 0.0
    %v9124 = vmin.f32 %v9120, 0.0
    %v9125 = vmin.f32 %v9121, 0.0
    %v9126 = vmul.f32 %v9124, 1.442695
    %v9127 = vpow.pop %v9126
    %v9128 = vmul.f32 %v9125, 1.442695
    %v9129 = vpow.pop %v9128
    %v9130 = vsub.f32 %v9127, 1.0
    %v9131 = vsub.f32 %v9129, 1.0
    %v9132 = vmul.f32 %v9130, 1.6732632
    %v9133 = vmul.f32 %v9131, 1.6732632
    %v9134 = vsel %vm9122, %v9120, %v9132
    %v9135 = vsel %vm9123, %v9121, %v9133
    %v9136 = vmul.f32 %v9134, 1.050701
    %v9137 = vmul.f32 %v9135, 1.050701
    %v9138 = vpack.c.bf16 %v9136, %v9136
    %v9139 = vpack.c.bf16 %v9137, %v9137
    %v9140 = vld [vmem:[%s7] sm:$0xf]
    %v9141 = vld [vmem:[%s7 + $0x4] sm:$0xf]
    %v9142 = vld [vmem:[%s7 + $0x8] sm:$0xf]
    %v9143 = vld [vmem:[%s7 + $0xc] sm:$0xf]
    %v9144 = vld [vmem:[%s7 + $0x10] sm:$0xf]
    %v9145 = vld [vmem:[%s7 + $0x14] sm:$0xf]
    %v9146 = vld [vmem:[%s7 + $0x18] sm:$0xf]
    %v9147 = vld [vmem:[%s7 + $0x1c] sm:$0xf]
    %v9148 = vld [vmem:[%s7 + $0x20] sm:$0xf]
    %v9149 = vld [vmem:[%s7 + $0x24] sm:$0xf]
    %v9150 = vld [vmem:[%s7 + $0x28] sm:$0xf]
    %v9151 = vld [vmem:[%s7 + $0x2c] sm:$0xf]
    %v9152 = vld [vmem:[%s7 + $0x30] sm:$0xf]
    %v9153 = vld [vmem:[%s7 + $0x34] sm:$0xf]
    %v9154 = vld [vmem:[%s7 + $0x38] sm:$0xf]
    %v9155 = vld [vmem:[%s7 + $0x3c] sm:$0xf]
    %v9156 = vld [vmem:[%s7 + $0x40] sm:$0xf]
    %v9157 = vld [vmem:[%s7 + $0x44] sm:$0xf]
    %v9158 = vld [vmem:[%s7 + $0x48] sm:$0xf]
    %v9159 = vld [vmem:[%s7 + $0x4c] sm:$0xf]
    %v9160 = vld [vmem:[%s7 + $0x50] sm:$0xf]
    %v9161 = vld [vmem:[%s7 + $0x54] sm:$0xf]
    %v9162 = vld [vmem:[%s7 + $0x58] sm:$0xf]
    %v9163 = vld [vmem:[%s7 + $0x5c] sm:$0xf]
    %v9164 = vld [vmem:[%s7 + $0x60] sm:$0xf]
    %v9165 = vld [vmem:[%s7 + $0x64] sm:$0xf]
    %v9166 = vld [vmem:[%s7 + $0x68] sm:$0xf]
    %v9167 = vld [vmem:[%s7 + $0x6c] sm:$0xf]
    %v9168 = vld [vmem:[%s7 + $0x70] sm:$0xf]
    %v9169 = vld [vmem:[%s7 + $0x74] sm:$0xf]
    %v9170 = vld [vmem:[%s7 + $0x78] sm:$0xf]
    %v9171 = vld [vmem:[%s7 + $0x7c] sm:$0xf]
    %v9172 = vld [vmem:[%s8] sm:$0x1]
    %v9174 = vperm.slane %v9172, 0
    %v9208 = vunpack.c.l.b16 %v9140
    %v9209 = vunpack.c.l.b16 %v9141
    %v9210 = vunpack.c.l.b16 %v9142
    %v9211 = vunpack.c.l.b16 %v9143
    %v9212 = vunpack.c.l.b16 %v9144
    %v9213 = vunpack.c.l.b16 %v9145
    %v9214 = vunpack.c.l.b16 %v9146
    %v9215 = vunpack.c.l.b16 %v9147
    %v9216 = vunpack.c.l.b16 %v9148
    %v9217 = vunpack.c.l.b16 %v9149
    %v9218 = vunpack.c.l.b16 %v9150
    %v9219 = vunpack.c.l.b16 %v9151
    %v9220 = vunpack.c.l.b16 %v9152
    %v9221 = vunpack.c.l.b16 %v9153
    %v9222 = vunpack.c.l.b16 %v9154
    %v9223 = vunpack.c.l.b16 %v9155
    %v9224 = vunpack.c.l.b16 %v9156
    %v9225 = vunpack.c.l.b16 %v9157
    %v9226 = vunpack.c.l.b16 %v9158
    %v9227 = vunpack.c.l.b16 %v9159
    %v9228 = vunpack.c.l.b16 %v9160
    %v9229 = vunpack.c.l.b16 %v9161
    %v9230 = vunpack.c.l.b16 %v9162
    %v9231 = vunpack.c.l.b16 %v9163
    %v9232 = vunpack.c.l.b16 %v9164
    %v9233 = vunpack.c.l.b16 %v9165
    %v9234 = vunpack.c.l.b16 %v9166
    %v9235 = vunpack.c.l.b16 %v9167
    %v9236 = vunpack.c.l.b16 %v9168
    %v9237 = vunpack.c.l.b16 %v9169
    %v9238 = vunpack.c.l.b16 %v9170
    %v9239 = vunpack.c.l.b16 %v9171
    %v9240 = vpack.c.b16 %v9209, %v9208
    %v9241 = vpack.c.b16 %v9211, %v9210
    %v9242 = vpack.c.b16 %v9213, %v9212
    %v9243 = vpack.c.b16 %v9215, %v9214
    %v9244 = vpack.c.b16 %v9217, %v9216
    %v9245 = vpack.c.b16 %v9219, %v9218
    %v9246 = vpack.c.b16 %v9221, %v9220
    %v9247 = vpack.c.b16 %v9223, %v9222
    %v9248 = vpack.c.b16 %v9225, %v9224
    %v9249 = vpack.c.b16 %v9227, %v9226
    %v9250 = vpack.c.b16 %v9229, %v9228
    %v9251 = vpack.c.b16 %v9231, %v9230
    %v9252 = vpack.c.b16 %v9233, %v9232
    %v9253 = vpack.c.b16 %v9235, %v9234
    %v9254 = vpack.c.b16 %v9237, %v9236
    %v9255 = vpack.c.b16 %v9239, %v9238
    %9272 = vmatpush.bf16.msra.mxu0 %v9247
    %9273 = vmatpush.bf16.msra.mxu0 %v9246
    %9274 = vmatpush.bf16.msra.mxu0 %v9245
    %9275 = vmatpush.bf16.msra.mxu0 %v9244
    %9276 = vmatpush.bf16.msra.mxu0 %v9243
    %9277 = vmatpush.bf16.msra.mxu0 %v9242
    %9278 = vmatpush.bf16.msra.mxu0 %v9241
    %9279 = vmatpush.bf16.msra.mxu0 %v9240
    %9280 = vmatmul.bf16.gmra.mxu0 %v9138
    %v9281 = vpop.f32.mrf.mxu0
    %v9282 = vadd.f32 %v9174, %v9281
    %v9283 = vpop.f32.mrf.mxu0
    %9284 = vdwg.mxu0
    %9285 = vmatpush.bf16.msra.mxu0 %v9255
    %9286 = vmatpush.bf16.msra.mxu0 %v9254
    %9287 = vmatpush.bf16.msra.mxu0 %v9253
    %9288 = vmatpush.bf16.msra.mxu0 %v9252
    %9289 = vmatpush.bf16.msra.mxu0 %v9251
    %9290 = vmatpush.bf16.msra.mxu0 %v9250
    %9291 = vmatpush.bf16.msra.mxu0 %v9249
    %9292 = vmatpush.bf16.msra.mxu0 %v9248
    %9293 = vmatmul.bf16.gmra.mxu0 %v9139
    %v9294 = vpop.f32.mrf.mxu0
    %v9295 = vadd.f32 %v9282, %v9294
    %v9296 = vpop.f32.mrf.mxu0
    %9297 = vdwg.mxu0
    %vm9298 = vcmp.gt.f32.partialorder %v9295, 0.0
    %v9299 = vmin.f32 %v9295, 0.0
    %v9300 = vmul.f32 %v9299, 1.442695
    %v9301 = vpow.pop %v9300
    %v9302 = vsub.f32 %v9301, 1.0
    %v9303 = vmul.f32 %v9302, 1.6732632
    %v9304 = vsel %vm9298, %v9295, %v9303
    %v9305 = vmul.f32 %v9304, 1.050701
    %v9306 = vpack.c.bf16 %v9305, %v9305
    %v9307 = vld [vmem:[%s9] sm:$0xf]
    %v9308 = vld [vmem:[%s9 + $0x4] sm:$0xf]
    %v9309 = vld [vmem:[%s9 + $0x8] sm:$0xf]
    %v9310 = vld [vmem:[%s9 + $0xc] sm:$0xf]
    %v9311 = vld [vmem:[%s10] sm:$0x1]
    %v9313 = vperm.slane %v9311, 0
    %v9319 = vunpack.c.l.b16 %v9307
    %v9320 = vunpack.c.l.b16 %v9308
    %v9321 = vunpack.c.l.b16 %v9309
    %v9322 = vunpack.c.l.b16 %v9310
    %v9323 = vpack.c.b16 %v9320, %v9319
    %v9324 = vpack.c.b16 %v9322, %v9321
    %v9328 = vsel %vm229, %v9306, 0
    %9330 = vmatpush.bf16.msra.mxu0 0
    %9331 = vmatpush.bf16.msra.mxu0 0
    %9332 = vmatpush.bf16.msra.mxu0 0
    %9333 = vmatpush.bf16.msra.mxu0 0
    %9334 = vmatpush.bf16.msra.mxu0 0
    %9335 = vmatpush.bf16.msra.mxu0 0
    %9336 = vmatpush.bf16.msra.mxu0 %v9324
    %9337 = vmatpush.bf16.msra.mxu0 %v9323
    %9338 = vmatmul.bf16.gmra.mxu0 %v9328
    %v9339 = vpop.f32.mrf.mxu0
    %v9340 = vadd.f32 %v9313, %v9339
    %v9341 = vpop.f32.mrf.mxu0
    %9342 = vdwg.mxu0
    %vm9343 = vcmask 130048
    %9344 = vst.msk [vmem:[#allocation10] sm:$0xff] %vm9343, %v9340
    // Predicated region
    $region58: #{tpu_custom_call.1} parent=1 // pred_check
      _
    $region59: #{tpu_custom_call.1} parent=1 // pred_check_branch
      %9346 = sbr.rel (0) target = $region61
    $region60: #{tpu_custom_call.1} parent=1 // pred_region
      %9348 = vsyncadd [#allocation6], 0
      %s9350 = sshll.u32 [#allocation10], 4
      %s9351 = int_to_ptr.vmem [resolvable:$true] %s9350
      %s9352 = sshll.u32 %s11, 4
      %s9353 = int_to_ptr.hbm [resolvable:$true] %s9352
      %9355 = dma.vmem_to_hbm [thread:$0]  %s9351, 128, %s9353, [#allocation6]
    $region61: #{tpu_custom_call.1} parent=1 // pred_fallthru
      _
    // Predicated region
    $region62: #{tpu_custom_call.1} parent=1 // pred_check
      _
    $region63: #{tpu_custom_call.1} parent=1 // pred_check_branch
      %9357 = sbr.rel (0) target = $region65
    $region64: #{tpu_custom_call.1} parent=1 // pred_region
      %9359 = dma.done [#allocation6], 128
    $region65: #{tpu_custom_call.1} parent=1 // pred_fallthru
      _
    %9360 = vsyncpa [#allocation5], 1
    %9361 = vsyncpa [#allocation8], 1
    %9362 = vsyncpa [#allocation6], 1

</llo_original>
